<compile_context>
chip_gen: v7x
topology: tpu7x:2x2x1
jax: 0.10.0
libtpu: 0.0.40
codegen_flags: <defaults>
</compile_context>

<pallas_src>
import jax
import jax.numpy as jnp
import numpy as np
from jax.experimental import pallas as pl
from jax.experimental.pallas import tpu as pltpu

# ---------------- configuration (small, consistent with the module) ----------------
OUTER_NC = 4            # outer conv filters
INNER_NC = 8            # inner conv filters
INPUT_NC = OUTER_NC     # input_nc defaults to outer_nc
N, H, W = 2, 16, 16
HO, WO = H // 2, W // 2
EPS = 1e-5              # BatchNorm2d eps (training mode -> batch statistics)
NEG_SLOPE = 0.2

assert (W & (W - 1)) == 0 and (WO & (WO - 1)) == 0, "power-of-two spatial dims assumed"
W_SHIFT = W.bit_length() - 1     # so // W  -> >> W_SHIFT
WO_SHIFT = WO.bit_length() - 1   # s  // WO -> >> WO_SHIFT


# ---------------- the single fused kernel ----------------
def _unet_block_kernel(x_ref, wd_ref, wu_ref, gamma_ref, beta_ref, o_ref):
    # x_ref : (N, INPUT_NC, H*W)           channels-major, spatial flattened in lanes
    # wd_ref: (16, INNER_NC, INPUT_NC)     4x4 down-conv weights, one (co, ci) matrix per tap
    # wu_ref: (9, OUTER_NC, INNER_NC)      3x3 up-conv weights, one (co, ci) matrix per tap
    # gamma_ref / beta_ref: (OUTER_NC, 1)  BatchNorm affine parameters
    # o_ref : (N, INPUT_NC + OUTER_NC, H*W)

    # ---- LeakyReLU(0.2) + skip branch (lane-dense slab store, no concat) --------------
    h = []
    for n in range(N):
        xn = x_ref[n]                                      # (INPUT_NC, H*W)
        hn = jnp.where(xn >= 0.0, xn, NEG_SLOPE * xn)      # inplace-LeakyReLU'd x
        o_ref[n, :INPUT_NC, :] = hn                        # skip branch
        h.append(hn)

    # ---- down conv: 4x4, stride 2, zero pad 1 (16 tap matmuls) ------------------------
    # gather matrices are built in-registers from iota; zero padding == masked-out columns
    # (valid only because leaky_relu(0) == 0 and the pad value is 0).
    s_in = jax.lax.broadcasted_iota(jnp.int32, (H * W, HO * WO), 0)
    s_out = jax.lax.broadcasted_iota(jnp.int32, (H * W, HO * WO), 1)
    ho2 = 2 * (s_out >> WO_SHIFT)          # 2 * (s_out // WO)
    wo2 = 2 * (s_out & (WO - 1))           # 2 * (s_out %  WO)

    acc_d = [jnp.zeros((INNER_NC, HO * WO), jnp.float32) for _ in range(N)]
    for t in range(16):
        kh, kw = t // 4, t % 4
        hi = ho2 + (kh - 1)
        wi = wo2 + (kw - 1)
        valid = (hi >= 0) & (hi < H) & (wi >= 0) & (wi < W)
        g = jnp.where(valid & (s_in == hi * W + wi), 1.0, 0.0)   # (H*W, HO*WO) 0/1 gather
        w_t = wd_ref[t]                                          # (INNER_NC, INPUT_NC)
        for n in range(N):
            tap = jnp.dot(h[n], g, preferred_element_type=jnp.float32)          # (INPUT_NC, HO*WO)
            acc_d[n] += jnp.dot(w_t, tap, preferred_element_type=jnp.float32)   # (INNER_NC, HO*WO)
    d = [jnp.maximum(a, 0.0) for a in acc_d]                     # uprelu (before upsample)

    # ---- nearest x2 upsample + 3x3 replicate-pad conv (9 tap matmuls) -----------------
    # upsample + replicate pad folded into index math: src = clamp(dst + offset, 0, H-1) // 2
    sd = jax.lax.broadcasted_iota(jnp.int32, (HO * WO, H * W), 0)
    so = jax.lax.broadcasted_iota(jnp.int32, (HO * WO, H * W), 1)
    hh = so >> W_SHIFT                     # so // W
    ww = so & (W - 1)                      # so %  W

    acc_u = [jnp.zeros((OUTER_NC, H * W), jnp.float32) for _ in range(N)]
    for t in range(9):
        kh, kw = t // 3, t % 3
        hs = jnp.clip(hh + (kh - 1), 0, H - 1) >> 1
        ws = jnp.clip(ww + (kw - 1), 0, W - 1) >> 1
        g = jnp.where(sd == hs * WO + ws, 1.0, 0.0)              # (HO*WO, H*W) 0/1 gather
        w_t = wu_ref[t]                                          # (OUTER_NC, INNER_NC)
        for n in range(N):
            tap = jnp.dot(d[n], g, preferred_element_type=jnp.float32)          # (INNER_NC, H*W)
            acc_u[n] += jnp.dot(w_t, tap, preferred_element_type=jnp.float32)   # (OUTER_NC, H*W)

    # ---- BatchNorm2d (training mode: biased batch stats over N,H,W) + BN-branch store --
    inv_cnt = 1.0 / float(N * H * W)
    tot = jnp.zeros((OUTER_NC, 1), jnp.float32)
    for a in acc_u:
        tot += jnp.sum(a, axis=1, keepdims=True)                 # lane-axis reduction
    mean = tot * inv_cnt
    sq = jnp.zeros((OUTER_NC, 1), jnp.float32)
    for a in acc_u:
        sq += jnp.sum(jnp.square(a - mean), axis=1, keepdims=True)
    var = sq * inv_cnt
    scale = gamma_ref[...] * jax.lax.rsqrt(var + EPS)            # gamma folded into one scale
    shift = beta_ref[...] - mean * scale
    for n in range(N):
        o_ref[n, INPUT_NC:, :] = acc_u[n] * scale + shift        # disjoint slice, lane-dense


def _full_spec(shape):
    n = len(shape)
    return pl.BlockSpec(shape, lambda i: (0,) * n)


@jax.jit
def unet_skip_block_forward(x, w_down, w_up, gamma, beta):
    """x: (N, INPUT_NC, H, W) f32 -> (N, INPUT_NC + OUTER_NC, H, W) f32 (NCHW, like PyTorch)."""
    # Free, contiguous reshape: NCHW is already channels-major with H*W contiguous in memory.
    x_flat = x.reshape(N, INPUT_NC, H * W)
    # Tiny weight reorganization (<= 512 elements): one (co, ci) matrix per conv tap.
    wd_taps = jnp.transpose(w_down, (2, 3, 0, 1)).reshape(16, INNER_NC, INPUT_NC)
    wu_taps = jnp.transpose(w_up, (2, 3, 0, 1)).reshape(9, OUTER_NC, INNER_NC)
    gamma_c = gamma.reshape(OUTER_NC, 1)
    beta_c = beta.reshape(OUTER_NC, 1)

    out_flat = pl.pallas_call(
        _unet_block_kernel,
        out_shape=jax.ShapeDtypeStruct((N, INPUT_NC + OUTER_NC, H * W), jnp.float32),
        grid=(1,),
        in_specs=[
            _full_spec((N, INPUT_NC, H * W)),
            _full_spec((16, INNER_NC, INPUT_NC)),
            _full_spec((9, OUTER_NC, INNER_NC)),
            _full_spec((OUTER_NC, 1)),
            _full_spec((OUTER_NC, 1)),
        ],
        out_specs=_full_spec((N, INPUT_NC + OUTER_NC, H * W)),
        compiler_params=pltpu.CompilerParams(dimension_semantics=("arbitrary",)),
    )(x_flat, wd_taps, wu_taps, gamma_c, beta_c)

    return out_flat.reshape(N, INPUT_NC + OUTER_NC, H, W)        # free reshape back to NCHW


# ---------------- pure-JAX reference (for correctness check) ----------------
def reference(x, w_down, w_up, gamma, beta):
    h = jnp.where(x >= 0.0, x, NEG_SLOPE * x)                    # inplace LeakyReLU(0.2)
    d = jax.lax.conv_general_dilated(h, w_down, (2, 2), ((1, 1), (1, 1)),
                                     dimension_numbers=("NCHW", "OIHW", "NCHW"))
    r = jnp.maximum(d, 0.0)
    u = jnp.repeat(jnp.repeat(r, 2, axis=2), 2, axis=3)
    up = jnp.pad(u, ((0, 0), (0, 0), (1, 1), (1, 1)), mode="edge")
    c = jax.lax.conv_general_dilated(up, w_up, (1, 1), "VALID",
                                     dimension_numbers=("NCHW", "OIHW", "NCHW"))
    mean = jnp.mean(c, axis=(0, 2, 3), keepdims=True)
    var = jnp.mean(jnp.square(c - mean), axis=(0, 2, 3), keepdims=True)
    bn = (c - mean) * jax.lax.rsqrt(var + EPS) * gamma.reshape(1, -1, 1, 1) + beta.reshape(1, -1, 1, 1)
    return jnp.concatenate([h, bn], axis=1)


if __name__ == "__main__":
    key = jax.random.PRNGKey(0)
    kx, kd, ku, kg, kb = jax.random.split(key, 5)

    x = jax.random.normal(kx, (N, INPUT_NC, H, W), dtype=jnp.float32)
    # deterministic parameter init (shapes from the module __init__)
    w_down = 0.05 * jax.random.normal(kd, (INNER_NC, INPUT_NC, 4, 4), dtype=jnp.float32)
    w_up = 0.05 * jax.random.normal(ku, (OUTER_NC, INNER_NC, 3, 3), dtype=jnp.float32)
    gamma = 1.0 + 0.1 * jax.random.normal(kg, (OUTER_NC,), dtype=jnp.float32)
    beta = 0.1 * jax.random.normal(kb, (OUTER_NC,), dtype=jnp.float32)

    out = jax.block_until_ready(unet_skip_block_forward(x, w_down, w_up, gamma, beta))
    ref = jax.block_until_ready(reference(x, w_down, w_up, gamma, beta))

    assert out.shape == (N, INPUT_NC + OUTER_NC, H, W), out.shape
    np.testing.assert_allclose(np.asarray(out), np.asarray(ref), rtol=1e-4, atol=1e-4)

    print("KERNEL_OK")
</pallas_src>

<mosaic_0001>
module attributes {stable_mosaic.version = 11 : i64} {
  func.func @_unet_block_kernel(%arg0: i32, %arg1: memref<2x4x256xf32, #tpu.memory_space<vmem>>, %arg2: memref<16x8x4xf32, #tpu.memory_space<vmem>>, %arg3: memref<9x4x8xf32, #tpu.memory_space<vmem>>, %arg4: memref<4x1xf32, #tpu.memory_space<vmem>>, %arg5: memref<4x1xf32, #tpu.memory_space<vmem>>, %arg6: memref<2x8x256xf32, #tpu.memory_space<vmem>>) attributes {dimension_semantics = [#tpu.dimension_semantics<arbitrary>], iteration_bounds = array<i64: 1>, scalar_prefetch = 0 : i64, scratch_operands = 0 : i64, tpu.core_type = #tpu.core_type<tc>, window_params = [{pipeline_mode = #tpu.pipeline_mode<synchronous>, transform_indices = @transform_0, window_bounds = array<i64: 2, 4, 256>}, {pipeline_mode = #tpu.pipeline_mode<synchronous>, transform_indices = @transform_1, window_bounds = array<i64: 16, 8, 4>}, {pipeline_mode = #tpu.pipeline_mode<synchronous>, transform_indices = @transform_2, window_bounds = array<i64: 9, 4, 8>}, {pipeline_mode = #tpu.pipeline_mode<synchronous>, transform_indices = @transform_3, window_bounds = array<i64: 4, 1>}, {pipeline_mode = #tpu.pipeline_mode<synchronous>, transform_indices = @transform_4, window_bounds = array<i64: 4, 1>}, {pipeline_mode = #tpu.pipeline_mode<synchronous>, transform_indices = @transform_5, window_bounds = array<i64: 2, 8, 256>}]} {
    %c0 = arith.constant 0 : index
    %c0_0 = arith.constant 0 : index
    %c0_1 = arith.constant 0 : index
    %0 = vector.load %arg1[%c0, %c0_0, %c0_1] : memref<2x4x256xf32, #tpu.memory_space<vmem>>, vector<1x4x256xf32>
    %1 = vector.shape_cast %0 : vector<1x4x256xf32> to vector<4x256xf32>
    %cst = arith.constant 0.000000e+00 : f32
    %2 = vector.broadcast %cst : f32 to vector<4x256xf32>
    %3 = arith.cmpf oge, %1, %2 : vector<4x256xf32>
    %cst_2 = arith.constant 2.000000e-01 : f32
    %4 = vector.broadcast %cst_2 : f32 to vector<4x256xf32>
    %5 = arith.mulf %4, %1 : vector<4x256xf32>
    %6 = arith.select %3, %1, %5 : vector<4x256xi1>, vector<4x256xf32>
    %c0_3 = arith.constant 0 : index
    %c0_4 = arith.constant 0 : index
    %c0_5 = arith.constant 0 : index
    %7 = vector.load %arg6[%c0_3, %c0_4, %c0_5] : memref<2x8x256xf32, #tpu.memory_space<vmem>>, vector<1x4x256xf32>
    %8 = vector.shape_cast %7 : vector<1x4x256xf32> to vector<4x256xf32>
    %9 = vector.shape_cast %6 : vector<4x256xf32> to vector<1x4x256xf32>
    tpu.vector_store %arg6[%c0_3, %c0_4, %c0_5], %9 {strides = array<i32>} : memref<2x8x256xf32, #tpu.memory_space<vmem>>, vector<1x4x256xf32>,
    %c1 = arith.constant 1 : index
    %c0_6 = arith.constant 0 : index
    %c0_7 = arith.constant 0 : index
    %10 = vector.load %arg1[%c1, %c0_6, %c0_7] : memref<2x4x256xf32, #tpu.memory_space<vmem>>, vector<1x4x256xf32>
    %11 = vector.shape_cast %10 : vector<1x4x256xf32> to vector<4x256xf32>
    %cst_8 = arith.constant 0.000000e+00 : f32
    %12 = vector.broadcast %cst_8 : f32 to vector<4x256xf32>
    %13 = arith.cmpf oge, %11, %12 : vector<4x256xf32>
    %cst_9 = arith.constant 2.000000e-01 : f32
    %14 = vector.broadcast %cst_9 : f32 to vector<4x256xf32>
    %15 = arith.mulf %14, %11 : vector<4x256xf32>
    %16 = arith.select %13, %11, %15 : vector<4x256xi1>, vector<4x256xf32>
    %c1_10 = arith.constant 1 : index
    %c0_11 = arith.constant 0 : index
    %c0_12 = arith.constant 0 : index
    %17 = vector.load %arg6[%c1_10, %c0_11, %c0_12] : memref<2x8x256xf32, #tpu.memory_space<vmem>>, vector<1x4x256xf32>
    %18 = vector.shape_cast %17 : vector<1x4x256xf32> to vector<4x256xf32>
    %19 = vector.shape_cast %16 : vector<4x256xf32> to vector<1x4x256xf32>
    tpu.vector_store %arg6[%c1_10, %c0_11, %c0_12], %19 {strides = array<i32>} : memref<2x8x256xf32, #tpu.memory_space<vmem>>, vector<1x4x256xf32>,
    %20 = tpu.iota {dimensions = array<i32: 0>} : vector<256x64xi32>
    %21 = tpu.iota {dimensions = array<i32: 1>} : vector<256x64xi32>
    %c3_i32 = arith.constant 3 : i32
    %22 = vector.broadcast %c3_i32 : i32 to vector<256x64xi32>
    %23 = arith.shrsi %21, %22 : vector<256x64xi32>
    %c2_i32 = arith.constant 2 : i32
    %24 = vector.broadcast %c2_i32 : i32 to vector<256x64xi32>
    %25 = arith.muli %24, %23 : vector<256x64xi32>
    %c7_i32 = arith.constant 7 : i32
    %26 = vector.broadcast %c7_i32 : i32 to vector<256x64xi32>
    %27 = arith.andi %21, %26 : vector<256x64xi32>
    %c2_i32_13 = arith.constant 2 : i32
    %28 = vector.broadcast %c2_i32_13 : i32 to vector<256x64xi32>
    %29 = arith.muli %28, %27 : vector<256x64xi32>
    %cst_14 = arith.constant 0.000000e+00 : f32
    %30 = vector.broadcast %cst_14 : f32 to vector<8x64xf32>
    %cst_15 = arith.constant 0.000000e+00 : f32
    %31 = vector.broadcast %cst_15 : f32 to vector<8x64xf32>
    %c-1_i32 = arith.constant -1 : i32
    %32 = vector.broadcast %c-1_i32 : i32 to vector<256x64xi32>
    %33 = arith.addi %25, %32 : vector<256x64xi32>
    %c-1_i32_16 = arith.constant -1 : i32
    %34 = vector.broadcast %c-1_i32_16 : i32 to vector<256x64xi32>
    %35 = arith.addi %29, %34 : vector<256x64xi32>
    %c0_i32 = arith.constant 0 : i32
    %36 = vector.broadcast %c0_i32 : i32 to vector<256x64xi32>
    %37 = arith.cmpi sge, %33, %36 : vector<256x64xi32>
    %c16_i32 = arith.constant 16 : i32
    %38 = vector.broadcast %c16_i32 : i32 to vector<256x64xi32>
    %39 = arith.cmpi slt, %33, %38 : vector<256x64xi32>
    %40 = arith.andi %37, %39 : vector<256x64xi1>
    %c0_i32_17 = arith.constant 0 : i32
    %41 = vector.broadcast %c0_i32_17 : i32 to vector<256x64xi32>
    %42 = arith.cmpi sge, %35, %41 : vector<256x64xi32>
    %43 = arith.andi %40, %42 : vector<256x64xi1>
    %c16_i32_18 = arith.constant 16 : i32
    %44 = vector.broadcast %c16_i32_18 : i32 to vector<256x64xi32>
    %45 = arith.cmpi slt, %35, %44 : vector<256x64xi32>
    %46 = arith.andi %43, %45 : vector<256x64xi1>
    %c16_i32_19 = arith.constant 16 : i32
    %47 = vector.broadcast %c16_i32_19 : i32 to vector<256x64xi32>
    %48 = arith.muli %33, %47 : vector<256x64xi32>
    %49 = arith.addi %48, %35 : vector<256x64xi32>
    %50 = arith.cmpi eq, %20, %49 : vector<256x64xi32>
    %51 = arith.andi %46, %50 : vector<256x64xi1>
    %cst_20 = arith.constant 1.000000e+00 : f32
    %cst_21 = arith.constant 0.000000e+00 : f32
    %52 = vector.broadcast %cst_20 : f32 to vector<256x64xf32>
    %53 = vector.broadcast %cst_21 : f32 to vector<256x64xf32>
    %54 = arith.select %51, %52, %53 : vector<256x64xi1>, vector<256x64xf32>
    %c0_22 = arith.constant 0 : index
    %c0_23 = arith.constant 0 : index
    %c0_24 = arith.constant 0 : index
    %55 = vector.load %arg2[%c0_22, %c0_23, %c0_24] : memref<16x8x4xf32, #tpu.memory_space<vmem>>, vector<1x8x4xf32>
    %56 = vector.shape_cast %55 : vector<1x8x4xf32> to vector<8x4xf32>
    %cst_25 = arith.constant dense<0.000000e+00> : vector<4x64xf32>
    %57 = tpu.matmul %6, %54, %cst_25 {dimension_numbers = #tpu.dot_dimension_numbers<[1], [0], [0], [1], [0, 0, 1, 1], [], []>} : vector<4x256xf32>, vector<256x64xf32>, vector<4x64xf32> -> vector<4x64xf32>
    %cst_26 = arith.constant dense<0.000000e+00> : vector<8x64xf32>
    %58 = tpu.matmul %56, %57, %cst_26 {dimension_numbers = #tpu.dot_dimension_numbers<[1], [0], [0], [1], [0, 0, 1, 1], [], []>} : vector<8x4xf32>, vector<4x64xf32>, vector<8x64xf32> -> vector<8x64xf32>
    %59 = arith.addf %30, %58 : vector<8x64xf32>
    %cst_27 = arith.constant dense<0.000000e+00> : vector<4x64xf32>
    %60 = tpu.matmul %16, %54, %cst_27 {dimension_numbers = #tpu.dot_dimension_numbers<[1], [0], [0], [1], [0, 0, 1, 1], [], []>} : vector<4x256xf32>, vector<256x64xf32>, vector<4x64xf32> -> vector<4x64xf32>
    %cst_28 = arith.constant dense<0.000000e+00> : vector<8x64xf32>
    %61 = tpu.matmul %56, %60, %cst_28 {dimension_numbers = #tpu.dot_dimension_numbers<[1], [0], [0], [1], [0, 0, 1, 1], [], []>} : vector<8x4xf32>, vector<4x64xf32>, vector<8x64xf32> -> vector<8x64xf32>
    %62 = arith.addf %31, %61 : vector<8x64xf32>
    %c-1_i32_29 = arith.constant -1 : i32
    %63 = vector.broadcast %c-1_i32_29 : i32 to vector<256x64xi32>
    %64 = arith.addi %25, %63 : vector<256x64xi32>
    %c0_i32_30 = arith.constant 0 : i32
    %65 = vector.broadcast %c0_i32_30 : i32 to vector<256x64xi32>
    %66 = arith.addi %29, %65 : vector<256x64xi32>
    %c0_i32_31 = arith.constant 0 : i32
    %67 = vector.broadcast %c0_i32_31 : i32 to vector<256x64xi32>
    %68 = arith.cmpi sge, %64, %67 : vector<256x64xi32>
    %c16_i32_32 = arith.constant 16 : i32
    %69 = vector.broadcast %c16_i32_32 : i32 to vector<256x64xi32>
    %70 = arith.cmpi slt, %64, %69 : vector<256x64xi32>
    %71 = arith.andi %68, %70 : vector<256x64xi1>
    %c0_i32_33 = arith.constant 0 : i32
    %72 = vector.broadcast %c0_i32_33 : i32 to vector<256x64xi32>
    %73 = arith.cmpi sge, %66, %72 : vector<256x64xi32>
    %74 = arith.andi %71, %73 : vector<256x64xi1>
    %c16_i32_34 = arith.constant 16 : i32
    %75 = vector.broadcast %c16_i32_34 : i32 to vector<256x64xi32>
    %76 = arith.cmpi slt, %66, %75 : vector<256x64xi32>
    %77 = arith.andi %74, %76 : vector<256x64xi1>
    %c16_i32_35 = arith.constant 16 : i32
    %78 = vector.broadcast %c16_i32_35 : i32 to vector<256x64xi32>
    %79 = arith.muli %64, %78 : vector<256x64xi32>
    %80 = arith.addi %79, %66 : vector<256x64xi32>
    %81 = arith.cmpi eq, %20, %80 : vector<256x64xi32>
    %82 = arith.andi %77, %81 : vector<256x64xi1>
    %cst_36 = arith.constant 1.000000e+00 : f32
    %cst_37 = arith.constant 0.000000e+00 : f32
    %83 = vector.broadcast %cst_36 : f32 to vector<256x64xf32>
    %84 = vector.broadcast %cst_37 : f32 to vector<256x64xf32>
    %85 = arith.select %82, %83, %84 : vector<256x64xi1>, vector<256x64xf32>
    %c1_38 = arith.constant 1 : index
    %c0_39 = arith.constant 0 : index
    %c0_40 = arith.constant 0 : index
    %86 = vector.load %arg2[%c1_38, %c0_39, %c0_40] : memref<16x8x4xf32, #tpu.memory_space<vmem>>, vector<1x8x4xf32>
    %87 = vector.shape_cast %86 : vector<1x8x4xf32> to vector<8x4xf32>
    %cst_41 = arith.constant dense<0.000000e+00> : vector<4x64xf32>
    %88 = tpu.matmul %6, %85, %cst_41 {dimension_numbers = #tpu.dot_dimension_numbers<[1], [0], [0], [1], [0, 0, 1, 1], [], []>} : vector<4x256xf32>, vector<256x64xf32>, vector<4x64xf32> -> vector<4x64xf32>
    %cst_42 = arith.constant dense<0.000000e+00> : vector<8x64xf32>
    %89 = tpu.matmul %87, %88, %cst_42 {dimension_numbers = #tpu.dot_dimension_numbers<[1], [0], [0], [1], [0, 0, 1, 1], [], []>} : vector<8x4xf32>, vector<4x64xf32>, vector<8x64xf32> -> vector<8x64xf32>
    %90 = arith.addf %59, %89 : vector<8x64xf32>
    %cst_43 = arith.constant dense<0.000000e+00> : vector<4x64xf32>
    %91 = tpu.matmul %16, %85, %cst_43 {dimension_numbers = #tpu.dot_dimension_numbers<[1], [0], [0], [1], [0, 0, 1, 1], [], []>} : vector<4x256xf32>, vector<256x64xf32>, vector<4x64xf32> -> vector<4x64xf32>
    %cst_44 = arith.constant dense<0.000000e+00> : vector<8x64xf32>
    %92 = tpu.matmul %87, %91, %cst_44 {dimension_numbers = #tpu.dot_dimension_numbers<[1], [0], [0], [1], [0, 0, 1, 1], [], []>} : vector<8x4xf32>, vector<4x64xf32>, vector<8x64xf32> -> vector<8x64xf32>
    %93 = arith.addf %62, %92 : vector<8x64xf32>
    %c-1_i32_45 = arith.constant -1 : i32
    %94 = vector.broadcast %c-1_i32_45 : i32 to vector<256x64xi32>
    %95 = arith.addi %25, %94 : vector<256x64xi32>
    %c1_i32 = arith.constant 1 : i32
    %96 = vector.broadcast %c1_i32 : i32 to vector<256x64xi32>
    %97 = arith.addi %29, %96 : vector<256x64xi32>
    %c0_i32_46 = arith.constant 0 : i32
    %98 = vector.broadcast %c0_i32_46 : i32 to vector<256x64xi32>
    %99 = arith.cmpi sge, %95, %98 : vector<256x64xi32>
    %c16_i32_47 = arith.constant 16 : i32
    %100 = vector.broadcast %c16_i32_47 : i32 to vector<256x64xi32>
    %101 = arith.cmpi slt, %95, %100 : vector<256x64xi32>
    %102 = arith.andi %99, %101 : vector<256x64xi1>
    %c0_i32_48 = arith.constant 0 : i32
    %103 = vector.broadcast %c0_i32_48 : i32 to vector<256x64xi32>
    %104 = arith.cmpi sge, %97, %103 : vector<256x64xi32>
    %105 = arith.andi %102, %104 : vector<256x64xi1>
    %c16_i32_49 = arith.constant 16 : i32
    %106 = vector.broadcast %c16_i32_49 : i32 to vector<256x64xi32>
    %107 = arith.cmpi slt, %97, %106 : vector<256x64xi32>
    %108 = arith.andi %105, %107 : vector<256x64xi1>
    %c16_i32_50 = arith.constant 16 : i32
    %109 = vector.broadcast %c16_i32_50 : i32 to vector<256x64xi32>
    %110 = arith.muli %95, %109 : vector<256x64xi32>
    %111 = arith.addi %110, %97 : vector<256x64xi32>
    %112 = arith.cmpi eq, %20, %111 : vector<256x64xi32>
    %113 = arith.andi %108, %112 : vector<256x64xi1>
    %cst_51 = arith.constant 1.000000e+00 : f32
    %cst_52 = arith.constant 0.000000e+00 : f32
    %114 = vector.broadcast %cst_51 : f32 to vector<256x64xf32>
    %115 = vector.broadcast %cst_52 : f32 to vector<256x64xf32>
    %116 = arith.select %113, %114, %115 : vector<256x64xi1>, vector<256x64xf32>
    %c2 = arith.constant 2 : index
    %c0_53 = arith.constant 0 : index
    %c0_54 = arith.constant 0 : index
    %117 = vector.load %arg2[%c2, %c0_53, %c0_54] : memref<16x8x4xf32, #tpu.memory_space<vmem>>, vector<1x8x4xf32>
    %118 = vector.shape_cast %117 : vector<1x8x4xf32> to vector<8x4xf32>
    %cst_55 = arith.constant dense<0.000000e+00> : vector<4x64xf32>
    %119 = tpu.matmul %6, %116, %cst_55 {dimension_numbers = #tpu.dot_dimension_numbers<[1], [0], [0], [1], [0, 0, 1, 1], [], []>} : vector<4x256xf32>, vector<256x64xf32>, vector<4x64xf32> -> vector<4x64xf32>
    %cst_56 = arith.constant dense<0.000000e+00> : vector<8x64xf32>
    %120 = tpu.matmul %118, %119, %cst_56 {dimension_numbers = #tpu.dot_dimension_numbers<[1], [0], [0], [1], [0, 0, 1, 1], [], []>} : vector<8x4xf32>, vector<4x64xf32>, vector<8x64xf32> -> vector<8x64xf32>
    %121 = arith.addf %90, %120 : vector<8x64xf32>
    %cst_57 = arith.constant dense<0.000000e+00> : vector<4x64xf32>
    %122 = tpu.matmul %16, %116, %cst_57 {dimension_numbers = #tpu.dot_dimension_numbers<[1], [0], [0], [1], [0, 0, 1, 1], [], []>} : vector<4x256xf32>, vector<256x64xf32>, vector<4x64xf32> -> vector<4x64xf32>
    %cst_58 = arith.constant dense<0.000000e+00> : vector<8x64xf32>
    %123 = tpu.matmul %118, %122, %cst_58 {dimension_numbers = #tpu.dot_dimension_numbers<[1], [0], [0], [1], [0, 0, 1, 1], [], []>} : vector<8x4xf32>, vector<4x64xf32>, vector<8x64xf32> -> vector<8x64xf32>
    %124 = arith.addf %93, %123 : vector<8x64xf32>
    %c-1_i32_59 = arith.constant -1 : i32
    %125 = vector.broadcast %c-1_i32_59 : i32 to vector<256x64xi32>
    %126 = arith.addi %25, %125 : vector<256x64xi32>
    %c2_i32_60 = arith.constant 2 : i32
    %127 = vector.broadcast %c2_i32_60 : i32 to vector<256x64xi32>
    %128 = arith.addi %29, %127 : vector<256x64xi32>
    %c0_i32_61 = arith.constant 0 : i32
    %129 = vector.broadcast %c0_i32_61 : i32 to vector<256x64xi32>
    %130 = arith.cmpi sge, %126, %129 : vector<256x64xi32>
    %c16_i32_62 = arith.constant 16 : i32
    %131 = vector.broadcast %c16_i32_62 : i32 to vector<256x64xi32>
    %132 = arith.cmpi slt, %126, %131 : vector<256x64xi32>
    %133 = arith.andi %130, %132 : vector<256x64xi1>
    %c0_i32_63 = arith.constant 0 : i32
    %134 = vector.broadcast %c0_i32_63 : i32 to vector<256x64xi32>
    %135 = arith.cmpi sge, %128, %134 : vector<256x64xi32>
    %136 = arith.andi %133, %135 : vector<256x64xi1>
    %c16_i32_64 = arith.constant 16 : i32
    %137 = vector.broadcast %c16_i32_64 : i32 to vector<256x64xi32>
    %138 = arith.cmpi slt, %128, %137 : vector<256x64xi32>
    %139 = arith.andi %136, %138 : vector<256x64xi1>
    %c16_i32_65 = arith.constant 16 : i32
    %140 = vector.broadcast %c16_i32_65 : i32 to vector<256x64xi32>
    %141 = arith.muli %126, %140 : vector<256x64xi32>
    %142 = arith.addi %141, %128 : vector<256x64xi32>
    %143 = arith.cmpi eq, %20, %142 : vector<256x64xi32>
    %144 = arith.andi %139, %143 : vector<256x64xi1>
    %cst_66 = arith.constant 1.000000e+00 : f32
    %cst_67 = arith.constant 0.000000e+00 : f32
    %145 = vector.broadcast %cst_66 : f32 to vector<256x64xf32>
    %146 = vector.broadcast %cst_67 : f32 to vector<256x64xf32>
    %147 = arith.select %144, %145, %146 : vector<256x64xi1>, vector<256x64xf32>
    %c3 = arith.constant 3 : index
    %c0_68 = arith.constant 0 : index
    %c0_69 = arith.constant 0 : index
    %148 = vector.load %arg2[%c3, %c0_68, %c0_69] : memref<16x8x4xf32, #tpu.memory_space<vmem>>, vector<1x8x4xf32>
    %149 = vector.shape_cast %148 : vector<1x8x4xf32> to vector<8x4xf32>
    %cst_70 = arith.constant dense<0.000000e+00> : vector<4x64xf32>
    %150 = tpu.matmul %6, %147, %cst_70 {dimension_numbers = #tpu.dot_dimension_numbers<[1], [0], [0], [1], [0, 0, 1, 1], [], []>} : vector<4x256xf32>, vector<256x64xf32>, vector<4x64xf32> -> vector<4x64xf32>
    %cst_71 = arith.constant dense<0.000000e+00> : vector<8x64xf32>
    %151 = tpu.matmul %149, %150, %cst_71 {dimension_numbers = #tpu.dot_dimension_numbers<[1], [0], [0], [1], [0, 0, 1, 1], [], []>} : vector<8x4xf32>, vector<4x64xf32>, vector<8x64xf32> -> vector<8x64xf32>
    %152 = arith.addf %121, %151 : vector<8x64xf32>
    %cst_72 = arith.constant dense<0.000000e+00> : vector<4x64xf32>
    %153 = tpu.matmul %16, %147, %cst_72 {dimension_numbers = #tpu.dot_dimension_numbers<[1], [0], [0], [1], [0, 0, 1, 1], [], []>} : vector<4x256xf32>, vector<256x64xf32>, vector<4x64xf32> -> vector<4x64xf32>
    %cst_73 = arith.constant dense<0.000000e+00> : vector<8x64xf32>
    %154 = tpu.matmul %149, %153, %cst_73 {dimension_numbers = #tpu.dot_dimension_numbers<[1], [0], [0], [1], [0, 0, 1, 1], [], []>} : vector<8x4xf32>, vector<4x64xf32>, vector<8x64xf32> -> vector<8x64xf32>
    %155 = arith.addf %124, %154 : vector<8x64xf32>
    %c0_i32_74 = arith.constant 0 : i32
    %156 = vector.broadcast %c0_i32_74 : i32 to vector<256x64xi32>
    %157 = arith.addi %25, %156 : vector<256x64xi32>
    %c-1_i32_75 = arith.constant -1 : i32
    %158 = vector.broadcast %c-1_i32_75 : i32 to vector<256x64xi32>
    %159 = arith.addi %29, %158 : vector<256x64xi32>
    %c0_i32_76 = arith.constant 0 : i32
    %160 = vector.broadcast %c0_i32_76 : i32 to vector<256x64xi32>
    %161 = arith.cmpi sge, %157, %160 : vector<256x64xi32>
    %c16_i32_77 = arith.constant 16 : i32
    %162 = vector.broadcast %c16_i32_77 : i32 to vector<256x64xi32>
    %163 = arith.cmpi slt, %157, %162 : vector<256x64xi32>
    %164 = arith.andi %161, %163 : vector<256x64xi1>
    %c0_i32_78 = arith.constant 0 : i32
    %165 = vector.broadcast %c0_i32_78 : i32 to vector<256x64xi32>
    %166 = arith.cmpi sge, %159, %165 : vector<256x64xi32>
    %167 = arith.andi %164, %166 : vector<256x64xi1>
    %c16_i32_79 = arith.constant 16 : i32
    %168 = vector.broadcast %c16_i32_79 : i32 to vector<256x64xi32>
    %169 = arith.cmpi slt, %159, %168 : vector<256x64xi32>
    %170 = arith.andi %167, %169 : vector<256x64xi1>
    %c16_i32_80 = arith.constant 16 : i32
    %171 = vector.broadcast %c16_i32_80 : i32 to vector<256x64xi32>
    %172 = arith.muli %157, %171 : vector<256x64xi32>
    %173 = arith.addi %172, %159 : vector<256x64xi32>
    %174 = arith.cmpi eq, %20, %173 : vector<256x64xi32>
    %175 = arith.andi %170, %174 : vector<256x64xi1>
    %cst_81 = arith.constant 1.000000e+00 : f32
    %cst_82 = arith.constant 0.000000e+00 : f32
    %176 = vector.broadcast %cst_81 : f32 to vector<256x64xf32>
    %177 = vector.broadcast %cst_82 : f32 to vector<256x64xf32>
    %178 = arith.select %175, %176, %177 : vector<256x64xi1>, vector<256x64xf32>
    %c4 = arith.constant 4 : index
    %c0_83 = arith.constant 0 : index
    %c0_84 = arith.constant 0 : index
    %179 = vector.load %arg2[%c4, %c0_83, %c0_84] : memref<16x8x4xf32, #tpu.memory_space<vmem>>, vector<1x8x4xf32>
    %180 = vector.shape_cast %179 : vector<1x8x4xf32> to vector<8x4xf32>
    %cst_85 = arith.constant dense<0.000000e+00> : vector<4x64xf32>
    %181 = tpu.matmul %6, %178, %cst_85 {dimension_numbers = #tpu.dot_dimension_numbers<[1], [0], [0], [1], [0, 0, 1, 1], [], []>} : vector<4x256xf32>, vector<256x64xf32>, vector<4x64xf32> -> vector<4x64xf32>
    %cst_86 = arith.constant dense<0.000000e+00> : vector<8x64xf32>
    %182 = tpu.matmul %180, %181, %cst_86 {dimension_numbers = #tpu.dot_dimension_numbers<[1], [0], [0], [1], [0, 0, 1, 1], [], []>} : vector<8x4xf32>, vector<4x64xf32>, vector<8x64xf32> -> vector<8x64xf32>
    %183 = arith.addf %152, %182 : vector<8x64xf32>
    %cst_87 = arith.constant dense<0.000000e+00> : vector<4x64xf32>
    %184 = tpu.matmul %16, %178, %cst_87 {dimension_numbers = #tpu.dot_dimension_numbers<[1], [0], [0], [1], [0, 0, 1, 1], [], []>} : vector<4x256xf32>, vector<256x64xf32>, vector<4x64xf32> -> vector<4x64xf32>
    %cst_88 = arith.constant dense<0.000000e+00> : vector<8x64xf32>
    %185 = tpu.matmul %180, %184, %cst_88 {dimension_numbers = #tpu.dot_dimension_numbers<[1], [0], [0], [1], [0, 0, 1, 1], [], []>} : vector<8x4xf32>, vector<4x64xf32>, vector<8x64xf32> -> vector<8x64xf32>
    %186 = arith.addf %155, %185 : vector<8x64xf32>
    %c0_i32_89 = arith.constant 0 : i32
    %187 = vector.broadcast %c0_i32_89 : i32 to vector<256x64xi32>
    %188 = arith.addi %25, %187 : vector<256x64xi32>
    %c0_i32_90 = arith.constant 0 : i32
    %189 = vector.broadcast %c0_i32_90 : i32 to vector<256x64xi32>
    %190 = arith.addi %29, %189 : vector<256x64xi32>
    %c0_i32_91 = arith.constant 0 : i32
    %191 = vector.broadcast %c0_i32_91 : i32 to vector<256x64xi32>
    %192 = arith.cmpi sge, %188, %191 : vector<256x64xi32>
    %c16_i32_92 = arith.constant 16 : i32
    %193 = vector.broadcast %c16_i32_92 : i32 to vector<256x64xi32>
    %194 = arith.cmpi slt, %188, %193 : vector<256x64xi32>
    %195 = arith.andi %192, %194 : vector<256x64xi1>
    %c0_i32_93 = arith.constant 0 : i32
    %196 = vector.broadcast %c0_i32_93 : i32 to vector<256x64xi32>
    %197 = arith.cmpi sge, %190, %196 : vector<256x64xi32>
    %198 = arith.andi %195, %197 : vector<256x64xi1>
    %c16_i32_94 = arith.constant 16 : i32
    %199 = vector.broadcast %c16_i32_94 : i32 to vector<256x64xi32>
    %200 = arith.cmpi slt, %190, %199 : vector<256x64xi32>
    %201 = arith.andi %198, %200 : vector<256x64xi1>
    %c16_i32_95 = arith.constant 16 : i32
    %202 = vector.broadcast %c16_i32_95 : i32 to vector<256x64xi32>
    %203 = arith.muli %188, %202 : vector<256x64xi32>
    %204 = arith.addi %203, %190 : vector<256x64xi32>
    %205 = arith.cmpi eq, %20, %204 : vector<256x64xi32>
    %206 = arith.andi %201, %205 : vector<256x64xi1>
    %cst_96 = arith.constant 1.000000e+00 : f32
    %cst_97 = arith.constant 0.000000e+00 : f32
    %207 = vector.broadcast %cst_96 : f32 to vector<256x64xf32>
    %208 = vector.broadcast %cst_97 : f32 to vector<256x64xf32>
    %209 = arith.select %206, %207, %208 : vector<256x64xi1>, vector<256x64xf32>
    %c5 = arith.constant 5 : index
    %c0_98 = arith.constant 0 : index
    %c0_99 = arith.constant 0 : index
    %210 = vector.load %arg2[%c5, %c0_98, %c0_99] : memref<16x8x4xf32, #tpu.memory_space<vmem>>, vector<1x8x4xf32>
    %211 = vector.shape_cast %210 : vector<1x8x4xf32> to vector<8x4xf32>
    %cst_100 = arith.constant dense<0.000000e+00> : vector<4x64xf32>
    %212 = tpu.matmul %6, %209, %cst_100 {dimension_numbers = #tpu.dot_dimension_numbers<[1], [0], [0], [1], [0, 0, 1, 1], [], []>} : vector<4x256xf32>, vector<256x64xf32>, vector<4x64xf32> -> vector<4x64xf32>
    %cst_101 = arith.constant dense<0.000000e+00> : vector<8x64xf32>
    %213 = tpu.matmul %211, %212, %cst_101 {dimension_numbers = #tpu.dot_dimension_numbers<[1], [0], [0], [1], [0, 0, 1, 1], [], []>} : vector<8x4xf32>, vector<4x64xf32>, vector<8x64xf32> -> vector<8x64xf32>
    %214 = arith.addf %183, %213 : vector<8x64xf32>
    %cst_102 = arith.constant dense<0.000000e+00> : vector<4x64xf32>
    %215 = tpu.matmul %16, %209, %cst_102 {dimension_numbers = #tpu.dot_dimension_numbers<[1], [0], [0], [1], [0, 0, 1, 1], [], []>} : vector<4x256xf32>, vector<256x64xf32>, vector<4x64xf32> -> vector<4x64xf32>
    %cst_103 = arith.constant dense<0.000000e+00> : vector<8x64xf32>
    %216 = tpu.matmul %211, %215, %cst_103 {dimension_numbers = #tpu.dot_dimension_numbers<[1], [0], [0], [1], [0, 0, 1, 1], [], []>} : vector<8x4xf32>, vector<4x64xf32>, vector<8x64xf32> -> vector<8x64xf32>
    %217 = arith.addf %186, %216 : vector<8x64xf32>
    %c0_i32_104 = arith.constant 0 : i32
    %218 = vector.broadcast %c0_i32_104 : i32 to vector<256x64xi32>
    %219 = arith.addi %25, %218 : vector<256x64xi32>
    %c1_i32_105 = arith.constant 1 : i32
    %220 = vector.broadcast %c1_i32_105 : i32 to vector<256x64xi32>
    %221 = arith.addi %29, %220 : vector<256x64xi32>
    %c0_i32_106 = arith.constant 0 : i32
    %222 = vector.broadcast %c0_i32_106 : i32 to vector<256x64xi32>
    %223 = arith.cmpi sge, %219, %222 : vector<256x64xi32>
    %c16_i32_107 = arith.constant 16 : i32
    %224 = vector.broadcast %c16_i32_107 : i32 to vector<256x64xi32>
    %225 = arith.cmpi slt, %219, %224 : vector<256x64xi32>
    %226 = arith.andi %223, %225 : vector<256x64xi1>
    %c0_i32_108 = arith.constant 0 : i32
    %227 = vector.broadcast %c0_i32_108 : i32 to vector<256x64xi32>
    %228 = arith.cmpi sge, %221, %227 : vector<256x64xi32>
    %229 = arith.andi %226, %228 : vector<256x64xi1>
    %c16_i32_109 = arith.constant 16 : i32
    %230 = vector.broadcast %c16_i32_109 : i32 to vector<256x64xi32>
    %231 = arith.cmpi slt, %221, %230 : vector<256x64xi32>
    %232 = arith.andi %229, %231 : vector<256x64xi1>
    %c16_i32_110 = arith.constant 16 : i32
    %233 = vector.broadcast %c16_i32_110 : i32 to vector<256x64xi32>
    %234 = arith.muli %219, %233 : vector<256x64xi32>
    %235 = arith.addi %234, %221 : vector<256x64xi32>
    %236 = arith.cmpi eq, %20, %235 : vector<256x64xi32>
    %237 = arith.andi %232, %236 : vector<256x64xi1>
    %cst_111 = arith.constant 1.000000e+00 : f32
    %cst_112 = arith.constant 0.000000e+00 : f32
    %238 = vector.broadcast %cst_111 : f32 to vector<256x64xf32>
    %239 = vector.broadcast %cst_112 : f32 to vector<256x64xf32>
    %240 = arith.select %237, %238, %239 : vector<256x64xi1>, vector<256x64xf32>
    %c6 = arith.constant 6 : index
    %c0_113 = arith.constant 0 : index
    %c0_114 = arith.constant 0 : index
    %241 = vector.load %arg2[%c6, %c0_113, %c0_114] : memref<16x8x4xf32, #tpu.memory_space<vmem>>, vector<1x8x4xf32>
    %242 = vector.shape_cast %241 : vector<1x8x4xf32> to vector<8x4xf32>
    %cst_115 = arith.constant dense<0.000000e+00> : vector<4x64xf32>
    %243 = tpu.matmul %6, %240, %cst_115 {dimension_numbers = #tpu.dot_dimension_numbers<[1], [0], [0], [1], [0, 0, 1, 1], [], []>} : vector<4x256xf32>, vector<256x64xf32>, vector<4x64xf32> -> vector<4x64xf32>
    %cst_116 = arith.constant dense<0.000000e+00> : vector<8x64xf32>
    %244 = tpu.matmul %242, %243, %cst_116 {dimension_numbers = #tpu.dot_dimension_numbers<[1], [0], [0], [1], [0, 0, 1, 1], [], []>} : vector<8x4xf32>, vector<4x64xf32>, vector<8x64xf32> -> vector<8x64xf32>
    %245 = arith.addf %214, %244 : vector<8x64xf32>
    %cst_117 = arith.constant dense<0.000000e+00> : vector<4x64xf32>
    %246 = tpu.matmul %16, %240, %cst_117 {dimension_numbers = #tpu.dot_dimension_numbers<[1], [0], [0], [1], [0, 0, 1, 1], [], []>} : vector<4x256xf32>, vector<256x64xf32>, vector<4x64xf32> -> vector<4x64xf32>
    %cst_118 = arith.constant dense<0.000000e+00> : vector<8x64xf32>
    %247 = tpu.matmul %242, %246, %cst_118 {dimension_numbers = #tpu.dot_dimension_numbers<[1], [0], [0], [1], [0, 0, 1, 1], [], []>} : vector<8x4xf32>, vector<4x64xf32>, vector<8x64xf32> -> vector<8x64xf32>
    %248 = arith.addf %217, %247 : vector<8x64xf32>
    %c0_i32_119 = arith.constant 0 : i32
    %249 = vector.broadcast %c0_i32_119 : i32 to vector<256x64xi32>
    %250 = arith.addi %25, %249 : vector<256x64xi32>
    %c2_i32_120 = arith.constant 2 : i32
    %251 = vector.broadcast %c2_i32_120 : i32 to vector<256x64xi32>
    %252 = arith.addi %29, %251 : vector<256x64xi32>
    %c0_i32_121 = arith.constant 0 : i32
    %253 = vector.broadcast %c0_i32_121 : i32 to vector<256x64xi32>
    %254 = arith.cmpi sge, %250, %253 : vector<256x64xi32>
    %c16_i32_122 = arith.constant 16 : i32
    %255 = vector.broadcast %c16_i32_122 : i32 to vector<256x64xi32>
    %256 = arith.cmpi slt, %250, %255 : vector<256x64xi32>
    %257 = arith.andi %254, %256 : vector<256x64xi1>
    %c0_i32_123 = arith.constant 0 : i32
    %258 = vector.broadcast %c0_i32_123 : i32 to vector<256x64xi32>
    %259 = arith.cmpi sge, %252, %258 : vector<256x64xi32>
    %260 = arith.andi %257, %259 : vector<256x64xi1>
    %c16_i32_124 = arith.constant 16 : i32
    %261 = vector.broadcast %c16_i32_124 : i32 to vector<256x64xi32>
    %262 = arith.cmpi slt, %252, %261 : vector<256x64xi32>
    %263 = arith.andi %260, %262 : vector<256x64xi1>
    %c16_i32_125 = arith.constant 16 : i32
    %264 = vector.broadcast %c16_i32_125 : i32 to vector<256x64xi32>
    %265 = arith.muli %250, %264 : vector<256x64xi32>
    %266 = arith.addi %265, %252 : vector<256x64xi32>
    %267 = arith.cmpi eq, %20, %266 : vector<256x64xi32>
    %268 = arith.andi %263, %267 : vector<256x64xi1>
    %cst_126 = arith.constant 1.000000e+00 : f32
    %cst_127 = arith.constant 0.000000e+00 : f32
    %269 = vector.broadcast %cst_126 : f32 to vector<256x64xf32>
    %270 = vector.broadcast %cst_127 : f32 to vector<256x64xf32>
    %271 = arith.select %268, %269, %270 : vector<256x64xi1>, vector<256x64xf32>
    %c7 = arith.constant 7 : index
    %c0_128 = arith.constant 0 : index
    %c0_129 = arith.constant 0 : index
    %272 = vector.load %arg2[%c7, %c0_128, %c0_129] : memref<16x8x4xf32, #tpu.memory_space<vmem>>, vector<1x8x4xf32>
    %273 = vector.shape_cast %272 : vector<1x8x4xf32> to vector<8x4xf32>
    %cst_130 = arith.constant dense<0.000000e+00> : vector<4x64xf32>
    %274 = tpu.matmul %6, %271, %cst_130 {dimension_numbers = #tpu.dot_dimension_numbers<[1], [0], [0], [1], [0, 0, 1, 1], [], []>} : vector<4x256xf32>, vector<256x64xf32>, vector<4x64xf32> -> vector<4x64xf32>
    %cst_131 = arith.constant dense<0.000000e+00> : vector<8x64xf32>
    %275 = tpu.matmul %273, %274, %cst_131 {dimension_numbers = #tpu.dot_dimension_numbers<[1], [0], [0], [1], [0, 0, 1, 1], [], []>} : vector<8x4xf32>, vector<4x64xf32>, vector<8x64xf32> -> vector<8x64xf32>
    %276 = arith.addf %245, %275 : vector<8x64xf32>
    %cst_132 = arith.constant dense<0.000000e+00> : vector<4x64xf32>
    %277 = tpu.matmul %16, %271, %cst_132 {dimension_numbers = #tpu.dot_dimension_numbers<[1], [0], [0], [1], [0, 0, 1, 1], [], []>} : vector<4x256xf32>, vector<256x64xf32>, vector<4x64xf32> -> vector<4x64xf32>
    %cst_133 = arith.constant dense<0.000000e+00> : vector<8x64xf32>
    %278 = tpu.matmul %273, %277, %cst_133 {dimension_numbers = #tpu.dot_dimension_numbers<[1], [0], [0], [1], [0, 0, 1, 1], [], []>} : vector<8x4xf32>, vector<4x64xf32>, vector<8x64xf32> -> vector<8x64xf32>
    %279 = arith.addf %248, %278 : vector<8x64xf32>
    %c1_i32_134 = arith.constant 1 : i32
    %280 = vector.broadcast %c1_i32_134 : i32 to vector<256x64xi32>
    %281 = arith.addi %25, %280 : vector<256x64xi32>
    %c-1_i32_135 = arith.constant -1 : i32
    %282 = vector.broadcast %c-1_i32_135 : i32 to vector<256x64xi32>
    %283 = arith.addi %29, %282 : vector<256x64xi32>
    %c0_i32_136 = arith.constant 0 : i32
    %284 = vector.broadcast %c0_i32_136 : i32 to vector<256x64xi32>
    %285 = arith.cmpi sge, %281, %284 : vector<256x64xi32>
    %c16_i32_137 = arith.constant 16 : i32
    %286 = vector.broadcast %c16_i32_137 : i32 to vector<256x64xi32>
    %287 = arith.cmpi slt, %281, %286 : vector<256x64xi32>
    %288 = arith.andi %285, %287 : vector<256x64xi1>
    %c0_i32_138 = arith.constant 0 : i32
    %289 = vector.broadcast %c0_i32_138 : i32 to vector<256x64xi32>
    %290 = arith.cmpi sge, %283, %289 : vector<256x64xi32>
    %291 = arith.andi %288, %290 : vector<256x64xi1>
    %c16_i32_139 = arith.constant 16 : i32
    %292 = vector.broadcast %c16_i32_139 : i32 to vector<256x64xi32>
    %293 = arith.cmpi slt, %283, %292 : vector<256x64xi32>
    %294 = arith.andi %291, %293 : vector<256x64xi1>
    %c16_i32_140 = arith.constant 16 : i32
    %295 = vector.broadcast %c16_i32_140 : i32 to vector<256x64xi32>
    %296 = arith.muli %281, %295 : vector<256x64xi32>
    %297 = arith.addi %296, %283 : vector<256x64xi32>
    %298 = arith.cmpi eq, %20, %297 : vector<256x64xi32>
    %299 = arith.andi %294, %298 : vector<256x64xi1>
    %cst_141 = arith.constant 1.000000e+00 : f32
    %cst_142 = arith.constant 0.000000e+00 : f32
    %300 = vector.broadcast %cst_141 : f32 to vector<256x64xf32>
    %301 = vector.broadcast %cst_142 : f32 to vector<256x64xf32>
    %302 = arith.select %299, %300, %301 : vector<256x64xi1>, vector<256x64xf32>
    %c8 = arith.constant 8 : index
    %c0_143 = arith.constant 0 : index
    %c0_144 = arith.constant 0 : index
    %303 = vector.load %arg2[%c8, %c0_143, %c0_144] : memref<16x8x4xf32, #tpu.memory_space<vmem>>, vector<1x8x4xf32>
    %304 = vector.shape_cast %303 : vector<1x8x4xf32> to vector<8x4xf32>
    %cst_145 = arith.constant dense<0.000000e+00> : vector<4x64xf32>
    %305 = tpu.matmul %6, %302, %cst_145 {dimension_numbers = #tpu.dot_dimension_numbers<[1], [0], [0], [1], [0, 0, 1, 1], [], []>} : vector<4x256xf32>, vector<256x64xf32>, vector<4x64xf32> -> vector<4x64xf32>
    %cst_146 = arith.constant dense<0.000000e+00> : vector<8x64xf32>
    %306 = tpu.matmul %304, %305, %cst_146 {dimension_numbers = #tpu.dot_dimension_numbers<[1], [0], [0], [1], [0, 0, 1, 1], [], []>} : vector<8x4xf32>, vector<4x64xf32>, vector<8x64xf32> -> vector<8x64xf32>
    %307 = arith.addf %276, %306 : vector<8x64xf32>
    %cst_147 = arith.constant dense<0.000000e+00> : vector<4x64xf32>
    %308 = tpu.matmul %16, %302, %cst_147 {dimension_numbers = #tpu.dot_dimension_numbers<[1], [0], [0], [1], [0, 0, 1, 1], [], []>} : vector<4x256xf32>, vector<256x64xf32>, vector<4x64xf32> -> vector<4x64xf32>
    %cst_148 = arith.constant dense<0.000000e+00> : vector<8x64xf32>
    %309 = tpu.matmul %304, %308, %cst_148 {dimension_numbers = #tpu.dot_dimension_numbers<[1], [0], [0], [1], [0, 0, 1, 1], [], []>} : vector<8x4xf32>, vector<4x64xf32>, vector<8x64xf32> -> vector<8x64xf32>
    %310 = arith.addf %279, %309 : vector<8x64xf32>
    %c1_i32_149 = arith.constant 1 : i32
    %311 = vector.broadcast %c1_i32_149 : i32 to vector<256x64xi32>
    %312 = arith.addi %25, %311 : vector<256x64xi32>
    %c0_i32_150 = arith.constant 0 : i32
    %313 = vector.broadcast %c0_i32_150 : i32 to vector<256x64xi32>
    %314 = arith.addi %29, %313 : vector<256x64xi32>
    %c0_i32_151 = arith.constant 0 : i32
    %315 = vector.broadcast %c0_i32_151 : i32 to vector<256x64xi32>
    %316 = arith.cmpi sge, %312, %315 : vector<256x64xi32>
    %c16_i32_152 = arith.constant 16 : i32
    %317 = vector.broadcast %c16_i32_152 : i32 to vector<256x64xi32>
    %318 = arith.cmpi slt, %312, %317 : vector<256x64xi32>
    %319 = arith.andi %316, %318 : vector<256x64xi1>
    %c0_i32_153 = arith.constant 0 : i32
    %320 = vector.broadcast %c0_i32_153 : i32 to vector<256x64xi32>
    %321 = arith.cmpi sge, %314, %320 : vector<256x64xi32>
    %322 = arith.andi %319, %321 : vector<256x64xi1>
    %c16_i32_154 = arith.constant 16 : i32
    %323 = vector.broadcast %c16_i32_154 : i32 to vector<256x64xi32>
    %324 = arith.cmpi slt, %314, %323 : vector<256x64xi32>
    %325 = arith.andi %322, %324 : vector<256x64xi1>
    %c16_i32_155 = arith.constant 16 : i32
    %326 = vector.broadcast %c16_i32_155 : i32 to vector<256x64xi32>
    %327 = arith.muli %312, %326 : vector<256x64xi32>
    %328 = arith.addi %327, %314 : vector<256x64xi32>
    %329 = arith.cmpi eq, %20, %328 : vector<256x64xi32>
    %330 = arith.andi %325, %329 : vector<256x64xi1>
    %cst_156 = arith.constant 1.000000e+00 : f32
    %cst_157 = arith.constant 0.000000e+00 : f32
    %331 = vector.broadcast %cst_156 : f32 to vector<256x64xf32>
    %332 = vector.broadcast %cst_157 : f32 to vector<256x64xf32>
    %333 = arith.select %330, %331, %332 : vector<256x64xi1>, vector<256x64xf32>
    %c9 = arith.constant 9 : index
    %c0_158 = arith.constant 0 : index
    %c0_159 = arith.constant 0 : index
    %334 = vector.load %arg2[%c9, %c0_158, %c0_159] : memref<16x8x4xf32, #tpu.memory_space<vmem>>, vector<1x8x4xf32>
    %335 = vector.shape_cast %334 : vector<1x8x4xf32> to vector<8x4xf32>
    %cst_160 = arith.constant dense<0.000000e+00> : vector<4x64xf32>
    %336 = tpu.matmul %6, %333, %cst_160 {dimension_numbers = #tpu.dot_dimension_numbers<[1], [0], [0], [1], [0, 0, 1, 1], [], []>} : vector<4x256xf32>, vector<256x64xf32>, vector<4x64xf32> -> vector<4x64xf32>
    %cst_161 = arith.constant dense<0.000000e+00> : vector<8x64xf32>
    %337 = tpu.matmul %335, %336, %cst_161 {dimension_numbers = #tpu.dot_dimension_numbers<[1], [0], [0], [1], [0, 0, 1, 1], [], []>} : vector<8x4xf32>, vector<4x64xf32>, vector<8x64xf32> -> vector<8x64xf32>
    %338 = arith.addf %307, %337 : vector<8x64xf32>
    %cst_162 = arith.constant dense<0.000000e+00> : vector<4x64xf32>
    %339 = tpu.matmul %16, %333, %cst_162 {dimension_numbers = #tpu.dot_dimension_numbers<[1], [0], [0], [1], [0, 0, 1, 1], [], []>} : vector<4x256xf32>, vector<256x64xf32>, vector<4x64xf32> -> vector<4x64xf32>
    %cst_163 = arith.constant dense<0.000000e+00> : vector<8x64xf32>
    %340 = tpu.matmul %335, %339, %cst_163 {dimension_numbers = #tpu.dot_dimension_numbers<[1], [0], [0], [1], [0, 0, 1, 1], [], []>} : vector<8x4xf32>, vector<4x64xf32>, vector<8x64xf32> -> vector<8x64xf32>
    %341 = arith.addf %310, %340 : vector<8x64xf32>
    %c1_i32_164 = arith.constant 1 : i32
    %342 = vector.broadcast %c1_i32_164 : i32 to vector<256x64xi32>
    %343 = arith.addi %25, %342 : vector<256x64xi32>
    %c1_i32_165 = arith.constant 1 : i32
    %344 = vector.broadcast %c1_i32_165 : i32 to vector<256x64xi32>
    %345 = arith.addi %29, %344 : vector<256x64xi32>
    %c0_i32_166 = arith.constant 0 : i32
    %346 = vector.broadcast %c0_i32_166 : i32 to vector<256x64xi32>
    %347 = arith.cmpi sge, %343, %346 : vector<256x64xi32>
    %c16_i32_167 = arith.constant 16 : i32
    %348 = vector.broadcast %c16_i32_167 : i32 to vector<256x64xi32>
    %349 = arith.cmpi slt, %343, %348 : vector<256x64xi32>
    %350 = arith.andi %347, %349 : vector<256x64xi1>
    %c0_i32_168 = arith.constant 0 : i32
    %351 = vector.broadcast %c0_i32_168 : i32 to vector<256x64xi32>
    %352 = arith.cmpi sge, %345, %351 : vector<256x64xi32>
    %353 = arith.andi %350, %352 : vector<256x64xi1>
    %c16_i32_169 = arith.constant 16 : i32
    %354 = vector.broadcast %c16_i32_169 : i32 to vector<256x64xi32>
    %355 = arith.cmpi slt, %345, %354 : vector<256x64xi32>
    %356 = arith.andi %353, %355 : vector<256x64xi1>
    %c16_i32_170 = arith.constant 16 : i32
    %357 = vector.broadcast %c16_i32_170 : i32 to vector<256x64xi32>
    %358 = arith.muli %343, %357 : vector<256x64xi32>
    %359 = arith.addi %358, %345 : vector<256x64xi32>
    %360 = arith.cmpi eq, %20, %359 : vector<256x64xi32>
    %361 = arith.andi %356, %360 : vector<256x64xi1>
    %cst_171 = arith.constant 1.000000e+00 : f32
    %cst_172 = arith.constant 0.000000e+00 : f32
    %362 = vector.broadcast %cst_171 : f32 to vector<256x64xf32>
    %363 = vector.broadcast %cst_172 : f32 to vector<256x64xf32>
    %364 = arith.select %361, %362, %363 : vector<256x64xi1>, vector<256x64xf32>
    %c10 = arith.constant 10 : index
    %c0_173 = arith.constant 0 : index
    %c0_174 = arith.constant 0 : index
    %365 = vector.load %arg2[%c10, %c0_173, %c0_174] : memref<16x8x4xf32, #tpu.memory_space<vmem>>, vector<1x8x4xf32>
    %366 = vector.shape_cast %365 : vector<1x8x4xf32> to vector<8x4xf32>
    %cst_175 = arith.constant dense<0.000000e+00> : vector<4x64xf32>
    %367 = tpu.matmul %6, %364, %cst_175 {dimension_numbers = #tpu.dot_dimension_numbers<[1], [0], [0], [1], [0, 0, 1, 1], [], []>} : vector<4x256xf32>, vector<256x64xf32>, vector<4x64xf32> -> vector<4x64xf32>
    %cst_176 = arith.constant dense<0.000000e+00> : vector<8x64xf32>
    %368 = tpu.matmul %366, %367, %cst_176 {dimension_numbers = #tpu.dot_dimension_numbers<[1], [0], [0], [1], [0, 0, 1, 1], [], []>} : vector<8x4xf32>, vector<4x64xf32>, vector<8x64xf32> -> vector<8x64xf32>
    %369 = arith.addf %338, %368 : vector<8x64xf32>
    %cst_177 = arith.constant dense<0.000000e+00> : vector<4x64xf32>
    %370 = tpu.matmul %16, %364, %cst_177 {dimension_numbers = #tpu.dot_dimension_numbers<[1], [0], [0], [1], [0, 0, 1, 1], [], []>} : vector<4x256xf32>, vector<256x64xf32>, vector<4x64xf32> -> vector<4x64xf32>
    %cst_178 = arith.constant dense<0.000000e+00> : vector<8x64xf32>
    %371 = tpu.matmul %366, %370, %cst_178 {dimension_numbers = #tpu.dot_dimension_numbers<[1], [0], [0], [1], [0, 0, 1, 1], [], []>} : vector<8x4xf32>, vector<4x64xf32>, vector<8x64xf32> -> vector<8x64xf32>
    %372 = arith.addf %341, %371 : vector<8x64xf32>
    %c1_i32_179 = arith.constant 1 : i32
    %373 = vector.broadcast %c1_i32_179 : i32 to vector<256x64xi32>
    %374 = arith.addi %25, %373 : vector<256x64xi32>
    %c2_i32_180 = arith.constant 2 : i32
    %375 = vector.broadcast %c2_i32_180 : i32 to vector<256x64xi32>
    %376 = arith.addi %29, %375 : vector<256x64xi32>
    %c0_i32_181 = arith.constant 0 : i32
    %377 = vector.broadcast %c0_i32_181 : i32 to vector<256x64xi32>
    %378 = arith.cmpi sge, %374, %377 : vector<256x64xi32>
    %c16_i32_182 = arith.constant 16 : i32
    %379 = vector.broadcast %c16_i32_182 : i32 to vector<256x64xi32>
    %380 = arith.cmpi slt, %374, %379 : vector<256x64xi32>
    %381 = arith.andi %378, %380 : vector<256x64xi1>
    %c0_i32_183 = arith.constant 0 : i32
    %382 = vector.broadcast %c0_i32_183 : i32 to vector<256x64xi32>
    %383 = arith.cmpi sge, %376, %382 : vector<256x64xi32>
    %384 = arith.andi %381, %383 : vector<256x64xi1>
    %c16_i32_184 = arith.constant 16 : i32
    %385 = vector.broadcast %c16_i32_184 : i32 to vector<256x64xi32>
    %386 = arith.cmpi slt, %376, %385 : vector<256x64xi32>
    %387 = arith.andi %384, %386 : vector<256x64xi1>
    %c16_i32_185 = arith.constant 16 : i32
    %388 = vector.broadcast %c16_i32_185 : i32 to vector<256x64xi32>
    %389 = arith.muli %374, %388 : vector<256x64xi32>
    %390 = arith.addi %389, %376 : vector<256x64xi32>
    %391 = arith.cmpi eq, %20, %390 : vector<256x64xi32>
    %392 = arith.andi %387, %391 : vector<256x64xi1>
    %cst_186 = arith.constant 1.000000e+00 : f32
    %cst_187 = arith.constant 0.000000e+00 : f32
    %393 = vector.broadcast %cst_186 : f32 to vector<256x64xf32>
    %394 = vector.broadcast %cst_187 : f32 to vector<256x64xf32>
    %395 = arith.select %392, %393, %394 : vector<256x64xi1>, vector<256x64xf32>
    %c11 = arith.constant 11 : index
    %c0_188 = arith.constant 0 : index
    %c0_189 = arith.constant 0 : index
    %396 = vector.load %arg2[%c11, %c0_188, %c0_189] : memref<16x8x4xf32, #tpu.memory_space<vmem>>, vector<1x8x4xf32>
    %397 = vector.shape_cast %396 : vector<1x8x4xf32> to vector<8x4xf32>
    %cst_190 = arith.constant dense<0.000000e+00> : vector<4x64xf32>
    %398 = tpu.matmul %6, %395, %cst_190 {dimension_numbers = #tpu.dot_dimension_numbers<[1], [0], [0], [1], [0, 0, 1, 1], [], []>} : vector<4x256xf32>, vector<256x64xf32>, vector<4x64xf32> -> vector<4x64xf32>
    %cst_191 = arith.constant dense<0.000000e+00> : vector<8x64xf32>
    %399 = tpu.matmul %397, %398, %cst_191 {dimension_numbers = #tpu.dot_dimension_numbers<[1], [0], [0], [1], [0, 0, 1, 1], [], []>} : vector<8x4xf32>, vector<4x64xf32>, vector<8x64xf32> -> vector<8x64xf32>
    %400 = arith.addf %369, %399 : vector<8x64xf32>
    %cst_192 = arith.constant dense<0.000000e+00> : vector<4x64xf32>
    %401 = tpu.matmul %16, %395, %cst_192 {dimension_numbers = #tpu.dot_dimension_numbers<[1], [0], [0], [1], [0, 0, 1, 1], [], []>} : vector<4x256xf32>, vector<256x64xf32>, vector<4x64xf32> -> vector<4x64xf32>
    %cst_193 = arith.constant dense<0.000000e+00> : vector<8x64xf32>
    %402 = tpu.matmul %397, %401, %cst_193 {dimension_numbers = #tpu.dot_dimension_numbers<[1], [0], [0], [1], [0, 0, 1, 1], [], []>} : vector<8x4xf32>, vector<4x64xf32>, vector<8x64xf32> -> vector<8x64xf32>
    %403 = arith.addf %372, %402 : vector<8x64xf32>
    %c2_i32_194 = arith.constant 2 : i32
    %404 = vector.broadcast %c2_i32_194 : i32 to vector<256x64xi32>
    %405 = arith.addi %25, %404 : vector<256x64xi32>
    %c-1_i32_195 = arith.constant -1 : i32
    %406 = vector.broadcast %c-1_i32_195 : i32 to vector<256x64xi32>
    %407 = arith.addi %29, %406 : vector<256x64xi32>
    %c0_i32_196 = arith.constant 0 : i32
    %408 = vector.broadcast %c0_i32_196 : i32 to vector<256x64xi32>
    %409 = arith.cmpi sge, %405, %408 : vector<256x64xi32>
    %c16_i32_197 = arith.constant 16 : i32
    %410 = vector.broadcast %c16_i32_197 : i32 to vector<256x64xi32>
    %411 = arith.cmpi slt, %405, %410 : vector<256x64xi32>
    %412 = arith.andi %409, %411 : vector<256x64xi1>
    %c0_i32_198 = arith.constant 0 : i32
    %413 = vector.broadcast %c0_i32_198 : i32 to vector<256x64xi32>
    %414 = arith.cmpi sge, %407, %413 : vector<256x64xi32>
    %415 = arith.andi %412, %414 : vector<256x64xi1>
    %c16_i32_199 = arith.constant 16 : i32
    %416 = vector.broadcast %c16_i32_199 : i32 to vector<256x64xi32>
    %417 = arith.cmpi slt, %407, %416 : vector<256x64xi32>
    %418 = arith.andi %415, %417 : vector<256x64xi1>
    %c16_i32_200 = arith.constant 16 : i32
    %419 = vector.broadcast %c16_i32_200 : i32 to vector<256x64xi32>
    %420 = arith.muli %405, %419 : vector<256x64xi32>
    %421 = arith.addi %420, %407 : vector<256x64xi32>
    %422 = arith.cmpi eq, %20, %421 : vector<256x64xi32>
    %423 = arith.andi %418, %422 : vector<256x64xi1>
    %cst_201 = arith.constant 1.000000e+00 : f32
    %cst_202 = arith.constant 0.000000e+00 : f32
    %424 = vector.broadcast %cst_201 : f32 to vector<256x64xf32>
    %425 = vector.broadcast %cst_202 : f32 to vector<256x64xf32>
    %426 = arith.select %423, %424, %425 : vector<256x64xi1>, vector<256x64xf32>
    %c12 = arith.constant 12 : index
    %c0_203 = arith.constant 0 : index
    %c0_204 = arith.constant 0 : index
    %427 = vector.load %arg2[%c12, %c0_203, %c0_204] : memref<16x8x4xf32, #tpu.memory_space<vmem>>, vector<1x8x4xf32>
    %428 = vector.shape_cast %427 : vector<1x8x4xf32> to vector<8x4xf32>
    %cst_205 = arith.constant dense<0.000000e+00> : vector<4x64xf32>
    %429 = tpu.matmul %6, %426, %cst_205 {dimension_numbers = #tpu.dot_dimension_numbers<[1], [0], [0], [1], [0, 0, 1, 1], [], []>} : vector<4x256xf32>, vector<256x64xf32>, vector<4x64xf32> -> vector<4x64xf32>
    %cst_206 = arith.constant dense<0.000000e+00> : vector<8x64xf32>
    %430 = tpu.matmul %428, %429, %cst_206 {dimension_numbers = #tpu.dot_dimension_numbers<[1], [0], [0], [1], [0, 0, 1, 1], [], []>} : vector<8x4xf32>, vector<4x64xf32>, vector<8x64xf32> -> vector<8x64xf32>
    %431 = arith.addf %400, %430 : vector<8x64xf32>
    %cst_207 = arith.constant dense<0.000000e+00> : vector<4x64xf32>
    %432 = tpu.matmul %16, %426, %cst_207 {dimension_numbers = #tpu.dot_dimension_numbers<[1], [0], [0], [1], [0, 0, 1, 1], [], []>} : vector<4x256xf32>, vector<256x64xf32>, vector<4x64xf32> -> vector<4x64xf32>
    %cst_208 = arith.constant dense<0.000000e+00> : vector<8x64xf32>
    %433 = tpu.matmul %428, %432, %cst_208 {dimension_numbers = #tpu.dot_dimension_numbers<[1], [0], [0], [1], [0, 0, 1, 1], [], []>} : vector<8x4xf32>, vector<4x64xf32>, vector<8x64xf32> -> vector<8x64xf32>
    %434 = arith.addf %403, %433 : vector<8x64xf32>
    %c2_i32_209 = arith.constant 2 : i32
    %435 = vector.broadcast %c2_i32_209 : i32 to vector<256x64xi32>
    %436 = arith.addi %25, %435 : vector<256x64xi32>
    %c0_i32_210 = arith.constant 0 : i32
    %437 = vector.broadcast %c0_i32_210 : i32 to vector<256x64xi32>
    %438 = arith.addi %29, %437 : vector<256x64xi32>
    %c0_i32_211 = arith.constant 0 : i32
    %439 = vector.broadcast %c0_i32_211 : i32 to vector<256x64xi32>
    %440 = arith.cmpi sge, %436, %439 : vector<256x64xi32>
    %c16_i32_212 = arith.constant 16 : i32
    %441 = vector.broadcast %c16_i32_212 : i32 to vector<256x64xi32>
    %442 = arith.cmpi slt, %436, %441 : vector<256x64xi32>
    %443 = arith.andi %440, %442 : vector<256x64xi1>
    %c0_i32_213 = arith.constant 0 : i32
    %444 = vector.broadcast %c0_i32_213 : i32 to vector<256x64xi32>
    %445 = arith.cmpi sge, %438, %444 : vector<256x64xi32>
    %446 = arith.andi %443, %445 : vector<256x64xi1>
    %c16_i32_214 = arith.constant 16 : i32
    %447 = vector.broadcast %c16_i32_214 : i32 to vector<256x64xi32>
    %448 = arith.cmpi slt, %438, %447 : vector<256x64xi32>
    %449 = arith.andi %446, %448 : vector<256x64xi1>
    %c16_i32_215 = arith.constant 16 : i32
    %450 = vector.broadcast %c16_i32_215 : i32 to vector<256x64xi32>
    %451 = arith.muli %436, %450 : vector<256x64xi32>
    %452 = arith.addi %451, %438 : vector<256x64xi32>
    %453 = arith.cmpi eq, %20, %452 : vector<256x64xi32>
    %454 = arith.andi %449, %453 : vector<256x64xi1>
    %cst_216 = arith.constant 1.000000e+00 : f32
    %cst_217 = arith.constant 0.000000e+00 : f32
    %455 = vector.broadcast %cst_216 : f32 to vector<256x64xf32>
    %456 = vector.broadcast %cst_217 : f32 to vector<256x64xf32>
    %457 = arith.select %454, %455, %456 : vector<256x64xi1>, vector<256x64xf32>
    %c13 = arith.constant 13 : index
    %c0_218 = arith.constant 0 : index
    %c0_219 = arith.constant 0 : index
    %458 = vector.load %arg2[%c13, %c0_218, %c0_219] : memref<16x8x4xf32, #tpu.memory_space<vmem>>, vector<1x8x4xf32>
    %459 = vector.shape_cast %458 : vector<1x8x4xf32> to vector<8x4xf32>
    %cst_220 = arith.constant dense<0.000000e+00> : vector<4x64xf32>
    %460 = tpu.matmul %6, %457, %cst_220 {dimension_numbers = #tpu.dot_dimension_numbers<[1], [0], [0], [1], [0, 0, 1, 1], [], []>} : vector<4x256xf32>, vector<256x64xf32>, vector<4x64xf32> -> vector<4x64xf32>
    %cst_221 = arith.constant dense<0.000000e+00> : vector<8x64xf32>
    %461 = tpu.matmul %459, %460, %cst_221 {dimension_numbers = #tpu.dot_dimension_numbers<[1], [0], [0], [1], [0, 0, 1, 1], [], []>} : vector<8x4xf32>, vector<4x64xf32>, vector<8x64xf32> -> vector<8x64xf32>
    %462 = arith.addf %431, %461 : vector<8x64xf32>
    %cst_222 = arith.constant dense<0.000000e+00> : vector<4x64xf32>
    %463 = tpu.matmul %16, %457, %cst_222 {dimension_numbers = #tpu.dot_dimension_numbers<[1], [0], [0], [1], [0, 0, 1, 1], [], []>} : vector<4x256xf32>, vector<256x64xf32>, vector<4x64xf32> -> vector<4x64xf32>
    %cst_223 = arith.constant dense<0.000000e+00> : vector<8x64xf32>
    %464 = tpu.matmul %459, %463, %cst_223 {dimension_numbers = #tpu.dot_dimension_numbers<[1], [0], [0], [1], [0, 0, 1, 1], [], []>} : vector<8x4xf32>, vector<4x64xf32>, vector<8x64xf32> -> vector<8x64xf32>
    %465 = arith.addf %434, %464 : vector<8x64xf32>
    %c2_i32_224 = arith.constant 2 : i32
    %466 = vector.broadcast %c2_i32_224 : i32 to vector<256x64xi32>
    %467 = arith.addi %25, %466 : vector<256x64xi32>
    %c1_i32_225 = arith.constant 1 : i32
    %468 = vector.broadcast %c1_i32_225 : i32 to vector<256x64xi32>
    %469 = arith.addi %29, %468 : vector<256x64xi32>
    %c0_i32_226 = arith.constant 0 : i32
    %470 = vector.broadcast %c0_i32_226 : i32 to vector<256x64xi32>
    %471 = arith.cmpi sge, %467, %470 : vector<256x64xi32>
    %c16_i32_227 = arith.constant 16 : i32
    %472 = vector.broadcast %c16_i32_227 : i32 to vector<256x64xi32>
    %473 = arith.cmpi slt, %467, %472 : vector<256x64xi32>
    %474 = arith.andi %471, %473 : vector<256x64xi1>
    %c0_i32_228 = arith.constant 0 : i32
    %475 = vector.broadcast %c0_i32_228 : i32 to vector<256x64xi32>
    %476 = arith.cmpi sge, %469, %475 : vector<256x64xi32>
    %477 = arith.andi %474, %476 : vector<256x64xi1>
    %c16_i32_229 = arith.constant 16 : i32
    %478 = vector.broadcast %c16_i32_229 : i32 to vector<256x64xi32>
    %479 = arith.cmpi slt, %469, %478 : vector<256x64xi32>
    %480 = arith.andi %477, %479 : vector<256x64xi1>
    %c16_i32_230 = arith.constant 16 : i32
    %481 = vector.broadcast %c16_i32_230 : i32 to vector<256x64xi32>
    %482 = arith.muli %467, %481 : vector<256x64xi32>
    %483 = arith.addi %482, %469 : vector<256x64xi32>
    %484 = arith.cmpi eq, %20, %483 : vector<256x64xi32>
    %485 = arith.andi %480, %484 : vector<256x64xi1>
    %cst_231 = arith.constant 1.000000e+00 : f32
    %cst_232 = arith.constant 0.000000e+00 : f32
    %486 = vector.broadcast %cst_231 : f32 to vector<256x64xf32>
    %487 = vector.broadcast %cst_232 : f32 to vector<256x64xf32>
    %488 = arith.select %485, %486, %487 : vector<256x64xi1>, vector<256x64xf32>
    %c14 = arith.constant 14 : index
    %c0_233 = arith.constant 0 : index
    %c0_234 = arith.constant 0 : index
    %489 = vector.load %arg2[%c14, %c0_233, %c0_234] : memref<16x8x4xf32, #tpu.memory_space<vmem>>, vector<1x8x4xf32>
    %490 = vector.shape_cast %489 : vector<1x8x4xf32> to vector<8x4xf32>
    %cst_235 = arith.constant dense<0.000000e+00> : vector<4x64xf32>
    %491 = tpu.matmul %6, %488, %cst_235 {dimension_numbers = #tpu.dot_dimension_numbers<[1], [0], [0], [1], [0, 0, 1, 1], [], []>} : vector<4x256xf32>, vector<256x64xf32>, vector<4x64xf32> -> vector<4x64xf32>
    %cst_236 = arith.constant dense<0.000000e+00> : vector<8x64xf32>
    %492 = tpu.matmul %490, %491, %cst_236 {dimension_numbers = #tpu.dot_dimension_numbers<[1], [0], [0], [1], [0, 0, 1, 1], [], []>} : vector<8x4xf32>, vector<4x64xf32>, vector<8x64xf32> -> vector<8x64xf32>
    %493 = arith.addf %462, %492 : vector<8x64xf32>
    %cst_237 = arith.constant dense<0.000000e+00> : vector<4x64xf32>
    %494 = tpu.matmul %16, %488, %cst_237 {dimension_numbers = #tpu.dot_dimension_numbers<[1], [0], [0], [1], [0, 0, 1, 1], [], []>} : vector<4x256xf32>, vector<256x64xf32>, vector<4x64xf32> -> vector<4x64xf32>
    %cst_238 = arith.constant dense<0.000000e+00> : vector<8x64xf32>
    %495 = tpu.matmul %490, %494, %cst_238 {dimension_numbers = #tpu.dot_dimension_numbers<[1], [0], [0], [1], [0, 0, 1, 1], [], []>} : vector<8x4xf32>, vector<4x64xf32>, vector<8x64xf32> -> vector<8x64xf32>
    %496 = arith.addf %465, %495 : vector<8x64xf32>
    %c2_i32_239 = arith.constant 2 : i32
    %497 = vector.broadcast %c2_i32_239 : i32 to vector<256x64xi32>
    %498 = arith.addi %25, %497 : vector<256x64xi32>
    %c2_i32_240 = arith.constant 2 : i32
    %499 = vector.broadcast %c2_i32_240 : i32 to vector<256x64xi32>
    %500 = arith.addi %29, %499 : vector<256x64xi32>
    %c0_i32_241 = arith.constant 0 : i32
    %501 = vector.broadcast %c0_i32_241 : i32 to vector<256x64xi32>
    %502 = arith.cmpi sge, %498, %501 : vector<256x64xi32>
    %c16_i32_242 = arith.constant 16 : i32
    %503 = vector.broadcast %c16_i32_242 : i32 to vector<256x64xi32>
    %504 = arith.cmpi slt, %498, %503 : vector<256x64xi32>
    %505 = arith.andi %502, %504 : vector<256x64xi1>
    %c0_i32_243 = arith.constant 0 : i32
    %506 = vector.broadcast %c0_i32_243 : i32 to vector<256x64xi32>
    %507 = arith.cmpi sge, %500, %506 : vector<256x64xi32>
    %508 = arith.andi %505, %507 : vector<256x64xi1>
    %c16_i32_244 = arith.constant 16 : i32
    %509 = vector.broadcast %c16_i32_244 : i32 to vector<256x64xi32>
    %510 = arith.cmpi slt, %500, %509 : vector<256x64xi32>
    %511 = arith.andi %508, %510 : vector<256x64xi1>
    %c16_i32_245 = arith.constant 16 : i32
    %512 = vector.broadcast %c16_i32_245 : i32 to vector<256x64xi32>
    %513 = arith.muli %498, %512 : vector<256x64xi32>
    %514 = arith.addi %513, %500 : vector<256x64xi32>
    %515 = arith.cmpi eq, %20, %514 : vector<256x64xi32>
    %516 = arith.andi %511, %515 : vector<256x64xi1>
    %cst_246 = arith.constant 1.000000e+00 : f32
    %cst_247 = arith.constant 0.000000e+00 : f32
    %517 = vector.broadcast %cst_246 : f32 to vector<256x64xf32>
    %518 = vector.broadcast %cst_247 : f32 to vector<256x64xf32>
    %519 = arith.select %516, %517, %518 : vector<256x64xi1>, vector<256x64xf32>
    %c15 = arith.constant 15 : index
    %c0_248 = arith.constant 0 : index
    %c0_249 = arith.constant 0 : index
    %520 = vector.load %arg2[%c15, %c0_248, %c0_249] : memref<16x8x4xf32, #tpu.memory_space<vmem>>, vector<1x8x4xf32>
    %521 = vector.shape_cast %520 : vector<1x8x4xf32> to vector<8x4xf32>
    %cst_250 = arith.constant dense<0.000000e+00> : vector<4x64xf32>
    %522 = tpu.matmul %6, %519, %cst_250 {dimension_numbers = #tpu.dot_dimension_numbers<[1], [0], [0], [1], [0, 0, 1, 1], [], []>} : vector<4x256xf32>, vector<256x64xf32>, vector<4x64xf32> -> vector<4x64xf32>
    %cst_251 = arith.constant dense<0.000000e+00> : vector<8x64xf32>
    %523 = tpu.matmul %521, %522, %cst_251 {dimension_numbers = #tpu.dot_dimension_numbers<[1], [0], [0], [1], [0, 0, 1, 1], [], []>} : vector<8x4xf32>, vector<4x64xf32>, vector<8x64xf32> -> vector<8x64xf32>
    %524 = arith.addf %493, %523 : vector<8x64xf32>
    %cst_252 = arith.constant dense<0.000000e+00> : vector<4x64xf32>
    %525 = tpu.matmul %16, %519, %cst_252 {dimension_numbers = #tpu.dot_dimension_numbers<[1], [0], [0], [1], [0, 0, 1, 1], [], []>} : vector<4x256xf32>, vector<256x64xf32>, vector<4x64xf32> -> vector<4x64xf32>
    %cst_253 = arith.constant dense<0.000000e+00> : vector<8x64xf32>
    %526 = tpu.matmul %521, %525, %cst_253 {dimension_numbers = #tpu.dot_dimension_numbers<[1], [0], [0], [1], [0, 0, 1, 1], [], []>} : vector<8x4xf32>, vector<4x64xf32>, vector<8x64xf32> -> vector<8x64xf32>
    %527 = arith.addf %496, %526 : vector<8x64xf32>
    %cst_254 = arith.constant 0.000000e+00 : f32
    %528 = vector.broadcast %cst_254 : f32 to vector<8x64xf32>
    %529 = arith.maximumf %524, %528 : vector<8x64xf32>
    %cst_255 = arith.constant 0.000000e+00 : f32
    %530 = vector.broadcast %cst_255 : f32 to vector<8x64xf32>
    %531 = arith.maximumf %527, %530 : vector<8x64xf32>
    %532 = tpu.iota {dimensions = array<i32: 0>} : vector<64x256xi32>
    %533 = tpu.iota {dimensions = array<i32: 1>} : vector<64x256xi32>
    %c4_i32 = arith.constant 4 : i32
    %534 = vector.broadcast %c4_i32 : i32 to vector<64x256xi32>
    %535 = arith.shrsi %533, %534 : vector<64x256xi32>
    %c15_i32 = arith.constant 15 : i32
    %536 = vector.broadcast %c15_i32 : i32 to vector<64x256xi32>
    %537 = arith.andi %533, %536 : vector<64x256xi32>
    %cst_256 = arith.constant 0.000000e+00 : f32
    %538 = vector.broadcast %cst_256 : f32 to vector<4x256xf32>
    %cst_257 = arith.constant 0.000000e+00 : f32
    %539 = vector.broadcast %cst_257 : f32 to vector<4x256xf32>
    %c-1_i32_258 = arith.constant -1 : i32
    %540 = vector.broadcast %c-1_i32_258 : i32 to vector<64x256xi32>
    %541 = arith.addi %535, %540 : vector<64x256xi32>
    %c0_i32_259 = arith.constant 0 : i32
    %c15_i32_260 = arith.constant 15 : i32
    %542 = vector.broadcast %c0_i32_259 : i32 to vector<64x256xi32>
    %543 = arith.maxsi %542, %541 : vector<64x256xi32>
    %544 = vector.broadcast %c15_i32_260 : i32 to vector<64x256xi32>
    %545 = arith.minsi %544, %543 : vector<64x256xi32>
    %c1_i32_261 = arith.constant 1 : i32
    %546 = vector.broadcast %c1_i32_261 : i32 to vector<64x256xi32>
    %547 = arith.shrsi %545, %546 : vector<64x256xi32>
    %c-1_i32_262 = arith.constant -1 : i32
    %548 = vector.broadcast %c-1_i32_262 : i32 to vector<64x256xi32>
    %549 = arith.addi %537, %548 : vector<64x256xi32>
    %c0_i32_263 = arith.constant 0 : i32
    %c15_i32_264 = arith.constant 15 : i32
    %550 = vector.broadcast %c0_i32_263 : i32 to vector<64x256xi32>
    %551 = arith.maxsi %550, %549 : vector<64x256xi32>
    %552 = vector.broadcast %c15_i32_264 : i32 to vector<64x256xi32>
    %553 = arith.minsi %552, %551 : vector<64x256xi32>
    %c1_i32_265 = arith.constant 1 : i32
    %554 = vector.broadcast %c1_i32_265 : i32 to vector<64x256xi32>
    %555 = arith.shrsi %553, %554 : vector<64x256xi32>
    %c8_i32 = arith.constant 8 : i32
    %556 = vector.broadcast %c8_i32 : i32 to vector<64x256xi32>
    %557 = arith.muli %547, %556 : vector<64x256xi32>
    %558 = arith.addi %557, %555 : vector<64x256xi32>
    %559 = arith.cmpi eq, %532, %558 : vector<64x256xi32>
    %cst_266 = arith.constant 1.000000e+00 : f32
    %cst_267 = arith.constant 0.000000e+00 : f32
    %560 = vector.broadcast %cst_266 : f32 to vector<64x256xf32>
    %561 = vector.broadcast %cst_267 : f32 to vector<64x256xf32>
    %562 = arith.select %559, %560, %561 : vector<64x256xi1>, vector<64x256xf32>
    %c0_268 = arith.constant 0 : index
    %c0_269 = arith.constant 0 : index
    %c0_270 = arith.constant 0 : index
    %563 = vector.load %arg3[%c0_268, %c0_269, %c0_270] : memref<9x4x8xf32, #tpu.memory_space<vmem>>, vector<1x4x8xf32>
    %564 = vector.shape_cast %563 : vector<1x4x8xf32> to vector<4x8xf32>
    %cst_271 = arith.constant dense<0.000000e+00> : vector<8x256xf32>
    %565 = tpu.matmul %529, %562, %cst_271 {dimension_numbers = #tpu.dot_dimension_numbers<[1], [0], [0], [1], [0, 0, 1, 1], [], []>} : vector<8x64xf32>, vector<64x256xf32>, vector<8x256xf32> -> vector<8x256xf32>
    %cst_272 = arith.constant dense<0.000000e+00> : vector<4x256xf32>
    %566 = tpu.matmul %564, %565, %cst_272 {dimension_numbers = #tpu.dot_dimension_numbers<[1], [0], [0], [1], [0, 0, 1, 1], [], []>} : vector<4x8xf32>, vector<8x256xf32>, vector<4x256xf32> -> vector<4x256xf32>
    %567 = arith.addf %538, %566 : vector<4x256xf32>
    %cst_273 = arith.constant dense<0.000000e+00> : vector<8x256xf32>
    %568 = tpu.matmul %531, %562, %cst_273 {dimension_numbers = #tpu.dot_dimension_numbers<[1], [0], [0], [1], [0, 0, 1, 1], [], []>} : vector<8x64xf32>, vector<64x256xf32>, vector<8x256xf32> -> vector<8x256xf32>
    %cst_274 = arith.constant dense<0.000000e+00> : vector<4x256xf32>
    %569 = tpu.matmul %564, %568, %cst_274 {dimension_numbers = #tpu.dot_dimension_numbers<[1], [0], [0], [1], [0, 0, 1, 1], [], []>} : vector<4x8xf32>, vector<8x256xf32>, vector<4x256xf32> -> vector<4x256xf32>
    %570 = arith.addf %539, %569 : vector<4x256xf32>
    %c-1_i32_275 = arith.constant -1 : i32
    %571 = vector.broadcast %c-1_i32_275 : i32 to vector<64x256xi32>
    %572 = arith.addi %535, %571 : vector<64x256xi32>
    %c0_i32_276 = arith.constant 0 : i32
    %c15_i32_277 = arith.constant 15 : i32
    %573 = vector.broadcast %c0_i32_276 : i32 to vector<64x256xi32>
    %574 = arith.maxsi %573, %572 : vector<64x256xi32>
    %575 = vector.broadcast %c15_i32_277 : i32 to vector<64x256xi32>
    %576 = arith.minsi %575, %574 : vector<64x256xi32>
    %c1_i32_278 = arith.constant 1 : i32
    %577 = vector.broadcast %c1_i32_278 : i32 to vector<64x256xi32>
    %578 = arith.shrsi %576, %577 : vector<64x256xi32>
    %c0_i32_279 = arith.constant 0 : i32
    %579 = vector.broadcast %c0_i32_279 : i32 to vector<64x256xi32>
    %580 = arith.addi %537, %579 : vector<64x256xi32>
    %c0_i32_280 = arith.constant 0 : i32
    %c15_i32_281 = arith.constant 15 : i32
    %581 = vector.broadcast %c0_i32_280 : i32 to vector<64x256xi32>
    %582 = arith.maxsi %581, %580 : vector<64x256xi32>
    %583 = vector.broadcast %c15_i32_281 : i32 to vector<64x256xi32>
    %584 = arith.minsi %583, %582 : vector<64x256xi32>
    %c1_i32_282 = arith.constant 1 : i32
    %585 = vector.broadcast %c1_i32_282 : i32 to vector<64x256xi32>
    %586 = arith.shrsi %584, %585 : vector<64x256xi32>
    %c8_i32_283 = arith.constant 8 : i32
    %587 = vector.broadcast %c8_i32_283 : i32 to vector<64x256xi32>
    %588 = arith.muli %578, %587 : vector<64x256xi32>
    %589 = arith.addi %588, %586 : vector<64x256xi32>
    %590 = arith.cmpi eq, %532, %589 : vector<64x256xi32>
    %cst_284 = arith.constant 1.000000e+00 : f32
    %cst_285 = arith.constant 0.000000e+00 : f32
    %591 = vector.broadcast %cst_284 : f32 to vector<64x256xf32>
    %592 = vector.broadcast %cst_285 : f32 to vector<64x256xf32>
    %593 = arith.select %590, %591, %592 : vector<64x256xi1>, vector<64x256xf32>
    %c1_286 = arith.constant 1 : index
    %c0_287 = arith.constant 0 : index
    %c0_288 = arith.constant 0 : index
    %594 = vector.load %arg3[%c1_286, %c0_287, %c0_288] : memref<9x4x8xf32, #tpu.memory_space<vmem>>, vector<1x4x8xf32>
    %595 = vector.shape_cast %594 : vector<1x4x8xf32> to vector<4x8xf32>
    %cst_289 = arith.constant dense<0.000000e+00> : vector<8x256xf32>
    %596 = tpu.matmul %529, %593, %cst_289 {dimension_numbers = #tpu.dot_dimension_numbers<[1], [0], [0], [1], [0, 0, 1, 1], [], []>} : vector<8x64xf32>, vector<64x256xf32>, vector<8x256xf32> -> vector<8x256xf32>
    %cst_290 = arith.constant dense<0.000000e+00> : vector<4x256xf32>
    %597 = tpu.matmul %595, %596, %cst_290 {dimension_numbers = #tpu.dot_dimension_numbers<[1], [0], [0], [1], [0, 0, 1, 1], [], []>} : vector<4x8xf32>, vector<8x256xf32>, vector<4x256xf32> -> vector<4x256xf32>
    %598 = arith.addf %567, %597 : vector<4x256xf32>
    %cst_291 = arith.constant dense<0.000000e+00> : vector<8x256xf32>
    %599 = tpu.matmul %531, %593, %cst_291 {dimension_numbers = #tpu.dot_dimension_numbers<[1], [0], [0], [1], [0, 0, 1, 1], [], []>} : vector<8x64xf32>, vector<64x256xf32>, vector<8x256xf32> -> vector<8x256xf32>
    %cst_292 = arith.constant dense<0.000000e+00> : vector<4x256xf32>
    %600 = tpu.matmul %595, %599, %cst_292 {dimension_numbers = #tpu.dot_dimension_numbers<[1], [0], [0], [1], [0, 0, 1, 1], [], []>} : vector<4x8xf32>, vector<8x256xf32>, vector<4x256xf32> -> vector<4x256xf32>
    %601 = arith.addf %570, %600 : vector<4x256xf32>
    %c-1_i32_293 = arith.constant -1 : i32
    %602 = vector.broadcast %c-1_i32_293 : i32 to vector<64x256xi32>
    %603 = arith.addi %535, %602 : vector<64x256xi32>
    %c0_i32_294 = arith.constant 0 : i32
    %c15_i32_295 = arith.constant 15 : i32
    %604 = vector.broadcast %c0_i32_294 : i32 to vector<64x256xi32>
    %605 = arith.maxsi %604, %603 : vector<64x256xi32>
    %606 = vector.broadcast %c15_i32_295 : i32 to vector<64x256xi32>
    %607 = arith.minsi %606, %605 : vector<64x256xi32>
    %c1_i32_296 = arith.constant 1 : i32
    %608 = vector.broadcast %c1_i32_296 : i32 to vector<64x256xi32>
    %609 = arith.shrsi %607, %608 : vector<64x256xi32>
    %c1_i32_297 = arith.constant 1 : i32
    %610 = vector.broadcast %c1_i32_297 : i32 to vector<64x256xi32>
    %611 = arith.addi %537, %610 : vector<64x256xi32>
    %c0_i32_298 = arith.constant 0 : i32
    %c15_i32_299 = arith.constant 15 : i32
    %612 = vector.broadcast %c0_i32_298 : i32 to vector<64x256xi32>
    %613 = arith.maxsi %612, %611 : vector<64x256xi32>
    %614 = vector.broadcast %c15_i32_299 : i32 to vector<64x256xi32>
    %615 = arith.minsi %614, %613 : vector<64x256xi32>
    %c1_i32_300 = arith.constant 1 : i32
    %616 = vector.broadcast %c1_i32_300 : i32 to vector<64x256xi32>
    %617 = arith.shrsi %615, %616 : vector<64x256xi32>
    %c8_i32_301 = arith.constant 8 : i32
    %618 = vector.broadcast %c8_i32_301 : i32 to vector<64x256xi32>
    %619 = arith.muli %609, %618 : vector<64x256xi32>
    %620 = arith.addi %619, %617 : vector<64x256xi32>
    %621 = arith.cmpi eq, %532, %620 : vector<64x256xi32>
    %cst_302 = arith.constant 1.000000e+00 : f32
    %cst_303 = arith.constant 0.000000e+00 : f32
    %622 = vector.broadcast %cst_302 : f32 to vector<64x256xf32>
    %623 = vector.broadcast %cst_303 : f32 to vector<64x256xf32>
    %624 = arith.select %621, %622, %623 : vector<64x256xi1>, vector<64x256xf32>
    %c2_304 = arith.constant 2 : index
    %c0_305 = arith.constant 0 : index
    %c0_306 = arith.constant 0 : index
    %625 = vector.load %arg3[%c2_304, %c0_305, %c0_306] : memref<9x4x8xf32, #tpu.memory_space<vmem>>, vector<1x4x8xf32>
    %626 = vector.shape_cast %625 : vector<1x4x8xf32> to vector<4x8xf32>
    %cst_307 = arith.constant dense<0.000000e+00> : vector<8x256xf32>
    %627 = tpu.matmul %529, %624, %cst_307 {dimension_numbers = #tpu.dot_dimension_numbers<[1], [0], [0], [1], [0, 0, 1, 1], [], []>} : vector<8x64xf32>, vector<64x256xf32>, vector<8x256xf32> -> vector<8x256xf32>
    %cst_308 = arith.constant dense<0.000000e+00> : vector<4x256xf32>
    %628 = tpu.matmul %626, %627, %cst_308 {dimension_numbers = #tpu.dot_dimension_numbers<[1], [0], [0], [1], [0, 0, 1, 1], [], []>} : vector<4x8xf32>, vector<8x256xf32>, vector<4x256xf32> -> vector<4x256xf32>
    %629 = arith.addf %598, %628 : vector<4x256xf32>
    %cst_309 = arith.constant dense<0.000000e+00> : vector<8x256xf32>
    %630 = tpu.matmul %531, %624, %cst_309 {dimension_numbers = #tpu.dot_dimension_numbers<[1], [0], [0], [1], [0, 0, 1, 1], [], []>} : vector<8x64xf32>, vector<64x256xf32>, vector<8x256xf32> -> vector<8x256xf32>
    %cst_310 = arith.constant dense<0.000000e+00> : vector<4x256xf32>
    %631 = tpu.matmul %626, %630, %cst_310 {dimension_numbers = #tpu.dot_dimension_numbers<[1], [0], [0], [1], [0, 0, 1, 1], [], []>} : vector<4x8xf32>, vector<8x256xf32>, vector<4x256xf32> -> vector<4x256xf32>
    %632 = arith.addf %601, %631 : vector<4x256xf32>
    %c0_i32_311 = arith.constant 0 : i32
    %633 = vector.broadcast %c0_i32_311 : i32 to vector<64x256xi32>
    %634 = arith.addi %535, %633 : vector<64x256xi32>
    %c0_i32_312 = arith.constant 0 : i32
    %c15_i32_313 = arith.constant 15 : i32
    %635 = vector.broadcast %c0_i32_312 : i32 to vector<64x256xi32>
    %636 = arith.maxsi %635, %634 : vector<64x256xi32>
    %637 = vector.broadcast %c15_i32_313 : i32 to vector<64x256xi32>
    %638 = arith.minsi %637, %636 : vector<64x256xi32>
    %c1_i32_314 = arith.constant 1 : i32
    %639 = vector.broadcast %c1_i32_314 : i32 to vector<64x256xi32>
    %640 = arith.shrsi %638, %639 : vector<64x256xi32>
    %c-1_i32_315 = arith.constant -1 : i32
    %641 = vector.broadcast %c-1_i32_315 : i32 to vector<64x256xi32>
    %642 = arith.addi %537, %641 : vector<64x256xi32>
    %c0_i32_316 = arith.constant 0 : i32
    %c15_i32_317 = arith.constant 15 : i32
    %643 = vector.broadcast %c0_i32_316 : i32 to vector<64x256xi32>
    %644 = arith.maxsi %643, %642 : vector<64x256xi32>
    %645 = vector.broadcast %c15_i32_317 : i32 to vector<64x256xi32>
    %646 = arith.minsi %645, %644 : vector<64x256xi32>
    %c1_i32_318 = arith.constant 1 : i32
    %647 = vector.broadcast %c1_i32_318 : i32 to vector<64x256xi32>
    %648 = arith.shrsi %646, %647 : vector<64x256xi32>
    %c8_i32_319 = arith.constant 8 : i32
    %649 = vector.broadcast %c8_i32_319 : i32 to vector<64x256xi32>
    %650 = arith.muli %640, %649 : vector<64x256xi32>
    %651 = arith.addi %650, %648 : vector<64x256xi32>
    %652 = arith.cmpi eq, %532, %651 : vector<64x256xi32>
    %cst_320 = arith.constant 1.000000e+00 : f32
    %cst_321 = arith.constant 0.000000e+00 : f32
    %653 = vector.broadcast %cst_320 : f32 to vector<64x256xf32>
    %654 = vector.broadcast %cst_321 : f32 to vector<64x256xf32>
    %655 = arith.select %652, %653, %654 : vector<64x256xi1>, vector<64x256xf32>
    %c3_322 = arith.constant 3 : index
    %c0_323 = arith.constant 0 : index
    %c0_324 = arith.constant 0 : index
    %656 = vector.load %arg3[%c3_322, %c0_323, %c0_324] : memref<9x4x8xf32, #tpu.memory_space<vmem>>, vector<1x4x8xf32>
    %657 = vector.shape_cast %656 : vector<1x4x8xf32> to vector<4x8xf32>
    %cst_325 = arith.constant dense<0.000000e+00> : vector<8x256xf32>
    %658 = tpu.matmul %529, %655, %cst_325 {dimension_numbers = #tpu.dot_dimension_numbers<[1], [0], [0], [1], [0, 0, 1, 1], [], []>} : vector<8x64xf32>, vector<64x256xf32>, vector<8x256xf32> -> vector<8x256xf32>
    %cst_326 = arith.constant dense<0.000000e+00> : vector<4x256xf32>
    %659 = tpu.matmul %657, %658, %cst_326 {dimension_numbers = #tpu.dot_dimension_numbers<[1], [0], [0], [1], [0, 0, 1, 1], [], []>} : vector<4x8xf32>, vector<8x256xf32>, vector<4x256xf32> -> vector<4x256xf32>
    %660 = arith.addf %629, %659 : vector<4x256xf32>
    %cst_327 = arith.constant dense<0.000000e+00> : vector<8x256xf32>
    %661 = tpu.matmul %531, %655, %cst_327 {dimension_numbers = #tpu.dot_dimension_numbers<[1], [0], [0], [1], [0, 0, 1, 1], [], []>} : vector<8x64xf32>, vector<64x256xf32>, vector<8x256xf32> -> vector<8x256xf32>
    %cst_328 = arith.constant dense<0.000000e+00> : vector<4x256xf32>
    %662 = tpu.matmul %657, %661, %cst_328 {dimension_numbers = #tpu.dot_dimension_numbers<[1], [0], [0], [1], [0, 0, 1, 1], [], []>} : vector<4x8xf32>, vector<8x256xf32>, vector<4x256xf32> -> vector<4x256xf32>
    %663 = arith.addf %632, %662 : vector<4x256xf32>
    %c0_i32_329 = arith.constant 0 : i32
    %664 = vector.broadcast %c0_i32_329 : i32 to vector<64x256xi32>
    %665 = arith.addi %535, %664 : vector<64x256xi32>
    %c0_i32_330 = arith.constant 0 : i32
    %c15_i32_331 = arith.constant 15 : i32
    %666 = vector.broadcast %c0_i32_330 : i32 to vector<64x256xi32>
    %667 = arith.maxsi %666, %665 : vector<64x256xi32>
    %668 = vector.broadcast %c15_i32_331 : i32 to vector<64x256xi32>
    %669 = arith.minsi %668, %667 : vector<64x256xi32>
    %c1_i32_332 = arith.constant 1 : i32
    %670 = vector.broadcast %c1_i32_332 : i32 to vector<64x256xi32>
    %671 = arith.shrsi %669, %670 : vector<64x256xi32>
    %c0_i32_333 = arith.constant 0 : i32
    %672 = vector.broadcast %c0_i32_333 : i32 to vector<64x256xi32>
    %673 = arith.addi %537, %672 : vector<64x256xi32>
    %c0_i32_334 = arith.constant 0 : i32
    %c15_i32_335 = arith.constant 15 : i32
    %674 = vector.broadcast %c0_i32_334 : i32 to vector<64x256xi32>
    %675 = arith.maxsi %674, %673 : vector<64x256xi32>
    %676 = vector.broadcast %c15_i32_335 : i32 to vector<64x256xi32>
    %677 = arith.minsi %676, %675 : vector<64x256xi32>
    %c1_i32_336 = arith.constant 1 : i32
    %678 = vector.broadcast %c1_i32_336 : i32 to vector<64x256xi32>
    %679 = arith.shrsi %677, %678 : vector<64x256xi32>
    %c8_i32_337 = arith.constant 8 : i32
    %680 = vector.broadcast %c8_i32_337 : i32 to vector<64x256xi32>
    %681 = arith.muli %671, %680 : vector<64x256xi32>
    %682 = arith.addi %681, %679 : vector<64x256xi32>
    %683 = arith.cmpi eq, %532, %682 : vector<64x256xi32>
    %cst_338 = arith.constant 1.000000e+00 : f32
    %cst_339 = arith.constant 0.000000e+00 : f32
    %684 = vector.broadcast %cst_338 : f32 to vector<64x256xf32>
    %685 = vector.broadcast %cst_339 : f32 to vector<64x256xf32>
    %686 = arith.select %683, %684, %685 : vector<64x256xi1>, vector<64x256xf32>
    %c4_340 = arith.constant 4 : index
    %c0_341 = arith.constant 0 : index
    %c0_342 = arith.constant 0 : index
    %687 = vector.load %arg3[%c4_340, %c0_341, %c0_342] : memref<9x4x8xf32, #tpu.memory_space<vmem>>, vector<1x4x8xf32>
    %688 = vector.shape_cast %687 : vector<1x4x8xf32> to vector<4x8xf32>
    %cst_343 = arith.constant dense<0.000000e+00> : vector<8x256xf32>
    %689 = tpu.matmul %529, %686, %cst_343 {dimension_numbers = #tpu.dot_dimension_numbers<[1], [0], [0], [1], [0, 0, 1, 1], [], []>} : vector<8x64xf32>, vector<64x256xf32>, vector<8x256xf32> -> vector<8x256xf32>
    %cst_344 = arith.constant dense<0.000000e+00> : vector<4x256xf32>
    %690 = tpu.matmul %688, %689, %cst_344 {dimension_numbers = #tpu.dot_dimension_numbers<[1], [0], [0], [1], [0, 0, 1, 1], [], []>} : vector<4x8xf32>, vector<8x256xf32>, vector<4x256xf32> -> vector<4x256xf32>
    %691 = arith.addf %660, %690 : vector<4x256xf32>
    %cst_345 = arith.constant dense<0.000000e+00> : vector<8x256xf32>
    %692 = tpu.matmul %531, %686, %cst_345 {dimension_numbers = #tpu.dot_dimension_numbers<[1], [0], [0], [1], [0, 0, 1, 1], [], []>} : vector<8x64xf32>, vector<64x256xf32>, vector<8x256xf32> -> vector<8x256xf32>
    %cst_346 = arith.constant dense<0.000000e+00> : vector<4x256xf32>
    %693 = tpu.matmul %688, %692, %cst_346 {dimension_numbers = #tpu.dot_dimension_numbers<[1], [0], [0], [1], [0, 0, 1, 1], [], []>} : vector<4x8xf32>, vector<8x256xf32>, vector<4x256xf32> -> vector<4x256xf32>
    %694 = arith.addf %663, %693 : vector<4x256xf32>
    %c0_i32_347 = arith.constant 0 : i32
    %695 = vector.broadcast %c0_i32_347 : i32 to vector<64x256xi32>
    %696 = arith.addi %535, %695 : vector<64x256xi32>
    %c0_i32_348 = arith.constant 0 : i32
    %c15_i32_349 = arith.constant 15 : i32
    %697 = vector.broadcast %c0_i32_348 : i32 to vector<64x256xi32>
    %698 = arith.maxsi %697, %696 : vector<64x256xi32>
    %699 = vector.broadcast %c15_i32_349 : i32 to vector<64x256xi32>
    %700 = arith.minsi %699, %698 : vector<64x256xi32>
    %c1_i32_350 = arith.constant 1 : i32
    %701 = vector.broadcast %c1_i32_350 : i32 to vector<64x256xi32>
    %702 = arith.shrsi %700, %701 : vector<64x256xi32>
    %c1_i32_351 = arith.constant 1 : i32
    %703 = vector.broadcast %c1_i32_351 : i32 to vector<64x256xi32>
    %704 = arith.addi %537, %703 : vector<64x256xi32>
    %c0_i32_352 = arith.constant 0 : i32
    %c15_i32_353 = arith.constant 15 : i32
    %705 = vector.broadcast %c0_i32_352 : i32 to vector<64x256xi32>
    %706 = arith.maxsi %705, %704 : vector<64x256xi32>
    %707 = vector.broadcast %c15_i32_353 : i32 to vector<64x256xi32>
    %708 = arith.minsi %707, %706 : vector<64x256xi32>
    %c1_i32_354 = arith.constant 1 : i32
    %709 = vector.broadcast %c1_i32_354 : i32 to vector<64x256xi32>
    %710 = arith.shrsi %708, %709 : vector<64x256xi32>
    %c8_i32_355 = arith.constant 8 : i32
    %711 = vector.broadcast %c8_i32_355 : i32 to vector<64x256xi32>
    %712 = arith.muli %702, %711 : vector<64x256xi32>
    %713 = arith.addi %712, %710 : vector<64x256xi32>
    %714 = arith.cmpi eq, %532, %713 : vector<64x256xi32>
    %cst_356 = arith.constant 1.000000e+00 : f32
    %cst_357 = arith.constant 0.000000e+00 : f32
    %715 = vector.broadcast %cst_356 : f32 to vector<64x256xf32>
    %716 = vector.broadcast %cst_357 : f32 to vector<64x256xf32>
    %717 = arith.select %714, %715, %716 : vector<64x256xi1>, vector<64x256xf32>
    %c5_358 = arith.constant 5 : index
    %c0_359 = arith.constant 0 : index
    %c0_360 = arith.constant 0 : index
    %718 = vector.load %arg3[%c5_358, %c0_359, %c0_360] : memref<9x4x8xf32, #tpu.memory_space<vmem>>, vector<1x4x8xf32>
    %719 = vector.shape_cast %718 : vector<1x4x8xf32> to vector<4x8xf32>
    %cst_361 = arith.constant dense<0.000000e+00> : vector<8x256xf32>
    %720 = tpu.matmul %529, %717, %cst_361 {dimension_numbers = #tpu.dot_dimension_numbers<[1], [0], [0], [1], [0, 0, 1, 1], [], []>} : vector<8x64xf32>, vector<64x256xf32>, vector<8x256xf32> -> vector<8x256xf32>
    %cst_362 = arith.constant dense<0.000000e+00> : vector<4x256xf32>
    %721 = tpu.matmul %719, %720, %cst_362 {dimension_numbers = #tpu.dot_dimension_numbers<[1], [0], [0], [1], [0, 0, 1, 1], [], []>} : vector<4x8xf32>, vector<8x256xf32>, vector<4x256xf32> -> vector<4x256xf32>
    %722 = arith.addf %691, %721 : vector<4x256xf32>
    %cst_363 = arith.constant dense<0.000000e+00> : vector<8x256xf32>
    %723 = tpu.matmul %531, %717, %cst_363 {dimension_numbers = #tpu.dot_dimension_numbers<[1], [0], [0], [1], [0, 0, 1, 1], [], []>} : vector<8x64xf32>, vector<64x256xf32>, vector<8x256xf32> -> vector<8x256xf32>
    %cst_364 = arith.constant dense<0.000000e+00> : vector<4x256xf32>
    %724 = tpu.matmul %719, %723, %cst_364 {dimension_numbers = #tpu.dot_dimension_numbers<[1], [0], [0], [1], [0, 0, 1, 1], [], []>} : vector<4x8xf32>, vector<8x256xf32>, vector<4x256xf32> -> vector<4x256xf32>
    %725 = arith.addf %694, %724 : vector<4x256xf32>
    %c1_i32_365 = arith.constant 1 : i32
    %726 = vector.broadcast %c1_i32_365 : i32 to vector<64x256xi32>
    %727 = arith.addi %535, %726 : vector<64x256xi32>
    %c0_i32_366 = arith.constant 0 : i32
    %c15_i32_367 = arith.constant 15 : i32
    %728 = vector.broadcast %c0_i32_366 : i32 to vector<64x256xi32>
    %729 = arith.maxsi %728, %727 : vector<64x256xi32>
    %730 = vector.broadcast %c15_i32_367 : i32 to vector<64x256xi32>
    %731 = arith.minsi %730, %729 : vector<64x256xi32>
    %c1_i32_368 = arith.constant 1 : i32
    %732 = vector.broadcast %c1_i32_368 : i32 to vector<64x256xi32>
    %733 = arith.shrsi %731, %732 : vector<64x256xi32>
    %c-1_i32_369 = arith.constant -1 : i32
    %734 = vector.broadcast %c-1_i32_369 : i32 to vector<64x256xi32>
    %735 = arith.addi %537, %734 : vector<64x256xi32>
    %c0_i32_370 = arith.constant 0 : i32
    %c15_i32_371 = arith.constant 15 : i32
    %736 = vector.broadcast %c0_i32_370 : i32 to vector<64x256xi32>
    %737 = arith.maxsi %736, %735 : vector<64x256xi32>
    %738 = vector.broadcast %c15_i32_371 : i32 to vector<64x256xi32>
    %739 = arith.minsi %738, %737 : vector<64x256xi32>
    %c1_i32_372 = arith.constant 1 : i32
    %740 = vector.broadcast %c1_i32_372 : i32 to vector<64x256xi32>
    %741 = arith.shrsi %739, %740 : vector<64x256xi32>
    %c8_i32_373 = arith.constant 8 : i32
    %742 = vector.broadcast %c8_i32_373 : i32 to vector<64x256xi32>
    %743 = arith.muli %733, %742 : vector<64x256xi32>
    %744 = arith.addi %743, %741 : vector<64x256xi32>
    %745 = arith.cmpi eq, %532, %744 : vector<64x256xi32>
    %cst_374 = arith.constant 1.000000e+00 : f32
    %cst_375 = arith.constant 0.000000e+00 : f32
    %746 = vector.broadcast %cst_374 : f32 to vector<64x256xf32>
    %747 = vector.broadcast %cst_375 : f32 to vector<64x256xf32>
    %748 = arith.select %745, %746, %747 : vector<64x256xi1>, vector<64x256xf32>
    %c6_376 = arith.constant 6 : index
    %c0_377 = arith.constant 0 : index
    %c0_378 = arith.constant 0 : index
    %749 = vector.load %arg3[%c6_376, %c0_377, %c0_378] : memref<9x4x8xf32, #tpu.memory_space<vmem>>, vector<1x4x8xf32>
    %750 = vector.shape_cast %749 : vector<1x4x8xf32> to vector<4x8xf32>
    %cst_379 = arith.constant dense<0.000000e+00> : vector<8x256xf32>
    %751 = tpu.matmul %529, %748, %cst_379 {dimension_numbers = #tpu.dot_dimension_numbers<[1], [0], [0], [1], [0, 0, 1, 1], [], []>} : vector<8x64xf32>, vector<64x256xf32>, vector<8x256xf32> -> vector<8x256xf32>
    %cst_380 = arith.constant dense<0.000000e+00> : vector<4x256xf32>
    %752 = tpu.matmul %750, %751, %cst_380 {dimension_numbers = #tpu.dot_dimension_numbers<[1], [0], [0], [1], [0, 0, 1, 1], [], []>} : vector<4x8xf32>, vector<8x256xf32>, vector<4x256xf32> -> vector<4x256xf32>
    %753 = arith.addf %722, %752 : vector<4x256xf32>
    %cst_381 = arith.constant dense<0.000000e+00> : vector<8x256xf32>
    %754 = tpu.matmul %531, %748, %cst_381 {dimension_numbers = #tpu.dot_dimension_numbers<[1], [0], [0], [1], [0, 0, 1, 1], [], []>} : vector<8x64xf32>, vector<64x256xf32>, vector<8x256xf32> -> vector<8x256xf32>
    %cst_382 = arith.constant dense<0.000000e+00> : vector<4x256xf32>
    %755 = tpu.matmul %750, %754, %cst_382 {dimension_numbers = #tpu.dot_dimension_numbers<[1], [0], [0], [1], [0, 0, 1, 1], [], []>} : vector<4x8xf32>, vector<8x256xf32>, vector<4x256xf32> -> vector<4x256xf32>
    %756 = arith.addf %725, %755 : vector<4x256xf32>
    %c1_i32_383 = arith.constant 1 : i32
    %757 = vector.broadcast %c1_i32_383 : i32 to vector<64x256xi32>
    %758 = arith.addi %535, %757 : vector<64x256xi32>
    %c0_i32_384 = arith.constant 0 : i32
    %c15_i32_385 = arith.constant 15 : i32
    %759 = vector.broadcast %c0_i32_384 : i32 to vector<64x256xi32>
    %760 = arith.maxsi %759, %758 : vector<64x256xi32>
    %761 = vector.broadcast %c15_i32_385 : i32 to vector<64x256xi32>
    %762 = arith.minsi %761, %760 : vector<64x256xi32>
    %c1_i32_386 = arith.constant 1 : i32
    %763 = vector.broadcast %c1_i32_386 : i32 to vector<64x256xi32>
    %764 = arith.shrsi %762, %763 : vector<64x256xi32>
    %c0_i32_387 = arith.constant 0 : i32
    %765 = vector.broadcast %c0_i32_387 : i32 to vector<64x256xi32>
    %766 = arith.addi %537, %765 : vector<64x256xi32>
    %c0_i32_388 = arith.constant 0 : i32
    %c15_i32_389 = arith.constant 15 : i32
    %767 = vector.broadcast %c0_i32_388 : i32 to vector<64x256xi32>
    %768 = arith.maxsi %767, %766 : vector<64x256xi32>
    %769 = vector.broadcast %c15_i32_389 : i32 to vector<64x256xi32>
    %770 = arith.minsi %769, %768 : vector<64x256xi32>
    %c1_i32_390 = arith.constant 1 : i32
    %771 = vector.broadcast %c1_i32_390 : i32 to vector<64x256xi32>
    %772 = arith.shrsi %770, %771 : vector<64x256xi32>
    %c8_i32_391 = arith.constant 8 : i32
    %773 = vector.broadcast %c8_i32_391 : i32 to vector<64x256xi32>
    %774 = arith.muli %764, %773 : vector<64x256xi32>
    %775 = arith.addi %774, %772 : vector<64x256xi32>
    %776 = arith.cmpi eq, %532, %775 : vector<64x256xi32>
    %cst_392 = arith.constant 1.000000e+00 : f32
    %cst_393 = arith.constant 0.000000e+00 : f32
    %777 = vector.broadcast %cst_392 : f32 to vector<64x256xf32>
    %778 = vector.broadcast %cst_393 : f32 to vector<64x256xf32>
    %779 = arith.select %776, %777, %778 : vector<64x256xi1>, vector<64x256xf32>
    %c7_394 = arith.constant 7 : index
    %c0_395 = arith.constant 0 : index
    %c0_396 = arith.constant 0 : index
    %780 = vector.load %arg3[%c7_394, %c0_395, %c0_396] : memref<9x4x8xf32, #tpu.memory_space<vmem>>, vector<1x4x8xf32>
    %781 = vector.shape_cast %780 : vector<1x4x8xf32> to vector<4x8xf32>
    %cst_397 = arith.constant dense<0.000000e+00> : vector<8x256xf32>
    %782 = tpu.matmul %529, %779, %cst_397 {dimension_numbers = #tpu.dot_dimension_numbers<[1], [0], [0], [1], [0, 0, 1, 1], [], []>} : vector<8x64xf32>, vector<64x256xf32>, vector<8x256xf32> -> vector<8x256xf32>
    %cst_398 = arith.constant dense<0.000000e+00> : vector<4x256xf32>
    %783 = tpu.matmul %781, %782, %cst_398 {dimension_numbers = #tpu.dot_dimension_numbers<[1], [0], [0], [1], [0, 0, 1, 1], [], []>} : vector<4x8xf32>, vector<8x256xf32>, vector<4x256xf32> -> vector<4x256xf32>
    %784 = arith.addf %753, %783 : vector<4x256xf32>
    %cst_399 = arith.constant dense<0.000000e+00> : vector<8x256xf32>
    %785 = tpu.matmul %531, %779, %cst_399 {dimension_numbers = #tpu.dot_dimension_numbers<[1], [0], [0], [1], [0, 0, 1, 1], [], []>} : vector<8x64xf32>, vector<64x256xf32>, vector<8x256xf32> -> vector<8x256xf32>
    %cst_400 = arith.constant dense<0.000000e+00> : vector<4x256xf32>
    %786 = tpu.matmul %781, %785, %cst_400 {dimension_numbers = #tpu.dot_dimension_numbers<[1], [0], [0], [1], [0, 0, 1, 1], [], []>} : vector<4x8xf32>, vector<8x256xf32>, vector<4x256xf32> -> vector<4x256xf32>
    %787 = arith.addf %756, %786 : vector<4x256xf32>
    %c1_i32_401 = arith.constant 1 : i32
    %788 = vector.broadcast %c1_i32_401 : i32 to vector<64x256xi32>
    %789 = arith.addi %535, %788 : vector<64x256xi32>
    %c0_i32_402 = arith.constant 0 : i32
    %c15_i32_403 = arith.constant 15 : i32
    %790 = vector.broadcast %c0_i32_402 : i32 to vector<64x256xi32>
    %791 = arith.maxsi %790, %789 : vector<64x256xi32>
    %792 = vector.broadcast %c15_i32_403 : i32 to vector<64x256xi32>
    %793 = arith.minsi %792, %791 : vector<64x256xi32>
    %c1_i32_404 = arith.constant 1 : i32
    %794 = vector.broadcast %c1_i32_404 : i32 to vector<64x256xi32>
    %795 = arith.shrsi %793, %794 : vector<64x256xi32>
    %c1_i32_405 = arith.constant 1 : i32
    %796 = vector.broadcast %c1_i32_405 : i32 to vector<64x256xi32>
    %797 = arith.addi %537, %796 : vector<64x256xi32>
    %c0_i32_406 = arith.constant 0 : i32
    %c15_i32_407 = arith.constant 15 : i32
    %798 = vector.broadcast %c0_i32_406 : i32 to vector<64x256xi32>
    %799 = arith.maxsi %798, %797 : vector<64x256xi32>
    %800 = vector.broadcast %c15_i32_407 : i32 to vector<64x256xi32>
    %801 = arith.minsi %800, %799 : vector<64x256xi32>
    %c1_i32_408 = arith.constant 1 : i32
    %802 = vector.broadcast %c1_i32_408 : i32 to vector<64x256xi32>
    %803 = arith.shrsi %801, %802 : vector<64x256xi32>
    %c8_i32_409 = arith.constant 8 : i32
    %804 = vector.broadcast %c8_i32_409 : i32 to vector<64x256xi32>
    %805 = arith.muli %795, %804 : vector<64x256xi32>
    %806 = arith.addi %805, %803 : vector<64x256xi32>
    %807 = arith.cmpi eq, %532, %806 : vector<64x256xi32>
    %cst_410 = arith.constant 1.000000e+00 : f32
    %cst_411 = arith.constant 0.000000e+00 : f32
    %808 = vector.broadcast %cst_410 : f32 to vector<64x256xf32>
    %809 = vector.broadcast %cst_411 : f32 to vector<64x256xf32>
    %810 = arith.select %807, %808, %809 : vector<64x256xi1>, vector<64x256xf32>
    %c8_412 = arith.constant 8 : index
    %c0_413 = arith.constant 0 : index
    %c0_414 = arith.constant 0 : index
    %811 = vector.load %arg3[%c8_412, %c0_413, %c0_414] : memref<9x4x8xf32, #tpu.memory_space<vmem>>, vector<1x4x8xf32>
    %812 = vector.shape_cast %811 : vector<1x4x8xf32> to vector<4x8xf32>
    %cst_415 = arith.constant dense<0.000000e+00> : vector<8x256xf32>
    %813 = tpu.matmul %529, %810, %cst_415 {dimension_numbers = #tpu.dot_dimension_numbers<[1], [0], [0], [1], [0, 0, 1, 1], [], []>} : vector<8x64xf32>, vector<64x256xf32>, vector<8x256xf32> -> vector<8x256xf32>
    %cst_416 = arith.constant dense<0.000000e+00> : vector<4x256xf32>
    %814 = tpu.matmul %812, %813, %cst_416 {dimension_numbers = #tpu.dot_dimension_numbers<[1], [0], [0], [1], [0, 0, 1, 1], [], []>} : vector<4x8xf32>, vector<8x256xf32>, vector<4x256xf32> -> vector<4x256xf32>
    %815 = arith.addf %784, %814 : vector<4x256xf32>
    %cst_417 = arith.constant dense<0.000000e+00> : vector<8x256xf32>
    %816 = tpu.matmul %531, %810, %cst_417 {dimension_numbers = #tpu.dot_dimension_numbers<[1], [0], [0], [1], [0, 0, 1, 1], [], []>} : vector<8x64xf32>, vector<64x256xf32>, vector<8x256xf32> -> vector<8x256xf32>
    %cst_418 = arith.constant dense<0.000000e+00> : vector<4x256xf32>
    %817 = tpu.matmul %812, %816, %cst_418 {dimension_numbers = #tpu.dot_dimension_numbers<[1], [0], [0], [1], [0, 0, 1, 1], [], []>} : vector<4x8xf32>, vector<8x256xf32>, vector<4x256xf32> -> vector<4x256xf32>
    %818 = arith.addf %787, %817 : vector<4x256xf32>
    %cst_419 = arith.constant 0.000000e+00 : f32
    %819 = vector.broadcast %cst_419 : f32 to vector<4x1xf32>
    %cst_420 = arith.constant dense<0.000000e+00> : vector<4xf32>
    %820 = vector.multi_reduction <add>, %815, %cst_420 [1] : vector<4x256xf32> to vector<4xf32>
    %821 = vector.shape_cast %820 : vector<4xf32> to vector<4x1xf32>
    %822 = arith.addf %819, %821 : vector<4x1xf32>
    %cst_421 = arith.constant dense<0.000000e+00> : vector<4xf32>
    %823 = vector.multi_reduction <add>, %818, %cst_421 [1] : vector<4x256xf32> to vector<4xf32>
    %824 = vector.shape_cast %823 : vector<4xf32> to vector<4x1xf32>
    %825 = arith.addf %822, %824 : vector<4x1xf32>
    %cst_422 = arith.constant 0.001953125 : f32
    %826 = vector.broadcast %cst_422 : f32 to vector<4x1xf32>
    %827 = arith.mulf %825, %826 : vector<4x1xf32>
    %cst_423 = arith.constant 0.000000e+00 : f32
    %828 = vector.broadcast %cst_423 : f32 to vector<4x1xf32>
    %829 = vector.broadcast %827 : vector<4x1xf32> to vector<4x256xf32>
    %830 = arith.subf %815, %829 : vector<4x256xf32>
    %831 = arith.mulf %830, %830 : vector<4x256xf32>
    %cst_424 = arith.constant dense<0.000000e+00> : vector<4xf32>
    %832 = vector.multi_reduction <add>, %831, %cst_424 [1] : vector<4x256xf32> to vector<4xf32>
    %833 = vector.shape_cast %832 : vector<4xf32> to vector<4x1xf32>
    %834 = arith.addf %828, %833 : vector<4x1xf32>
    %835 = vector.broadcast %827 : vector<4x1xf32> to vector<4x256xf32>
    %836 = arith.subf %818, %835 : vector<4x256xf32>
    %837 = arith.mulf %836, %836 : vector<4x256xf32>
    %cst_425 = arith.constant dense<0.000000e+00> : vector<4xf32>
    %838 = vector.multi_reduction <add>, %837, %cst_425 [1] : vector<4x256xf32> to vector<4xf32>
    %839 = vector.shape_cast %838 : vector<4xf32> to vector<4x1xf32>
    %840 = arith.addf %834, %839 : vector<4x1xf32>
    %cst_426 = arith.constant 0.001953125 : f32
    %841 = vector.broadcast %cst_426 : f32 to vector<4x1xf32>
    %842 = arith.mulf %840, %841 : vector<4x1xf32>
    %c0_427 = arith.constant 0 : index
    %c0_428 = arith.constant 0 : index
    %843 = vector.load %arg4[%c0_427, %c0_428] : memref<4x1xf32, #tpu.memory_space<vmem>>, vector<4x1xf32>
    %cst_429 = arith.constant 9.99999974E-6 : f32
    %844 = vector.broadcast %cst_429 : f32 to vector<4x1xf32>
    %845 = arith.addf %842, %844 : vector<4x1xf32>
    %846 = math.rsqrt %845 : vector<4x1xf32>
    %847 = arith.mulf %843, %846 : vector<4x1xf32>
    %c0_430 = arith.constant 0 : index
    %c0_431 = arith.constant 0 : index
    %848 = vector.load %arg5[%c0_430, %c0_431] : memref<4x1xf32, #tpu.memory_space<vmem>>, vector<4x1xf32>
    %849 = arith.mulf %827, %847 : vector<4x1xf32>
    %850 = arith.subf %848, %849 : vector<4x1xf32>
    %851 = vector.broadcast %847 : vector<4x1xf32> to vector<4x256xf32>
    %852 = arith.mulf %815, %851 : vector<4x256xf32>
    %853 = vector.broadcast %850 : vector<4x1xf32> to vector<4x256xf32>
    %854 = arith.addf %852, %853 : vector<4x256xf32>
    %c0_432 = arith.constant 0 : index
    %c4_433 = arith.constant 4 : index
    %c0_434 = arith.constant 0 : index
    %855 = vector.load %arg6[%c0_432, %c4_433, %c0_434] : memref<2x8x256xf32, #tpu.memory_space<vmem>>, vector<1x4x256xf32>
    %856 = vector.shape_cast %855 : vector<1x4x256xf32> to vector<4x256xf32>
    %857 = vector.shape_cast %854 : vector<4x256xf32> to vector<1x4x256xf32>
    tpu.vector_store %arg6[%c0_432, %c4_433, %c0_434], %857 {strides = array<i32>} : memref<2x8x256xf32, #tpu.memory_space<vmem>>, vector<1x4x256xf32>,
    %858 = vector.broadcast %847 : vector<4x1xf32> to vector<4x256xf32>
    %859 = arith.mulf %818, %858 : vector<4x256xf32>
    %860 = vector.broadcast %850 : vector<4x1xf32> to vector<4x256xf32>
    %861 = arith.addf %859, %860 : vector<4x256xf32>
    %c1_435 = arith.constant 1 : index
    %c4_436 = arith.constant 4 : index
    %c0_437 = arith.constant 0 : index
    %862 = vector.load %arg6[%c1_435, %c4_436, %c0_437] : memref<2x8x256xf32, #tpu.memory_space<vmem>>, vector<1x4x256xf32>
    %863 = vector.shape_cast %862 : vector<1x4x256xf32> to vector<4x256xf32>
    %864 = vector.shape_cast %861 : vector<4x256xf32> to vector<1x4x256xf32>
    tpu.vector_store %arg6[%c1_435, %c4_436, %c0_437], %864 {strides = array<i32>} : memref<2x8x256xf32, #tpu.memory_space<vmem>>, vector<1x4x256xf32>,
    return
  }
  func.func @transform_0(%arg0: i32) -> (i32, i32, i32) {
    %c0_i32 = arith.constant 0 : i32
    %c0_i32_0 = arith.constant 0 : i32
    %c0_i32_1 = arith.constant 0 : i32
    %c0_i32_2 = arith.constant 0 : i32
    return %c0_i32, %c0_i32_0, %c0_i32_1 : i32, i32, i32
  }
  func.func @transform_1(%arg0: i32) -> (i32, i32, i32) {
    %c0_i32 = arith.constant 0 : i32
    %c0_i32_0 = arith.constant 0 : i32
    %c0_i32_1 = arith.constant 0 : i32
    %c0_i32_2 = arith.constant 0 : i32
    return %c0_i32, %c0_i32_0, %c0_i32_1 : i32, i32, i32
  }
  func.func @transform_2(%arg0: i32) -> (i32, i32, i32) {
    %c0_i32 = arith.constant 0 : i32
    %c0_i32_0 = arith.constant 0 : i32
    %c0_i32_1 = arith.constant 0 : i32
    %c0_i32_2 = arith.constant 0 : i32
    return %c0_i32, %c0_i32_0, %c0_i32_1 : i32, i32, i32
  }
  func.func @transform_3(%arg0: i32) -> (i32, i32) {
    %c0_i32 = arith.constant 0 : i32
    %c0_i32_0 = arith.constant 0 : i32
    %c0_i32_1 = arith.constant 0 : i32
    return %c0_i32, %c0_i32_0 : i32, i32
  }
  func.func @transform_4(%arg0: i32) -> (i32, i32) {
    %c0_i32 = arith.constant 0 : i32
    %c0_i32_0 = arith.constant 0 : i32
    %c0_i32_1 = arith.constant 0 : i32
    return %c0_i32, %c0_i32_0 : i32, i32
  }
  func.func @transform_5(%arg0: i32) -> (i32, i32, i32) {
    %c0_i32 = arith.constant 0 : i32
    %c0_i32_0 = arith.constant 0 : i32
    %c0_i32_1 = arith.constant 0 : i32
    %c0_i32_2 = arith.constant 0 : i32
    return %c0_i32, %c0_i32_0, %c0_i32_1 : i32, i32, i32
  }
}

</mosaic_0001>

<llo_original>
// kernel: unet_skip_block_forward.1
$region0: #{unet_skip_block_forward.1}
  #allocation0 [shape = 'u32[]', space=smem, size = 0x4, offset = 0x4, fixed_abs, tag = 'smem constant byte address 0x4 - core index']
  #allocation1 [shape = 'u32[144,128]{1,0:T(1,128)}', space=vmem, size = 0x12000, scoped, tag = 'internal scratch']
  %s0 = inlined_call_operand.vmem [shape: f32[2,4,256], index: 0, kind: input, shape index: {}]
  %s1 = inlined_call_operand.vmem [shape: f32[16,8,4], index: 1, kind: input, shape index: {}]
  %s2 = inlined_call_operand.vmem [shape: f32[9,4,8], index: 2, kind: input, shape index: {}]
  %s3 = inlined_call_operand.vmem [shape: f32[4,1], index: 3, kind: input, shape index: {}]
  %s4 = inlined_call_operand.vmem [shape: f32[4,1], index: 4, kind: input, shape index: {}]
  %s5 = inlined_call_operand.vmem [shape: f32[2,8,256], index: 5, kind: output, shape index: {}]
  %s6 = sld [smem:[#allocation0]]
  $region30: #{unet_skip_block_forward.1} parent=0
    _
  %s8 = ssub.s32 1, %s6
  %s9 = scalar_select 0, %s8, %s6
  // Predicated region
  $region2: #{unet_skip_block_forward.1} parent=0 // pred_check
    _
  $region3: #{unet_skip_block_forward.1} parent=0 // pred_check_branch
    %11 = sbr.rel (0) target = $region5
  $region4: #{unet_skip_block_forward.1} parent=0 // pred_region
    _
  $region5: #{unet_skip_block_forward.1} parent=0 // pred_fallthru
    _
  // Predicated region
  $region6: #{unet_skip_block_forward.1} parent=0 // pred_check
    _
  $region7: #{unet_skip_block_forward.1} parent=0 // pred_check_branch
    %13 = sbr.rel (0) target = $region9
  $region8: #{unet_skip_block_forward.1} parent=0 // pred_region
    _
  $region9: #{unet_skip_block_forward.1} parent=0 // pred_fallthru
    _
  // Predicated region
  $region10: #{unet_skip_block_forward.1} parent=0 // pred_check
    _
  $region11: #{unet_skip_block_forward.1} parent=0 // pred_check_branch
    %15 = sbr.rel (0) target = $region13
  $region12: #{unet_skip_block_forward.1} parent=0 // pred_region
    _
  $region13: #{unet_skip_block_forward.1} parent=0 // pred_fallthru
    _
  // Predicated region
  $region14: #{unet_skip_block_forward.1} parent=0 // pred_check
    _
  $region15: #{unet_skip_block_forward.1} parent=0 // pred_check_branch
    %17 = sbr.rel (0) target = $region17
  $region16: #{unet_skip_block_forward.1} parent=0 // pred_region
    _
  $region17: #{unet_skip_block_forward.1} parent=0 // pred_fallthru
    _
  // Predicated region
  $region18: #{unet_skip_block_forward.1} parent=0 // pred_check
    _
  $region19: #{unet_skip_block_forward.1} parent=0 // pred_check_branch
    %19 = sbr.rel (0) target = $region21
  $region20: #{unet_skip_block_forward.1} parent=0 // pred_region
    _
  $region21: #{unet_skip_block_forward.1} parent=0 // pred_fallthru
    _
  %v20 = vld [vmem:[%s0] sm:$0xff]
  %vm21 = vcmp.ge.f32.partialorder %v20, 0.0
  %v22 = vmul.f32 %v20, 0.2
  %v23 = vsel %vm21, %v20, %v22
  %v25 = vcombine.high %v23, %v23
  %27 = vst [vmem:[%s5] sm:$0xf] %v23
  %28 = vst [vmem:[%s5 + $0x8] sm:$0xf] %v25
  %s29 = scalar_lea.vmem %s0, 8
  %v30 = vld [vmem:[%s29] sm:$0xff]
  %vm31 = vcmp.ge.f32.partialorder %v30, 0.0
  %v32 = vmul.f32 %v30, 0.2
  %v33 = vsel %vm31, %v30, %v32
  %v35 = vcombine.high %v33, %v33
  %s37 = scalar_lea.vmem %s5, 16
  %38 = vst [vmem:[%s37] sm:$0xf] %v33
  %39 = vst [vmem:[%s37 + $0x8] sm:$0xf] %v35
  %v40 = vlaneseq
  %v41 = vshrl.u32 %v40, 7
  %v42 = vadd.s32 %v41, 8
  %v43 = vadd.s32 %v41, 16
  %v44 = vadd.s32 %v41, 24
  %v45 = vadd.s32 %v41, 32
  %v46 = vadd.s32 %v41, 40
  %v47 = vadd.s32 %v41, 48
  %v48 = vadd.s32 %v41, 56
  %v49 = vadd.s32 %v41, 64
  %v50 = vadd.s32 %v41, 72
  %v51 = vadd.s32 %v41, 80
  %v52 = vadd.s32 %v41, 88
  %v53 = vadd.s32 %v41, 96
  %v54 = vadd.s32 %v41, 104
  %v55 = vadd.s32 %v41, 112
  %v56 = vadd.s32 %v41, 120
  %v57 = vadd.s32 %v41, 128
  %v58 = vadd.s32 %v41, 136
  %v59 = vadd.s32 %v41, 144
  %v60 = vadd.s32 %v41, 152
  %v61 = vadd.s32 %v41, 160
  %v62 = vadd.s32 %v41, 168
  %v63 = vadd.s32 %v41, 176
  %v64 = vadd.s32 %v41, 184
  %v65 = vadd.s32 %v41, 192
  %v66 = vadd.s32 %v41, 200
  %v67 = vadd.s32 %v41, 208
  %v68 = vadd.s32 %v41, 216
  %v69 = vadd.s32 %v41, 224
  %v70 = vadd.s32 %v41, 232
  %v71 = vadd.s32 %v41, 240
  %v72 = vadd.s32 %v41, 248
  %v73 = vlaneseq
  %v74 = vand.u32 %v73, 127
  %v75 = vshra.s32 %v74, 3
  %v76 = vmul.u32 %v75, 2
  %v77 = vand.u32 %v74, 7
  %v78 = vmul.u32 %v77, 2
  %v79 = vadd.s32 %v76, 4294967295
  %v80 = vadd.s32 %v78, 4294967295
  %vm81 = vcmp.ge.s32.totalorder %v79, 0
  %vm82 = vcmp.lt.s32.totalorder %v79, 16
  %vm83 = vmand %vm81, %vm82
  %vm84 = vcmp.ge.s32.totalorder %v80, 0
  %vm85 = vmand %vm83, %vm84
  %vm86 = vcmp.lt.s32.totalorder %v80, 16
  %vm87 = vmand %vm85, %vm86
  %v88 = vmul.u32 %v79, 16
  %v89 = vadd.s32 %v88, %v80
  %vm90 = vcmp.eq.s32.totalorder %v41, %v89
  %vm91 = vcmp.eq.s32.totalorder %v42, %v89
  %vm92 = vcmp.eq.s32.totalorder %v43, %v89
  %vm93 = vcmp.eq.s32.totalorder %v44, %v89
  %vm94 = vcmp.eq.s32.totalorder %v45, %v89
  %vm95 = vcmp.eq.s32.totalorder %v46, %v89
  %vm96 = vcmp.eq.s32.totalorder %v47, %v89
  %vm97 = vcmp.eq.s32.totalorder %v48, %v89
  %vm98 = vcmp.eq.s32.totalorder %v49, %v89
  %vm99 = vcmp.eq.s32.totalorder %v50, %v89
  %vm100 = vcmp.eq.s32.totalorder %v51, %v89
  %vm101 = vcmp.eq.s32.totalorder %v52, %v89
  %vm102 = vcmp.eq.s32.totalorder %v53, %v89
  %vm103 = vcmp.eq.s32.totalorder %v54, %v89
  %vm104 = vcmp.eq.s32.totalorder %v55, %v89
  %vm105 = vcmp.eq.s32.totalorder %v56, %v89
  %vm106 = vcmp.eq.s32.totalorder %v57, %v89
  %vm107 = vcmp.eq.s32.totalorder %v58, %v89
  %vm108 = vcmp.eq.s32.totalorder %v59, %v89
  %vm109 = vcmp.eq.s32.totalorder %v60, %v89
  %vm110 = vcmp.eq.s32.totalorder %v61, %v89
  %vm111 = vcmp.eq.s32.totalorder %v62, %v89
  %vm112 = vcmp.eq.s32.totalorder %v63, %v89
  %vm113 = vcmp.eq.s32.totalorder %v64, %v89
  %vm114 = vcmp.eq.s32.totalorder %v65, %v89
  %vm115 = vcmp.eq.s32.totalorder %v66, %v89
  %vm116 = vcmp.eq.s32.totalorder %v67, %v89
  %vm117 = vcmp.eq.s32.totalorder %v68, %v89
  %vm118 = vcmp.eq.s32.totalorder %v69, %v89
  %vm119 = vcmp.eq.s32.totalorder %v70, %v89
  %vm120 = vcmp.eq.s32.totalorder %v71, %v89
  %vm121 = vcmp.eq.s32.totalorder %v72, %v89
  %vm122 = vmand %vm87, %vm90
  %vm123 = vmand %vm87, %vm91
  %vm124 = vmand %vm87, %vm92
  %vm125 = vmand %vm87, %vm93
  %vm126 = vmand %vm87, %vm94
  %vm127 = vmand %vm87, %vm95
  %vm128 = vmand %vm87, %vm96
  %vm129 = vmand %vm87, %vm97
  %vm130 = vmand %vm87, %vm98
  %vm131 = vmand %vm87, %vm99
  %vm132 = vmand %vm87, %vm100
  %vm133 = vmand %vm87, %vm101
  %vm134 = vmand %vm87, %vm102
  %vm135 = vmand %vm87, %vm103
  %vm136 = vmand %vm87, %vm104
  %vm137 = vmand %vm87, %vm105
  %vm138 = vmand %vm87, %vm106
  %vm139 = vmand %vm87, %vm107
  %vm140 = vmand %vm87, %vm108
  %vm141 = vmand %vm87, %vm109
  %vm142 = vmand %vm87, %vm110
  %vm143 = vmand %vm87, %vm111
  %vm144 = vmand %vm87, %vm112
  %vm145 = vmand %vm87, %vm113
  %vm146 = vmand %vm87, %vm114
  %vm147 = vmand %vm87, %vm115
  %vm148 = vmand %vm87, %vm116
  %vm149 = vmand %vm87, %vm117
  %vm150 = vmand %vm87, %vm118
  %vm151 = vmand %vm87, %vm119
  %vm152 = vmand %vm87, %vm120
  %vm153 = vmand %vm87, %vm121
  %v154 = vsel %vm122, 1.0, 0.0
  %v155 = vsel %vm123, 1.0, 0.0
  %v156 = vsel %vm124, 1.0, 0.0
  %v157 = vsel %vm125, 1.0, 0.0
  %v158 = vsel %vm126, 1.0, 0.0
  %v159 = vsel %vm127, 1.0, 0.0
  %v160 = vsel %vm128, 1.0, 0.0
  %v161 = vsel %vm129, 1.0, 0.0
  %v162 = vsel %vm130, 1.0, 0.0
  %v163 = vsel %vm131, 1.0, 0.0
  %v164 = vsel %vm132, 1.0, 0.0
  %v165 = vsel %vm133, 1.0, 0.0
  %v166 = vsel %vm134, 1.0, 0.0
  %v167 = vsel %vm135, 1.0, 0.0
  %v168 = vsel %vm136, 1.0, 0.0
  %v169 = vsel %vm137, 1.0, 0.0
  %v170 = vsel %vm138, 1.0, 0.0
  %v171 = vsel %vm139, 1.0, 0.0
  %v172 = vsel %vm140, 1.0, 0.0
  %v173 = vsel %vm141, 1.0, 0.0
  %v174 = vsel %vm142, 1.0, 0.0
  %v175 = vsel %vm143, 1.0, 0.0
  %v176 = vsel %vm144, 1.0, 0.0
  %v177 = vsel %vm145, 1.0, 0.0
  %v178 = vsel %vm146, 1.0, 0.0
  %v179 = vsel %vm147, 1.0, 0.0
  %v180 = vsel %vm148, 1.0, 0.0
  %v181 = vsel %vm149, 1.0, 0.0
  %v182 = vsel %vm150, 1.0, 0.0
  %v183 = vsel %vm151, 1.0, 0.0
  %v184 = vsel %vm152, 1.0, 0.0
  %v185 = vsel %vm153, 1.0, 0.0
  %v186 = vld [vmem:[%s1] sm:$0xff]
  %187 = vmatprep.subr.mxu0 0.0
  %188 = vmatpush1.msra.mxu0 %v154
  %189 = vmatprep.subr.mxu0 0.0
  %190 = vmatpush1.msra.mxu0 %v155
  %191 = vmatprep.subr.mxu0 0.0
  %192 = vmatpush1.msra.mxu0 %v156
  %193 = vmatprep.subr.mxu0 0.0
  %194 = vmatpush1.msra.mxu0 %v157
  %195 = vmatprep.subr.mxu0 0.0
  %196 = vmatpush1.msra.mxu0 %v158
  %197 = vmatprep.subr.mxu0 0.0
  %198 = vmatpush1.msra.mxu0 %v159
  %199 = vmatprep.subr.mxu0 0.0
  %200 = vmatpush1.msra.mxu0 %v160
  %201 = vmatprep.subr.mxu0 0.0
  %202 = vmatpush1.msra.mxu0 %v161
  %203 = vmatprep.subr.mxu0 0.0
  %204 = vmatpush1.msra.mxu0 %v162
  %205 = vmatprep.subr.mxu0 0.0
  %206 = vmatpush1.msra.mxu0 %v163
  %207 = vmatprep.subr.mxu0 0.0
  %208 = vmatpush1.msra.mxu0 %v164
  %209 = vmatprep.subr.mxu0 0.0
  %210 = vmatpush1.msra.mxu0 %v165
  %211 = vmatprep.subr.mxu0 0.0
  %212 = vmatpush1.msra.mxu0 %v166
  %213 = vmatprep.subr.mxu0 0.0
  %214 = vmatpush1.msra.mxu0 %v167
  %215 = vmatprep.subr.mxu0 0.0
  %216 = vmatpush1.msra.mxu0 %v168
  %217 = vmatprep.subr.mxu0 0.0
  %218 = vmatpush1.msra.mxu0 %v169
  %219 = vmatprep.subr.mxu0 0.0
  %220 = vmatpush1.msra.mxu0 %v170
  %221 = vmatprep.subr.mxu0 0.0
  %222 = vmatpush1.msra.mxu0 %v171
  %223 = vmatprep.subr.mxu0 0.0
  %224 = vmatpush1.msra.mxu0 %v172
  %225 = vmatprep.subr.mxu0 0.0
  %226 = vmatpush1.msra.mxu0 %v173
  %227 = vmatprep.subr.mxu0 0.0
  %228 = vmatpush1.msra.mxu0 %v174
  %229 = vmatprep.subr.mxu0 0.0
  %230 = vmatpush1.msra.mxu0 %v175
  %231 = vmatprep.subr.mxu0 0.0
  %232 = vmatpush1.msra.mxu0 %v176
  %233 = vmatprep.subr.mxu0 0.0
  %234 = vmatpush1.msra.mxu0 %v177
  %235 = vmatprep.subr.mxu0 0.0
  %236 = vmatpush1.msra.mxu0 %v178
  %237 = vmatprep.subr.mxu0 0.0
  %238 = vmatpush1.msra.mxu0 %v179
  %239 = vmatprep.subr.mxu0 0.0
  %240 = vmatpush1.msra.mxu0 %v180
  %241 = vmatprep.subr.mxu0 0.0
  %242 = vmatpush1.msra.mxu0 %v181
  %243 = vmatprep.subr.mxu0 0.0
  %244 = vmatpush1.msra.mxu0 %v182
  %245 = vmatprep.subr.mxu0 0.0
  %246 = vmatpush1.msra.mxu0 %v183
  %247 = vmatprep.subr.mxu0 0.0
  %248 = vmatpush1.msra.mxu0 %v184
  %249 = vmatprep.subr.mxu0 0.0
  %250 = vmatpush1.msra.mxu0 %v185
  %251 = vmatprep.mubr.f32.mxu0 %v25
  %252 = vmatmul.mubr.f32.gmra.mrb[0].mxu0 %v23
  %v253 = vpop.f32.mrb[0].mxu0
  %v254 = vadd.f32 0.0, %v253
  %v255 = vpop.f32.mrb[0].mxu0
  %256 = vdwg.mxu0
  %257 = vmatprep.subr.mxu0 0.0
  %258 = vmatpush1.msra.mxu0 %v154
  %259 = vmatprep.subr.mxu0 0.0
  %260 = vmatpush1.msra.mxu0 %v155
  %261 = vmatprep.subr.mxu0 0.0
  %262 = vmatpush1.msra.mxu0 %v156
  %263 = vmatprep.subr.mxu0 0.0
  %264 = vmatpush1.msra.mxu0 %v157
  %265 = vmatprep.subr.mxu0 0.0
  %266 = vmatpush1.msra.mxu0 %v158
  %267 = vmatprep.subr.mxu0 0.0
  %268 = vmatpush1.msra.mxu0 %v159
  %269 = vmatprep.subr.mxu0 0.0
  %270 = vmatpush1.msra.mxu0 %v160
  %271 = vmatprep.subr.mxu0 0.0
  %272 = vmatpush1.msra.mxu0 %v161
  %273 = vmatprep.subr.mxu0 0.0
  %274 = vmatpush1.msra.mxu0 %v162
  %275 = vmatprep.subr.mxu0 0.0
  %276 = vmatpush1.msra.mxu0 %v163
  %277 = vmatprep.subr.mxu0 0.0
  %278 = vmatpush1.msra.mxu0 %v164
  %279 = vmatprep.subr.mxu0 0.0
  %280 = vmatpush1.msra.mxu0 %v165
  %281 = vmatprep.subr.mxu0 0.0
  %282 = vmatpush1.msra.mxu0 %v166
  %283 = vmatprep.subr.mxu0 0.0
  %284 = vmatpush1.msra.mxu0 %v167
  %285 = vmatprep.subr.mxu0 0.0
  %286 = vmatpush1.msra.mxu0 %v168
  %287 = vmatprep.subr.mxu0 0.0
  %288 = vmatpush1.msra.mxu0 %v169
  %289 = vmatprep.subr.mxu0 0.0
  %290 = vmatpush1.msra.mxu0 %v170
  %291 = vmatprep.subr.mxu0 0.0
  %292 = vmatpush1.msra.mxu0 %v171
  %293 = vmatprep.subr.mxu0 0.0
  %294 = vmatpush1.msra.mxu0 %v172
  %295 = vmatprep.subr.mxu0 0.0
  %296 = vmatpush1.msra.mxu0 %v173
  %297 = vmatprep.subr.mxu0 0.0
  %298 = vmatpush1.msra.mxu0 %v174
  %299 = vmatprep.subr.mxu0 0.0
  %300 = vmatpush1.msra.mxu0 %v175
  %301 = vmatprep.subr.mxu0 0.0
  %302 = vmatpush1.msra.mxu0 %v176
  %303 = vmatprep.subr.mxu0 0.0
  %304 = vmatpush1.msra.mxu0 %v177
  %305 = vmatprep.subr.mxu0 0.0
  %306 = vmatpush1.msra.mxu0 %v178
  %307 = vmatprep.subr.mxu0 0.0
  %308 = vmatpush1.msra.mxu0 %v179
  %309 = vmatprep.subr.mxu0 0.0
  %310 = vmatpush1.msra.mxu0 %v180
  %311 = vmatprep.subr.mxu0 0.0
  %312 = vmatpush1.msra.mxu0 %v181
  %313 = vmatprep.subr.mxu0 0.0
  %314 = vmatpush1.msra.mxu0 %v182
  %315 = vmatprep.subr.mxu0 0.0
  %316 = vmatpush1.msra.mxu0 %v183
  %317 = vmatprep.subr.mxu0 0.0
  %318 = vmatpush1.msra.mxu0 %v184
  %319 = vmatprep.subr.mxu0 0.0
  %320 = vmatpush1.msra.mxu0 %v185
  %321 = vmatprep.mubr.f32.mxu0 %v35
  %322 = vmatmul.mubr.f32.gmra.mrb[0].mxu0 %v33
  %v323 = vpop.f32.mrb[0].mxu0
  %v324 = vadd.f32 0.0, %v323
  %v325 = vpop.f32.mrb[0].mxu0
  %326 = vdwg.mxu0
  %vm327 = vcmp.ge.s32.totalorder %v78, 0
  %vm328 = vmand %vm83, %vm327
  %vm329 = vcmp.lt.s32.totalorder %v78, 16
  %vm330 = vmand %vm328, %vm329
  %v331 = vadd.s32 %v88, %v78
  %vm332 = vcmp.eq.s32.totalorder %v41, %v331
  %vm333 = vcmp.eq.s32.totalorder %v42, %v331
  %vm334 = vcmp.eq.s32.totalorder %v43, %v331
  %vm335 = vcmp.eq.s32.totalorder %v44, %v331
  %vm336 = vcmp.eq.s32.totalorder %v45, %v331
  %vm337 = vcmp.eq.s32.totalorder %v46, %v331
  %vm338 = vcmp.eq.s32.totalorder %v47, %v331
  %vm339 = vcmp.eq.s32.totalorder %v48, %v331
  %vm340 = vcmp.eq.s32.totalorder %v49, %v331
  %vm341 = vcmp.eq.s32.totalorder %v50, %v331
  %vm342 = vcmp.eq.s32.totalorder %v51, %v331
  %vm343 = vcmp.eq.s32.totalorder %v52, %v331
  %vm344 = vcmp.eq.s32.totalorder %v53, %v331
  %vm345 = vcmp.eq.s32.totalorder %v54, %v331
  %vm346 = vcmp.eq.s32.totalorder %v55, %v331
  %vm347 = vcmp.eq.s32.totalorder %v56, %v331
  %vm348 = vcmp.eq.s32.totalorder %v57, %v331
  %vm349 = vcmp.eq.s32.totalorder %v58, %v331
  %vm350 = vcmp.eq.s32.totalorder %v59, %v331
  %vm351 = vcmp.eq.s32.totalorder %v60, %v331
  %vm352 = vcmp.eq.s32.totalorder %v61, %v331
  %vm353 = vcmp.eq.s32.totalorder %v62, %v331
  %vm354 = vcmp.eq.s32.totalorder %v63, %v331
  %vm355 = vcmp.eq.s32.totalorder %v64, %v331
  %vm356 = vcmp.eq.s32.totalorder %v65, %v331
  %vm357 = vcmp.eq.s32.totalorder %v66, %v331
  %vm358 = vcmp.eq.s32.totalorder %v67, %v331
  %vm359 = vcmp.eq.s32.totalorder %v68, %v331
  %vm360 = vcmp.eq.s32.totalorder %v69, %v331
  %vm361 = vcmp.eq.s32.totalorder %v70, %v331
  %vm362 = vcmp.eq.s32.totalorder %v71, %v331
  %vm363 = vcmp.eq.s32.totalorder %v72, %v331
  %vm364 = vmand %vm330, %vm332
  %vm365 = vmand %vm330, %vm333
  %vm366 = vmand %vm330, %vm334
  %vm367 = vmand %vm330, %vm335
  %vm368 = vmand %vm330, %vm336
  %vm369 = vmand %vm330, %vm337
  %vm370 = vmand %vm330, %vm338
  %vm371 = vmand %vm330, %vm339
  %vm372 = vmand %vm330, %vm340
  %vm373 = vmand %vm330, %vm341
  %vm374 = vmand %vm330, %vm342
  %vm375 = vmand %vm330, %vm343
  %vm376 = vmand %vm330, %vm344
  %vm377 = vmand %vm330, %vm345
  %vm378 = vmand %vm330, %vm346
  %vm379 = vmand %vm330, %vm347
  %vm380 = vmand %vm330, %vm348
  %vm381 = vmand %vm330, %vm349
  %vm382 = vmand %vm330, %vm350
  %vm383 = vmand %vm330, %vm351
  %vm384 = vmand %vm330, %vm352
  %vm385 = vmand %vm330, %vm353
  %vm386 = vmand %vm330, %vm354
  %vm387 = vmand %vm330, %vm355
  %vm388 = vmand %vm330, %vm356
  %vm389 = vmand %vm330, %vm357
  %vm390 = vmand %vm330, %vm358
  %vm391 = vmand %vm330, %vm359
  %vm392 = vmand %vm330, %vm360
  %vm393 = vmand %vm330, %vm361
  %vm394 = vmand %vm330, %vm362
  %vm395 = vmand %vm330, %vm363
  %v396 = vsel %vm364, 1.0, 0.0
  %v397 = vsel %vm365, 1.0, 0.0
  %v398 = vsel %vm366, 1.0, 0.0
  %v399 = vsel %vm367, 1.0, 0.0
  %v400 = vsel %vm368, 1.0, 0.0
  %v401 = vsel %vm369, 1.0, 0.0
  %v402 = vsel %vm370, 1.0, 0.0
  %v403 = vsel %vm371, 1.0, 0.0
  %v404 = vsel %vm372, 1.0, 0.0
  %v405 = vsel %vm373, 1.0, 0.0
  %v406 = vsel %vm374, 1.0, 0.0
  %v407 = vsel %vm375, 1.0, 0.0
  %v408 = vsel %vm376, 1.0, 0.0
  %v409 = vsel %vm377, 1.0, 0.0
  %v410 = vsel %vm378, 1.0, 0.0
  %v411 = vsel %vm379, 1.0, 0.0
  %v412 = vsel %vm380, 1.0, 0.0
  %v413 = vsel %vm381, 1.0, 0.0
  %v414 = vsel %vm382, 1.0, 0.0
  %v415 = vsel %vm383, 1.0, 0.0
  %v416 = vsel %vm384, 1.0, 0.0
  %v417 = vsel %vm385, 1.0, 0.0
  %v418 = vsel %vm386, 1.0, 0.0
  %v419 = vsel %vm387, 1.0, 0.0
  %v420 = vsel %vm388, 1.0, 0.0
  %v421 = vsel %vm389, 1.0, 0.0
  %v422 = vsel %vm390, 1.0, 0.0
  %v423 = vsel %vm391, 1.0, 0.0
  %v424 = vsel %vm392, 1.0, 0.0
  %v425 = vsel %vm393, 1.0, 0.0
  %v426 = vsel %vm394, 1.0, 0.0
  %v427 = vsel %vm395, 1.0, 0.0
  %s428 = scalar_lea.vmem %s1, 8
  %v429 = vld [vmem:[%s428] sm:$0xff]
  %430 = vmatprep.subr.mxu0 0.0
  %431 = vmatpush1.msra.mxu0 %v396
  %432 = vmatprep.subr.mxu0 0.0
  %433 = vmatpush1.msra.mxu0 %v397
  %434 = vmatprep.subr.mxu0 0.0
  %435 = vmatpush1.msra.mxu0 %v398
  %436 = vmatprep.subr.mxu0 0.0
  %437 = vmatpush1.msra.mxu0 %v399
  %438 = vmatprep.subr.mxu0 0.0
  %439 = vmatpush1.msra.mxu0 %v400
  %440 = vmatprep.subr.mxu0 0.0
  %441 = vmatpush1.msra.mxu0 %v401
  %442 = vmatprep.subr.mxu0 0.0
  %443 = vmatpush1.msra.mxu0 %v402
  %444 = vmatprep.subr.mxu0 0.0
  %445 = vmatpush1.msra.mxu0 %v403
  %446 = vmatprep.subr.mxu0 0.0
  %447 = vmatpush1.msra.mxu0 %v404
  %448 = vmatprep.subr.mxu0 0.0
  %449 = vmatpush1.msra.mxu0 %v405
  %450 = vmatprep.subr.mxu0 0.0
  %451 = vmatpush1.msra.mxu0 %v406
  %452 = vmatprep.subr.mxu0 0.0
  %453 = vmatpush1.msra.mxu0 %v407
  %454 = vmatprep.subr.mxu0 0.0
  %455 = vmatpush1.msra.mxu0 %v408
  %456 = vmatprep.subr.mxu0 0.0
  %457 = vmatpush1.msra.mxu0 %v409
  %458 = vmatprep.subr.mxu0 0.0
  %459 = vmatpush1.msra.mxu0 %v410
  %460 = vmatprep.subr.mxu0 0.0
  %461 = vmatpush1.msra.mxu0 %v411
  %462 = vmatprep.subr.mxu0 0.0
  %463 = vmatpush1.msra.mxu0 %v412
  %464 = vmatprep.subr.mxu0 0.0
  %465 = vmatpush1.msra.mxu0 %v413
  %466 = vmatprep.subr.mxu0 0.0
  %467 = vmatpush1.msra.mxu0 %v414
  %468 = vmatprep.subr.mxu0 0.0
  %469 = vmatpush1.msra.mxu0 %v415
  %470 = vmatprep.subr.mxu0 0.0
  %471 = vmatpush1.msra.mxu0 %v416
  %472 = vmatprep.subr.mxu0 0.0
  %473 = vmatpush1.msra.mxu0 %v417
  %474 = vmatprep.subr.mxu0 0.0
  %475 = vmatpush1.msra.mxu0 %v418
  %476 = vmatprep.subr.mxu0 0.0
  %477 = vmatpush1.msra.mxu0 %v419
  %478 = vmatprep.subr.mxu0 0.0
  %479 = vmatpush1.msra.mxu0 %v420
  %480 = vmatprep.subr.mxu0 0.0
  %481 = vmatpush1.msra.mxu0 %v421
  %482 = vmatprep.subr.mxu0 0.0
  %483 = vmatpush1.msra.mxu0 %v422
  %484 = vmatprep.subr.mxu0 0.0
  %485 = vmatpush1.msra.mxu0 %v423
  %486 = vmatprep.subr.mxu0 0.0
  %487 = vmatpush1.msra.mxu0 %v424
  %488 = vmatprep.subr.mxu0 0.0
  %489 = vmatpush1.msra.mxu0 %v425
  %490 = vmatprep.subr.mxu0 0.0
  %491 = vmatpush1.msra.mxu0 %v426
  %492 = vmatprep.subr.mxu0 0.0
  %493 = vmatpush1.msra.mxu0 %v427
  %494 = vmatprep.mubr.f32.mxu0 %v25
  %495 = vmatmul.mubr.f32.gmra.mrb[0].mxu0 %v23
  %v496 = vpop.f32.mrb[0].mxu0
  %v497 = vadd.f32 0.0, %v496
  %v498 = vpop.f32.mrb[0].mxu0
  %499 = vdwg.mxu0
  %vm500 = vcmask 31744
  %v502 = vsel %vm500, %v429, 0
  %vm504 = vcmask 1043456
  %v506 = vsel %vm504, %v497, 0
  %508 = vmatprep.subr.mxu0 0.0
  %509 = vmatpush1.msra.mxu0 %v506
  %510 = vmatprep.subr.mxu0 0.0
  %511 = vmatpush1.msra.mxu0 0.0
  %512 = vmatprep.subr.mxu0 0.0
  %513 = vmatpush1.msra.mxu0 0.0
  %514 = vmatprep.subr.mxu0 0.0
  %515 = vmatpush1.msra.mxu0 0.0
  %516 = vmatprep.subr.mxu0 0.0
  %517 = vmatpush1.msra.mxu0 0.0
  %518 = vmatprep.subr.mxu0 0.0
  %519 = vmatpush1.msra.mxu0 0.0
  %520 = vmatprep.subr.mxu0 0.0
  %521 = vmatpush1.msra.mxu0 0.0
  %522 = vmatprep.subr.mxu0 0.0
  %523 = vmatpush1.msra.mxu0 0.0
  %524 = vmatprep.subr.mxu0 0.0
  %525 = vmatpush1.msra.mxu0 0.0
  %526 = vmatprep.subr.mxu0 0.0
  %527 = vmatpush1.msra.mxu0 0.0
  %528 = vmatprep.subr.mxu0 0.0
  %529 = vmatpush1.msra.mxu0 0.0
  %530 = vmatprep.subr.mxu0 0.0
  %531 = vmatpush1.msra.mxu0 0.0
  %532 = vmatprep.subr.mxu0 0.0
  %533 = vmatpush1.msra.mxu0 0.0
  %534 = vmatprep.subr.mxu0 0.0
  %535 = vmatpush1.msra.mxu0 0.0
  %536 = vmatprep.subr.mxu0 0.0
  %537 = vmatpush1.msra.mxu0 0.0
  %538 = vmatprep.subr.mxu0 0.0
  %539 = vmatpush1.msra.mxu0 0.0
  %540 = vmatprep.subr.mxu0 0.0
  %541 = vmatpush1.msra.mxu0 0.0
  %542 = vmatprep.subr.mxu0 0.0
  %543 = vmatpush1.msra.mxu0 0.0
  %544 = vmatprep.subr.mxu0 0.0
  %545 = vmatpush1.msra.mxu0 0.0
  %546 = vmatprep.subr.mxu0 0.0
  %547 = vmatpush1.msra.mxu0 0.0
  %548 = vmatprep.subr.mxu0 0.0
  %549 = vmatpush1.msra.mxu0 0.0
  %550 = vmatprep.subr.mxu0 0.0
  %551 = vmatpush1.msra.mxu0 0.0
  %552 = vmatprep.subr.mxu0 0.0
  %553 = vmatpush1.msra.mxu0 0.0
  %554 = vmatprep.subr.mxu0 0.0
  %555 = vmatpush1.msra.mxu0 0.0
  %556 = vmatprep.subr.mxu0 0.0
  %557 = vmatpush1.msra.mxu0 0.0
  %558 = vmatprep.subr.mxu0 0.0
  %559 = vmatpush1.msra.mxu0 0.0
  %560 = vmatprep.subr.mxu0 0.0
  %561 = vmatpush1.msra.mxu0 0.0
  %562 = vmatprep.subr.mxu0 0.0
  %563 = vmatpush1.msra.mxu0 0.0
  %564 = vmatprep.subr.mxu0 0.0
  %565 = vmatpush1.msra.mxu0 0.0
  %566 = vmatprep.subr.mxu0 0.0
  %567 = vmatpush1.msra.mxu0 0.0
  %568 = vmatprep.subr.mxu0 0.0
  %569 = vmatpush1.msra.mxu0 0.0
  %570 = vmatprep.subr.mxu0 0.0
  %571 = vmatpush1.msra.mxu0 0.0
  %572 = vmatprep.mubr.f32.mxu0 0.0
  %573 = vmatmul.mubr.f32.gmra.mrb[0].mxu0 %v502
  %v574 = vpop.f32.mrb[0].mxu0
  %v575 = vadd.f32 0.0, %v574
  %v576 = vpop.f32.mrb[0].mxu0
  %577 = vdwg.mxu0
  %v579 = vsel %vm500, %v186, 0
  %v582 = vsel %vm504, %v254, 0
  %584 = vmatprep.subr.mxu0 0.0
  %585 = vmatpush1.msra.mxu0 %v582
  %586 = vmatprep.subr.mxu0 0.0
  %587 = vmatpush1.msra.mxu0 0.0
  %588 = vmatprep.subr.mxu0 0.0
  %589 = vmatpush1.msra.mxu0 0.0
  %590 = vmatprep.subr.mxu0 0.0
  %591 = vmatpush1.msra.mxu0 0.0
  %592 = vmatprep.subr.mxu0 0.0
  %593 = vmatpush1.msra.mxu0 0.0
  %594 = vmatprep.subr.mxu0 0.0
  %595 = vmatpush1.msra.mxu0 0.0
  %596 = vmatprep.subr.mxu0 0.0
  %597 = vmatpush1.msra.mxu0 0.0
  %598 = vmatprep.subr.mxu0 0.0
  %599 = vmatpush1.msra.mxu0 0.0
  %600 = vmatprep.subr.mxu0 0.0
  %601 = vmatpush1.msra.mxu0 0.0
  %602 = vmatprep.subr.mxu0 0.0
  %603 = vmatpush1.msra.mxu0 0.0
  %604 = vmatprep.subr.mxu0 0.0
  %605 = vmatpush1.msra.mxu0 0.0
  %606 = vmatprep.subr.mxu0 0.0
  %607 = vmatpush1.msra.mxu0 0.0
  %608 = vmatprep.subr.mxu0 0.0
  %609 = vmatpush1.msra.mxu0 0.0
  %610 = vmatprep.subr.mxu0 0.0
  %611 = vmatpush1.msra.mxu0 0.0
  %612 = vmatprep.subr.mxu0 0.0
  %613 = vmatpush1.msra.mxu0 0.0
  %614 = vmatprep.subr.mxu0 0.0
  %615 = vmatpush1.msra.mxu0 0.0
  %616 = vmatprep.subr.mxu0 0.0
  %617 = vmatpush1.msra.mxu0 0.0
  %618 = vmatprep.subr.mxu0 0.0
  %619 = vmatpush1.msra.mxu0 0.0
  %620 = vmatprep.subr.mxu0 0.0
  %621 = vmatpush1.msra.mxu0 0.0
  %622 = vmatprep.subr.mxu0 0.0
  %623 = vmatpush1.msra.mxu0 0.0
  %624 = vmatprep.subr.mxu0 0.0
  %625 = vmatpush1.msra.mxu0 0.0
  %626 = vmatprep.subr.mxu0 0.0
  %627 = vmatpush1.msra.mxu0 0.0
  %628 = vmatprep.subr.mxu0 0.0
  %629 = vmatpush1.msra.mxu0 0.0
  %630 = vmatprep.subr.mxu0 0.0
  %631 = vmatpush1.msra.mxu0 0.0
  %632 = vmatprep.subr.mxu0 0.0
  %633 = vmatpush1.msra.mxu0 0.0
  %634 = vmatprep.subr.mxu0 0.0
  %635 = vmatpush1.msra.mxu0 0.0
  %636 = vmatprep.subr.mxu0 0.0
  %637 = vmatpush1.msra.mxu0 0.0
  %638 = vmatprep.subr.mxu0 0.0
  %639 = vmatpush1.msra.mxu0 0.0
  %640 = vmatprep.subr.mxu0 0.0
  %641 = vmatpush1.msra.mxu0 0.0
  %642 = vmatprep.subr.mxu0 0.0
  %643 = vmatpush1.msra.mxu0 0.0
  %644 = vmatprep.subr.mxu0 0.0
  %645 = vmatpush1.msra.mxu0 0.0
  %646 = vmatprep.subr.mxu0 0.0
  %647 = vmatpush1.msra.mxu0 0.0
  %648 = vmatprep.mubr.f32.mxu0 0.0
  %649 = vmatmul.mubr.f32.gmra.mrb[0].mxu0 %v579
  %v650 = vpop.f32.mrb[0].mxu0
  %v651 = vadd.f32 %v575, %v650
  %v652 = vpop.f32.mrb[0].mxu0
  %653 = vdwg.mxu0
  %654 = vmatprep.subr.mxu0 0.0
  %655 = vmatpush1.msra.mxu0 %v396
  %656 = vmatprep.subr.mxu0 0.0
  %657 = vmatpush1.msra.mxu0 %v397
  %658 = vmatprep.subr.mxu0 0.0
  %659 = vmatpush1.msra.mxu0 %v398
  %660 = vmatprep.subr.mxu0 0.0
  %661 = vmatpush1.msra.mxu0 %v399
  %662 = vmatprep.subr.mxu0 0.0
  %663 = vmatpush1.msra.mxu0 %v400
  %664 = vmatprep.subr.mxu0 0.0
  %665 = vmatpush1.msra.mxu0 %v401
  %666 = vmatprep.subr.mxu0 0.0
  %667 = vmatpush1.msra.mxu0 %v402
  %668 = vmatprep.subr.mxu0 0.0
  %669 = vmatpush1.msra.mxu0 %v403
  %670 = vmatprep.subr.mxu0 0.0
  %671 = vmatpush1.msra.mxu0 %v404
  %672 = vmatprep.subr.mxu0 0.0
  %673 = vmatpush1.msra.mxu0 %v405
  %674 = vmatprep.subr.mxu0 0.0
  %675 = vmatpush1.msra.mxu0 %v406
  %676 = vmatprep.subr.mxu0 0.0
  %677 = vmatpush1.msra.mxu0 %v407
  %678 = vmatprep.subr.mxu0 0.0
  %679 = vmatpush1.msra.mxu0 %v408
  %680 = vmatprep.subr.mxu0 0.0
  %681 = vmatpush1.msra.mxu0 %v409
  %682 = vmatprep.subr.mxu0 0.0
  %683 = vmatpush1.msra.mxu0 %v410
  %684 = vmatprep.subr.mxu0 0.0
  %685 = vmatpush1.msra.mxu0 %v411
  %686 = vmatprep.subr.mxu0 0.0
  %687 = vmatpush1.msra.mxu0 %v412
  %688 = vmatprep.subr.mxu0 0.0
  %689 = vmatpush1.msra.mxu0 %v413
  %690 = vmatprep.subr.mxu0 0.0
  %691 = vmatpush1.msra.mxu0 %v414
  %692 = vmatprep.subr.mxu0 0.0
  %693 = vmatpush1.msra.mxu0 %v415
  %694 = vmatprep.subr.mxu0 0.0
  %695 = vmatpush1.msra.mxu0 %v416
  %696 = vmatprep.subr.mxu0 0.0
  %697 = vmatpush1.msra.mxu0 %v417
  %698 = vmatprep.subr.mxu0 0.0
  %699 = vmatpush1.msra.mxu0 %v418
  %700 = vmatprep.subr.mxu0 0.0
  %701 = vmatpush1.msra.mxu0 %v419
  %702 = vmatprep.subr.mxu0 0.0
  %703 = vmatpush1.msra.mxu0 %v420
  %704 = vmatprep.subr.mxu0 0.0
  %705 = vmatpush1.msra.mxu0 %v421
  %706 = vmatprep.subr.mxu0 0.0
  %707 = vmatpush1.msra.mxu0 %v422
  %708 = vmatprep.subr.mxu0 0.0
  %709 = vmatpush1.msra.mxu0 %v423
  %710 = vmatprep.subr.mxu0 0.0
  %711 = vmatpush1.msra.mxu0 %v424
  %712 = vmatprep.subr.mxu0 0.0
  %713 = vmatpush1.msra.mxu0 %v425
  %714 = vmatprep.subr.mxu0 0.0
  %715 = vmatpush1.msra.mxu0 %v426
  %716 = vmatprep.subr.mxu0 0.0
  %717 = vmatpush1.msra.mxu0 %v427
  %718 = vmatprep.mubr.f32.mxu0 %v35
  %719 = vmatmul.mubr.f32.gmra.mrb[0].mxu0 %v33
  %v720 = vpop.f32.mrb[0].mxu0
  %v721 = vadd.f32 0.0, %v720
  %v722 = vpop.f32.mrb[0].mxu0
  %723 = vdwg.mxu0
  %v725 = vsel %vm504, %v721, 0
  %727 = vmatprep.subr.mxu0 0.0
  %728 = vmatpush1.msra.mxu0 %v725
  %729 = vmatprep.subr.mxu0 0.0
  %730 = vmatpush1.msra.mxu0 0.0
  %731 = vmatprep.subr.mxu0 0.0
  %732 = vmatpush1.msra.mxu0 0.0
  %733 = vmatprep.subr.mxu0 0.0
  %734 = vmatpush1.msra.mxu0 0.0
  %735 = vmatprep.subr.mxu0 0.0
  %736 = vmatpush1.msra.mxu0 0.0
  %737 = vmatprep.subr.mxu0 0.0
  %738 = vmatpush1.msra.mxu0 0.0
  %739 = vmatprep.subr.mxu0 0.0
  %740 = vmatpush1.msra.mxu0 0.0
  %741 = vmatprep.subr.mxu0 0.0
  %742 = vmatpush1.msra.mxu0 0.0
  %743 = vmatprep.subr.mxu0 0.0
  %744 = vmatpush1.msra.mxu0 0.0
  %745 = vmatprep.subr.mxu0 0.0
  %746 = vmatpush1.msra.mxu0 0.0
  %747 = vmatprep.subr.mxu0 0.0
  %748 = vmatpush1.msra.mxu0 0.0
  %749 = vmatprep.subr.mxu0 0.0
  %750 = vmatpush1.msra.mxu0 0.0
  %751 = vmatprep.subr.mxu0 0.0
  %752 = vmatpush1.msra.mxu0 0.0
  %753 = vmatprep.subr.mxu0 0.0
  %754 = vmatpush1.msra.mxu0 0.0
  %755 = vmatprep.subr.mxu0 0.0
  %756 = vmatpush1.msra.mxu0 0.0
  %757 = vmatprep.subr.mxu0 0.0
  %758 = vmatpush1.msra.mxu0 0.0
  %759 = vmatprep.subr.mxu0 0.0
  %760 = vmatpush1.msra.mxu0 0.0
  %761 = vmatprep.subr.mxu0 0.0
  %762 = vmatpush1.msra.mxu0 0.0
  %763 = vmatprep.subr.mxu0 0.0
  %764 = vmatpush1.msra.mxu0 0.0
  %765 = vmatprep.subr.mxu0 0.0
  %766 = vmatpush1.msra.mxu0 0.0
  %767 = vmatprep.subr.mxu0 0.0
  %768 = vmatpush1.msra.mxu0 0.0
  %769 = vmatprep.subr.mxu0 0.0
  %770 = vmatpush1.msra.mxu0 0.0
  %771 = vmatprep.subr.mxu0 0.0
  %772 = vmatpush1.msra.mxu0 0.0
  %773 = vmatprep.subr.mxu0 0.0
  %774 = vmatpush1.msra.mxu0 0.0
  %775 = vmatprep.subr.mxu0 0.0
  %776 = vmatpush1.msra.mxu0 0.0
  %777 = vmatprep.subr.mxu0 0.0
  %778 = vmatpush1.msra.mxu0 0.0
  %779 = vmatprep.subr.mxu0 0.0
  %780 = vmatpush1.msra.mxu0 0.0
  %781 = vmatprep.subr.mxu0 0.0
  %782 = vmatpush1.msra.mxu0 0.0
  %783 = vmatprep.subr.mxu0 0.0
  %784 = vmatpush1.msra.mxu0 0.0
  %785 = vmatprep.subr.mxu0 0.0
  %786 = vmatpush1.msra.mxu0 0.0
  %787 = vmatprep.subr.mxu0 0.0
  %788 = vmatpush1.msra.mxu0 0.0
  %789 = vmatprep.subr.mxu0 0.0
  %790 = vmatpush1.msra.mxu0 0.0
  %791 = vmatprep.mubr.f32.mxu0 0.0
  %792 = vmatmul.mubr.f32.gmra.mrb[0].mxu0 %v502
  %v793 = vpop.f32.mrb[0].mxu0
  %v794 = vadd.f32 0.0, %v793
  %v795 = vpop.f32.mrb[0].mxu0
  %796 = vdwg.mxu0
  %v798 = vsel %vm504, %v324, 0
  %800 = vmatprep.subr.mxu0 0.0
  %801 = vmatpush1.msra.mxu0 %v798
  %802 = vmatprep.subr.mxu0 0.0
  %803 = vmatpush1.msra.mxu0 0.0
  %804 = vmatprep.subr.mxu0 0.0
  %805 = vmatpush1.msra.mxu0 0.0
  %806 = vmatprep.subr.mxu0 0.0
  %807 = vmatpush1.msra.mxu0 0.0
  %808 = vmatprep.subr.mxu0 0.0
  %809 = vmatpush1.msra.mxu0 0.0
  %810 = vmatprep.subr.mxu0 0.0
  %811 = vmatpush1.msra.mxu0 0.0
  %812 = vmatprep.subr.mxu0 0.0
  %813 = vmatpush1.msra.mxu0 0.0
  %814 = vmatprep.subr.mxu0 0.0
  %815 = vmatpush1.msra.mxu0 0.0
  %816 = vmatprep.subr.mxu0 0.0
  %817 = vmatpush1.msra.mxu0 0.0
  %818 = vmatprep.subr.mxu0 0.0
  %819 = vmatpush1.msra.mxu0 0.0
  %820 = vmatprep.subr.mxu0 0.0
  %821 = vmatpush1.msra.mxu0 0.0
  %822 = vmatprep.subr.mxu0 0.0
  %823 = vmatpush1.msra.mxu0 0.0
  %824 = vmatprep.subr.mxu0 0.0
  %825 = vmatpush1.msra.mxu0 0.0
  %826 = vmatprep.subr.mxu0 0.0
  %827 = vmatpush1.msra.mxu0 0.0
  %828 = vmatprep.subr.mxu0 0.0
  %829 = vmatpush1.msra.mxu0 0.0
  %830 = vmatprep.subr.mxu0 0.0
  %831 = vmatpush1.msra.mxu0 0.0
  %832 = vmatprep.subr.mxu0 0.0
  %833 = vmatpush1.msra.mxu0 0.0
  %834 = vmatprep.subr.mxu0 0.0
  %835 = vmatpush1.msra.mxu0 0.0
  %836 = vmatprep.subr.mxu0 0.0
  %837 = vmatpush1.msra.mxu0 0.0
  %838 = vmatprep.subr.mxu0 0.0
  %839 = vmatpush1.msra.mxu0 0.0
  %840 = vmatprep.subr.mxu0 0.0
  %841 = vmatpush1.msra.mxu0 0.0
  %842 = vmatprep.subr.mxu0 0.0
  %843 = vmatpush1.msra.mxu0 0.0
  %844 = vmatprep.subr.mxu0 0.0
  %845 = vmatpush1.msra.mxu0 0.0
  %846 = vmatprep.subr.mxu0 0.0
  %847 = vmatpush1.msra.mxu0 0.0
  %848 = vmatprep.subr.mxu0 0.0
  %849 = vmatpush1.msra.mxu0 0.0
  %850 = vmatprep.subr.mxu0 0.0
  %851 = vmatpush1.msra.mxu0 0.0
  %852 = vmatprep.subr.mxu0 0.0
  %853 = vmatpush1.msra.mxu0 0.0
  %854 = vmatprep.subr.mxu0 0.0
  %855 = vmatpush1.msra.mxu0 0.0
  %856 = vmatprep.subr.mxu0 0.0
  %857 = vmatpush1.msra.mxu0 0.0
  %858 = vmatprep.subr.mxu0 0.0
  %859 = vmatpush1.msra.mxu0 0.0
  %860 = vmatprep.subr.mxu0 0.0
  %861 = vmatpush1.msra.mxu0 0.0
  %862 = vmatprep.subr.mxu0 0.0
  %863 = vmatpush1.msra.mxu0 0.0
  %864 = vmatprep.mubr.f32.mxu0 0.0
  %865 = vmatmul.mubr.f32.gmra.mrb[0].mxu0 %v579
  %v866 = vpop.f32.mrb[0].mxu0
  %v867 = vadd.f32 %v794, %v866
  %v868 = vpop.f32.mrb[0].mxu0
  %869 = vdwg.mxu0
  %v870 = vadd.s32 %v78, 1
  %vm871 = vcmp.ge.s32.totalorder %v870, 0
  %vm872 = vmand %vm83, %vm871
  %vm873 = vcmp.lt.s32.totalorder %v870, 16
  %vm874 = vmand %vm872, %vm873
  %v875 = vadd.s32 %v88, %v870
  %vm876 = vcmp.eq.s32.totalorder %v41, %v875
  %vm877 = vcmp.eq.s32.totalorder %v42, %v875
  %vm878 = vcmp.eq.s32.totalorder %v43, %v875
  %vm879 = vcmp.eq.s32.totalorder %v44, %v875
  %vm880 = vcmp.eq.s32.totalorder %v45, %v875
  %vm881 = vcmp.eq.s32.totalorder %v46, %v875
  %vm882 = vcmp.eq.s32.totalorder %v47, %v875
  %vm883 = vcmp.eq.s32.totalorder %v48, %v875
  %vm884 = vcmp.eq.s32.totalorder %v49, %v875
  %vm885 = vcmp.eq.s32.totalorder %v50, %v875
  %vm886 = vcmp.eq.s32.totalorder %v51, %v875
  %vm887 = vcmp.eq.s32.totalorder %v52, %v875
  %vm888 = vcmp.eq.s32.totalorder %v53, %v875
  %vm889 = vcmp.eq.s32.totalorder %v54, %v875
  %vm890 = vcmp.eq.s32.totalorder %v55, %v875
  %vm891 = vcmp.eq.s32.totalorder %v56, %v875
  %vm892 = vcmp.eq.s32.totalorder %v57, %v875
  %vm893 = vcmp.eq.s32.totalorder %v58, %v875
  %vm894 = vcmp.eq.s32.totalorder %v59, %v875
  %vm895 = vcmp.eq.s32.totalorder %v60, %v875
  %vm896 = vcmp.eq.s32.totalorder %v61, %v875
  %vm897 = vcmp.eq.s32.totalorder %v62, %v875
  %vm898 = vcmp.eq.s32.totalorder %v63, %v875
  %vm899 = vcmp.eq.s32.totalorder %v64, %v875
  %vm900 = vcmp.eq.s32.totalorder %v65, %v875
  %vm901 = vcmp.eq.s32.totalorder %v66, %v875
  %vm902 = vcmp.eq.s32.totalorder %v67, %v875
  %vm903 = vcmp.eq.s32.totalorder %v68, %v875
  %vm904 = vcmp.eq.s32.totalorder %v69, %v875
  %vm905 = vcmp.eq.s32.totalorder %v70, %v875
  %vm906 = vcmp.eq.s32.totalorder %v71, %v875
  %vm907 = vcmp.eq.s32.totalorder %v72, %v875
  %vm908 = vmand %vm874, %vm876
  %vm909 = vmand %vm874, %vm877
  %vm910 = vmand %vm874, %vm878
  %vm911 = vmand %vm874, %vm879
  %vm912 = vmand %vm874, %vm880
  %vm913 = vmand %vm874, %vm881
  %vm914 = vmand %vm874, %vm882
  %vm915 = vmand %vm874, %vm883
  %vm916 = vmand %vm874, %vm884
  %vm917 = vmand %vm874, %vm885
  %vm918 = vmand %vm874, %vm886
  %vm919 = vmand %vm874, %vm887
  %vm920 = vmand %vm874, %vm888
  %vm921 = vmand %vm874, %vm889
  %vm922 = vmand %vm874, %vm890
  %vm923 = vmand %vm874, %vm891
  %vm924 = vmand %vm874, %vm892
  %vm925 = vmand %vm874, %vm893
  %vm926 = vmand %vm874, %vm894
  %vm927 = vmand %vm874, %vm895
  %vm928 = vmand %vm874, %vm896
  %vm929 = vmand %vm874, %vm897
  %vm930 = vmand %vm874, %vm898
  %vm931 = vmand %vm874, %vm899
  %vm932 = vmand %vm874, %vm900
  %vm933 = vmand %vm874, %vm901
  %vm934 = vmand %vm874, %vm902
  %vm935 = vmand %vm874, %vm903
  %vm936 = vmand %vm874, %vm904
  %vm937 = vmand %vm874, %vm905
  %vm938 = vmand %vm874, %vm906
  %vm939 = vmand %vm874, %vm907
  %v940 = vsel %vm908, 1.0, 0.0
  %v941 = vsel %vm909, 1.0, 0.0
  %v942 = vsel %vm910, 1.0, 0.0
  %v943 = vsel %vm911, 1.0, 0.0
  %v944 = vsel %vm912, 1.0, 0.0
  %v945 = vsel %vm913, 1.0, 0.0
  %v946 = vsel %vm914, 1.0, 0.0
  %v947 = vsel %vm915, 1.0, 0.0
  %v948 = vsel %vm916, 1.0, 0.0
  %v949 = vsel %vm917, 1.0, 0.0
  %v950 = vsel %vm918, 1.0, 0.0
  %v951 = vsel %vm919, 1.0, 0.0
  %v952 = vsel %vm920, 1.0, 0.0
  %v953 = vsel %vm921, 1.0, 0.0
  %v954 = vsel %vm922, 1.0, 0.0
  %v955 = vsel %vm923, 1.0, 0.0
  %v956 = vsel %vm924, 1.0, 0.0
  %v957 = vsel %vm925, 1.0, 0.0
  %v958 = vsel %vm926, 1.0, 0.0
  %v959 = vsel %vm927, 1.0, 0.0
  %v960 = vsel %vm928, 1.0, 0.0
  %v961 = vsel %vm929, 1.0, 0.0
  %v962 = vsel %vm930, 1.0, 0.0
  %v963 = vsel %vm931, 1.0, 0.0
  %v964 = vsel %vm932, 1.0, 0.0
  %v965 = vsel %vm933, 1.0, 0.0
  %v966 = vsel %vm934, 1.0, 0.0
  %v967 = vsel %vm935, 1.0, 0.0
  %v968 = vsel %vm936, 1.0, 0.0
  %v969 = vsel %vm937, 1.0, 0.0
  %v970 = vsel %vm938, 1.0, 0.0
  %v971 = vsel %vm939, 1.0, 0.0
  %s972 = scalar_lea.vmem %s1, 16
  %v973 = vld [vmem:[%s972] sm:$0xff]
  %974 = vmatprep.subr.mxu0 0.0
  %975 = vmatpush1.msra.mxu0 %v940
  %976 = vmatprep.subr.mxu0 0.0
  %977 = vmatpush1.msra.mxu0 %v941
  %978 = vmatprep.subr.mxu0 0.0
  %979 = vmatpush1.msra.mxu0 %v942
  %980 = vmatprep.subr.mxu0 0.0
  %981 = vmatpush1.msra.mxu0 %v943
  %982 = vmatprep.subr.mxu0 0.0
  %983 = vmatpush1.msra.mxu0 %v944
  %984 = vmatprep.subr.mxu0 0.0
  %985 = vmatpush1.msra.mxu0 %v945
  %986 = vmatprep.subr.mxu0 0.0
  %987 = vmatpush1.msra.mxu0 %v946
  %988 = vmatprep.subr.mxu0 0.0
  %989 = vmatpush1.msra.mxu0 %v947
  %990 = vmatprep.subr.mxu0 0.0
  %991 = vmatpush1.msra.mxu0 %v948
  %992 = vmatprep.subr.mxu0 0.0
  %993 = vmatpush1.msra.mxu0 %v949
  %994 = vmatprep.subr.mxu0 0.0
  %995 = vmatpush1.msra.mxu0 %v950
  %996 = vmatprep.subr.mxu0 0.0
  %997 = vmatpush1.msra.mxu0 %v951
  %998 = vmatprep.subr.mxu0 0.0
  %999 = vmatpush1.msra.mxu0 %v952
  %1000 = vmatprep.subr.mxu0 0.0
  %1001 = vmatpush1.msra.mxu0 %v953
  %1002 = vmatprep.subr.mxu0 0.0
  %1003 = vmatpush1.msra.mxu0 %v954
  %1004 = vmatprep.subr.mxu0 0.0
  %1005 = vmatpush1.msra.mxu0 %v955
  %1006 = vmatprep.subr.mxu0 0.0
  %1007 = vmatpush1.msra.mxu0 %v956
  %1008 = vmatprep.subr.mxu0 0.0
  %1009 = vmatpush1.msra.mxu0 %v957
  %1010 = vmatprep.subr.mxu0 0.0
  %1011 = vmatpush1.msra.mxu0 %v958
  %1012 = vmatprep.subr.mxu0 0.0
  %1013 = vmatpush1.msra.mxu0 %v959
  %1014 = vmatprep.subr.mxu0 0.0
  %1015 = vmatpush1.msra.mxu0 %v960
  %1016 = vmatprep.subr.mxu0 0.0
  %1017 = vmatpush1.msra.mxu0 %v961
  %1018 = vmatprep.subr.mxu0 0.0
  %1019 = vmatpush1.msra.mxu0 %v962
  %1020 = vmatprep.subr.mxu0 0.0
  %1021 = vmatpush1.msra.mxu0 %v963
  %1022 = vmatprep.subr.mxu0 0.0
  %1023 = vmatpush1.msra.mxu0 %v964
  %1024 = vmatprep.subr.mxu0 0.0
  %1025 = vmatpush1.msra.mxu0 %v965
  %1026 = vmatprep.subr.mxu0 0.0
  %1027 = vmatpush1.msra.mxu0 %v966
  %1028 = vmatprep.subr.mxu0 0.0
  %1029 = vmatpush1.msra.mxu0 %v967
  %1030 = vmatprep.subr.mxu0 0.0
  %1031 = vmatpush1.msra.mxu0 %v968
  %1032 = vmatprep.subr.mxu0 0.0
  %1033 = vmatpush1.msra.mxu0 %v969
  %1034 = vmatprep.subr.mxu0 0.0
  %1035 = vmatpush1.msra.mxu0 %v970
  %1036 = vmatprep.subr.mxu0 0.0
  %1037 = vmatpush1.msra.mxu0 %v971
  %1038 = vmatprep.mubr.f32.mxu0 %v25
  %1039 = vmatmul.mubr.f32.gmra.mrb[0].mxu0 %v23
  %v1040 = vpop.f32.mrb[0].mxu0
  %v1041 = vadd.f32 0.0, %v1040
  %v1042 = vpop.f32.mrb[0].mxu0
  %1043 = vdwg.mxu0
  %v1045 = vsel %vm500, %v973, 0
  %v1048 = vsel %vm504, %v1041, 0
  %1050 = vmatprep.subr.mxu0 0.0
  %1051 = vmatpush1.msra.mxu0 %v1048
  %1052 = vmatprep.subr.mxu0 0.0
  %1053 = vmatpush1.msra.mxu0 0.0
  %1054 = vmatprep.subr.mxu0 0.0
  %1055 = vmatpush1.msra.mxu0 0.0
  %1056 = vmatprep.subr.mxu0 0.0
  %1057 = vmatpush1.msra.mxu0 0.0
  %1058 = vmatprep.subr.mxu0 0.0
  %1059 = vmatpush1.msra.mxu0 0.0
  %1060 = vmatprep.subr.mxu0 0.0
  %1061 = vmatpush1.msra.mxu0 0.0
  %1062 = vmatprep.subr.mxu0 0.0
  %1063 = vmatpush1.msra.mxu0 0.0
  %1064 = vmatprep.subr.mxu0 0.0
  %1065 = vmatpush1.msra.mxu0 0.0
  %1066 = vmatprep.subr.mxu0 0.0
  %1067 = vmatpush1.msra.mxu0 0.0
  %1068 = vmatprep.subr.mxu0 0.0
  %1069 = vmatpush1.msra.mxu0 0.0
  %1070 = vmatprep.subr.mxu0 0.0
  %1071 = vmatpush1.msra.mxu0 0.0
  %1072 = vmatprep.subr.mxu0 0.0
  %1073 = vmatpush1.msra.mxu0 0.0
  %1074 = vmatprep.subr.mxu0 0.0
  %1075 = vmatpush1.msra.mxu0 0.0
  %1076 = vmatprep.subr.mxu0 0.0
  %1077 = vmatpush1.msra.mxu0 0.0
  %1078 = vmatprep.subr.mxu0 0.0
  %1079 = vmatpush1.msra.mxu0 0.0
  %1080 = vmatprep.subr.mxu0 0.0
  %1081 = vmatpush1.msra.mxu0 0.0
  %1082 = vmatprep.subr.mxu0 0.0
  %1083 = vmatpush1.msra.mxu0 0.0
  %1084 = vmatprep.subr.mxu0 0.0
  %1085 = vmatpush1.msra.mxu0 0.0
  %1086 = vmatprep.subr.mxu0 0.0
  %1087 = vmatpush1.msra.mxu0 0.0
  %1088 = vmatprep.subr.mxu0 0.0
  %1089 = vmatpush1.msra.mxu0 0.0
  %1090 = vmatprep.subr.mxu0 0.0
  %1091 = vmatpush1.msra.mxu0 0.0
  %1092 = vmatprep.subr.mxu0 0.0
  %1093 = vmatpush1.msra.mxu0 0.0
  %1094 = vmatprep.subr.mxu0 0.0
  %1095 = vmatpush1.msra.mxu0 0.0
  %1096 = vmatprep.subr.mxu0 0.0
  %1097 = vmatpush1.msra.mxu0 0.0
  %1098 = vmatprep.subr.mxu0 0.0
  %1099 = vmatpush1.msra.mxu0 0.0
  %1100 = vmatprep.subr.mxu0 0.0
  %1101 = vmatpush1.msra.mxu0 0.0
  %1102 = vmatprep.subr.mxu0 0.0
  %1103 = vmatpush1.msra.mxu0 0.0
  %1104 = vmatprep.subr.mxu0 0.0
  %1105 = vmatpush1.msra.mxu0 0.0
  %1106 = vmatprep.subr.mxu0 0.0
  %1107 = vmatpush1.msra.mxu0 0.0
  %1108 = vmatprep.subr.mxu0 0.0
  %1109 = vmatpush1.msra.mxu0 0.0
  %1110 = vmatprep.subr.mxu0 0.0
  %1111 = vmatpush1.msra.mxu0 0.0
  %1112 = vmatprep.subr.mxu0 0.0
  %1113 = vmatpush1.msra.mxu0 0.0
  %1114 = vmatprep.mubr.f32.mxu0 0.0
  %1115 = vmatmul.mubr.f32.gmra.mrb[0].mxu0 %v1045
  %v1116 = vpop.f32.mrb[0].mxu0
  %v1117 = vadd.f32 0.0, %v1116
  %v1118 = vpop.f32.mrb[0].mxu0
  %1119 = vdwg.mxu0
  %v1120 = vadd.f32 %v651, %v1117
  %1121 = vmatprep.subr.mxu0 0.0
  %1122 = vmatpush1.msra.mxu0 %v940
  %1123 = vmatprep.subr.mxu0 0.0
  %1124 = vmatpush1.msra.mxu0 %v941
  %1125 = vmatprep.subr.mxu0 0.0
  %1126 = vmatpush1.msra.mxu0 %v942
  %1127 = vmatprep.subr.mxu0 0.0
  %1128 = vmatpush1.msra.mxu0 %v943
  %1129 = vmatprep.subr.mxu0 0.0
  %1130 = vmatpush1.msra.mxu0 %v944
  %1131 = vmatprep.subr.mxu0 0.0
  %1132 = vmatpush1.msra.mxu0 %v945
  %1133 = vmatprep.subr.mxu0 0.0
  %1134 = vmatpush1.msra.mxu0 %v946
  %1135 = vmatprep.subr.mxu0 0.0
  %1136 = vmatpush1.msra.mxu0 %v947
  %1137 = vmatprep.subr.mxu0 0.0
  %1138 = vmatpush1.msra.mxu0 %v948
  %1139 = vmatprep.subr.mxu0 0.0
  %1140 = vmatpush1.msra.mxu0 %v949
  %1141 = vmatprep.subr.mxu0 0.0
  %1142 = vmatpush1.msra.mxu0 %v950
  %1143 = vmatprep.subr.mxu0 0.0
  %1144 = vmatpush1.msra.mxu0 %v951
  %1145 = vmatprep.subr.mxu0 0.0
  %1146 = vmatpush1.msra.mxu0 %v952
  %1147 = vmatprep.subr.mxu0 0.0
  %1148 = vmatpush1.msra.mxu0 %v953
  %1149 = vmatprep.subr.mxu0 0.0
  %1150 = vmatpush1.msra.mxu0 %v954
  %1151 = vmatprep.subr.mxu0 0.0
  %1152 = vmatpush1.msra.mxu0 %v955
  %1153 = vmatprep.subr.mxu0 0.0
  %1154 = vmatpush1.msra.mxu0 %v956
  %1155 = vmatprep.subr.mxu0 0.0
  %1156 = vmatpush1.msra.mxu0 %v957
  %1157 = vmatprep.subr.mxu0 0.0
  %1158 = vmatpush1.msra.mxu0 %v958
  %1159 = vmatprep.subr.mxu0 0.0
  %1160 = vmatpush1.msra.mxu0 %v959
  %1161 = vmatprep.subr.mxu0 0.0
  %1162 = vmatpush1.msra.mxu0 %v960
  %1163 = vmatprep.subr.mxu0 0.0
  %1164 = vmatpush1.msra.mxu0 %v961
  %1165 = vmatprep.subr.mxu0 0.0
  %1166 = vmatpush1.msra.mxu0 %v962
  %1167 = vmatprep.subr.mxu0 0.0
  %1168 = vmatpush1.msra.mxu0 %v963
  %1169 = vmatprep.subr.mxu0 0.0
  %1170 = vmatpush1.msra.mxu0 %v964
  %1171 = vmatprep.subr.mxu0 0.0
  %1172 = vmatpush1.msra.mxu0 %v965
  %1173 = vmatprep.subr.mxu0 0.0
  %1174 = vmatpush1.msra.mxu0 %v966
  %1175 = vmatprep.subr.mxu0 0.0
  %1176 = vmatpush1.msra.mxu0 %v967
  %1177 = vmatprep.subr.mxu0 0.0
  %1178 = vmatpush1.msra.mxu0 %v968
  %1179 = vmatprep.subr.mxu0 0.0
  %1180 = vmatpush1.msra.mxu0 %v969
  %1181 = vmatprep.subr.mxu0 0.0
  %1182 = vmatpush1.msra.mxu0 %v970
  %1183 = vmatprep.subr.mxu0 0.0
  %1184 = vmatpush1.msra.mxu0 %v971
  %1185 = vmatprep.mubr.f32.mxu0 %v35
  %1186 = vmatmul.mubr.f32.gmra.mrb[0].mxu0 %v33
  %v1187 = vpop.f32.mrb[0].mxu0
  %v1188 = vadd.f32 0.0, %v1187
  %v1189 = vpop.f32.mrb[0].mxu0
  %1190 = vdwg.mxu0
  %v1192 = vsel %vm504, %v1188, 0
  %1194 = vmatprep.subr.mxu0 0.0
  %1195 = vmatpush1.msra.mxu0 %v1192
  %1196 = vmatprep.subr.mxu0 0.0
  %1197 = vmatpush1.msra.mxu0 0.0
  %1198 = vmatprep.subr.mxu0 0.0
  %1199 = vmatpush1.msra.mxu0 0.0
  %1200 = vmatprep.subr.mxu0 0.0
  %1201 = vmatpush1.msra.mxu0 0.0
  %1202 = vmatprep.subr.mxu0 0.0
  %1203 = vmatpush1.msra.mxu0 0.0
  %1204 = vmatprep.subr.mxu0 0.0
  %1205 = vmatpush1.msra.mxu0 0.0
  %1206 = vmatprep.subr.mxu0 0.0
  %1207 = vmatpush1.msra.mxu0 0.0
  %1208 = vmatprep.subr.mxu0 0.0
  %1209 = vmatpush1.msra.mxu0 0.0
  %1210 = vmatprep.subr.mxu0 0.0
  %1211 = vmatpush1.msra.mxu0 0.0
  %1212 = vmatprep.subr.mxu0 0.0
  %1213 = vmatpush1.msra.mxu0 0.0
  %1214 = vmatprep.subr.mxu0 0.0
  %1215 = vmatpush1.msra.mxu0 0.0
  %1216 = vmatprep.subr.mxu0 0.0
  %1217 = vmatpush1.msra.mxu0 0.0
  %1218 = vmatprep.subr.mxu0 0.0
  %1219 = vmatpush1.msra.mxu0 0.0
  %1220 = vmatprep.subr.mxu0 0.0
  %1221 = vmatpush1.msra.mxu0 0.0
  %1222 = vmatprep.subr.mxu0 0.0
  %1223 = vmatpush1.msra.mxu0 0.0
  %1224 = vmatprep.subr.mxu0 0.0
  %1225 = vmatpush1.msra.mxu0 0.0
  %1226 = vmatprep.subr.mxu0 0.0
  %1227 = vmatpush1.msra.mxu0 0.0
  %1228 = vmatprep.subr.mxu0 0.0
  %1229 = vmatpush1.msra.mxu0 0.0
  %1230 = vmatprep.subr.mxu0 0.0
  %1231 = vmatpush1.msra.mxu0 0.0
  %1232 = vmatprep.subr.mxu0 0.0
  %1233 = vmatpush1.msra.mxu0 0.0
  %1234 = vmatprep.subr.mxu0 0.0
  %1235 = vmatpush1.msra.mxu0 0.0
  %1236 = vmatprep.subr.mxu0 0.0
  %1237 = vmatpush1.msra.mxu0 0.0
  %1238 = vmatprep.subr.mxu0 0.0
  %1239 = vmatpush1.msra.mxu0 0.0
  %1240 = vmatprep.subr.mxu0 0.0
  %1241 = vmatpush1.msra.mxu0 0.0
  %1242 = vmatprep.subr.mxu0 0.0
  %1243 = vmatpush1.msra.mxu0 0.0
  %1244 = vmatprep.subr.mxu0 0.0
  %1245 = vmatpush1.msra.mxu0 0.0
  %1246 = vmatprep.subr.mxu0 0.0
  %1247 = vmatpush1.msra.mxu0 0.0
  %1248 = vmatprep.subr.mxu0 0.0
  %1249 = vmatpush1.msra.mxu0 0.0
  %1250 = vmatprep.subr.mxu0 0.0
  %1251 = vmatpush1.msra.mxu0 0.0
  %1252 = vmatprep.subr.mxu0 0.0
  %1253 = vmatpush1.msra.mxu0 0.0
  %1254 = vmatprep.subr.mxu0 0.0
  %1255 = vmatpush1.msra.mxu0 0.0
  %1256 = vmatprep.subr.mxu0 0.0
  %1257 = vmatpush1.msra.mxu0 0.0
  %1258 = vmatprep.mubr.f32.mxu0 0.0
  %1259 = vmatmul.mubr.f32.gmra.mrb[0].mxu0 %v1045
  %v1260 = vpop.f32.mrb[0].mxu0
  %v1261 = vadd.f32 0.0, %v1260
  %v1262 = vpop.f32.mrb[0].mxu0
  %1263 = vdwg.mxu0
  %v1264 = vadd.f32 %v867, %v1261
  %v1265 = vadd.s32 %v78, 2
  %vm1266 = vcmp.ge.s32.totalorder %v1265, 0
  %vm1267 = vmand %vm83, %vm1266
  %vm1268 = vcmp.lt.s32.totalorder %v1265, 16
  %vm1269 = vmand %vm1267, %vm1268
  %v1270 = vadd.s32 %v88, %v1265
  %vm1271 = vcmp.eq.s32.totalorder %v41, %v1270
  %vm1272 = vcmp.eq.s32.totalorder %v42, %v1270
  %vm1273 = vcmp.eq.s32.totalorder %v43, %v1270
  %vm1274 = vcmp.eq.s32.totalorder %v44, %v1270
  %vm1275 = vcmp.eq.s32.totalorder %v45, %v1270
  %vm1276 = vcmp.eq.s32.totalorder %v46, %v1270
  %vm1277 = vcmp.eq.s32.totalorder %v47, %v1270
  %vm1278 = vcmp.eq.s32.totalorder %v48, %v1270
  %vm1279 = vcmp.eq.s32.totalorder %v49, %v1270
  %vm1280 = vcmp.eq.s32.totalorder %v50, %v1270
  %vm1281 = vcmp.eq.s32.totalorder %v51, %v1270
  %vm1282 = vcmp.eq.s32.totalorder %v52, %v1270
  %vm1283 = vcmp.eq.s32.totalorder %v53, %v1270
  %vm1284 = vcmp.eq.s32.totalorder %v54, %v1270
  %vm1285 = vcmp.eq.s32.totalorder %v55, %v1270
  %vm1286 = vcmp.eq.s32.totalorder %v56, %v1270
  %vm1287 = vcmp.eq.s32.totalorder %v57, %v1270
  %vm1288 = vcmp.eq.s32.totalorder %v58, %v1270
  %vm1289 = vcmp.eq.s32.totalorder %v59, %v1270
  %vm1290 = vcmp.eq.s32.totalorder %v60, %v1270
  %vm1291 = vcmp.eq.s32.totalorder %v61, %v1270
  %vm1292 = vcmp.eq.s32.totalorder %v62, %v1270
  %vm1293 = vcmp.eq.s32.totalorder %v63, %v1270
  %vm1294 = vcmp.eq.s32.totalorder %v64, %v1270
  %vm1295 = vcmp.eq.s32.totalorder %v65, %v1270
  %vm1296 = vcmp.eq.s32.totalorder %v66, %v1270
  %vm1297 = vcmp.eq.s32.totalorder %v67, %v1270
  %vm1298 = vcmp.eq.s32.totalorder %v68, %v1270
  %vm1299 = vcmp.eq.s32.totalorder %v69, %v1270
  %vm1300 = vcmp.eq.s32.totalorder %v70, %v1270
  %vm1301 = vcmp.eq.s32.totalorder %v71, %v1270
  %vm1302 = vcmp.eq.s32.totalorder %v72, %v1270
  %vm1303 = vmand %vm1269, %vm1271
  %vm1304 = vmand %vm1269, %vm1272
  %vm1305 = vmand %vm1269, %vm1273
  %vm1306 = vmand %vm1269, %vm1274
  %vm1307 = vmand %vm1269, %vm1275
  %vm1308 = vmand %vm1269, %vm1276
  %vm1309 = vmand %vm1269, %vm1277
  %vm1310 = vmand %vm1269, %vm1278
  %vm1311 = vmand %vm1269, %vm1279
  %vm1312 = vmand %vm1269, %vm1280
  %vm1313 = vmand %vm1269, %vm1281
  %vm1314 = vmand %vm1269, %vm1282
  %vm1315 = vmand %vm1269, %vm1283
  %vm1316 = vmand %vm1269, %vm1284
  %vm1317 = vmand %vm1269, %vm1285
  %vm1318 = vmand %vm1269, %vm1286
  %vm1319 = vmand %vm1269, %vm1287
  %vm1320 = vmand %vm1269, %vm1288
  %vm1321 = vmand %vm1269, %vm1289
  %vm1322 = vmand %vm1269, %vm1290
  %vm1323 = vmand %vm1269, %vm1291
  %vm1324 = vmand %vm1269, %vm1292
  %vm1325 = vmand %vm1269, %vm1293
  %vm1326 = vmand %vm1269, %vm1294
  %vm1327 = vmand %vm1269, %vm1295
  %vm1328 = vmand %vm1269, %vm1296
  %vm1329 = vmand %vm1269, %vm1297
  %vm1330 = vmand %vm1269, %vm1298
  %vm1331 = vmand %vm1269, %vm1299
  %vm1332 = vmand %vm1269, %vm1300
  %vm1333 = vmand %vm1269, %vm1301
  %vm1334 = vmand %vm1269, %vm1302
  %v1335 = vsel %vm1303, 1.0, 0.0
  %v1336 = vsel %vm1304, 1.0, 0.0
  %v1337 = vsel %vm1305, 1.0, 0.0
  %v1338 = vsel %vm1306, 1.0, 0.0
  %v1339 = vsel %vm1307, 1.0, 0.0
  %v1340 = vsel %vm1308, 1.0, 0.0
  %v1341 = vsel %vm1309, 1.0, 0.0
  %v1342 = vsel %vm1310, 1.0, 0.0
  %v1343 = vsel %vm1311, 1.0, 0.0
  %v1344 = vsel %vm1312, 1.0, 0.0
  %v1345 = vsel %vm1313, 1.0, 0.0
  %v1346 = vsel %vm1314, 1.0, 0.0
  %v1347 = vsel %vm1315, 1.0, 0.0
  %v1348 = vsel %vm1316, 1.0, 0.0
  %v1349 = vsel %vm1317, 1.0, 0.0
  %v1350 = vsel %vm1318, 1.0, 0.0
  %v1351 = vsel %vm1319, 1.0, 0.0
  %v1352 = vsel %vm1320, 1.0, 0.0
  %v1353 = vsel %vm1321, 1.0, 0.0
  %v1354 = vsel %vm1322, 1.0, 0.0
  %v1355 = vsel %vm1323, 1.0, 0.0
  %v1356 = vsel %vm1324, 1.0, 0.0
  %v1357 = vsel %vm1325, 1.0, 0.0
  %v1358 = vsel %vm1326, 1.0, 0.0
  %v1359 = vsel %vm1327, 1.0, 0.0
  %v1360 = vsel %vm1328, 1.0, 0.0
  %v1361 = vsel %vm1329, 1.0, 0.0
  %v1362 = vsel %vm1330, 1.0, 0.0
  %v1363 = vsel %vm1331, 1.0, 0.0
  %v1364 = vsel %vm1332, 1.0, 0.0
  %v1365 = vsel %vm1333, 1.0, 0.0
  %v1366 = vsel %vm1334, 1.0, 0.0
  %s1367 = scalar_lea.vmem %s1, 24
  %v1368 = vld [vmem:[%s1367] sm:$0xff]
  %1369 = vmatprep.subr.mxu0 0.0
  %1370 = vmatpush1.msra.mxu0 %v1335
  %1371 = vmatprep.subr.mxu0 0.0
  %1372 = vmatpush1.msra.mxu0 %v1336
  %1373 = vmatprep.subr.mxu0 0.0
  %1374 = vmatpush1.msra.mxu0 %v1337
  %1375 = vmatprep.subr.mxu0 0.0
  %1376 = vmatpush1.msra.mxu0 %v1338
  %1377 = vmatprep.subr.mxu0 0.0
  %1378 = vmatpush1.msra.mxu0 %v1339
  %1379 = vmatprep.subr.mxu0 0.0
  %1380 = vmatpush1.msra.mxu0 %v1340
  %1381 = vmatprep.subr.mxu0 0.0
  %1382 = vmatpush1.msra.mxu0 %v1341
  %1383 = vmatprep.subr.mxu0 0.0
  %1384 = vmatpush1.msra.mxu0 %v1342
  %1385 = vmatprep.subr.mxu0 0.0
  %1386 = vmatpush1.msra.mxu0 %v1343
  %1387 = vmatprep.subr.mxu0 0.0
  %1388 = vmatpush1.msra.mxu0 %v1344
  %1389 = vmatprep.subr.mxu0 0.0
  %1390 = vmatpush1.msra.mxu0 %v1345
  %1391 = vmatprep.subr.mxu0 0.0
  %1392 = vmatpush1.msra.mxu0 %v1346
  %1393 = vmatprep.subr.mxu0 0.0
  %1394 = vmatpush1.msra.mxu0 %v1347
  %1395 = vmatprep.subr.mxu0 0.0
  %1396 = vmatpush1.msra.mxu0 %v1348
  %1397 = vmatprep.subr.mxu0 0.0
  %1398 = vmatpush1.msra.mxu0 %v1349
  %1399 = vmatprep.subr.mxu0 0.0
  %1400 = vmatpush1.msra.mxu0 %v1350
  %1401 = vmatprep.subr.mxu0 0.0
  %1402 = vmatpush1.msra.mxu0 %v1351
  %1403 = vmatprep.subr.mxu0 0.0
  %1404 = vmatpush1.msra.mxu0 %v1352
  %1405 = vmatprep.subr.mxu0 0.0
  %1406 = vmatpush1.msra.mxu0 %v1353
  %1407 = vmatprep.subr.mxu0 0.0
  %1408 = vmatpush1.msra.mxu0 %v1354
  %1409 = vmatprep.subr.mxu0 0.0
  %1410 = vmatpush1.msra.mxu0 %v1355
  %1411 = vmatprep.subr.mxu0 0.0
  %1412 = vmatpush1.msra.mxu0 %v1356
  %1413 = vmatprep.subr.mxu0 0.0
  %1414 = vmatpush1.msra.mxu0 %v1357
  %1415 = vmatprep.subr.mxu0 0.0
  %1416 = vmatpush1.msra.mxu0 %v1358
  %1417 = vmatprep.subr.mxu0 0.0
  %1418 = vmatpush1.msra.mxu0 %v1359
  %1419 = vmatprep.subr.mxu0 0.0
  %1420 = vmatpush1.msra.mxu0 %v1360
  %1421 = vmatprep.subr.mxu0 0.0
  %1422 = vmatpush1.msra.mxu0 %v1361
  %1423 = vmatprep.subr.mxu0 0.0
  %1424 = vmatpush1.msra.mxu0 %v1362
  %1425 = vmatprep.subr.mxu0 0.0
  %1426 = vmatpush1.msra.mxu0 %v1363
  %1427 = vmatprep.subr.mxu0 0.0
  %1428 = vmatpush1.msra.mxu0 %v1364
  %1429 = vmatprep.subr.mxu0 0.0
  %1430 = vmatpush1.msra.mxu0 %v1365
  %1431 = vmatprep.subr.mxu0 0.0
  %1432 = vmatpush1.msra.mxu0 %v1366
  %1433 = vmatprep.mubr.f32.mxu0 %v25
  %1434 = vmatmul.mubr.f32.gmra.mrb[0].mxu0 %v23
  %v1435 = vpop.f32.mrb[0].mxu0
  %v1436 = vadd.f32 0.0, %v1435
  %v1437 = vpop.f32.mrb[0].mxu0
  %1438 = vdwg.mxu0
  %v1440 = vsel %vm500, %v1368, 0
  %v1443 = vsel %vm504, %v1436, 0
  %1445 = vmatprep.subr.mxu0 0.0
  %1446 = vmatpush1.msra.mxu0 %v1443
  %1447 = vmatprep.subr.mxu0 0.0
  %1448 = vmatpush1.msra.mxu0 0.0
  %1449 = vmatprep.subr.mxu0 0.0
  %1450 = vmatpush1.msra.mxu0 0.0
  %1451 = vmatprep.subr.mxu0 0.0
  %1452 = vmatpush1.msra.mxu0 0.0
  %1453 = vmatprep.subr.mxu0 0.0
  %1454 = vmatpush1.msra.mxu0 0.0
  %1455 = vmatprep.subr.mxu0 0.0
  %1456 = vmatpush1.msra.mxu0 0.0
  %1457 = vmatprep.subr.mxu0 0.0
  %1458 = vmatpush1.msra.mxu0 0.0
  %1459 = vmatprep.subr.mxu0 0.0
  %1460 = vmatpush1.msra.mxu0 0.0
  %1461 = vmatprep.subr.mxu0 0.0
  %1462 = vmatpush1.msra.mxu0 0.0
  %1463 = vmatprep.subr.mxu0 0.0
  %1464 = vmatpush1.msra.mxu0 0.0
  %1465 = vmatprep.subr.mxu0 0.0
  %1466 = vmatpush1.msra.mxu0 0.0
  %1467 = vmatprep.subr.mxu0 0.0
  %1468 = vmatpush1.msra.mxu0 0.0
  %1469 = vmatprep.subr.mxu0 0.0
  %1470 = vmatpush1.msra.mxu0 0.0
  %1471 = vmatprep.subr.mxu0 0.0
  %1472 = vmatpush1.msra.mxu0 0.0
  %1473 = vmatprep.subr.mxu0 0.0
  %1474 = vmatpush1.msra.mxu0 0.0
  %1475 = vmatprep.subr.mxu0 0.0
  %1476 = vmatpush1.msra.mxu0 0.0
  %1477 = vmatprep.subr.mxu0 0.0
  %1478 = vmatpush1.msra.mxu0 0.0
  %1479 = vmatprep.subr.mxu0 0.0
  %1480 = vmatpush1.msra.mxu0 0.0
  %1481 = vmatprep.subr.mxu0 0.0
  %1482 = vmatpush1.msra.mxu0 0.0
  %1483 = vmatprep.subr.mxu0 0.0
  %1484 = vmatpush1.msra.mxu0 0.0
  %1485 = vmatprep.subr.mxu0 0.0
  %1486 = vmatpush1.msra.mxu0 0.0
  %1487 = vmatprep.subr.mxu0 0.0
  %1488 = vmatpush1.msra.mxu0 0.0
  %1489 = vmatprep.subr.mxu0 0.0
  %1490 = vmatpush1.msra.mxu0 0.0
  %1491 = vmatprep.subr.mxu0 0.0
  %1492 = vmatpush1.msra.mxu0 0.0
  %1493 = vmatprep.subr.mxu0 0.0
  %1494 = vmatpush1.msra.mxu0 0.0
  %1495 = vmatprep.subr.mxu0 0.0
  %1496 = vmatpush1.msra.mxu0 0.0
  %1497 = vmatprep.subr.mxu0 0.0
  %1498 = vmatpush1.msra.mxu0 0.0
  %1499 = vmatprep.subr.mxu0 0.0
  %1500 = vmatpush1.msra.mxu0 0.0
  %1501 = vmatprep.subr.mxu0 0.0
  %1502 = vmatpush1.msra.mxu0 0.0
  %1503 = vmatprep.subr.mxu0 0.0
  %1504 = vmatpush1.msra.mxu0 0.0
  %1505 = vmatprep.subr.mxu0 0.0
  %1506 = vmatpush1.msra.mxu0 0.0
  %1507 = vmatprep.subr.mxu0 0.0
  %1508 = vmatpush1.msra.mxu0 0.0
  %1509 = vmatprep.mubr.f32.mxu0 0.0
  %1510 = vmatmul.mubr.f32.gmra.mrb[0].mxu0 %v1440
  %v1511 = vpop.f32.mrb[0].mxu0
  %v1512 = vadd.f32 0.0, %v1511
  %v1513 = vpop.f32.mrb[0].mxu0
  %1514 = vdwg.mxu0
  %v1515 = vadd.f32 %v1120, %v1512
  %1516 = vmatprep.subr.mxu0 0.0
  %1517 = vmatpush1.msra.mxu0 %v1335
  %1518 = vmatprep.subr.mxu0 0.0
  %1519 = vmatpush1.msra.mxu0 %v1336
  %1520 = vmatprep.subr.mxu0 0.0
  %1521 = vmatpush1.msra.mxu0 %v1337
  %1522 = vmatprep.subr.mxu0 0.0
  %1523 = vmatpush1.msra.mxu0 %v1338
  %1524 = vmatprep.subr.mxu0 0.0
  %1525 = vmatpush1.msra.mxu0 %v1339
  %1526 = vmatprep.subr.mxu0 0.0
  %1527 = vmatpush1.msra.mxu0 %v1340
  %1528 = vmatprep.subr.mxu0 0.0
  %1529 = vmatpush1.msra.mxu0 %v1341
  %1530 = vmatprep.subr.mxu0 0.0
  %1531 = vmatpush1.msra.mxu0 %v1342
  %1532 = vmatprep.subr.mxu0 0.0
  %1533 = vmatpush1.msra.mxu0 %v1343
  %1534 = vmatprep.subr.mxu0 0.0
  %1535 = vmatpush1.msra.mxu0 %v1344
  %1536 = vmatprep.subr.mxu0 0.0
  %1537 = vmatpush1.msra.mxu0 %v1345
  %1538 = vmatprep.subr.mxu0 0.0
  %1539 = vmatpush1.msra.mxu0 %v1346
  %1540 = vmatprep.subr.mxu0 0.0
  %1541 = vmatpush1.msra.mxu0 %v1347
  %1542 = vmatprep.subr.mxu0 0.0
  %1543 = vmatpush1.msra.mxu0 %v1348
  %1544 = vmatprep.subr.mxu0 0.0
  %1545 = vmatpush1.msra.mxu0 %v1349
  %1546 = vmatprep.subr.mxu0 0.0
  %1547 = vmatpush1.msra.mxu0 %v1350
  %1548 = vmatprep.subr.mxu0 0.0
  %1549 = vmatpush1.msra.mxu0 %v1351
  %1550 = vmatprep.subr.mxu0 0.0
  %1551 = vmatpush1.msra.mxu0 %v1352
  %1552 = vmatprep.subr.mxu0 0.0
  %1553 = vmatpush1.msra.mxu0 %v1353
  %1554 = vmatprep.subr.mxu0 0.0
  %1555 = vmatpush1.msra.mxu0 %v1354
  %1556 = vmatprep.subr.mxu0 0.0
  %1557 = vmatpush1.msra.mxu0 %v1355
  %1558 = vmatprep.subr.mxu0 0.0
  %1559 = vmatpush1.msra.mxu0 %v1356
  %1560 = vmatprep.subr.mxu0 0.0
  %1561 = vmatpush1.msra.mxu0 %v1357
  %1562 = vmatprep.subr.mxu0 0.0
  %1563 = vmatpush1.msra.mxu0 %v1358
  %1564 = vmatprep.subr.mxu0 0.0
  %1565 = vmatpush1.msra.mxu0 %v1359
  %1566 = vmatprep.subr.mxu0 0.0
  %1567 = vmatpush1.msra.mxu0 %v1360
  %1568 = vmatprep.subr.mxu0 0.0
  %1569 = vmatpush1.msra.mxu0 %v1361
  %1570 = vmatprep.subr.mxu0 0.0
  %1571 = vmatpush1.msra.mxu0 %v1362
  %1572 = vmatprep.subr.mxu0 0.0
  %1573 = vmatpush1.msra.mxu0 %v1363
  %1574 = vmatprep.subr.mxu0 0.0
  %1575 = vmatpush1.msra.mxu0 %v1364
  %1576 = vmatprep.subr.mxu0 0.0
  %1577 = vmatpush1.msra.mxu0 %v1365
  %1578 = vmatprep.subr.mxu0 0.0
  %1579 = vmatpush1.msra.mxu0 %v1366
  %1580 = vmatprep.mubr.f32.mxu0 %v35
  %1581 = vmatmul.mubr.f32.gmra.mrb[0].mxu0 %v33
  %v1582 = vpop.f32.mrb[0].mxu0
  %v1583 = vadd.f32 0.0, %v1582
  %v1584 = vpop.f32.mrb[0].mxu0
  %1585 = vdwg.mxu0
  %v1587 = vsel %vm504, %v1583, 0
  %1589 = vmatprep.subr.mxu0 0.0
  %1590 = vmatpush1.msra.mxu0 %v1587
  %1591 = vmatprep.subr.mxu0 0.0
  %1592 = vmatpush1.msra.mxu0 0.0
  %1593 = vmatprep.subr.mxu0 0.0
  %1594 = vmatpush1.msra.mxu0 0.0
  %1595 = vmatprep.subr.mxu0 0.0
  %1596 = vmatpush1.msra.mxu0 0.0
  %1597 = vmatprep.subr.mxu0 0.0
  %1598 = vmatpush1.msra.mxu0 0.0
  %1599 = vmatprep.subr.mxu0 0.0
  %1600 = vmatpush1.msra.mxu0 0.0
  %1601 = vmatprep.subr.mxu0 0.0
  %1602 = vmatpush1.msra.mxu0 0.0
  %1603 = vmatprep.subr.mxu0 0.0
  %1604 = vmatpush1.msra.mxu0 0.0
  %1605 = vmatprep.subr.mxu0 0.0
  %1606 = vmatpush1.msra.mxu0 0.0
  %1607 = vmatprep.subr.mxu0 0.0
  %1608 = vmatpush1.msra.mxu0 0.0
  %1609 = vmatprep.subr.mxu0 0.0
  %1610 = vmatpush1.msra.mxu0 0.0
  %1611 = vmatprep.subr.mxu0 0.0
  %1612 = vmatpush1.msra.mxu0 0.0
  %1613 = vmatprep.subr.mxu0 0.0
  %1614 = vmatpush1.msra.mxu0 0.0
  %1615 = vmatprep.subr.mxu0 0.0
  %1616 = vmatpush1.msra.mxu0 0.0
  %1617 = vmatprep.subr.mxu0 0.0
  %1618 = vmatpush1.msra.mxu0 0.0
  %1619 = vmatprep.subr.mxu0 0.0
  %1620 = vmatpush1.msra.mxu0 0.0
  %1621 = vmatprep.subr.mxu0 0.0
  %1622 = vmatpush1.msra.mxu0 0.0
  %1623 = vmatprep.subr.mxu0 0.0
  %1624 = vmatpush1.msra.mxu0 0.0
  %1625 = vmatprep.subr.mxu0 0.0
  %1626 = vmatpush1.msra.mxu0 0.0
  %1627 = vmatprep.subr.mxu0 0.0
  %1628 = vmatpush1.msra.mxu0 0.0
  %1629 = vmatprep.subr.mxu0 0.0
  %1630 = vmatpush1.msra.mxu0 0.0
  %1631 = vmatprep.subr.mxu0 0.0
  %1632 = vmatpush1.msra.mxu0 0.0
  %1633 = vmatprep.subr.mxu0 0.0
  %1634 = vmatpush1.msra.mxu0 0.0
  %1635 = vmatprep.subr.mxu0 0.0
  %1636 = vmatpush1.msra.mxu0 0.0
  %1637 = vmatprep.subr.mxu0 0.0
  %1638 = vmatpush1.msra.mxu0 0.0
  %1639 = vmatprep.subr.mxu0 0.0
  %1640 = vmatpush1.msra.mxu0 0.0
  %1641 = vmatprep.subr.mxu0 0.0
  %1642 = vmatpush1.msra.mxu0 0.0
  %1643 = vmatprep.subr.mxu0 0.0
  %1644 = vmatpush1.msra.mxu0 0.0
  %1645 = vmatprep.subr.mxu0 0.0
  %1646 = vmatpush1.msra.mxu0 0.0
  %1647 = vmatprep.subr.mxu0 0.0
  %1648 = vmatpush1.msra.mxu0 0.0
  %1649 = vmatprep.subr.mxu0 0.0
  %1650 = vmatpush1.msra.mxu0 0.0
  %1651 = vmatprep.subr.mxu0 0.0
  %1652 = vmatpush1.msra.mxu0 0.0
  %1653 = vmatprep.mubr.f32.mxu0 0.0
  %1654 = vmatmul.mubr.f32.gmra.mrb[0].mxu0 %v1440
  %v1655 = vpop.f32.mrb[0].mxu0
  %v1656 = vadd.f32 0.0, %v1655
  %v1657 = vpop.f32.mrb[0].mxu0
  %1658 = vdwg.mxu0
  %v1659 = vadd.f32 %v1264, %v1656
  %vm1660 = vcmp.ge.s32.totalorder %v76, 0
  %vm1661 = vcmp.lt.s32.totalorder %v76, 16
  %vm1662 = vmand %vm1660, %vm1661
  %vm1663 = vmand %vm1662, %vm84
  %vm1664 = vmand %vm1663, %vm86
  %v1665 = vmul.u32 %v76, 16
  %v1666 = vadd.s32 %v1665, %v80
  %vm1667 = vcmp.eq.s32.totalorder %v41, %v1666
  %vm1668 = vcmp.eq.s32.totalorder %v42, %v1666
  %vm1669 = vcmp.eq.s32.totalorder %v43, %v1666
  %vm1670 = vcmp.eq.s32.totalorder %v44, %v1666
  %vm1671 = vcmp.eq.s32.totalorder %v45, %v1666
  %vm1672 = vcmp.eq.s32.totalorder %v46, %v1666
  %vm1673 = vcmp.eq.s32.totalorder %v47, %v1666
  %vm1674 = vcmp.eq.s32.totalorder %v48, %v1666
  %vm1675 = vcmp.eq.s32.totalorder %v49, %v1666
  %vm1676 = vcmp.eq.s32.totalorder %v50, %v1666
  %vm1677 = vcmp.eq.s32.totalorder %v51, %v1666
  %vm1678 = vcmp.eq.s32.totalorder %v52, %v1666
  %vm1679 = vcmp.eq.s32.totalorder %v53, %v1666
  %vm1680 = vcmp.eq.s32.totalorder %v54, %v1666
  %vm1681 = vcmp.eq.s32.totalorder %v55, %v1666
  %vm1682 = vcmp.eq.s32.totalorder %v56, %v1666
  %vm1683 = vcmp.eq.s32.totalorder %v57, %v1666
  %vm1684 = vcmp.eq.s32.totalorder %v58, %v1666
  %vm1685 = vcmp.eq.s32.totalorder %v59, %v1666
  %vm1686 = vcmp.eq.s32.totalorder %v60, %v1666
  %vm1687 = vcmp.eq.s32.totalorder %v61, %v1666
  %vm1688 = vcmp.eq.s32.totalorder %v62, %v1666
  %vm1689 = vcmp.eq.s32.totalorder %v63, %v1666
  %vm1690 = vcmp.eq.s32.totalorder %v64, %v1666
  %vm1691 = vcmp.eq.s32.totalorder %v65, %v1666
  %vm1692 = vcmp.eq.s32.totalorder %v66, %v1666
  %vm1693 = vcmp.eq.s32.totalorder %v67, %v1666
  %vm1694 = vcmp.eq.s32.totalorder %v68, %v1666
  %vm1695 = vcmp.eq.s32.totalorder %v69, %v1666
  %vm1696 = vcmp.eq.s32.totalorder %v70, %v1666
  %vm1697 = vcmp.eq.s32.totalorder %v71, %v1666
  %vm1698 = vcmp.eq.s32.totalorder %v72, %v1666
  %vm1699 = vmand %vm1664, %vm1667
  %vm1700 = vmand %vm1664, %vm1668
  %vm1701 = vmand %vm1664, %vm1669
  %vm1702 = vmand %vm1664, %vm1670
  %vm1703 = vmand %vm1664, %vm1671
  %vm1704 = vmand %vm1664, %vm1672
  %vm1705 = vmand %vm1664, %vm1673
  %vm1706 = vmand %vm1664, %vm1674
  %vm1707 = vmand %vm1664, %vm1675
  %vm1708 = vmand %vm1664, %vm1676
  %vm1709 = vmand %vm1664, %vm1677
  %vm1710 = vmand %vm1664, %vm1678
  %vm1711 = vmand %vm1664, %vm1679
  %vm1712 = vmand %vm1664, %vm1680
  %vm1713 = vmand %vm1664, %vm1681
  %vm1714 = vmand %vm1664, %vm1682
  %vm1715 = vmand %vm1664, %vm1683
  %vm1716 = vmand %vm1664, %vm1684
  %vm1717 = vmand %vm1664, %vm1685
  %vm1718 = vmand %vm1664, %vm1686
  %vm1719 = vmand %vm1664, %vm1687
  %vm1720 = vmand %vm1664, %vm1688
  %vm1721 = vmand %vm1664, %vm1689
  %vm1722 = vmand %vm1664, %vm1690
  %vm1723 = vmand %vm1664, %vm1691
  %vm1724 = vmand %vm1664, %vm1692
  %vm1725 = vmand %vm1664, %vm1693
  %vm1726 = vmand %vm1664, %vm1694
  %vm1727 = vmand %vm1664, %vm1695
  %vm1728 = vmand %vm1664, %vm1696
  %vm1729 = vmand %vm1664, %vm1697
  %vm1730 = vmand %vm1664, %vm1698
  %v1731 = vsel %vm1699, 1.0, 0.0
  %v1732 = vsel %vm1700, 1.0, 0.0
  %v1733 = vsel %vm1701, 1.0, 0.0
  %v1734 = vsel %vm1702, 1.0, 0.0
  %v1735 = vsel %vm1703, 1.0, 0.0
  %v1736 = vsel %vm1704, 1.0, 0.0
  %v1737 = vsel %vm1705, 1.0, 0.0
  %v1738 = vsel %vm1706, 1.0, 0.0
  %v1739 = vsel %vm1707, 1.0, 0.0
  %v1740 = vsel %vm1708, 1.0, 0.0
  %v1741 = vsel %vm1709, 1.0, 0.0
  %v1742 = vsel %vm1710, 1.0, 0.0
  %v1743 = vsel %vm1711, 1.0, 0.0
  %v1744 = vsel %vm1712, 1.0, 0.0
  %v1745 = vsel %vm1713, 1.0, 0.0
  %v1746 = vsel %vm1714, 1.0, 0.0
  %v1747 = vsel %vm1715, 1.0, 0.0
  %v1748 = vsel %vm1716, 1.0, 0.0
  %v1749 = vsel %vm1717, 1.0, 0.0
  %v1750 = vsel %vm1718, 1.0, 0.0
  %v1751 = vsel %vm1719, 1.0, 0.0
  %v1752 = vsel %vm1720, 1.0, 0.0
  %v1753 = vsel %vm1721, 1.0, 0.0
  %v1754 = vsel %vm1722, 1.0, 0.0
  %v1755 = vsel %vm1723, 1.0, 0.0
  %v1756 = vsel %vm1724, 1.0, 0.0
  %v1757 = vsel %vm1725, 1.0, 0.0
  %v1758 = vsel %vm1726, 1.0, 0.0
  %v1759 = vsel %vm1727, 1.0, 0.0
  %v1760 = vsel %vm1728, 1.0, 0.0
  %v1761 = vsel %vm1729, 1.0, 0.0
  %v1762 = vsel %vm1730, 1.0, 0.0
  %s1763 = scalar_lea.vmem %s1, 32
  %v1764 = vld [vmem:[%s1763] sm:$0xff]
  %1765 = vmatprep.subr.mxu0 0.0
  %1766 = vmatpush1.msra.mxu0 %v1731
  %1767 = vmatprep.subr.mxu0 0.0
  %1768 = vmatpush1.msra.mxu0 %v1732
  %1769 = vmatprep.subr.mxu0 0.0
  %1770 = vmatpush1.msra.mxu0 %v1733
  %1771 = vmatprep.subr.mxu0 0.0
  %1772 = vmatpush1.msra.mxu0 %v1734
  %1773 = vmatprep.subr.mxu0 0.0
  %1774 = vmatpush1.msra.mxu0 %v1735
  %1775 = vmatprep.subr.mxu0 0.0
  %1776 = vmatpush1.msra.mxu0 %v1736
  %1777 = vmatprep.subr.mxu0 0.0
  %1778 = vmatpush1.msra.mxu0 %v1737
  %1779 = vmatprep.subr.mxu0 0.0
  %1780 = vmatpush1.msra.mxu0 %v1738
  %1781 = vmatprep.subr.mxu0 0.0
  %1782 = vmatpush1.msra.mxu0 %v1739
  %1783 = vmatprep.subr.mxu0 0.0
  %1784 = vmatpush1.msra.mxu0 %v1740
  %1785 = vmatprep.subr.mxu0 0.0
  %1786 = vmatpush1.msra.mxu0 %v1741
  %1787 = vmatprep.subr.mxu0 0.0
  %1788 = vmatpush1.msra.mxu0 %v1742
  %1789 = vmatprep.subr.mxu0 0.0
  %1790 = vmatpush1.msra.mxu0 %v1743
  %1791 = vmatprep.subr.mxu0 0.0
  %1792 = vmatpush1.msra.mxu0 %v1744
  %1793 = vmatprep.subr.mxu0 0.0
  %1794 = vmatpush1.msra.mxu0 %v1745
  %1795 = vmatprep.subr.mxu0 0.0
  %1796 = vmatpush1.msra.mxu0 %v1746
  %1797 = vmatprep.subr.mxu0 0.0
  %1798 = vmatpush1.msra.mxu0 %v1747
  %1799 = vmatprep.subr.mxu0 0.0
  %1800 = vmatpush1.msra.mxu0 %v1748
  %1801 = vmatprep.subr.mxu0 0.0
  %1802 = vmatpush1.msra.mxu0 %v1749
  %1803 = vmatprep.subr.mxu0 0.0
  %1804 = vmatpush1.msra.mxu0 %v1750
  %1805 = vmatprep.subr.mxu0 0.0
  %1806 = vmatpush1.msra.mxu0 %v1751
  %1807 = vmatprep.subr.mxu0 0.0
  %1808 = vmatpush1.msra.mxu0 %v1752
  %1809 = vmatprep.subr.mxu0 0.0
  %1810 = vmatpush1.msra.mxu0 %v1753
  %1811 = vmatprep.subr.mxu0 0.0
  %1812 = vmatpush1.msra.mxu0 %v1754
  %1813 = vmatprep.subr.mxu0 0.0
  %1814 = vmatpush1.msra.mxu0 %v1755
  %1815 = vmatprep.subr.mxu0 0.0
  %1816 = vmatpush1.msra.mxu0 %v1756
  %1817 = vmatprep.subr.mxu0 0.0
  %1818 = vmatpush1.msra.mxu0 %v1757
  %1819 = vmatprep.subr.mxu0 0.0
  %1820 = vmatpush1.msra.mxu0 %v1758
  %1821 = vmatprep.subr.mxu0 0.0
  %1822 = vmatpush1.msra.mxu0 %v1759
  %1823 = vmatprep.subr.mxu0 0.0
  %1824 = vmatpush1.msra.mxu0 %v1760
  %1825 = vmatprep.subr.mxu0 0.0
  %1826 = vmatpush1.msra.mxu0 %v1761
  %1827 = vmatprep.subr.mxu0 0.0
  %1828 = vmatpush1.msra.mxu0 %v1762
  %1829 = vmatprep.mubr.f32.mxu0 %v25
  %1830 = vmatmul.mubr.f32.gmra.mrb[0].mxu0 %v23
  %v1831 = vpop.f32.mrb[0].mxu0
  %v1832 = vadd.f32 0.0, %v1831
  %v1833 = vpop.f32.mrb[0].mxu0
  %1834 = vdwg.mxu0
  %v1836 = vsel %vm500, %v1764, 0
  %v1839 = vsel %vm504, %v1832, 0
  %1841 = vmatprep.subr.mxu0 0.0
  %1842 = vmatpush1.msra.mxu0 %v1839
  %1843 = vmatprep.subr.mxu0 0.0
  %1844 = vmatpush1.msra.mxu0 0.0
  %1845 = vmatprep.subr.mxu0 0.0
  %1846 = vmatpush1.msra.mxu0 0.0
  %1847 = vmatprep.subr.mxu0 0.0
  %1848 = vmatpush1.msra.mxu0 0.0
  %1849 = vmatprep.subr.mxu0 0.0
  %1850 = vmatpush1.msra.mxu0 0.0
  %1851 = vmatprep.subr.mxu0 0.0
  %1852 = vmatpush1.msra.mxu0 0.0
  %1853 = vmatprep.subr.mxu0 0.0
  %1854 = vmatpush1.msra.mxu0 0.0
  %1855 = vmatprep.subr.mxu0 0.0
  %1856 = vmatpush1.msra.mxu0 0.0
  %1857 = vmatprep.subr.mxu0 0.0
  %1858 = vmatpush1.msra.mxu0 0.0
  %1859 = vmatprep.subr.mxu0 0.0
  %1860 = vmatpush1.msra.mxu0 0.0
  %1861 = vmatprep.subr.mxu0 0.0
  %1862 = vmatpush1.msra.mxu0 0.0
  %1863 = vmatprep.subr.mxu0 0.0
  %1864 = vmatpush1.msra.mxu0 0.0
  %1865 = vmatprep.subr.mxu0 0.0
  %1866 = vmatpush1.msra.mxu0 0.0
  %1867 = vmatprep.subr.mxu0 0.0
  %1868 = vmatpush1.msra.mxu0 0.0
  %1869 = vmatprep.subr.mxu0 0.0
  %1870 = vmatpush1.msra.mxu0 0.0
  %1871 = vmatprep.subr.mxu0 0.0
  %1872 = vmatpush1.msra.mxu0 0.0
  %1873 = vmatprep.subr.mxu0 0.0
  %1874 = vmatpush1.msra.mxu0 0.0
  %1875 = vmatprep.subr.mxu0 0.0
  %1876 = vmatpush1.msra.mxu0 0.0
  %1877 = vmatprep.subr.mxu0 0.0
  %1878 = vmatpush1.msra.mxu0 0.0
  %1879 = vmatprep.subr.mxu0 0.0
  %1880 = vmatpush1.msra.mxu0 0.0
  %1881 = vmatprep.subr.mxu0 0.0
  %1882 = vmatpush1.msra.mxu0 0.0
  %1883 = vmatprep.subr.mxu0 0.0
  %1884 = vmatpush1.msra.mxu0 0.0
  %1885 = vmatprep.subr.mxu0 0.0
  %1886 = vmatpush1.msra.mxu0 0.0
  %1887 = vmatprep.subr.mxu0 0.0
  %1888 = vmatpush1.msra.mxu0 0.0
  %1889 = vmatprep.subr.mxu0 0.0
  %1890 = vmatpush1.msra.mxu0 0.0
  %1891 = vmatprep.subr.mxu0 0.0
  %1892 = vmatpush1.msra.mxu0 0.0
  %1893 = vmatprep.subr.mxu0 0.0
  %1894 = vmatpush1.msra.mxu0 0.0
  %1895 = vmatprep.subr.mxu0 0.0
  %1896 = vmatpush1.msra.mxu0 0.0
  %1897 = vmatprep.subr.mxu0 0.0
  %1898 = vmatpush1.msra.mxu0 0.0
  %1899 = vmatprep.subr.mxu0 0.0
  %1900 = vmatpush1.msra.mxu0 0.0
  %1901 = vmatprep.subr.mxu0 0.0
  %1902 = vmatpush1.msra.mxu0 0.0
  %1903 = vmatprep.subr.mxu0 0.0
  %1904 = vmatpush1.msra.mxu0 0.0
  %1905 = vmatprep.mubr.f32.mxu0 0.0
  %1906 = vmatmul.mubr.f32.gmra.mrb[0].mxu0 %v1836
  %v1907 = vpop.f32.mrb[0].mxu0
  %v1908 = vadd.f32 0.0, %v1907
  %v1909 = vpop.f32.mrb[0].mxu0
  %1910 = vdwg.mxu0
  %v1911 = vadd.f32 %v1515, %v1908
  %1912 = vmatprep.subr.mxu0 0.0
  %1913 = vmatpush1.msra.mxu0 %v1731
  %1914 = vmatprep.subr.mxu0 0.0
  %1915 = vmatpush1.msra.mxu0 %v1732
  %1916 = vmatprep.subr.mxu0 0.0
  %1917 = vmatpush1.msra.mxu0 %v1733
  %1918 = vmatprep.subr.mxu0 0.0
  %1919 = vmatpush1.msra.mxu0 %v1734
  %1920 = vmatprep.subr.mxu0 0.0
  %1921 = vmatpush1.msra.mxu0 %v1735
  %1922 = vmatprep.subr.mxu0 0.0
  %1923 = vmatpush1.msra.mxu0 %v1736
  %1924 = vmatprep.subr.mxu0 0.0
  %1925 = vmatpush1.msra.mxu0 %v1737
  %1926 = vmatprep.subr.mxu0 0.0
  %1927 = vmatpush1.msra.mxu0 %v1738
  %1928 = vmatprep.subr.mxu0 0.0
  %1929 = vmatpush1.msra.mxu0 %v1739
  %1930 = vmatprep.subr.mxu0 0.0
  %1931 = vmatpush1.msra.mxu0 %v1740
  %1932 = vmatprep.subr.mxu0 0.0
  %1933 = vmatpush1.msra.mxu0 %v1741
  %1934 = vmatprep.subr.mxu0 0.0
  %1935 = vmatpush1.msra.mxu0 %v1742
  %1936 = vmatprep.subr.mxu0 0.0
  %1937 = vmatpush1.msra.mxu0 %v1743
  %1938 = vmatprep.subr.mxu0 0.0
  %1939 = vmatpush1.msra.mxu0 %v1744
  %1940 = vmatprep.subr.mxu0 0.0
  %1941 = vmatpush1.msra.mxu0 %v1745
  %1942 = vmatprep.subr.mxu0 0.0
  %1943 = vmatpush1.msra.mxu0 %v1746
  %1944 = vmatprep.subr.mxu0 0.0
  %1945 = vmatpush1.msra.mxu0 %v1747
  %1946 = vmatprep.subr.mxu0 0.0
  %1947 = vmatpush1.msra.mxu0 %v1748
  %1948 = vmatprep.subr.mxu0 0.0
  %1949 = vmatpush1.msra.mxu0 %v1749
  %1950 = vmatprep.subr.mxu0 0.0
  %1951 = vmatpush1.msra.mxu0 %v1750
  %1952 = vmatprep.subr.mxu0 0.0
  %1953 = vmatpush1.msra.mxu0 %v1751
  %1954 = vmatprep.subr.mxu0 0.0
  %1955 = vmatpush1.msra.mxu0 %v1752
  %1956 = vmatprep.subr.mxu0 0.0
  %1957 = vmatpush1.msra.mxu0 %v1753
  %1958 = vmatprep.subr.mxu0 0.0
  %1959 = vmatpush1.msra.mxu0 %v1754
  %1960 = vmatprep.subr.mxu0 0.0
  %1961 = vmatpush1.msra.mxu0 %v1755
  %1962 = vmatprep.subr.mxu0 0.0
  %1963 = vmatpush1.msra.mxu0 %v1756
  %1964 = vmatprep.subr.mxu0 0.0
  %1965 = vmatpush1.msra.mxu0 %v1757
  %1966 = vmatprep.subr.mxu0 0.0
  %1967 = vmatpush1.msra.mxu0 %v1758
  %1968 = vmatprep.subr.mxu0 0.0
  %1969 = vmatpush1.msra.mxu0 %v1759
  %1970 = vmatprep.subr.mxu0 0.0
  %1971 = vmatpush1.msra.mxu0 %v1760
  %1972 = vmatprep.subr.mxu0 0.0
  %1973 = vmatpush1.msra.mxu0 %v1761
  %1974 = vmatprep.subr.mxu0 0.0
  %1975 = vmatpush1.msra.mxu0 %v1762
  %1976 = vmatprep.mubr.f32.mxu0 %v35
  %1977 = vmatmul.mubr.f32.gmra.mrb[0].mxu0 %v33
  %v1978 = vpop.f32.mrb[0].mxu0
  %v1979 = vadd.f32 0.0, %v1978
  %v1980 = vpop.f32.mrb[0].mxu0
  %1981 = vdwg.mxu0
  %v1983 = vsel %vm504, %v1979, 0
  %1985 = vmatprep.subr.mxu0 0.0
  %1986 = vmatpush1.msra.mxu0 %v1983
  %1987 = vmatprep.subr.mxu0 0.0
  %1988 = vmatpush1.msra.mxu0 0.0
  %1989 = vmatprep.subr.mxu0 0.0
  %1990 = vmatpush1.msra.mxu0 0.0
  %1991 = vmatprep.subr.mxu0 0.0
  %1992 = vmatpush1.msra.mxu0 0.0
  %1993 = vmatprep.subr.mxu0 0.0
  %1994 = vmatpush1.msra.mxu0 0.0
  %1995 = vmatprep.subr.mxu0 0.0
  %1996 = vmatpush1.msra.mxu0 0.0
  %1997 = vmatprep.subr.mxu0 0.0
  %1998 = vmatpush1.msra.mxu0 0.0
  %1999 = vmatprep.subr.mxu0 0.0
  %2000 = vmatpush1.msra.mxu0 0.0
  %2001 = vmatprep.subr.mxu0 0.0
  %2002 = vmatpush1.msra.mxu0 0.0
  %2003 = vmatprep.subr.mxu0 0.0
  %2004 = vmatpush1.msra.mxu0 0.0
  %2005 = vmatprep.subr.mxu0 0.0
  %2006 = vmatpush1.msra.mxu0 0.0
  %2007 = vmatprep.subr.mxu0 0.0
  %2008 = vmatpush1.msra.mxu0 0.0
  %2009 = vmatprep.subr.mxu0 0.0
  %2010 = vmatpush1.msra.mxu0 0.0
  %2011 = vmatprep.subr.mxu0 0.0
  %2012 = vmatpush1.msra.mxu0 0.0
  %2013 = vmatprep.subr.mxu0 0.0
  %2014 = vmatpush1.msra.mxu0 0.0
  %2015 = vmatprep.subr.mxu0 0.0
  %2016 = vmatpush1.msra.mxu0 0.0
  %2017 = vmatprep.subr.mxu0 0.0
  %2018 = vmatpush1.msra.mxu0 0.0
  %2019 = vmatprep.subr.mxu0 0.0
  %2020 = vmatpush1.msra.mxu0 0.0
  %2021 = vmatprep.subr.mxu0 0.0
  %2022 = vmatpush1.msra.mxu0 0.0
  %2023 = vmatprep.subr.mxu0 0.0
  %2024 = vmatpush1.msra.mxu0 0.0
  %2025 = vmatprep.subr.mxu0 0.0
  %2026 = vmatpush1.msra.mxu0 0.0
  %2027 = vmatprep.subr.mxu0 0.0
  %2028 = vmatpush1.msra.mxu0 0.0
  %2029 = vmatprep.subr.mxu0 0.0
  %2030 = vmatpush1.msra.mxu0 0.0
  %2031 = vmatprep.subr.mxu0 0.0
  %2032 = vmatpush1.msra.mxu0 0.0
  %2033 = vmatprep.subr.mxu0 0.0
  %2034 = vmatpush1.msra.mxu0 0.0
  %2035 = vmatprep.subr.mxu0 0.0
  %2036 = vmatpush1.msra.mxu0 0.0
  %2037 = vmatprep.subr.mxu0 0.0
  %2038 = vmatpush1.msra.mxu0 0.0
  %2039 = vmatprep.subr.mxu0 0.0
  %2040 = vmatpush1.msra.mxu0 0.0
  %2041 = vmatprep.subr.mxu0 0.0
  %2042 = vmatpush1.msra.mxu0 0.0
  %2043 = vmatprep.subr.mxu0 0.0
  %2044 = vmatpush1.msra.mxu0 0.0
  %2045 = vmatprep.subr.mxu0 0.0
  %2046 = vmatpush1.msra.mxu0 0.0
  %2047 = vmatprep.subr.mxu0 0.0
  %2048 = vmatpush1.msra.mxu0 0.0
  %2049 = vmatprep.mubr.f32.mxu0 0.0
  %2050 = vmatmul.mubr.f32.gmra.mrb[0].mxu0 %v1836
  %v2051 = vpop.f32.mrb[0].mxu0
  %v2052 = vadd.f32 0.0, %v2051
  %v2053 = vpop.f32.mrb[0].mxu0
  %2054 = vdwg.mxu0
  %v2055 = vadd.f32 %v1659, %v2052
  %vm2056 = vmand %vm1662, %vm327
  %vm2057 = vmand %vm2056, %vm329
  %v2058 = vadd.s32 %v1665, %v78
  %vm2059 = vcmp.eq.s32.totalorder %v41, %v2058
  %vm2060 = vcmp.eq.s32.totalorder %v42, %v2058
  %vm2061 = vcmp.eq.s32.totalorder %v43, %v2058
  %vm2062 = vcmp.eq.s32.totalorder %v44, %v2058
  %vm2063 = vcmp.eq.s32.totalorder %v45, %v2058
  %vm2064 = vcmp.eq.s32.totalorder %v46, %v2058
  %vm2065 = vcmp.eq.s32.totalorder %v47, %v2058
  %vm2066 = vcmp.eq.s32.totalorder %v48, %v2058
  %vm2067 = vcmp.eq.s32.totalorder %v49, %v2058
  %vm2068 = vcmp.eq.s32.totalorder %v50, %v2058
  %vm2069 = vcmp.eq.s32.totalorder %v51, %v2058
  %vm2070 = vcmp.eq.s32.totalorder %v52, %v2058
  %vm2071 = vcmp.eq.s32.totalorder %v53, %v2058
  %vm2072 = vcmp.eq.s32.totalorder %v54, %v2058
  %vm2073 = vcmp.eq.s32.totalorder %v55, %v2058
  %vm2074 = vcmp.eq.s32.totalorder %v56, %v2058
  %vm2075 = vcmp.eq.s32.totalorder %v57, %v2058
  %vm2076 = vcmp.eq.s32.totalorder %v58, %v2058
  %vm2077 = vcmp.eq.s32.totalorder %v59, %v2058
  %vm2078 = vcmp.eq.s32.totalorder %v60, %v2058
  %vm2079 = vcmp.eq.s32.totalorder %v61, %v2058
  %vm2080 = vcmp.eq.s32.totalorder %v62, %v2058
  %vm2081 = vcmp.eq.s32.totalorder %v63, %v2058
  %vm2082 = vcmp.eq.s32.totalorder %v64, %v2058
  %vm2083 = vcmp.eq.s32.totalorder %v65, %v2058
  %vm2084 = vcmp.eq.s32.totalorder %v66, %v2058
  %vm2085 = vcmp.eq.s32.totalorder %v67, %v2058
  %vm2086 = vcmp.eq.s32.totalorder %v68, %v2058
  %vm2087 = vcmp.eq.s32.totalorder %v69, %v2058
  %vm2088 = vcmp.eq.s32.totalorder %v70, %v2058
  %vm2089 = vcmp.eq.s32.totalorder %v71, %v2058
  %vm2090 = vcmp.eq.s32.totalorder %v72, %v2058
  %vm2091 = vmand %vm2057, %vm2059
  %vm2092 = vmand %vm2057, %vm2060
  %vm2093 = vmand %vm2057, %vm2061
  %vm2094 = vmand %vm2057, %vm2062
  %vm2095 = vmand %vm2057, %vm2063
  %vm2096 = vmand %vm2057, %vm2064
  %vm2097 = vmand %vm2057, %vm2065
  %vm2098 = vmand %vm2057, %vm2066
  %vm2099 = vmand %vm2057, %vm2067
  %vm2100 = vmand %vm2057, %vm2068
  %vm2101 = vmand %vm2057, %vm2069
  %vm2102 = vmand %vm2057, %vm2070
  %vm2103 = vmand %vm2057, %vm2071
  %vm2104 = vmand %vm2057, %vm2072
  %vm2105 = vmand %vm2057, %vm2073
  %vm2106 = vmand %vm2057, %vm2074
  %vm2107 = vmand %vm2057, %vm2075
  %vm2108 = vmand %vm2057, %vm2076
  %vm2109 = vmand %vm2057, %vm2077
  %vm2110 = vmand %vm2057, %vm2078
  %vm2111 = vmand %vm2057, %vm2079
  %vm2112 = vmand %vm2057, %vm2080
  %vm2113 = vmand %vm2057, %vm2081
  %vm2114 = vmand %vm2057, %vm2082
  %vm2115 = vmand %vm2057, %vm2083
  %vm2116 = vmand %vm2057, %vm2084
  %vm2117 = vmand %vm2057, %vm2085
  %vm2118 = vmand %vm2057, %vm2086
  %vm2119 = vmand %vm2057, %vm2087
  %vm2120 = vmand %vm2057, %vm2088
  %vm2121 = vmand %vm2057, %vm2089
  %vm2122 = vmand %vm2057, %vm2090
  %v2123 = vsel %vm2091, 1.0, 0.0
  %v2124 = vsel %vm2092, 1.0, 0.0
  %v2125 = vsel %vm2093, 1.0, 0.0
  %v2126 = vsel %vm2094, 1.0, 0.0
  %v2127 = vsel %vm2095, 1.0, 0.0
  %v2128 = vsel %vm2096, 1.0, 0.0
  %v2129 = vsel %vm2097, 1.0, 0.0
  %v2130 = vsel %vm2098, 1.0, 0.0
  %v2131 = vsel %vm2099, 1.0, 0.0
  %v2132 = vsel %vm2100, 1.0, 0.0
  %v2133 = vsel %vm2101, 1.0, 0.0
  %v2134 = vsel %vm2102, 1.0, 0.0
  %v2135 = vsel %vm2103, 1.0, 0.0
  %v2136 = vsel %vm2104, 1.0, 0.0
  %v2137 = vsel %vm2105, 1.0, 0.0
  %v2138 = vsel %vm2106, 1.0, 0.0
  %v2139 = vsel %vm2107, 1.0, 0.0
  %v2140 = vsel %vm2108, 1.0, 0.0
  %v2141 = vsel %vm2109, 1.0, 0.0
  %v2142 = vsel %vm2110, 1.0, 0.0
  %v2143 = vsel %vm2111, 1.0, 0.0
  %v2144 = vsel %vm2112, 1.0, 0.0
  %v2145 = vsel %vm2113, 1.0, 0.0
  %v2146 = vsel %vm2114, 1.0, 0.0
  %v2147 = vsel %vm2115, 1.0, 0.0
  %v2148 = vsel %vm2116, 1.0, 0.0
  %v2149 = vsel %vm2117, 1.0, 0.0
  %v2150 = vsel %vm2118, 1.0, 0.0
  %v2151 = vsel %vm2119, 1.0, 0.0
  %v2152 = vsel %vm2120, 1.0, 0.0
  %v2153 = vsel %vm2121, 1.0, 0.0
  %v2154 = vsel %vm2122, 1.0, 0.0
  %s2155 = scalar_lea.vmem %s1, 40
  %v2156 = vld [vmem:[%s2155] sm:$0xff]
  %2157 = vmatprep.subr.mxu0 0.0
  %2158 = vmatpush1.msra.mxu0 %v2123
  %2159 = vmatprep.subr.mxu0 0.0
  %2160 = vmatpush1.msra.mxu0 %v2124
  %2161 = vmatprep.subr.mxu0 0.0
  %2162 = vmatpush1.msra.mxu0 %v2125
  %2163 = vmatprep.subr.mxu0 0.0
  %2164 = vmatpush1.msra.mxu0 %v2126
  %2165 = vmatprep.subr.mxu0 0.0
  %2166 = vmatpush1.msra.mxu0 %v2127
  %2167 = vmatprep.subr.mxu0 0.0
  %2168 = vmatpush1.msra.mxu0 %v2128
  %2169 = vmatprep.subr.mxu0 0.0
  %2170 = vmatpush1.msra.mxu0 %v2129
  %2171 = vmatprep.subr.mxu0 0.0
  %2172 = vmatpush1.msra.mxu0 %v2130
  %2173 = vmatprep.subr.mxu0 0.0
  %2174 = vmatpush1.msra.mxu0 %v2131
  %2175 = vmatprep.subr.mxu0 0.0
  %2176 = vmatpush1.msra.mxu0 %v2132
  %2177 = vmatprep.subr.mxu0 0.0
  %2178 = vmatpush1.msra.mxu0 %v2133
  %2179 = vmatprep.subr.mxu0 0.0
  %2180 = vmatpush1.msra.mxu0 %v2134
  %2181 = vmatprep.subr.mxu0 0.0
  %2182 = vmatpush1.msra.mxu0 %v2135
  %2183 = vmatprep.subr.mxu0 0.0
  %2184 = vmatpush1.msra.mxu0 %v2136
  %2185 = vmatprep.subr.mxu0 0.0
  %2186 = vmatpush1.msra.mxu0 %v2137
  %2187 = vmatprep.subr.mxu0 0.0
  %2188 = vmatpush1.msra.mxu0 %v2138
  %2189 = vmatprep.subr.mxu0 0.0
  %2190 = vmatpush1.msra.mxu0 %v2139
  %2191 = vmatprep.subr.mxu0 0.0
  %2192 = vmatpush1.msra.mxu0 %v2140
  %2193 = vmatprep.subr.mxu0 0.0
  %2194 = vmatpush1.msra.mxu0 %v2141
  %2195 = vmatprep.subr.mxu0 0.0
  %2196 = vmatpush1.msra.mxu0 %v2142
  %2197 = vmatprep.subr.mxu0 0.0
  %2198 = vmatpush1.msra.mxu0 %v2143
  %2199 = vmatprep.subr.mxu0 0.0
  %2200 = vmatpush1.msra.mxu0 %v2144
  %2201 = vmatprep.subr.mxu0 0.0
  %2202 = vmatpush1.msra.mxu0 %v2145
  %2203 = vmatprep.subr.mxu0 0.0
  %2204 = vmatpush1.msra.mxu0 %v2146
  %2205 = vmatprep.subr.mxu0 0.0
  %2206 = vmatpush1.msra.mxu0 %v2147
  %2207 = vmatprep.subr.mxu0 0.0
  %2208 = vmatpush1.msra.mxu0 %v2148
  %2209 = vmatprep.subr.mxu0 0.0
  %2210 = vmatpush1.msra.mxu0 %v2149
  %2211 = vmatprep.subr.mxu0 0.0
  %2212 = vmatpush1.msra.mxu0 %v2150
  %2213 = vmatprep.subr.mxu0 0.0
  %2214 = vmatpush1.msra.mxu0 %v2151
  %2215 = vmatprep.subr.mxu0 0.0
  %2216 = vmatpush1.msra.mxu0 %v2152
  %2217 = vmatprep.subr.mxu0 0.0
  %2218 = vmatpush1.msra.mxu0 %v2153
  %2219 = vmatprep.subr.mxu0 0.0
  %2220 = vmatpush1.msra.mxu0 %v2154
  %2221 = vmatprep.mubr.f32.mxu0 %v25
  %2222 = vmatmul.mubr.f32.gmra.mrb[0].mxu0 %v23
  %v2223 = vpop.f32.mrb[0].mxu0
  %v2224 = vadd.f32 0.0, %v2223
  %v2225 = vpop.f32.mrb[0].mxu0
  %2226 = vdwg.mxu0
  %v2228 = vsel %vm500, %v2156, 0
  %v2231 = vsel %vm504, %v2224, 0
  %2233 = vmatprep.subr.mxu0 0.0
  %2234 = vmatpush1.msra.mxu0 %v2231
  %2235 = vmatprep.subr.mxu0 0.0
  %2236 = vmatpush1.msra.mxu0 0.0
  %2237 = vmatprep.subr.mxu0 0.0
  %2238 = vmatpush1.msra.mxu0 0.0
  %2239 = vmatprep.subr.mxu0 0.0
  %2240 = vmatpush1.msra.mxu0 0.0
  %2241 = vmatprep.subr.mxu0 0.0
  %2242 = vmatpush1.msra.mxu0 0.0
  %2243 = vmatprep.subr.mxu0 0.0
  %2244 = vmatpush1.msra.mxu0 0.0
  %2245 = vmatprep.subr.mxu0 0.0
  %2246 = vmatpush1.msra.mxu0 0.0
  %2247 = vmatprep.subr.mxu0 0.0
  %2248 = vmatpush1.msra.mxu0 0.0
  %2249 = vmatprep.subr.mxu0 0.0
  %2250 = vmatpush1.msra.mxu0 0.0
  %2251 = vmatprep.subr.mxu0 0.0
  %2252 = vmatpush1.msra.mxu0 0.0
  %2253 = vmatprep.subr.mxu0 0.0
  %2254 = vmatpush1.msra.mxu0 0.0
  %2255 = vmatprep.subr.mxu0 0.0
  %2256 = vmatpush1.msra.mxu0 0.0
  %2257 = vmatprep.subr.mxu0 0.0
  %2258 = vmatpush1.msra.mxu0 0.0
  %2259 = vmatprep.subr.mxu0 0.0
  %2260 = vmatpush1.msra.mxu0 0.0
  %2261 = vmatprep.subr.mxu0 0.0
  %2262 = vmatpush1.msra.mxu0 0.0
  %2263 = vmatprep.subr.mxu0 0.0
  %2264 = vmatpush1.msra.mxu0 0.0
  %2265 = vmatprep.subr.mxu0 0.0
  %2266 = vmatpush1.msra.mxu0 0.0
  %2267 = vmatprep.subr.mxu0 0.0
  %2268 = vmatpush1.msra.mxu0 0.0
  %2269 = vmatprep.subr.mxu0 0.0
  %2270 = vmatpush1.msra.mxu0 0.0
  %2271 = vmatprep.subr.mxu0 0.0
  %2272 = vmatpush1.msra.mxu0 0.0
  %2273 = vmatprep.subr.mxu0 0.0
  %2274 = vmatpush1.msra.mxu0 0.0
  %2275 = vmatprep.subr.mxu0 0.0
  %2276 = vmatpush1.msra.mxu0 0.0
  %2277 = vmatprep.subr.mxu0 0.0
  %2278 = vmatpush1.msra.mxu0 0.0
  %2279 = vmatprep.subr.mxu0 0.0
  %2280 = vmatpush1.msra.mxu0 0.0
  %2281 = vmatprep.subr.mxu0 0.0
  %2282 = vmatpush1.msra.mxu0 0.0
  %2283 = vmatprep.subr.mxu0 0.0
  %2284 = vmatpush1.msra.mxu0 0.0
  %2285 = vmatprep.subr.mxu0 0.0
  %2286 = vmatpush1.msra.mxu0 0.0
  %2287 = vmatprep.subr.mxu0 0.0
  %2288 = vmatpush1.msra.mxu0 0.0
  %2289 = vmatprep.subr.mxu0 0.0
  %2290 = vmatpush1.msra.mxu0 0.0
  %2291 = vmatprep.subr.mxu0 0.0
  %2292 = vmatpush1.msra.mxu0 0.0
  %2293 = vmatprep.subr.mxu0 0.0
  %2294 = vmatpush1.msra.mxu0 0.0
  %2295 = vmatprep.subr.mxu0 0.0
  %2296 = vmatpush1.msra.mxu0 0.0
  %2297 = vmatprep.mubr.f32.mxu0 0.0
  %2298 = vmatmul.mubr.f32.gmra.mrb[0].mxu0 %v2228
  %v2299 = vpop.f32.mrb[0].mxu0
  %v2300 = vadd.f32 0.0, %v2299
  %v2301 = vpop.f32.mrb[0].mxu0
  %2302 = vdwg.mxu0
  %v2303 = vadd.f32 %v1911, %v2300
  %2304 = vmatprep.subr.mxu0 0.0
  %2305 = vmatpush1.msra.mxu0 %v2123
  %2306 = vmatprep.subr.mxu0 0.0
  %2307 = vmatpush1.msra.mxu0 %v2124
  %2308 = vmatprep.subr.mxu0 0.0
  %2309 = vmatpush1.msra.mxu0 %v2125
  %2310 = vmatprep.subr.mxu0 0.0
  %2311 = vmatpush1.msra.mxu0 %v2126
  %2312 = vmatprep.subr.mxu0 0.0
  %2313 = vmatpush1.msra.mxu0 %v2127
  %2314 = vmatprep.subr.mxu0 0.0
  %2315 = vmatpush1.msra.mxu0 %v2128
  %2316 = vmatprep.subr.mxu0 0.0
  %2317 = vmatpush1.msra.mxu0 %v2129
  %2318 = vmatprep.subr.mxu0 0.0
  %2319 = vmatpush1.msra.mxu0 %v2130
  %2320 = vmatprep.subr.mxu0 0.0
  %2321 = vmatpush1.msra.mxu0 %v2131
  %2322 = vmatprep.subr.mxu0 0.0
  %2323 = vmatpush1.msra.mxu0 %v2132
  %2324 = vmatprep.subr.mxu0 0.0
  %2325 = vmatpush1.msra.mxu0 %v2133
  %2326 = vmatprep.subr.mxu0 0.0
  %2327 = vmatpush1.msra.mxu0 %v2134
  %2328 = vmatprep.subr.mxu0 0.0
  %2329 = vmatpush1.msra.mxu0 %v2135
  %2330 = vmatprep.subr.mxu0 0.0
  %2331 = vmatpush1.msra.mxu0 %v2136
  %2332 = vmatprep.subr.mxu0 0.0
  %2333 = vmatpush1.msra.mxu0 %v2137
  %2334 = vmatprep.subr.mxu0 0.0
  %2335 = vmatpush1.msra.mxu0 %v2138
  %2336 = vmatprep.subr.mxu0 0.0
  %2337 = vmatpush1.msra.mxu0 %v2139
  %2338 = vmatprep.subr.mxu0 0.0
  %2339 = vmatpush1.msra.mxu0 %v2140
  %2340 = vmatprep.subr.mxu0 0.0
  %2341 = vmatpush1.msra.mxu0 %v2141
  %2342 = vmatprep.subr.mxu0 0.0
  %2343 = vmatpush1.msra.mxu0 %v2142
  %2344 = vmatprep.subr.mxu0 0.0
  %2345 = vmatpush1.msra.mxu0 %v2143
  %2346 = vmatprep.subr.mxu0 0.0
  %2347 = vmatpush1.msra.mxu0 %v2144
  %2348 = vmatprep.subr.mxu0 0.0
  %2349 = vmatpush1.msra.mxu0 %v2145
  %2350 = vmatprep.subr.mxu0 0.0
  %2351 = vmatpush1.msra.mxu0 %v2146
  %2352 = vmatprep.subr.mxu0 0.0
  %2353 = vmatpush1.msra.mxu0 %v2147
  %2354 = vmatprep.subr.mxu0 0.0
  %2355 = vmatpush1.msra.mxu0 %v2148
  %2356 = vmatprep.subr.mxu0 0.0
  %2357 = vmatpush1.msra.mxu0 %v2149
  %2358 = vmatprep.subr.mxu0 0.0
  %2359 = vmatpush1.msra.mxu0 %v2150
  %2360 = vmatprep.subr.mxu0 0.0
  %2361 = vmatpush1.msra.mxu0 %v2151
  %2362 = vmatprep.subr.mxu0 0.0
  %2363 = vmatpush1.msra.mxu0 %v2152
  %2364 = vmatprep.subr.mxu0 0.0
  %2365 = vmatpush1.msra.mxu0 %v2153
  %2366 = vmatprep.subr.mxu0 0.0
  %2367 = vmatpush1.msra.mxu0 %v2154
  %2368 = vmatprep.mubr.f32.mxu0 %v35
  %2369 = vmatmul.mubr.f32.gmra.mrb[0].mxu0 %v33
  %v2370 = vpop.f32.mrb[0].mxu0
  %v2371 = vadd.f32 0.0, %v2370
  %v2372 = vpop.f32.mrb[0].mxu0
  %2373 = vdwg.mxu0
  %v2375 = vsel %vm504, %v2371, 0
  %2377 = vmatprep.subr.mxu0 0.0
  %2378 = vmatpush1.msra.mxu0 %v2375
  %2379 = vmatprep.subr.mxu0 0.0
  %2380 = vmatpush1.msra.mxu0 0.0
  %2381 = vmatprep.subr.mxu0 0.0
  %2382 = vmatpush1.msra.mxu0 0.0
  %2383 = vmatprep.subr.mxu0 0.0
  %2384 = vmatpush1.msra.mxu0 0.0
  %2385 = vmatprep.subr.mxu0 0.0
  %2386 = vmatpush1.msra.mxu0 0.0
  %2387 = vmatprep.subr.mxu0 0.0
  %2388 = vmatpush1.msra.mxu0 0.0
  %2389 = vmatprep.subr.mxu0 0.0
  %2390 = vmatpush1.msra.mxu0 0.0
  %2391 = vmatprep.subr.mxu0 0.0
  %2392 = vmatpush1.msra.mxu0 0.0
  %2393 = vmatprep.subr.mxu0 0.0
  %2394 = vmatpush1.msra.mxu0 0.0
  %2395 = vmatprep.subr.mxu0 0.0
  %2396 = vmatpush1.msra.mxu0 0.0
  %2397 = vmatprep.subr.mxu0 0.0
  %2398 = vmatpush1.msra.mxu0 0.0
  %2399 = vmatprep.subr.mxu0 0.0
  %2400 = vmatpush1.msra.mxu0 0.0
  %2401 = vmatprep.subr.mxu0 0.0
  %2402 = vmatpush1.msra.mxu0 0.0
  %2403 = vmatprep.subr.mxu0 0.0
  %2404 = vmatpush1.msra.mxu0 0.0
  %2405 = vmatprep.subr.mxu0 0.0
  %2406 = vmatpush1.msra.mxu0 0.0
  %2407 = vmatprep.subr.mxu0 0.0
  %2408 = vmatpush1.msra.mxu0 0.0
  %2409 = vmatprep.subr.mxu0 0.0
  %2410 = vmatpush1.msra.mxu0 0.0
  %2411 = vmatprep.subr.mxu0 0.0
  %2412 = vmatpush1.msra.mxu0 0.0
  %2413 = vmatprep.subr.mxu0 0.0
  %2414 = vmatpush1.msra.mxu0 0.0
  %2415 = vmatprep.subr.mxu0 0.0
  %2416 = vmatpush1.msra.mxu0 0.0
  %2417 = vmatprep.subr.mxu0 0.0
  %2418 = vmatpush1.msra.mxu0 0.0
  %2419 = vmatprep.subr.mxu0 0.0
  %2420 = vmatpush1.msra.mxu0 0.0
  %2421 = vmatprep.subr.mxu0 0.0
  %2422 = vmatpush1.msra.mxu0 0.0
  %2423 = vmatprep.subr.mxu0 0.0
  %2424 = vmatpush1.msra.mxu0 0.0
  %2425 = vmatprep.subr.mxu0 0.0
  %2426 = vmatpush1.msra.mxu0 0.0
  %2427 = vmatprep.subr.mxu0 0.0
  %2428 = vmatpush1.msra.mxu0 0.0
  %2429 = vmatprep.subr.mxu0 0.0
  %2430 = vmatpush1.msra.mxu0 0.0
  %2431 = vmatprep.subr.mxu0 0.0
  %2432 = vmatpush1.msra.mxu0 0.0
  %2433 = vmatprep.subr.mxu0 0.0
  %2434 = vmatpush1.msra.mxu0 0.0
  %2435 = vmatprep.subr.mxu0 0.0
  %2436 = vmatpush1.msra.mxu0 0.0
  %2437 = vmatprep.subr.mxu0 0.0
  %2438 = vmatpush1.msra.mxu0 0.0
  %2439 = vmatprep.subr.mxu0 0.0
  %2440 = vmatpush1.msra.mxu0 0.0
  %2441 = vmatprep.mubr.f32.mxu0 0.0
  %2442 = vmatmul.mubr.f32.gmra.mrb[0].mxu0 %v2228
  %v2443 = vpop.f32.mrb[0].mxu0
  %v2444 = vadd.f32 0.0, %v2443
  %v2445 = vpop.f32.mrb[0].mxu0
  %2446 = vdwg.mxu0
  %v2447 = vadd.f32 %v2055, %v2444
  %vm2448 = vmand %vm1662, %vm871
  %vm2449 = vmand %vm2448, %vm873
  %v2450 = vadd.s32 %v1665, %v870
  %vm2451 = vcmp.eq.s32.totalorder %v41, %v2450
  %vm2452 = vcmp.eq.s32.totalorder %v42, %v2450
  %vm2453 = vcmp.eq.s32.totalorder %v43, %v2450
  %vm2454 = vcmp.eq.s32.totalorder %v44, %v2450
  %vm2455 = vcmp.eq.s32.totalorder %v45, %v2450
  %vm2456 = vcmp.eq.s32.totalorder %v46, %v2450
  %vm2457 = vcmp.eq.s32.totalorder %v47, %v2450
  %vm2458 = vcmp.eq.s32.totalorder %v48, %v2450
  %vm2459 = vcmp.eq.s32.totalorder %v49, %v2450
  %vm2460 = vcmp.eq.s32.totalorder %v50, %v2450
  %vm2461 = vcmp.eq.s32.totalorder %v51, %v2450
  %vm2462 = vcmp.eq.s32.totalorder %v52, %v2450
  %vm2463 = vcmp.eq.s32.totalorder %v53, %v2450
  %vm2464 = vcmp.eq.s32.totalorder %v54, %v2450
  %vm2465 = vcmp.eq.s32.totalorder %v55, %v2450
  %vm2466 = vcmp.eq.s32.totalorder %v56, %v2450
  %vm2467 = vcmp.eq.s32.totalorder %v57, %v2450
  %vm2468 = vcmp.eq.s32.totalorder %v58, %v2450
  %vm2469 = vcmp.eq.s32.totalorder %v59, %v2450
  %vm2470 = vcmp.eq.s32.totalorder %v60, %v2450
  %vm2471 = vcmp.eq.s32.totalorder %v61, %v2450
  %vm2472 = vcmp.eq.s32.totalorder %v62, %v2450
  %vm2473 = vcmp.eq.s32.totalorder %v63, %v2450
  %vm2474 = vcmp.eq.s32.totalorder %v64, %v2450
  %vm2475 = vcmp.eq.s32.totalorder %v65, %v2450
  %vm2476 = vcmp.eq.s32.totalorder %v66, %v2450
  %vm2477 = vcmp.eq.s32.totalorder %v67, %v2450
  %vm2478 = vcmp.eq.s32.totalorder %v68, %v2450
  %vm2479 = vcmp.eq.s32.totalorder %v69, %v2450
  %vm2480 = vcmp.eq.s32.totalorder %v70, %v2450
  %vm2481 = vcmp.eq.s32.totalorder %v71, %v2450
  %vm2482 = vcmp.eq.s32.totalorder %v72, %v2450
  %vm2483 = vmand %vm2449, %vm2451
  %vm2484 = vmand %vm2449, %vm2452
  %vm2485 = vmand %vm2449, %vm2453
  %vm2486 = vmand %vm2449, %vm2454
  %vm2487 = vmand %vm2449, %vm2455
  %vm2488 = vmand %vm2449, %vm2456
  %vm2489 = vmand %vm2449, %vm2457
  %vm2490 = vmand %vm2449, %vm2458
  %vm2491 = vmand %vm2449, %vm2459
  %vm2492 = vmand %vm2449, %vm2460
  %vm2493 = vmand %vm2449, %vm2461
  %vm2494 = vmand %vm2449, %vm2462
  %vm2495 = vmand %vm2449, %vm2463
  %vm2496 = vmand %vm2449, %vm2464
  %vm2497 = vmand %vm2449, %vm2465
  %vm2498 = vmand %vm2449, %vm2466
  %vm2499 = vmand %vm2449, %vm2467
  %vm2500 = vmand %vm2449, %vm2468
  %vm2501 = vmand %vm2449, %vm2469
  %vm2502 = vmand %vm2449, %vm2470
  %vm2503 = vmand %vm2449, %vm2471
  %vm2504 = vmand %vm2449, %vm2472
  %vm2505 = vmand %vm2449, %vm2473
  %vm2506 = vmand %vm2449, %vm2474
  %vm2507 = vmand %vm2449, %vm2475
  %vm2508 = vmand %vm2449, %vm2476
  %vm2509 = vmand %vm2449, %vm2477
  %vm2510 = vmand %vm2449, %vm2478
  %vm2511 = vmand %vm2449, %vm2479
  %vm2512 = vmand %vm2449, %vm2480
  %vm2513 = vmand %vm2449, %vm2481
  %vm2514 = vmand %vm2449, %vm2482
  %v2515 = vsel %vm2483, 1.0, 0.0
  %v2516 = vsel %vm2484, 1.0, 0.0
  %v2517 = vsel %vm2485, 1.0, 0.0
  %v2518 = vsel %vm2486, 1.0, 0.0
  %v2519 = vsel %vm2487, 1.0, 0.0
  %v2520 = vsel %vm2488, 1.0, 0.0
  %v2521 = vsel %vm2489, 1.0, 0.0
  %v2522 = vsel %vm2490, 1.0, 0.0
  %v2523 = vsel %vm2491, 1.0, 0.0
  %v2524 = vsel %vm2492, 1.0, 0.0
  %v2525 = vsel %vm2493, 1.0, 0.0
  %v2526 = vsel %vm2494, 1.0, 0.0
  %v2527 = vsel %vm2495, 1.0, 0.0
  %v2528 = vsel %vm2496, 1.0, 0.0
  %v2529 = vsel %vm2497, 1.0, 0.0
  %v2530 = vsel %vm2498, 1.0, 0.0
  %v2531 = vsel %vm2499, 1.0, 0.0
  %v2532 = vsel %vm2500, 1.0, 0.0
  %v2533 = vsel %vm2501, 1.0, 0.0
  %v2534 = vsel %vm2502, 1.0, 0.0
  %v2535 = vsel %vm2503, 1.0, 0.0
  %v2536 = vsel %vm2504, 1.0, 0.0
  %v2537 = vsel %vm2505, 1.0, 0.0
  %v2538 = vsel %vm2506, 1.0, 0.0
  %v2539 = vsel %vm2507, 1.0, 0.0
  %v2540 = vsel %vm2508, 1.0, 0.0
  %v2541 = vsel %vm2509, 1.0, 0.0
  %v2542 = vsel %vm2510, 1.0, 0.0
  %v2543 = vsel %vm2511, 1.0, 0.0
  %v2544 = vsel %vm2512, 1.0, 0.0
  %v2545 = vsel %vm2513, 1.0, 0.0
  %v2546 = vsel %vm2514, 1.0, 0.0
  %s2547 = scalar_lea.vmem %s1, 48
  %v2548 = vld [vmem:[%s2547] sm:$0xff]
  %2549 = vmatprep.subr.mxu0 0.0
  %2550 = vmatpush1.msra.mxu0 %v2515
  %2551 = vmatprep.subr.mxu0 0.0
  %2552 = vmatpush1.msra.mxu0 %v2516
  %2553 = vmatprep.subr.mxu0 0.0
  %2554 = vmatpush1.msra.mxu0 %v2517
  %2555 = vmatprep.subr.mxu0 0.0
  %2556 = vmatpush1.msra.mxu0 %v2518
  %2557 = vmatprep.subr.mxu0 0.0
  %2558 = vmatpush1.msra.mxu0 %v2519
  %2559 = vmatprep.subr.mxu0 0.0
  %2560 = vmatpush1.msra.mxu0 %v2520
  %2561 = vmatprep.subr.mxu0 0.0
  %2562 = vmatpush1.msra.mxu0 %v2521
  %2563 = vmatprep.subr.mxu0 0.0
  %2564 = vmatpush1.msra.mxu0 %v2522
  %2565 = vmatprep.subr.mxu0 0.0
  %2566 = vmatpush1.msra.mxu0 %v2523
  %2567 = vmatprep.subr.mxu0 0.0
  %2568 = vmatpush1.msra.mxu0 %v2524
  %2569 = vmatprep.subr.mxu0 0.0
  %2570 = vmatpush1.msra.mxu0 %v2525
  %2571 = vmatprep.subr.mxu0 0.0
  %2572 = vmatpush1.msra.mxu0 %v2526
  %2573 = vmatprep.subr.mxu0 0.0
  %2574 = vmatpush1.msra.mxu0 %v2527
  %2575 = vmatprep.subr.mxu0 0.0
  %2576 = vmatpush1.msra.mxu0 %v2528
  %2577 = vmatprep.subr.mxu0 0.0
  %2578 = vmatpush1.msra.mxu0 %v2529
  %2579 = vmatprep.subr.mxu0 0.0
  %2580 = vmatpush1.msra.mxu0 %v2530
  %2581 = vmatprep.subr.mxu0 0.0
  %2582 = vmatpush1.msra.mxu0 %v2531
  %2583 = vmatprep.subr.mxu0 0.0
  %2584 = vmatpush1.msra.mxu0 %v2532
  %2585 = vmatprep.subr.mxu0 0.0
  %2586 = vmatpush1.msra.mxu0 %v2533
  %2587 = vmatprep.subr.mxu0 0.0
  %2588 = vmatpush1.msra.mxu0 %v2534
  %2589 = vmatprep.subr.mxu0 0.0
  %2590 = vmatpush1.msra.mxu0 %v2535
  %2591 = vmatprep.subr.mxu0 0.0
  %2592 = vmatpush1.msra.mxu0 %v2536
  %2593 = vmatprep.subr.mxu0 0.0
  %2594 = vmatpush1.msra.mxu0 %v2537
  %2595 = vmatprep.subr.mxu0 0.0
  %2596 = vmatpush1.msra.mxu0 %v2538
  %2597 = vmatprep.subr.mxu0 0.0
  %2598 = vmatpush1.msra.mxu0 %v2539
  %2599 = vmatprep.subr.mxu0 0.0
  %2600 = vmatpush1.msra.mxu0 %v2540
  %2601 = vmatprep.subr.mxu0 0.0
  %2602 = vmatpush1.msra.mxu0 %v2541
  %2603 = vmatprep.subr.mxu0 0.0
  %2604 = vmatpush1.msra.mxu0 %v2542
  %2605 = vmatprep.subr.mxu0 0.0
  %2606 = vmatpush1.msra.mxu0 %v2543
  %2607 = vmatprep.subr.mxu0 0.0
  %2608 = vmatpush1.msra.mxu0 %v2544
  %2609 = vmatprep.subr.mxu0 0.0
  %2610 = vmatpush1.msra.mxu0 %v2545
  %2611 = vmatprep.subr.mxu0 0.0
  %2612 = vmatpush1.msra.mxu0 %v2546
  %2613 = vmatprep.mubr.f32.mxu0 %v25
  %2614 = vmatmul.mubr.f32.gmra.mrb[0].mxu0 %v23
  %v2615 = vpop.f32.mrb[0].mxu0
  %v2616 = vadd.f32 0.0, %v2615
  %v2617 = vpop.f32.mrb[0].mxu0
  %2618 = vdwg.mxu0
  %v2620 = vsel %vm500, %v2548, 0
  %v2623 = vsel %vm504, %v2616, 0
  %2625 = vmatprep.subr.mxu0 0.0
  %2626 = vmatpush1.msra.mxu0 %v2623
  %2627 = vmatprep.subr.mxu0 0.0
  %2628 = vmatpush1.msra.mxu0 0.0
  %2629 = vmatprep.subr.mxu0 0.0
  %2630 = vmatpush1.msra.mxu0 0.0
  %2631 = vmatprep.subr.mxu0 0.0
  %2632 = vmatpush1.msra.mxu0 0.0
  %2633 = vmatprep.subr.mxu0 0.0
  %2634 = vmatpush1.msra.mxu0 0.0
  %2635 = vmatprep.subr.mxu0 0.0
  %2636 = vmatpush1.msra.mxu0 0.0
  %2637 = vmatprep.subr.mxu0 0.0
  %2638 = vmatpush1.msra.mxu0 0.0
  %2639 = vmatprep.subr.mxu0 0.0
  %2640 = vmatpush1.msra.mxu0 0.0
  %2641 = vmatprep.subr.mxu0 0.0
  %2642 = vmatpush1.msra.mxu0 0.0
  %2643 = vmatprep.subr.mxu0 0.0
  %2644 = vmatpush1.msra.mxu0 0.0
  %2645 = vmatprep.subr.mxu0 0.0
  %2646 = vmatpush1.msra.mxu0 0.0
  %2647 = vmatprep.subr.mxu0 0.0
  %2648 = vmatpush1.msra.mxu0 0.0
  %2649 = vmatprep.subr.mxu0 0.0
  %2650 = vmatpush1.msra.mxu0 0.0
  %2651 = vmatprep.subr.mxu0 0.0
  %2652 = vmatpush1.msra.mxu0 0.0
  %2653 = vmatprep.subr.mxu0 0.0
  %2654 = vmatpush1.msra.mxu0 0.0
  %2655 = vmatprep.subr.mxu0 0.0
  %2656 = vmatpush1.msra.mxu0 0.0
  %2657 = vmatprep.subr.mxu0 0.0
  %2658 = vmatpush1.msra.mxu0 0.0
  %2659 = vmatprep.subr.mxu0 0.0
  %2660 = vmatpush1.msra.mxu0 0.0
  %2661 = vmatprep.subr.mxu0 0.0
  %2662 = vmatpush1.msra.mxu0 0.0
  %2663 = vmatprep.subr.mxu0 0.0
  %2664 = vmatpush1.msra.mxu0 0.0
  %2665 = vmatprep.subr.mxu0 0.0
  %2666 = vmatpush1.msra.mxu0 0.0
  %2667 = vmatprep.subr.mxu0 0.0
  %2668 = vmatpush1.msra.mxu0 0.0
  %2669 = vmatprep.subr.mxu0 0.0
  %2670 = vmatpush1.msra.mxu0 0.0
  %2671 = vmatprep.subr.mxu0 0.0
  %2672 = vmatpush1.msra.mxu0 0.0
  %2673 = vmatprep.subr.mxu0 0.0
  %2674 = vmatpush1.msra.mxu0 0.0
  %2675 = vmatprep.subr.mxu0 0.0
  %2676 = vmatpush1.msra.mxu0 0.0
  %2677 = vmatprep.subr.mxu0 0.0
  %2678 = vmatpush1.msra.mxu0 0.0
  %2679 = vmatprep.subr.mxu0 0.0
  %2680 = vmatpush1.msra.mxu0 0.0
  %2681 = vmatprep.subr.mxu0 0.0
  %2682 = vmatpush1.msra.mxu0 0.0
  %2683 = vmatprep.subr.mxu0 0.0
  %2684 = vmatpush1.msra.mxu0 0.0
  %2685 = vmatprep.subr.mxu0 0.0
  %2686 = vmatpush1.msra.mxu0 0.0
  %2687 = vmatprep.subr.mxu0 0.0
  %2688 = vmatpush1.msra.mxu0 0.0
  %2689 = vmatprep.mubr.f32.mxu0 0.0
  %2690 = vmatmul.mubr.f32.gmra.mrb[0].mxu0 %v2620
  %v2691 = vpop.f32.mrb[0].mxu0
  %v2692 = vadd.f32 0.0, %v2691
  %v2693 = vpop.f32.mrb[0].mxu0
  %2694 = vdwg.mxu0
  %v2695 = vadd.f32 %v2303, %v2692
  %2696 = vmatprep.subr.mxu0 0.0
  %2697 = vmatpush1.msra.mxu0 %v2515
  %2698 = vmatprep.subr.mxu0 0.0
  %2699 = vmatpush1.msra.mxu0 %v2516
  %2700 = vmatprep.subr.mxu0 0.0
  %2701 = vmatpush1.msra.mxu0 %v2517
  %2702 = vmatprep.subr.mxu0 0.0
  %2703 = vmatpush1.msra.mxu0 %v2518
  %2704 = vmatprep.subr.mxu0 0.0
  %2705 = vmatpush1.msra.mxu0 %v2519
  %2706 = vmatprep.subr.mxu0 0.0
  %2707 = vmatpush1.msra.mxu0 %v2520
  %2708 = vmatprep.subr.mxu0 0.0
  %2709 = vmatpush1.msra.mxu0 %v2521
  %2710 = vmatprep.subr.mxu0 0.0
  %2711 = vmatpush1.msra.mxu0 %v2522
  %2712 = vmatprep.subr.mxu0 0.0
  %2713 = vmatpush1.msra.mxu0 %v2523
  %2714 = vmatprep.subr.mxu0 0.0
  %2715 = vmatpush1.msra.mxu0 %v2524
  %2716 = vmatprep.subr.mxu0 0.0
  %2717 = vmatpush1.msra.mxu0 %v2525
  %2718 = vmatprep.subr.mxu0 0.0
  %2719 = vmatpush1.msra.mxu0 %v2526
  %2720 = vmatprep.subr.mxu0 0.0
  %2721 = vmatpush1.msra.mxu0 %v2527
  %2722 = vmatprep.subr.mxu0 0.0
  %2723 = vmatpush1.msra.mxu0 %v2528
  %2724 = vmatprep.subr.mxu0 0.0
  %2725 = vmatpush1.msra.mxu0 %v2529
  %2726 = vmatprep.subr.mxu0 0.0
  %2727 = vmatpush1.msra.mxu0 %v2530
  %2728 = vmatprep.subr.mxu0 0.0
  %2729 = vmatpush1.msra.mxu0 %v2531
  %2730 = vmatprep.subr.mxu0 0.0
  %2731 = vmatpush1.msra.mxu0 %v2532
  %2732 = vmatprep.subr.mxu0 0.0
  %2733 = vmatpush1.msra.mxu0 %v2533
  %2734 = vmatprep.subr.mxu0 0.0
  %2735 = vmatpush1.msra.mxu0 %v2534
  %2736 = vmatprep.subr.mxu0 0.0
  %2737 = vmatpush1.msra.mxu0 %v2535
  %2738 = vmatprep.subr.mxu0 0.0
  %2739 = vmatpush1.msra.mxu0 %v2536
  %2740 = vmatprep.subr.mxu0 0.0
  %2741 = vmatpush1.msra.mxu0 %v2537
  %2742 = vmatprep.subr.mxu0 0.0
  %2743 = vmatpush1.msra.mxu0 %v2538
  %2744 = vmatprep.subr.mxu0 0.0
  %2745 = vmatpush1.msra.mxu0 %v2539
  %2746 = vmatprep.subr.mxu0 0.0
  %2747 = vmatpush1.msra.mxu0 %v2540
  %2748 = vmatprep.subr.mxu0 0.0
  %2749 = vmatpush1.msra.mxu0 %v2541
  %2750 = vmatprep.subr.mxu0 0.0
  %2751 = vmatpush1.msra.mxu0 %v2542
  %2752 = vmatprep.subr.mxu0 0.0
  %2753 = vmatpush1.msra.mxu0 %v2543
  %2754 = vmatprep.subr.mxu0 0.0
  %2755 = vmatpush1.msra.mxu0 %v2544
  %2756 = vmatprep.subr.mxu0 0.0
  %2757 = vmatpush1.msra.mxu0 %v2545
  %2758 = vmatprep.subr.mxu0 0.0
  %2759 = vmatpush1.msra.mxu0 %v2546
  %2760 = vmatprep.mubr.f32.mxu0 %v35
  %2761 = vmatmul.mubr.f32.gmra.mrb[0].mxu0 %v33
  %v2762 = vpop.f32.mrb[0].mxu0
  %v2763 = vadd.f32 0.0, %v2762
  %v2764 = vpop.f32.mrb[0].mxu0
  %2765 = vdwg.mxu0
  %v2767 = vsel %vm504, %v2763, 0
  %2769 = vmatprep.subr.mxu0 0.0
  %2770 = vmatpush1.msra.mxu0 %v2767
  %2771 = vmatprep.subr.mxu0 0.0
  %2772 = vmatpush1.msra.mxu0 0.0
  %2773 = vmatprep.subr.mxu0 0.0
  %2774 = vmatpush1.msra.mxu0 0.0
  %2775 = vmatprep.subr.mxu0 0.0
  %2776 = vmatpush1.msra.mxu0 0.0
  %2777 = vmatprep.subr.mxu0 0.0
  %2778 = vmatpush1.msra.mxu0 0.0
  %2779 = vmatprep.subr.mxu0 0.0
  %2780 = vmatpush1.msra.mxu0 0.0
  %2781 = vmatprep.subr.mxu0 0.0
  %2782 = vmatpush1.msra.mxu0 0.0
  %2783 = vmatprep.subr.mxu0 0.0
  %2784 = vmatpush1.msra.mxu0 0.0
  %2785 = vmatprep.subr.mxu0 0.0
  %2786 = vmatpush1.msra.mxu0 0.0
  %2787 = vmatprep.subr.mxu0 0.0
  %2788 = vmatpush1.msra.mxu0 0.0
  %2789 = vmatprep.subr.mxu0 0.0
  %2790 = vmatpush1.msra.mxu0 0.0
  %2791 = vmatprep.subr.mxu0 0.0
  %2792 = vmatpush1.msra.mxu0 0.0
  %2793 = vmatprep.subr.mxu0 0.0
  %2794 = vmatpush1.msra.mxu0 0.0
  %2795 = vmatprep.subr.mxu0 0.0
  %2796 = vmatpush1.msra.mxu0 0.0
  %2797 = vmatprep.subr.mxu0 0.0
  %2798 = vmatpush1.msra.mxu0 0.0
  %2799 = vmatprep.subr.mxu0 0.0
  %2800 = vmatpush1.msra.mxu0 0.0
  %2801 = vmatprep.subr.mxu0 0.0
  %2802 = vmatpush1.msra.mxu0 0.0
  %2803 = vmatprep.subr.mxu0 0.0
  %2804 = vmatpush1.msra.mxu0 0.0
  %2805 = vmatprep.subr.mxu0 0.0
  %2806 = vmatpush1.msra.mxu0 0.0
  %2807 = vmatprep.subr.mxu0 0.0
  %2808 = vmatpush1.msra.mxu0 0.0
  %2809 = vmatprep.subr.mxu0 0.0
  %2810 = vmatpush1.msra.mxu0 0.0
  %2811 = vmatprep.subr.mxu0 0.0
  %2812 = vmatpush1.msra.mxu0 0.0
  %2813 = vmatprep.subr.mxu0 0.0
  %2814 = vmatpush1.msra.mxu0 0.0
  %2815 = vmatprep.subr.mxu0 0.0
  %2816 = vmatpush1.msra.mxu0 0.0
  %2817 = vmatprep.subr.mxu0 0.0
  %2818 = vmatpush1.msra.mxu0 0.0
  %2819 = vmatprep.subr.mxu0 0.0
  %2820 = vmatpush1.msra.mxu0 0.0
  %2821 = vmatprep.subr.mxu0 0.0
  %2822 = vmatpush1.msra.mxu0 0.0
  %2823 = vmatprep.subr.mxu0 0.0
  %2824 = vmatpush1.msra.mxu0 0.0
  %2825 = vmatprep.subr.mxu0 0.0
  %2826 = vmatpush1.msra.mxu0 0.0
  %2827 = vmatprep.subr.mxu0 0.0
  %2828 = vmatpush1.msra.mxu0 0.0
  %2829 = vmatprep.subr.mxu0 0.0
  %2830 = vmatpush1.msra.mxu0 0.0
  %2831 = vmatprep.subr.mxu0 0.0
  %2832 = vmatpush1.msra.mxu0 0.0
  %2833 = vmatprep.mubr.f32.mxu0 0.0
  %2834 = vmatmul.mubr.f32.gmra.mrb[0].mxu0 %v2620
  %v2835 = vpop.f32.mrb[0].mxu0
  %v2836 = vadd.f32 0.0, %v2835
  %v2837 = vpop.f32.mrb[0].mxu0
  %2838 = vdwg.mxu0
  %v2839 = vadd.f32 %v2447, %v2836
  %vm2840 = vmand %vm1662, %vm1266
  %vm2841 = vmand %vm2840, %vm1268
  %v2842 = vadd.s32 %v1665, %v1265
  %vm2843 = vcmp.eq.s32.totalorder %v41, %v2842
  %vm2844 = vcmp.eq.s32.totalorder %v42, %v2842
  %vm2845 = vcmp.eq.s32.totalorder %v43, %v2842
  %vm2846 = vcmp.eq.s32.totalorder %v44, %v2842
  %vm2847 = vcmp.eq.s32.totalorder %v45, %v2842
  %vm2848 = vcmp.eq.s32.totalorder %v46, %v2842
  %vm2849 = vcmp.eq.s32.totalorder %v47, %v2842
  %vm2850 = vcmp.eq.s32.totalorder %v48, %v2842
  %vm2851 = vcmp.eq.s32.totalorder %v49, %v2842
  %vm2852 = vcmp.eq.s32.totalorder %v50, %v2842
  %vm2853 = vcmp.eq.s32.totalorder %v51, %v2842
  %vm2854 = vcmp.eq.s32.totalorder %v52, %v2842
  %vm2855 = vcmp.eq.s32.totalorder %v53, %v2842
  %vm2856 = vcmp.eq.s32.totalorder %v54, %v2842
  %vm2857 = vcmp.eq.s32.totalorder %v55, %v2842
  %vm2858 = vcmp.eq.s32.totalorder %v56, %v2842
  %vm2859 = vcmp.eq.s32.totalorder %v57, %v2842
  %vm2860 = vcmp.eq.s32.totalorder %v58, %v2842
  %vm2861 = vcmp.eq.s32.totalorder %v59, %v2842
  %vm2862 = vcmp.eq.s32.totalorder %v60, %v2842
  %vm2863 = vcmp.eq.s32.totalorder %v61, %v2842
  %vm2864 = vcmp.eq.s32.totalorder %v62, %v2842
  %vm2865 = vcmp.eq.s32.totalorder %v63, %v2842
  %vm2866 = vcmp.eq.s32.totalorder %v64, %v2842
  %vm2867 = vcmp.eq.s32.totalorder %v65, %v2842
  %vm2868 = vcmp.eq.s32.totalorder %v66, %v2842
  %vm2869 = vcmp.eq.s32.totalorder %v67, %v2842
  %vm2870 = vcmp.eq.s32.totalorder %v68, %v2842
  %vm2871 = vcmp.eq.s32.totalorder %v69, %v2842
  %vm2872 = vcmp.eq.s32.totalorder %v70, %v2842
  %vm2873 = vcmp.eq.s32.totalorder %v71, %v2842
  %vm2874 = vcmp.eq.s32.totalorder %v72, %v2842
  %vm2875 = vmand %vm2841, %vm2843
  %vm2876 = vmand %vm2841, %vm2844
  %vm2877 = vmand %vm2841, %vm2845
  %vm2878 = vmand %vm2841, %vm2846
  %vm2879 = vmand %vm2841, %vm2847
  %vm2880 = vmand %vm2841, %vm2848
  %vm2881 = vmand %vm2841, %vm2849
  %vm2882 = vmand %vm2841, %vm2850
  %vm2883 = vmand %vm2841, %vm2851
  %vm2884 = vmand %vm2841, %vm2852
  %vm2885 = vmand %vm2841, %vm2853
  %vm2886 = vmand %vm2841, %vm2854
  %vm2887 = vmand %vm2841, %vm2855
  %vm2888 = vmand %vm2841, %vm2856
  %vm2889 = vmand %vm2841, %vm2857
  %vm2890 = vmand %vm2841, %vm2858
  %vm2891 = vmand %vm2841, %vm2859
  %vm2892 = vmand %vm2841, %vm2860
  %vm2893 = vmand %vm2841, %vm2861
  %vm2894 = vmand %vm2841, %vm2862
  %vm2895 = vmand %vm2841, %vm2863
  %vm2896 = vmand %vm2841, %vm2864
  %vm2897 = vmand %vm2841, %vm2865
  %vm2898 = vmand %vm2841, %vm2866
  %vm2899 = vmand %vm2841, %vm2867
  %vm2900 = vmand %vm2841, %vm2868
  %vm2901 = vmand %vm2841, %vm2869
  %vm2902 = vmand %vm2841, %vm2870
  %vm2903 = vmand %vm2841, %vm2871
  %vm2904 = vmand %vm2841, %vm2872
  %vm2905 = vmand %vm2841, %vm2873
  %vm2906 = vmand %vm2841, %vm2874
  %v2907 = vsel %vm2875, 1.0, 0.0
  %v2908 = vsel %vm2876, 1.0, 0.0
  %v2909 = vsel %vm2877, 1.0, 0.0
  %v2910 = vsel %vm2878, 1.0, 0.0
  %v2911 = vsel %vm2879, 1.0, 0.0
  %v2912 = vsel %vm2880, 1.0, 0.0
  %v2913 = vsel %vm2881, 1.0, 0.0
  %v2914 = vsel %vm2882, 1.0, 0.0
  %v2915 = vsel %vm2883, 1.0, 0.0
  %v2916 = vsel %vm2884, 1.0, 0.0
  %v2917 = vsel %vm2885, 1.0, 0.0
  %v2918 = vsel %vm2886, 1.0, 0.0
  %v2919 = vsel %vm2887, 1.0, 0.0
  %v2920 = vsel %vm2888, 1.0, 0.0
  %v2921 = vsel %vm2889, 1.0, 0.0
  %v2922 = vsel %vm2890, 1.0, 0.0
  %v2923 = vsel %vm2891, 1.0, 0.0
  %v2924 = vsel %vm2892, 1.0, 0.0
  %v2925 = vsel %vm2893, 1.0, 0.0
  %v2926 = vsel %vm2894, 1.0, 0.0
  %v2927 = vsel %vm2895, 1.0, 0.0
  %v2928 = vsel %vm2896, 1.0, 0.0
  %v2929 = vsel %vm2897, 1.0, 0.0
  %v2930 = vsel %vm2898, 1.0, 0.0
  %v2931 = vsel %vm2899, 1.0, 0.0
  %v2932 = vsel %vm2900, 1.0, 0.0
  %v2933 = vsel %vm2901, 1.0, 0.0
  %v2934 = vsel %vm2902, 1.0, 0.0
  %v2935 = vsel %vm2903, 1.0, 0.0
  %v2936 = vsel %vm2904, 1.0, 0.0
  %v2937 = vsel %vm2905, 1.0, 0.0
  %v2938 = vsel %vm2906, 1.0, 0.0
  %s2939 = scalar_lea.vmem %s1, 56
  %v2940 = vld [vmem:[%s2939] sm:$0xff]
  %2941 = vmatprep.subr.mxu0 0.0
  %2942 = vmatpush1.msra.mxu0 %v2907
  %2943 = vmatprep.subr.mxu0 0.0
  %2944 = vmatpush1.msra.mxu0 %v2908
  %2945 = vmatprep.subr.mxu0 0.0
  %2946 = vmatpush1.msra.mxu0 %v2909
  %2947 = vmatprep.subr.mxu0 0.0
  %2948 = vmatpush1.msra.mxu0 %v2910
  %2949 = vmatprep.subr.mxu0 0.0
  %2950 = vmatpush1.msra.mxu0 %v2911
  %2951 = vmatprep.subr.mxu0 0.0
  %2952 = vmatpush1.msra.mxu0 %v2912
  %2953 = vmatprep.subr.mxu0 0.0
  %2954 = vmatpush1.msra.mxu0 %v2913
  %2955 = vmatprep.subr.mxu0 0.0
  %2956 = vmatpush1.msra.mxu0 %v2914
  %2957 = vmatprep.subr.mxu0 0.0
  %2958 = vmatpush1.msra.mxu0 %v2915
  %2959 = vmatprep.subr.mxu0 0.0
  %2960 = vmatpush1.msra.mxu0 %v2916
  %2961 = vmatprep.subr.mxu0 0.0
  %2962 = vmatpush1.msra.mxu0 %v2917
  %2963 = vmatprep.subr.mxu0 0.0
  %2964 = vmatpush1.msra.mxu0 %v2918
  %2965 = vmatprep.subr.mxu0 0.0
  %2966 = vmatpush1.msra.mxu0 %v2919
  %2967 = vmatprep.subr.mxu0 0.0
  %2968 = vmatpush1.msra.mxu0 %v2920
  %2969 = vmatprep.subr.mxu0 0.0
  %2970 = vmatpush1.msra.mxu0 %v2921
  %2971 = vmatprep.subr.mxu0 0.0
  %2972 = vmatpush1.msra.mxu0 %v2922
  %2973 = vmatprep.subr.mxu0 0.0
  %2974 = vmatpush1.msra.mxu0 %v2923
  %2975 = vmatprep.subr.mxu0 0.0
  %2976 = vmatpush1.msra.mxu0 %v2924
  %2977 = vmatprep.subr.mxu0 0.0
  %2978 = vmatpush1.msra.mxu0 %v2925
  %2979 = vmatprep.subr.mxu0 0.0
  %2980 = vmatpush1.msra.mxu0 %v2926
  %2981 = vmatprep.subr.mxu0 0.0
  %2982 = vmatpush1.msra.mxu0 %v2927
  %2983 = vmatprep.subr.mxu0 0.0
  %2984 = vmatpush1.msra.mxu0 %v2928
  %2985 = vmatprep.subr.mxu0 0.0
  %2986 = vmatpush1.msra.mxu0 %v2929
  %2987 = vmatprep.subr.mxu0 0.0
  %2988 = vmatpush1.msra.mxu0 %v2930
  %2989 = vmatprep.subr.mxu0 0.0
  %2990 = vmatpush1.msra.mxu0 %v2931
  %2991 = vmatprep.subr.mxu0 0.0
  %2992 = vmatpush1.msra.mxu0 %v2932
  %2993 = vmatprep.subr.mxu0 0.0
  %2994 = vmatpush1.msra.mxu0 %v2933
  %2995 = vmatprep.subr.mxu0 0.0
  %2996 = vmatpush1.msra.mxu0 %v2934
  %2997 = vmatprep.subr.mxu0 0.0
  %2998 = vmatpush1.msra.mxu0 %v2935
  %2999 = vmatprep.subr.mxu0 0.0
  %3000 = vmatpush1.msra.mxu0 %v2936
  %3001 = vmatprep.subr.mxu0 0.0
  %3002 = vmatpush1.msra.mxu0 %v2937
  %3003 = vmatprep.subr.mxu0 0.0
  %3004 = vmatpush1.msra.mxu0 %v2938
  %3005 = vmatprep.mubr.f32.mxu0 %v25
  %3006 = vmatmul.mubr.f32.gmra.mrb[0].mxu0 %v23
  %v3007 = vpop.f32.mrb[0].mxu0
  %v3008 = vadd.f32 0.0, %v3007
  %v3009 = vpop.f32.mrb[0].mxu0
  %3010 = vdwg.mxu0
  %v3012 = vsel %vm500, %v2940, 0
  %v3015 = vsel %vm504, %v3008, 0
  %3017 = vmatprep.subr.mxu0 0.0
  %3018 = vmatpush1.msra.mxu0 %v3015
  %3019 = vmatprep.subr.mxu0 0.0
  %3020 = vmatpush1.msra.mxu0 0.0
  %3021 = vmatprep.subr.mxu0 0.0
  %3022 = vmatpush1.msra.mxu0 0.0
  %3023 = vmatprep.subr.mxu0 0.0
  %3024 = vmatpush1.msra.mxu0 0.0
  %3025 = vmatprep.subr.mxu0 0.0
  %3026 = vmatpush1.msra.mxu0 0.0
  %3027 = vmatprep.subr.mxu0 0.0
  %3028 = vmatpush1.msra.mxu0 0.0
  %3029 = vmatprep.subr.mxu0 0.0
  %3030 = vmatpush1.msra.mxu0 0.0
  %3031 = vmatprep.subr.mxu0 0.0
  %3032 = vmatpush1.msra.mxu0 0.0
  %3033 = vmatprep.subr.mxu0 0.0
  %3034 = vmatpush1.msra.mxu0 0.0
  %3035 = vmatprep.subr.mxu0 0.0
  %3036 = vmatpush1.msra.mxu0 0.0
  %3037 = vmatprep.subr.mxu0 0.0
  %3038 = vmatpush1.msra.mxu0 0.0
  %3039 = vmatprep.subr.mxu0 0.0
  %3040 = vmatpush1.msra.mxu0 0.0
  %3041 = vmatprep.subr.mxu0 0.0
  %3042 = vmatpush1.msra.mxu0 0.0
  %3043 = vmatprep.subr.mxu0 0.0
  %3044 = vmatpush1.msra.mxu0 0.0
  %3045 = vmatprep.subr.mxu0 0.0
  %3046 = vmatpush1.msra.mxu0 0.0
  %3047 = vmatprep.subr.mxu0 0.0
  %3048 = vmatpush1.msra.mxu0 0.0
  %3049 = vmatprep.subr.mxu0 0.0
  %3050 = vmatpush1.msra.mxu0 0.0
  %3051 = vmatprep.subr.mxu0 0.0
  %3052 = vmatpush1.msra.mxu0 0.0
  %3053 = vmatprep.subr.mxu0 0.0
  %3054 = vmatpush1.msra.mxu0 0.0
  %3055 = vmatprep.subr.mxu0 0.0
  %3056 = vmatpush1.msra.mxu0 0.0
  %3057 = vmatprep.subr.mxu0 0.0
  %3058 = vmatpush1.msra.mxu0 0.0
  %3059 = vmatprep.subr.mxu0 0.0
  %3060 = vmatpush1.msra.mxu0 0.0
  %3061 = vmatprep.subr.mxu0 0.0
  %3062 = vmatpush1.msra.mxu0 0.0
  %3063 = vmatprep.subr.mxu0 0.0
  %3064 = vmatpush1.msra.mxu0 0.0
  %3065 = vmatprep.subr.mxu0 0.0
  %3066 = vmatpush1.msra.mxu0 0.0
  %3067 = vmatprep.subr.mxu0 0.0
  %3068 = vmatpush1.msra.mxu0 0.0
  %3069 = vmatprep.subr.mxu0 0.0
  %3070 = vmatpush1.msra.mxu0 0.0
  %3071 = vmatprep.subr.mxu0 0.0
  %3072 = vmatpush1.msra.mxu0 0.0
  %3073 = vmatprep.subr.mxu0 0.0
  %3074 = vmatpush1.msra.mxu0 0.0
  %3075 = vmatprep.subr.mxu0 0.0
  %3076 = vmatpush1.msra.mxu0 0.0
  %3077 = vmatprep.subr.mxu0 0.0
  %3078 = vmatpush1.msra.mxu0 0.0
  %3079 = vmatprep.subr.mxu0 0.0
  %3080 = vmatpush1.msra.mxu0 0.0
  %3081 = vmatprep.mubr.f32.mxu0 0.0
  %3082 = vmatmul.mubr.f32.gmra.mrb[0].mxu0 %v3012
  %v3083 = vpop.f32.mrb[0].mxu0
  %v3084 = vadd.f32 0.0, %v3083
  %v3085 = vpop.f32.mrb[0].mxu0
  %3086 = vdwg.mxu0
  %v3087 = vadd.f32 %v2695, %v3084
  %3088 = vmatprep.subr.mxu0 0.0
  %3089 = vmatpush1.msra.mxu0 %v2907
  %3090 = vmatprep.subr.mxu0 0.0
  %3091 = vmatpush1.msra.mxu0 %v2908
  %3092 = vmatprep.subr.mxu0 0.0
  %3093 = vmatpush1.msra.mxu0 %v2909
  %3094 = vmatprep.subr.mxu0 0.0
  %3095 = vmatpush1.msra.mxu0 %v2910
  %3096 = vmatprep.subr.mxu0 0.0
  %3097 = vmatpush1.msra.mxu0 %v2911
  %3098 = vmatprep.subr.mxu0 0.0
  %3099 = vmatpush1.msra.mxu0 %v2912
  %3100 = vmatprep.subr.mxu0 0.0
  %3101 = vmatpush1.msra.mxu0 %v2913
  %3102 = vmatprep.subr.mxu0 0.0
  %3103 = vmatpush1.msra.mxu0 %v2914
  %3104 = vmatprep.subr.mxu0 0.0
  %3105 = vmatpush1.msra.mxu0 %v2915
  %3106 = vmatprep.subr.mxu0 0.0
  %3107 = vmatpush1.msra.mxu0 %v2916
  %3108 = vmatprep.subr.mxu0 0.0
  %3109 = vmatpush1.msra.mxu0 %v2917
  %3110 = vmatprep.subr.mxu0 0.0
  %3111 = vmatpush1.msra.mxu0 %v2918
  %3112 = vmatprep.subr.mxu0 0.0
  %3113 = vmatpush1.msra.mxu0 %v2919
  %3114 = vmatprep.subr.mxu0 0.0
  %3115 = vmatpush1.msra.mxu0 %v2920
  %3116 = vmatprep.subr.mxu0 0.0
  %3117 = vmatpush1.msra.mxu0 %v2921
  %3118 = vmatprep.subr.mxu0 0.0
  %3119 = vmatpush1.msra.mxu0 %v2922
  %3120 = vmatprep.subr.mxu0 0.0
  %3121 = vmatpush1.msra.mxu0 %v2923
  %3122 = vmatprep.subr.mxu0 0.0
  %3123 = vmatpush1.msra.mxu0 %v2924
  %3124 = vmatprep.subr.mxu0 0.0
  %3125 = vmatpush1.msra.mxu0 %v2925
  %3126 = vmatprep.subr.mxu0 0.0
  %3127 = vmatpush1.msra.mxu0 %v2926
  %3128 = vmatprep.subr.mxu0 0.0
  %3129 = vmatpush1.msra.mxu0 %v2927
  %3130 = vmatprep.subr.mxu0 0.0
  %3131 = vmatpush1.msra.mxu0 %v2928
  %3132 = vmatprep.subr.mxu0 0.0
  %3133 = vmatpush1.msra.mxu0 %v2929
  %3134 = vmatprep.subr.mxu0 0.0
  %3135 = vmatpush1.msra.mxu0 %v2930
  %3136 = vmatprep.subr.mxu0 0.0
  %3137 = vmatpush1.msra.mxu0 %v2931
  %3138 = vmatprep.subr.mxu0 0.0
  %3139 = vmatpush1.msra.mxu0 %v2932
  %3140 = vmatprep.subr.mxu0 0.0
  %3141 = vmatpush1.msra.mxu0 %v2933
  %3142 = vmatprep.subr.mxu0 0.0
  %3143 = vmatpush1.msra.mxu0 %v2934
  %3144 = vmatprep.subr.mxu0 0.0
  %3145 = vmatpush1.msra.mxu0 %v2935
  %3146 = vmatprep.subr.mxu0 0.0
  %3147 = vmatpush1.msra.mxu0 %v2936
  %3148 = vmatprep.subr.mxu0 0.0
  %3149 = vmatpush1.msra.mxu0 %v2937
  %3150 = vmatprep.subr.mxu0 0.0
  %3151 = vmatpush1.msra.mxu0 %v2938
  %3152 = vmatprep.mubr.f32.mxu0 %v35
  %3153 = vmatmul.mubr.f32.gmra.mrb[0].mxu0 %v33
  %v3154 = vpop.f32.mrb[0].mxu0
  %v3155 = vadd.f32 0.0, %v3154
  %v3156 = vpop.f32.mrb[0].mxu0
  %3157 = vdwg.mxu0
  %v3159 = vsel %vm504, %v3155, 0
  %3161 = vmatprep.subr.mxu0 0.0
  %3162 = vmatpush1.msra.mxu0 %v3159
  %3163 = vmatprep.subr.mxu0 0.0
  %3164 = vmatpush1.msra.mxu0 0.0
  %3165 = vmatprep.subr.mxu0 0.0
  %3166 = vmatpush1.msra.mxu0 0.0
  %3167 = vmatprep.subr.mxu0 0.0
  %3168 = vmatpush1.msra.mxu0 0.0
  %3169 = vmatprep.subr.mxu0 0.0
  %3170 = vmatpush1.msra.mxu0 0.0
  %3171 = vmatprep.subr.mxu0 0.0
  %3172 = vmatpush1.msra.mxu0 0.0
  %3173 = vmatprep.subr.mxu0 0.0
  %3174 = vmatpush1.msra.mxu0 0.0
  %3175 = vmatprep.subr.mxu0 0.0
  %3176 = vmatpush1.msra.mxu0 0.0
  %3177 = vmatprep.subr.mxu0 0.0
  %3178 = vmatpush1.msra.mxu0 0.0
  %3179 = vmatprep.subr.mxu0 0.0
  %3180 = vmatpush1.msra.mxu0 0.0
  %3181 = vmatprep.subr.mxu0 0.0
  %3182 = vmatpush1.msra.mxu0 0.0
  %3183 = vmatprep.subr.mxu0 0.0
  %3184 = vmatpush1.msra.mxu0 0.0
  %3185 = vmatprep.subr.mxu0 0.0
  %3186 = vmatpush1.msra.mxu0 0.0
  %3187 = vmatprep.subr.mxu0 0.0
  %3188 = vmatpush1.msra.mxu0 0.0
  %3189 = vmatprep.subr.mxu0 0.0
  %3190 = vmatpush1.msra.mxu0 0.0
  %3191 = vmatprep.subr.mxu0 0.0
  %3192 = vmatpush1.msra.mxu0 0.0
  %3193 = vmatprep.subr.mxu0 0.0
  %3194 = vmatpush1.msra.mxu0 0.0
  %3195 = vmatprep.subr.mxu0 0.0
  %3196 = vmatpush1.msra.mxu0 0.0
  %3197 = vmatprep.subr.mxu0 0.0
  %3198 = vmatpush1.msra.mxu0 0.0
  %3199 = vmatprep.subr.mxu0 0.0
  %3200 = vmatpush1.msra.mxu0 0.0
  %3201 = vmatprep.subr.mxu0 0.0
  %3202 = vmatpush1.msra.mxu0 0.0
  %3203 = vmatprep.subr.mxu0 0.0
  %3204 = vmatpush1.msra.mxu0 0.0
  %3205 = vmatprep.subr.mxu0 0.0
  %3206 = vmatpush1.msra.mxu0 0.0
  %3207 = vmatprep.subr.mxu0 0.0
  %3208 = vmatpush1.msra.mxu0 0.0
  %3209 = vmatprep.subr.mxu0 0.0
  %3210 = vmatpush1.msra.mxu0 0.0
  %3211 = vmatprep.subr.mxu0 0.0
  %3212 = vmatpush1.msra.mxu0 0.0
  %3213 = vmatprep.subr.mxu0 0.0
  %3214 = vmatpush1.msra.mxu0 0.0
  %3215 = vmatprep.subr.mxu0 0.0
  %3216 = vmatpush1.msra.mxu0 0.0
  %3217 = vmatprep.subr.mxu0 0.0
  %3218 = vmatpush1.msra.mxu0 0.0
  %3219 = vmatprep.subr.mxu0 0.0
  %3220 = vmatpush1.msra.mxu0 0.0
  %3221 = vmatprep.subr.mxu0 0.0
  %3222 = vmatpush1.msra.mxu0 0.0
  %3223 = vmatprep.subr.mxu0 0.0
  %3224 = vmatpush1.msra.mxu0 0.0
  %3225 = vmatprep.mubr.f32.mxu0 0.0
  %3226 = vmatmul.mubr.f32.gmra.mrb[0].mxu0 %v3012
  %v3227 = vpop.f32.mrb[0].mxu0
  %v3228 = vadd.f32 0.0, %v3227
  %v3229 = vpop.f32.mrb[0].mxu0
  %3230 = vdwg.mxu0
  %v3231 = vadd.f32 %v2839, %v3228
  %v3232 = vadd.s32 %v76, 1
  %vm3233 = vcmp.ge.s32.totalorder %v3232, 0
  %vm3234 = vcmp.lt.s32.totalorder %v3232, 16
  %vm3235 = vmand %vm3233, %vm3234
  %vm3236 = vmand %vm3235, %vm84
  %vm3237 = vmand %vm3236, %vm86
  %v3238 = vmul.u32 %v3232, 16
  %v3239 = vadd.s32 %v3238, %v80
  %vm3240 = vcmp.eq.s32.totalorder %v41, %v3239
  %vm3241 = vcmp.eq.s32.totalorder %v42, %v3239
  %vm3242 = vcmp.eq.s32.totalorder %v43, %v3239
  %vm3243 = vcmp.eq.s32.totalorder %v44, %v3239
  %vm3244 = vcmp.eq.s32.totalorder %v45, %v3239
  %vm3245 = vcmp.eq.s32.totalorder %v46, %v3239
  %vm3246 = vcmp.eq.s32.totalorder %v47, %v3239
  %vm3247 = vcmp.eq.s32.totalorder %v48, %v3239
  %vm3248 = vcmp.eq.s32.totalorder %v49, %v3239
  %vm3249 = vcmp.eq.s32.totalorder %v50, %v3239
  %vm3250 = vcmp.eq.s32.totalorder %v51, %v3239
  %vm3251 = vcmp.eq.s32.totalorder %v52, %v3239
  %vm3252 = vcmp.eq.s32.totalorder %v53, %v3239
  %vm3253 = vcmp.eq.s32.totalorder %v54, %v3239
  %vm3254 = vcmp.eq.s32.totalorder %v55, %v3239
  %vm3255 = vcmp.eq.s32.totalorder %v56, %v3239
  %vm3256 = vcmp.eq.s32.totalorder %v57, %v3239
  %vm3257 = vcmp.eq.s32.totalorder %v58, %v3239
  %vm3258 = vcmp.eq.s32.totalorder %v59, %v3239
  %vm3259 = vcmp.eq.s32.totalorder %v60, %v3239
  %vm3260 = vcmp.eq.s32.totalorder %v61, %v3239
  %vm3261 = vcmp.eq.s32.totalorder %v62, %v3239
  %vm3262 = vcmp.eq.s32.totalorder %v63, %v3239
  %vm3263 = vcmp.eq.s32.totalorder %v64, %v3239
  %vm3264 = vcmp.eq.s32.totalorder %v65, %v3239
  %vm3265 = vcmp.eq.s32.totalorder %v66, %v3239
  %vm3266 = vcmp.eq.s32.totalorder %v67, %v3239
  %vm3267 = vcmp.eq.s32.totalorder %v68, %v3239
  %vm3268 = vcmp.eq.s32.totalorder %v69, %v3239
  %vm3269 = vcmp.eq.s32.totalorder %v70, %v3239
  %vm3270 = vcmp.eq.s32.totalorder %v71, %v3239
  %vm3271 = vcmp.eq.s32.totalorder %v72, %v3239
  %vm3272 = vmand %vm3237, %vm3240
  %vm3273 = vmand %vm3237, %vm3241
  %vm3274 = vmand %vm3237, %vm3242
  %vm3275 = vmand %vm3237, %vm3243
  %vm3276 = vmand %vm3237, %vm3244
  %vm3277 = vmand %vm3237, %vm3245
  %vm3278 = vmand %vm3237, %vm3246
  %vm3279 = vmand %vm3237, %vm3247
  %vm3280 = vmand %vm3237, %vm3248
  %vm3281 = vmand %vm3237, %vm3249
  %vm3282 = vmand %vm3237, %vm3250
  %vm3283 = vmand %vm3237, %vm3251
  %vm3284 = vmand %vm3237, %vm3252
  %vm3285 = vmand %vm3237, %vm3253
  %vm3286 = vmand %vm3237, %vm3254
  %vm3287 = vmand %vm3237, %vm3255
  %vm3288 = vmand %vm3237, %vm3256
  %vm3289 = vmand %vm3237, %vm3257
  %vm3290 = vmand %vm3237, %vm3258
  %vm3291 = vmand %vm3237, %vm3259
  %vm3292 = vmand %vm3237, %vm3260
  %vm3293 = vmand %vm3237, %vm3261
  %vm3294 = vmand %vm3237, %vm3262
  %vm3295 = vmand %vm3237, %vm3263
  %vm3296 = vmand %vm3237, %vm3264
  %vm3297 = vmand %vm3237, %vm3265
  %vm3298 = vmand %vm3237, %vm3266
  %vm3299 = vmand %vm3237, %vm3267
  %vm3300 = vmand %vm3237, %vm3268
  %vm3301 = vmand %vm3237, %vm3269
  %vm3302 = vmand %vm3237, %vm3270
  %vm3303 = vmand %vm3237, %vm3271
  %v3304 = vsel %vm3272, 1.0, 0.0
  %v3305 = vsel %vm3273, 1.0, 0.0
  %v3306 = vsel %vm3274, 1.0, 0.0
  %v3307 = vsel %vm3275, 1.0, 0.0
  %v3308 = vsel %vm3276, 1.0, 0.0
  %v3309 = vsel %vm3277, 1.0, 0.0
  %v3310 = vsel %vm3278, 1.0, 0.0
  %v3311 = vsel %vm3279, 1.0, 0.0
  %v3312 = vsel %vm3280, 1.0, 0.0
  %v3313 = vsel %vm3281, 1.0, 0.0
  %v3314 = vsel %vm3282, 1.0, 0.0
  %v3315 = vsel %vm3283, 1.0, 0.0
  %v3316 = vsel %vm3284, 1.0, 0.0
  %v3317 = vsel %vm3285, 1.0, 0.0
  %v3318 = vsel %vm3286, 1.0, 0.0
  %v3319 = vsel %vm3287, 1.0, 0.0
  %v3320 = vsel %vm3288, 1.0, 0.0
  %v3321 = vsel %vm3289, 1.0, 0.0
  %v3322 = vsel %vm3290, 1.0, 0.0
  %v3323 = vsel %vm3291, 1.0, 0.0
  %v3324 = vsel %vm3292, 1.0, 0.0
  %v3325 = vsel %vm3293, 1.0, 0.0
  %v3326 = vsel %vm3294, 1.0, 0.0
  %v3327 = vsel %vm3295, 1.0, 0.0
  %v3328 = vsel %vm3296, 1.0, 0.0
  %v3329 = vsel %vm3297, 1.0, 0.0
  %v3330 = vsel %vm3298, 1.0, 0.0
  %v3331 = vsel %vm3299, 1.0, 0.0
  %v3332 = vsel %vm3300, 1.0, 0.0
  %v3333 = vsel %vm3301, 1.0, 0.0
  %v3334 = vsel %vm3302, 1.0, 0.0
  %v3335 = vsel %vm3303, 1.0, 0.0
  %s3336 = scalar_lea.vmem %s1, 64
  %v3337 = vld [vmem:[%s3336] sm:$0xff]
  %3338 = vmatprep.subr.mxu0 0.0
  %3339 = vmatpush1.msra.mxu0 %v3304
  %3340 = vmatprep.subr.mxu0 0.0
  %3341 = vmatpush1.msra.mxu0 %v3305
  %3342 = vmatprep.subr.mxu0 0.0
  %3343 = vmatpush1.msra.mxu0 %v3306
  %3344 = vmatprep.subr.mxu0 0.0
  %3345 = vmatpush1.msra.mxu0 %v3307
  %3346 = vmatprep.subr.mxu0 0.0
  %3347 = vmatpush1.msra.mxu0 %v3308
  %3348 = vmatprep.subr.mxu0 0.0
  %3349 = vmatpush1.msra.mxu0 %v3309
  %3350 = vmatprep.subr.mxu0 0.0
  %3351 = vmatpush1.msra.mxu0 %v3310
  %3352 = vmatprep.subr.mxu0 0.0
  %3353 = vmatpush1.msra.mxu0 %v3311
  %3354 = vmatprep.subr.mxu0 0.0
  %3355 = vmatpush1.msra.mxu0 %v3312
  %3356 = vmatprep.subr.mxu0 0.0
  %3357 = vmatpush1.msra.mxu0 %v3313
  %3358 = vmatprep.subr.mxu0 0.0
  %3359 = vmatpush1.msra.mxu0 %v3314
  %3360 = vmatprep.subr.mxu0 0.0
  %3361 = vmatpush1.msra.mxu0 %v3315
  %3362 = vmatprep.subr.mxu0 0.0
  %3363 = vmatpush1.msra.mxu0 %v3316
  %3364 = vmatprep.subr.mxu0 0.0
  %3365 = vmatpush1.msra.mxu0 %v3317
  %3366 = vmatprep.subr.mxu0 0.0
  %3367 = vmatpush1.msra.mxu0 %v3318
  %3368 = vmatprep.subr.mxu0 0.0
  %3369 = vmatpush1.msra.mxu0 %v3319
  %3370 = vmatprep.subr.mxu0 0.0
  %3371 = vmatpush1.msra.mxu0 %v3320
  %3372 = vmatprep.subr.mxu0 0.0
  %3373 = vmatpush1.msra.mxu0 %v3321
  %3374 = vmatprep.subr.mxu0 0.0
  %3375 = vmatpush1.msra.mxu0 %v3322
  %3376 = vmatprep.subr.mxu0 0.0
  %3377 = vmatpush1.msra.mxu0 %v3323
  %3378 = vmatprep.subr.mxu0 0.0
  %3379 = vmatpush1.msra.mxu0 %v3324
  %3380 = vmatprep.subr.mxu0 0.0
  %3381 = vmatpush1.msra.mxu0 %v3325
  %3382 = vmatprep.subr.mxu0 0.0
  %3383 = vmatpush1.msra.mxu0 %v3326
  %3384 = vmatprep.subr.mxu0 0.0
  %3385 = vmatpush1.msra.mxu0 %v3327
  %3386 = vmatprep.subr.mxu0 0.0
  %3387 = vmatpush1.msra.mxu0 %v3328
  %3388 = vmatprep.subr.mxu0 0.0
  %3389 = vmatpush1.msra.mxu0 %v3329
  %3390 = vmatprep.subr.mxu0 0.0
  %3391 = vmatpush1.msra.mxu0 %v3330
  %3392 = vmatprep.subr.mxu0 0.0
  %3393 = vmatpush1.msra.mxu0 %v3331
  %3394 = vmatprep.subr.mxu0 0.0
  %3395 = vmatpush1.msra.mxu0 %v3332
  %3396 = vmatprep.subr.mxu0 0.0
  %3397 = vmatpush1.msra.mxu0 %v3333
  %3398 = vmatprep.subr.mxu0 0.0
  %3399 = vmatpush1.msra.mxu0 %v3334
  %3400 = vmatprep.subr.mxu0 0.0
  %3401 = vmatpush1.msra.mxu0 %v3335
  %3402 = vmatprep.mubr.f32.mxu0 %v25
  %3403 = vmatmul.mubr.f32.gmra.mrb[0].mxu0 %v23
  %v3404 = vpop.f32.mrb[0].mxu0
  %v3405 = vadd.f32 0.0, %v3404
  %v3406 = vpop.f32.mrb[0].mxu0
  %3407 = vdwg.mxu0
  %v3409 = vsel %vm500, %v3337, 0
  %v3412 = vsel %vm504, %v3405, 0
  %3414 = vmatprep.subr.mxu0 0.0
  %3415 = vmatpush1.msra.mxu0 %v3412
  %3416 = vmatprep.subr.mxu0 0.0
  %3417 = vmatpush1.msra.mxu0 0.0
  %3418 = vmatprep.subr.mxu0 0.0
  %3419 = vmatpush1.msra.mxu0 0.0
  %3420 = vmatprep.subr.mxu0 0.0
  %3421 = vmatpush1.msra.mxu0 0.0
  %3422 = vmatprep.subr.mxu0 0.0
  %3423 = vmatpush1.msra.mxu0 0.0
  %3424 = vmatprep.subr.mxu0 0.0
  %3425 = vmatpush1.msra.mxu0 0.0
  %3426 = vmatprep.subr.mxu0 0.0
  %3427 = vmatpush1.msra.mxu0 0.0
  %3428 = vmatprep.subr.mxu0 0.0
  %3429 = vmatpush1.msra.mxu0 0.0
  %3430 = vmatprep.subr.mxu0 0.0
  %3431 = vmatpush1.msra.mxu0 0.0
  %3432 = vmatprep.subr.mxu0 0.0
  %3433 = vmatpush1.msra.mxu0 0.0
  %3434 = vmatprep.subr.mxu0 0.0
  %3435 = vmatpush1.msra.mxu0 0.0
  %3436 = vmatprep.subr.mxu0 0.0
  %3437 = vmatpush1.msra.mxu0 0.0
  %3438 = vmatprep.subr.mxu0 0.0
  %3439 = vmatpush1.msra.mxu0 0.0
  %3440 = vmatprep.subr.mxu0 0.0
  %3441 = vmatpush1.msra.mxu0 0.0
  %3442 = vmatprep.subr.mxu0 0.0
  %3443 = vmatpush1.msra.mxu0 0.0
  %3444 = vmatprep.subr.mxu0 0.0
  %3445 = vmatpush1.msra.mxu0 0.0
  %3446 = vmatprep.subr.mxu0 0.0
  %3447 = vmatpush1.msra.mxu0 0.0
  %3448 = vmatprep.subr.mxu0 0.0
  %3449 = vmatpush1.msra.mxu0 0.0
  %3450 = vmatprep.subr.mxu0 0.0
  %3451 = vmatpush1.msra.mxu0 0.0
  %3452 = vmatprep.subr.mxu0 0.0
  %3453 = vmatpush1.msra.mxu0 0.0
  %3454 = vmatprep.subr.mxu0 0.0
  %3455 = vmatpush1.msra.mxu0 0.0
  %3456 = vmatprep.subr.mxu0 0.0
  %3457 = vmatpush1.msra.mxu0 0.0
  %3458 = vmatprep.subr.mxu0 0.0
  %3459 = vmatpush1.msra.mxu0 0.0
  %3460 = vmatprep.subr.mxu0 0.0
  %3461 = vmatpush1.msra.mxu0 0.0
  %3462 = vmatprep.subr.mxu0 0.0
  %3463 = vmatpush1.msra.mxu0 0.0
  %3464 = vmatprep.subr.mxu0 0.0
  %3465 = vmatpush1.msra.mxu0 0.0
  %3466 = vmatprep.subr.mxu0 0.0
  %3467 = vmatpush1.msra.mxu0 0.0
  %3468 = vmatprep.subr.mxu0 0.0
  %3469 = vmatpush1.msra.mxu0 0.0
  %3470 = vmatprep.subr.mxu0 0.0
  %3471 = vmatpush1.msra.mxu0 0.0
  %3472 = vmatprep.subr.mxu0 0.0
  %3473 = vmatpush1.msra.mxu0 0.0
  %3474 = vmatprep.subr.mxu0 0.0
  %3475 = vmatpush1.msra.mxu0 0.0
  %3476 = vmatprep.subr.mxu0 0.0
  %3477 = vmatpush1.msra.mxu0 0.0
  %3478 = vmatprep.mubr.f32.mxu0 0.0
  %3479 = vmatmul.mubr.f32.gmra.mrb[0].mxu0 %v3409
  %v3480 = vpop.f32.mrb[0].mxu0
  %v3481 = vadd.f32 0.0, %v3480
  %v3482 = vpop.f32.mrb[0].mxu0
  %3483 = vdwg.mxu0
  %v3484 = vadd.f32 %v3087, %v3481
  %3485 = vmatprep.subr.mxu0 0.0
  %3486 = vmatpush1.msra.mxu0 %v3304
  %3487 = vmatprep.subr.mxu0 0.0
  %3488 = vmatpush1.msra.mxu0 %v3305
  %3489 = vmatprep.subr.mxu0 0.0
  %3490 = vmatpush1.msra.mxu0 %v3306
  %3491 = vmatprep.subr.mxu0 0.0
  %3492 = vmatpush1.msra.mxu0 %v3307
  %3493 = vmatprep.subr.mxu0 0.0
  %3494 = vmatpush1.msra.mxu0 %v3308
  %3495 = vmatprep.subr.mxu0 0.0
  %3496 = vmatpush1.msra.mxu0 %v3309
  %3497 = vmatprep.subr.mxu0 0.0
  %3498 = vmatpush1.msra.mxu0 %v3310
  %3499 = vmatprep.subr.mxu0 0.0
  %3500 = vmatpush1.msra.mxu0 %v3311
  %3501 = vmatprep.subr.mxu0 0.0
  %3502 = vmatpush1.msra.mxu0 %v3312
  %3503 = vmatprep.subr.mxu0 0.0
  %3504 = vmatpush1.msra.mxu0 %v3313
  %3505 = vmatprep.subr.mxu0 0.0
  %3506 = vmatpush1.msra.mxu0 %v3314
  %3507 = vmatprep.subr.mxu0 0.0
  %3508 = vmatpush1.msra.mxu0 %v3315
  %3509 = vmatprep.subr.mxu0 0.0
  %3510 = vmatpush1.msra.mxu0 %v3316
  %3511 = vmatprep.subr.mxu0 0.0
  %3512 = vmatpush1.msra.mxu0 %v3317
  %3513 = vmatprep.subr.mxu0 0.0
  %3514 = vmatpush1.msra.mxu0 %v3318
  %3515 = vmatprep.subr.mxu0 0.0
  %3516 = vmatpush1.msra.mxu0 %v3319
  %3517 = vmatprep.subr.mxu0 0.0
  %3518 = vmatpush1.msra.mxu0 %v3320
  %3519 = vmatprep.subr.mxu0 0.0
  %3520 = vmatpush1.msra.mxu0 %v3321
  %3521 = vmatprep.subr.mxu0 0.0
  %3522 = vmatpush1.msra.mxu0 %v3322
  %3523 = vmatprep.subr.mxu0 0.0
  %3524 = vmatpush1.msra.mxu0 %v3323
  %3525 = vmatprep.subr.mxu0 0.0
  %3526 = vmatpush1.msra.mxu0 %v3324
  %3527 = vmatprep.subr.mxu0 0.0
  %3528 = vmatpush1.msra.mxu0 %v3325
  %3529 = vmatprep.subr.mxu0 0.0
  %3530 = vmatpush1.msra.mxu0 %v3326
  %3531 = vmatprep.subr.mxu0 0.0
  %3532 = vmatpush1.msra.mxu0 %v3327
  %3533 = vmatprep.subr.mxu0 0.0
  %3534 = vmatpush1.msra.mxu0 %v3328
  %3535 = vmatprep.subr.mxu0 0.0
  %3536 = vmatpush1.msra.mxu0 %v3329
  %3537 = vmatprep.subr.mxu0 0.0
  %3538 = vmatpush1.msra.mxu0 %v3330
  %3539 = vmatprep.subr.mxu0 0.0
  %3540 = vmatpush1.msra.mxu0 %v3331
  %3541 = vmatprep.subr.mxu0 0.0
  %3542 = vmatpush1.msra.mxu0 %v3332
  %3543 = vmatprep.subr.mxu0 0.0
  %3544 = vmatpush1.msra.mxu0 %v3333
  %3545 = vmatprep.subr.mxu0 0.0
  %3546 = vmatpush1.msra.mxu0 %v3334
  %3547 = vmatprep.subr.mxu0 0.0
  %3548 = vmatpush1.msra.mxu0 %v3335
  %3549 = vmatprep.mubr.f32.mxu0 %v35
  %3550 = vmatmul.mubr.f32.gmra.mrb[0].mxu0 %v33
  %v3551 = vpop.f32.mrb[0].mxu0
  %v3552 = vadd.f32 0.0, %v3551
  %v3553 = vpop.f32.mrb[0].mxu0
  %3554 = vdwg.mxu0
  %v3556 = vsel %vm504, %v3552, 0
  %3558 = vmatprep.subr.mxu0 0.0
  %3559 = vmatpush1.msra.mxu0 %v3556
  %3560 = vmatprep.subr.mxu0 0.0
  %3561 = vmatpush1.msra.mxu0 0.0
  %3562 = vmatprep.subr.mxu0 0.0
  %3563 = vmatpush1.msra.mxu0 0.0
  %3564 = vmatprep.subr.mxu0 0.0
  %3565 = vmatpush1.msra.mxu0 0.0
  %3566 = vmatprep.subr.mxu0 0.0
  %3567 = vmatpush1.msra.mxu0 0.0
  %3568 = vmatprep.subr.mxu0 0.0
  %3569 = vmatpush1.msra.mxu0 0.0
  %3570 = vmatprep.subr.mxu0 0.0
  %3571 = vmatpush1.msra.mxu0 0.0
  %3572 = vmatprep.subr.mxu0 0.0
  %3573 = vmatpush1.msra.mxu0 0.0
  %3574 = vmatprep.subr.mxu0 0.0
  %3575 = vmatpush1.msra.mxu0 0.0
  %3576 = vmatprep.subr.mxu0 0.0
  %3577 = vmatpush1.msra.mxu0 0.0
  %3578 = vmatprep.subr.mxu0 0.0
  %3579 = vmatpush1.msra.mxu0 0.0
  %3580 = vmatprep.subr.mxu0 0.0
  %3581 = vmatpush1.msra.mxu0 0.0
  %3582 = vmatprep.subr.mxu0 0.0
  %3583 = vmatpush1.msra.mxu0 0.0
  %3584 = vmatprep.subr.mxu0 0.0
  %3585 = vmatpush1.msra.mxu0 0.0
  %3586 = vmatprep.subr.mxu0 0.0
  %3587 = vmatpush1.msra.mxu0 0.0
  %3588 = vmatprep.subr.mxu0 0.0
  %3589 = vmatpush1.msra.mxu0 0.0
  %3590 = vmatprep.subr.mxu0 0.0
  %3591 = vmatpush1.msra.mxu0 0.0
  %3592 = vmatprep.subr.mxu0 0.0
  %3593 = vmatpush1.msra.mxu0 0.0
  %3594 = vmatprep.subr.mxu0 0.0
  %3595 = vmatpush1.msra.mxu0 0.0
  %3596 = vmatprep.subr.mxu0 0.0
  %3597 = vmatpush1.msra.mxu0 0.0
  %3598 = vmatprep.subr.mxu0 0.0
  %3599 = vmatpush1.msra.mxu0 0.0
  %3600 = vmatprep.subr.mxu0 0.0
  %3601 = vmatpush1.msra.mxu0 0.0
  %3602 = vmatprep.subr.mxu0 0.0
  %3603 = vmatpush1.msra.mxu0 0.0
  %3604 = vmatprep.subr.mxu0 0.0
  %3605 = vmatpush1.msra.mxu0 0.0
  %3606 = vmatprep.subr.mxu0 0.0
  %3607 = vmatpush1.msra.mxu0 0.0
  %3608 = vmatprep.subr.mxu0 0.0
  %3609 = vmatpush1.msra.mxu0 0.0
  %3610 = vmatprep.subr.mxu0 0.0
  %3611 = vmatpush1.msra.mxu0 0.0
  %3612 = vmatprep.subr.mxu0 0.0
  %3613 = vmatpush1.msra.mxu0 0.0
  %3614 = vmatprep.subr.mxu0 0.0
  %3615 = vmatpush1.msra.mxu0 0.0
  %3616 = vmatprep.subr.mxu0 0.0
  %3617 = vmatpush1.msra.mxu0 0.0
  %3618 = vmatprep.subr.mxu0 0.0
  %3619 = vmatpush1.msra.mxu0 0.0
  %3620 = vmatprep.subr.mxu0 0.0
  %3621 = vmatpush1.msra.mxu0 0.0
  %3622 = vmatprep.mubr.f32.mxu0 0.0
  %3623 = vmatmul.mubr.f32.gmra.mrb[0].mxu0 %v3409
  %v3624 = vpop.f32.mrb[0].mxu0
  %v3625 = vadd.f32 0.0, %v3624
  %v3626 = vpop.f32.mrb[0].mxu0
  %3627 = vdwg.mxu0
  %v3628 = vadd.f32 %v3231, %v3625
  %vm3629 = vmand %vm3235, %vm327
  %vm3630 = vmand %vm3629, %vm329
  %v3631 = vadd.s32 %v3238, %v78
  %vm3632 = vcmp.eq.s32.totalorder %v41, %v3631
  %vm3633 = vcmp.eq.s32.totalorder %v42, %v3631
  %vm3634 = vcmp.eq.s32.totalorder %v43, %v3631
  %vm3635 = vcmp.eq.s32.totalorder %v44, %v3631
  %vm3636 = vcmp.eq.s32.totalorder %v45, %v3631
  %vm3637 = vcmp.eq.s32.totalorder %v46, %v3631
  %vm3638 = vcmp.eq.s32.totalorder %v47, %v3631
  %vm3639 = vcmp.eq.s32.totalorder %v48, %v3631
  %vm3640 = vcmp.eq.s32.totalorder %v49, %v3631
  %vm3641 = vcmp.eq.s32.totalorder %v50, %v3631
  %vm3642 = vcmp.eq.s32.totalorder %v51, %v3631
  %vm3643 = vcmp.eq.s32.totalorder %v52, %v3631
  %vm3644 = vcmp.eq.s32.totalorder %v53, %v3631
  %vm3645 = vcmp.eq.s32.totalorder %v54, %v3631
  %vm3646 = vcmp.eq.s32.totalorder %v55, %v3631
  %vm3647 = vcmp.eq.s32.totalorder %v56, %v3631
  %vm3648 = vcmp.eq.s32.totalorder %v57, %v3631
  %vm3649 = vcmp.eq.s32.totalorder %v58, %v3631
  %vm3650 = vcmp.eq.s32.totalorder %v59, %v3631
  %vm3651 = vcmp.eq.s32.totalorder %v60, %v3631
  %vm3652 = vcmp.eq.s32.totalorder %v61, %v3631
  %vm3653 = vcmp.eq.s32.totalorder %v62, %v3631
  %vm3654 = vcmp.eq.s32.totalorder %v63, %v3631
  %vm3655 = vcmp.eq.s32.totalorder %v64, %v3631
  %vm3656 = vcmp.eq.s32.totalorder %v65, %v3631
  %vm3657 = vcmp.eq.s32.totalorder %v66, %v3631
  %vm3658 = vcmp.eq.s32.totalorder %v67, %v3631
  %vm3659 = vcmp.eq.s32.totalorder %v68, %v3631
  %vm3660 = vcmp.eq.s32.totalorder %v69, %v3631
  %vm3661 = vcmp.eq.s32.totalorder %v70, %v3631
  %vm3662 = vcmp.eq.s32.totalorder %v71, %v3631
  %vm3663 = vcmp.eq.s32.totalorder %v72, %v3631
  %vm3664 = vmand %vm3630, %vm3632
  %vm3665 = vmand %vm3630, %vm3633
  %vm3666 = vmand %vm3630, %vm3634
  %vm3667 = vmand %vm3630, %vm3635
  %vm3668 = vmand %vm3630, %vm3636
  %vm3669 = vmand %vm3630, %vm3637
  %vm3670 = vmand %vm3630, %vm3638
  %vm3671 = vmand %vm3630, %vm3639
  %vm3672 = vmand %vm3630, %vm3640
  %vm3673 = vmand %vm3630, %vm3641
  %vm3674 = vmand %vm3630, %vm3642
  %vm3675 = vmand %vm3630, %vm3643
  %vm3676 = vmand %vm3630, %vm3644
  %vm3677 = vmand %vm3630, %vm3645
  %vm3678 = vmand %vm3630, %vm3646
  %vm3679 = vmand %vm3630, %vm3647
  %vm3680 = vmand %vm3630, %vm3648
  %vm3681 = vmand %vm3630, %vm3649
  %vm3682 = vmand %vm3630, %vm3650
  %vm3683 = vmand %vm3630, %vm3651
  %vm3684 = vmand %vm3630, %vm3652
  %vm3685 = vmand %vm3630, %vm3653
  %vm3686 = vmand %vm3630, %vm3654
  %vm3687 = vmand %vm3630, %vm3655
  %vm3688 = vmand %vm3630, %vm3656
  %vm3689 = vmand %vm3630, %vm3657
  %vm3690 = vmand %vm3630, %vm3658
  %vm3691 = vmand %vm3630, %vm3659
  %vm3692 = vmand %vm3630, %vm3660
  %vm3693 = vmand %vm3630, %vm3661
  %vm3694 = vmand %vm3630, %vm3662
  %vm3695 = vmand %vm3630, %vm3663
  %v3696 = vsel %vm3664, 1.0, 0.0
  %v3697 = vsel %vm3665, 1.0, 0.0
  %v3698 = vsel %vm3666, 1.0, 0.0
  %v3699 = vsel %vm3667, 1.0, 0.0
  %v3700 = vsel %vm3668, 1.0, 0.0
  %v3701 = vsel %vm3669, 1.0, 0.0
  %v3702 = vsel %vm3670, 1.0, 0.0
  %v3703 = vsel %vm3671, 1.0, 0.0
  %v3704 = vsel %vm3672, 1.0, 0.0
  %v3705 = vsel %vm3673, 1.0, 0.0
  %v3706 = vsel %vm3674, 1.0, 0.0
  %v3707 = vsel %vm3675, 1.0, 0.0
  %v3708 = vsel %vm3676, 1.0, 0.0
  %v3709 = vsel %vm3677, 1.0, 0.0
  %v3710 = vsel %vm3678, 1.0, 0.0
  %v3711 = vsel %vm3679, 1.0, 0.0
  %v3712 = vsel %vm3680, 1.0, 0.0
  %v3713 = vsel %vm3681, 1.0, 0.0
  %v3714 = vsel %vm3682, 1.0, 0.0
  %v3715 = vsel %vm3683, 1.0, 0.0
  %v3716 = vsel %vm3684, 1.0, 0.0
  %v3717 = vsel %vm3685, 1.0, 0.0
  %v3718 = vsel %vm3686, 1.0, 0.0
  %v3719 = vsel %vm3687, 1.0, 0.0
  %v3720 = vsel %vm3688, 1.0, 0.0
  %v3721 = vsel %vm3689, 1.0, 0.0
  %v3722 = vsel %vm3690, 1.0, 0.0
  %v3723 = vsel %vm3691, 1.0, 0.0
  %v3724 = vsel %vm3692, 1.0, 0.0
  %v3725 = vsel %vm3693, 1.0, 0.0
  %v3726 = vsel %vm3694, 1.0, 0.0
  %v3727 = vsel %vm3695, 1.0, 0.0
  %s3728 = scalar_lea.vmem %s1, 72
  %v3729 = vld [vmem:[%s3728] sm:$0xff]
  %3730 = vmatprep.subr.mxu0 0.0
  %3731 = vmatpush1.msra.mxu0 %v3696
  %3732 = vmatprep.subr.mxu0 0.0
  %3733 = vmatpush1.msra.mxu0 %v3697
  %3734 = vmatprep.subr.mxu0 0.0
  %3735 = vmatpush1.msra.mxu0 %v3698
  %3736 = vmatprep.subr.mxu0 0.0
  %3737 = vmatpush1.msra.mxu0 %v3699
  %3738 = vmatprep.subr.mxu0 0.0
  %3739 = vmatpush1.msra.mxu0 %v3700
  %3740 = vmatprep.subr.mxu0 0.0
  %3741 = vmatpush1.msra.mxu0 %v3701
  %3742 = vmatprep.subr.mxu0 0.0
  %3743 = vmatpush1.msra.mxu0 %v3702
  %3744 = vmatprep.subr.mxu0 0.0
  %3745 = vmatpush1.msra.mxu0 %v3703
  %3746 = vmatprep.subr.mxu0 0.0
  %3747 = vmatpush1.msra.mxu0 %v3704
  %3748 = vmatprep.subr.mxu0 0.0
  %3749 = vmatpush1.msra.mxu0 %v3705
  %3750 = vmatprep.subr.mxu0 0.0
  %3751 = vmatpush1.msra.mxu0 %v3706
  %3752 = vmatprep.subr.mxu0 0.0
  %3753 = vmatpush1.msra.mxu0 %v3707
  %3754 = vmatprep.subr.mxu0 0.0
  %3755 = vmatpush1.msra.mxu0 %v3708
  %3756 = vmatprep.subr.mxu0 0.0
  %3757 = vmatpush1.msra.mxu0 %v3709
  %3758 = vmatprep.subr.mxu0 0.0
  %3759 = vmatpush1.msra.mxu0 %v3710
  %3760 = vmatprep.subr.mxu0 0.0
  %3761 = vmatpush1.msra.mxu0 %v3711
  %3762 = vmatprep.subr.mxu0 0.0
  %3763 = vmatpush1.msra.mxu0 %v3712
  %3764 = vmatprep.subr.mxu0 0.0
  %3765 = vmatpush1.msra.mxu0 %v3713
  %3766 = vmatprep.subr.mxu0 0.0
  %3767 = vmatpush1.msra.mxu0 %v3714
  %3768 = vmatprep.subr.mxu0 0.0
  %3769 = vmatpush1.msra.mxu0 %v3715
  %3770 = vmatprep.subr.mxu0 0.0
  %3771 = vmatpush1.msra.mxu0 %v3716
  %3772 = vmatprep.subr.mxu0 0.0
  %3773 = vmatpush1.msra.mxu0 %v3717
  %3774 = vmatprep.subr.mxu0 0.0
  %3775 = vmatpush1.msra.mxu0 %v3718
  %3776 = vmatprep.subr.mxu0 0.0
  %3777 = vmatpush1.msra.mxu0 %v3719
  %3778 = vmatprep.subr.mxu0 0.0
  %3779 = vmatpush1.msra.mxu0 %v3720
  %3780 = vmatprep.subr.mxu0 0.0
  %3781 = vmatpush1.msra.mxu0 %v3721
  %3782 = vmatprep.subr.mxu0 0.0
  %3783 = vmatpush1.msra.mxu0 %v3722
  %3784 = vmatprep.subr.mxu0 0.0
  %3785 = vmatpush1.msra.mxu0 %v3723
  %3786 = vmatprep.subr.mxu0 0.0
  %3787 = vmatpush1.msra.mxu0 %v3724
  %3788 = vmatprep.subr.mxu0 0.0
  %3789 = vmatpush1.msra.mxu0 %v3725
  %3790 = vmatprep.subr.mxu0 0.0
  %3791 = vmatpush1.msra.mxu0 %v3726
  %3792 = vmatprep.subr.mxu0 0.0
  %3793 = vmatpush1.msra.mxu0 %v3727
  %3794 = vmatprep.mubr.f32.mxu0 %v25
  %3795 = vmatmul.mubr.f32.gmra.mrb[0].mxu0 %v23
  %v3796 = vpop.f32.mrb[0].mxu0
  %v3797 = vadd.f32 0.0, %v3796
  %v3798 = vpop.f32.mrb[0].mxu0
  %3799 = vdwg.mxu0
  %v3801 = vsel %vm500, %v3729, 0
  %v3804 = vsel %vm504, %v3797, 0
  %3806 = vmatprep.subr.mxu0 0.0
  %3807 = vmatpush1.msra.mxu0 %v3804
  %3808 = vmatprep.subr.mxu0 0.0
  %3809 = vmatpush1.msra.mxu0 0.0
  %3810 = vmatprep.subr.mxu0 0.0
  %3811 = vmatpush1.msra.mxu0 0.0
  %3812 = vmatprep.subr.mxu0 0.0
  %3813 = vmatpush1.msra.mxu0 0.0
  %3814 = vmatprep.subr.mxu0 0.0
  %3815 = vmatpush1.msra.mxu0 0.0
  %3816 = vmatprep.subr.mxu0 0.0
  %3817 = vmatpush1.msra.mxu0 0.0
  %3818 = vmatprep.subr.mxu0 0.0
  %3819 = vmatpush1.msra.mxu0 0.0
  %3820 = vmatprep.subr.mxu0 0.0
  %3821 = vmatpush1.msra.mxu0 0.0
  %3822 = vmatprep.subr.mxu0 0.0
  %3823 = vmatpush1.msra.mxu0 0.0
  %3824 = vmatprep.subr.mxu0 0.0
  %3825 = vmatpush1.msra.mxu0 0.0
  %3826 = vmatprep.subr.mxu0 0.0
  %3827 = vmatpush1.msra.mxu0 0.0
  %3828 = vmatprep.subr.mxu0 0.0
  %3829 = vmatpush1.msra.mxu0 0.0
  %3830 = vmatprep.subr.mxu0 0.0
  %3831 = vmatpush1.msra.mxu0 0.0
  %3832 = vmatprep.subr.mxu0 0.0
  %3833 = vmatpush1.msra.mxu0 0.0
  %3834 = vmatprep.subr.mxu0 0.0
  %3835 = vmatpush1.msra.mxu0 0.0
  %3836 = vmatprep.subr.mxu0 0.0
  %3837 = vmatpush1.msra.mxu0 0.0
  %3838 = vmatprep.subr.mxu0 0.0
  %3839 = vmatpush1.msra.mxu0 0.0
  %3840 = vmatprep.subr.mxu0 0.0
  %3841 = vmatpush1.msra.mxu0 0.0
  %3842 = vmatprep.subr.mxu0 0.0
  %3843 = vmatpush1.msra.mxu0 0.0
  %3844 = vmatprep.subr.mxu0 0.0
  %3845 = vmatpush1.msra.mxu0 0.0
  %3846 = vmatprep.subr.mxu0 0.0
  %3847 = vmatpush1.msra.mxu0 0.0
  %3848 = vmatprep.subr.mxu0 0.0
  %3849 = vmatpush1.msra.mxu0 0.0
  %3850 = vmatprep.subr.mxu0 0.0
  %3851 = vmatpush1.msra.mxu0 0.0
  %3852 = vmatprep.subr.mxu0 0.0
  %3853 = vmatpush1.msra.mxu0 0.0
  %3854 = vmatprep.subr.mxu0 0.0
  %3855 = vmatpush1.msra.mxu0 0.0
  %3856 = vmatprep.subr.mxu0 0.0
  %3857 = vmatpush1.msra.mxu0 0.0
  %3858 = vmatprep.subr.mxu0 0.0
  %3859 = vmatpush1.msra.mxu0 0.0
  %3860 = vmatprep.subr.mxu0 0.0
  %3861 = vmatpush1.msra.mxu0 0.0
  %3862 = vmatprep.subr.mxu0 0.0
  %3863 = vmatpush1.msra.mxu0 0.0
  %3864 = vmatprep.subr.mxu0 0.0
  %3865 = vmatpush1.msra.mxu0 0.0
  %3866 = vmatprep.subr.mxu0 0.0
  %3867 = vmatpush1.msra.mxu0 0.0
  %3868 = vmatprep.subr.mxu0 0.0
  %3869 = vmatpush1.msra.mxu0 0.0
  %3870 = vmatprep.mubr.f32.mxu0 0.0
  %3871 = vmatmul.mubr.f32.gmra.mrb[0].mxu0 %v3801
  %v3872 = vpop.f32.mrb[0].mxu0
  %v3873 = vadd.f32 0.0, %v3872
  %v3874 = vpop.f32.mrb[0].mxu0
  %3875 = vdwg.mxu0
  %v3876 = vadd.f32 %v3484, %v3873
  %3877 = vmatprep.subr.mxu0 0.0
  %3878 = vmatpush1.msra.mxu0 %v3696
  %3879 = vmatprep.subr.mxu0 0.0
  %3880 = vmatpush1.msra.mxu0 %v3697
  %3881 = vmatprep.subr.mxu0 0.0
  %3882 = vmatpush1.msra.mxu0 %v3698
  %3883 = vmatprep.subr.mxu0 0.0
  %3884 = vmatpush1.msra.mxu0 %v3699
  %3885 = vmatprep.subr.mxu0 0.0
  %3886 = vmatpush1.msra.mxu0 %v3700
  %3887 = vmatprep.subr.mxu0 0.0
  %3888 = vmatpush1.msra.mxu0 %v3701
  %3889 = vmatprep.subr.mxu0 0.0
  %3890 = vmatpush1.msra.mxu0 %v3702
  %3891 = vmatprep.subr.mxu0 0.0
  %3892 = vmatpush1.msra.mxu0 %v3703
  %3893 = vmatprep.subr.mxu0 0.0
  %3894 = vmatpush1.msra.mxu0 %v3704
  %3895 = vmatprep.subr.mxu0 0.0
  %3896 = vmatpush1.msra.mxu0 %v3705
  %3897 = vmatprep.subr.mxu0 0.0
  %3898 = vmatpush1.msra.mxu0 %v3706
  %3899 = vmatprep.subr.mxu0 0.0
  %3900 = vmatpush1.msra.mxu0 %v3707
  %3901 = vmatprep.subr.mxu0 0.0
  %3902 = vmatpush1.msra.mxu0 %v3708
  %3903 = vmatprep.subr.mxu0 0.0
  %3904 = vmatpush1.msra.mxu0 %v3709
  %3905 = vmatprep.subr.mxu0 0.0
  %3906 = vmatpush1.msra.mxu0 %v3710
  %3907 = vmatprep.subr.mxu0 0.0
  %3908 = vmatpush1.msra.mxu0 %v3711
  %3909 = vmatprep.subr.mxu0 0.0
  %3910 = vmatpush1.msra.mxu0 %v3712
  %3911 = vmatprep.subr.mxu0 0.0
  %3912 = vmatpush1.msra.mxu0 %v3713
  %3913 = vmatprep.subr.mxu0 0.0
  %3914 = vmatpush1.msra.mxu0 %v3714
  %3915 = vmatprep.subr.mxu0 0.0
  %3916 = vmatpush1.msra.mxu0 %v3715
  %3917 = vmatprep.subr.mxu0 0.0
  %3918 = vmatpush1.msra.mxu0 %v3716
  %3919 = vmatprep.subr.mxu0 0.0
  %3920 = vmatpush1.msra.mxu0 %v3717
  %3921 = vmatprep.subr.mxu0 0.0
  %3922 = vmatpush1.msra.mxu0 %v3718
  %3923 = vmatprep.subr.mxu0 0.0
  %3924 = vmatpush1.msra.mxu0 %v3719
  %3925 = vmatprep.subr.mxu0 0.0
  %3926 = vmatpush1.msra.mxu0 %v3720
  %3927 = vmatprep.subr.mxu0 0.0
  %3928 = vmatpush1.msra.mxu0 %v3721
  %3929 = vmatprep.subr.mxu0 0.0
  %3930 = vmatpush1.msra.mxu0 %v3722
  %3931 = vmatprep.subr.mxu0 0.0
  %3932 = vmatpush1.msra.mxu0 %v3723
  %3933 = vmatprep.subr.mxu0 0.0
  %3934 = vmatpush1.msra.mxu0 %v3724
  %3935 = vmatprep.subr.mxu0 0.0
  %3936 = vmatpush1.msra.mxu0 %v3725
  %3937 = vmatprep.subr.mxu0 0.0
  %3938 = vmatpush1.msra.mxu0 %v3726
  %3939 = vmatprep.subr.mxu0 0.0
  %3940 = vmatpush1.msra.mxu0 %v3727
  %3941 = vmatprep.mubr.f32.mxu0 %v35
  %3942 = vmatmul.mubr.f32.gmra.mrb[0].mxu0 %v33
  %v3943 = vpop.f32.mrb[0].mxu0
  %v3944 = vadd.f32 0.0, %v3943
  %v3945 = vpop.f32.mrb[0].mxu0
  %3946 = vdwg.mxu0
  %v3948 = vsel %vm504, %v3944, 0
  %3950 = vmatprep.subr.mxu0 0.0
  %3951 = vmatpush1.msra.mxu0 %v3948
  %3952 = vmatprep.subr.mxu0 0.0
  %3953 = vmatpush1.msra.mxu0 0.0
  %3954 = vmatprep.subr.mxu0 0.0
  %3955 = vmatpush1.msra.mxu0 0.0
  %3956 = vmatprep.subr.mxu0 0.0
  %3957 = vmatpush1.msra.mxu0 0.0
  %3958 = vmatprep.subr.mxu0 0.0
  %3959 = vmatpush1.msra.mxu0 0.0
  %3960 = vmatprep.subr.mxu0 0.0
  %3961 = vmatpush1.msra.mxu0 0.0
  %3962 = vmatprep.subr.mxu0 0.0
  %3963 = vmatpush1.msra.mxu0 0.0
  %3964 = vmatprep.subr.mxu0 0.0
  %3965 = vmatpush1.msra.mxu0 0.0
  %3966 = vmatprep.subr.mxu0 0.0
  %3967 = vmatpush1.msra.mxu0 0.0
  %3968 = vmatprep.subr.mxu0 0.0
  %3969 = vmatpush1.msra.mxu0 0.0
  %3970 = vmatprep.subr.mxu0 0.0
  %3971 = vmatpush1.msra.mxu0 0.0
  %3972 = vmatprep.subr.mxu0 0.0
  %3973 = vmatpush1.msra.mxu0 0.0
  %3974 = vmatprep.subr.mxu0 0.0
  %3975 = vmatpush1.msra.mxu0 0.0
  %3976 = vmatprep.subr.mxu0 0.0
  %3977 = vmatpush1.msra.mxu0 0.0
  %3978 = vmatprep.subr.mxu0 0.0
  %3979 = vmatpush1.msra.mxu0 0.0
  %3980 = vmatprep.subr.mxu0 0.0
  %3981 = vmatpush1.msra.mxu0 0.0
  %3982 = vmatprep.subr.mxu0 0.0
  %3983 = vmatpush1.msra.mxu0 0.0
  %3984 = vmatprep.subr.mxu0 0.0
  %3985 = vmatpush1.msra.mxu0 0.0
  %3986 = vmatprep.subr.mxu0 0.0
  %3987 = vmatpush1.msra.mxu0 0.0
  %3988 = vmatprep.subr.mxu0 0.0
  %3989 = vmatpush1.msra.mxu0 0.0
  %3990 = vmatprep.subr.mxu0 0.0
  %3991 = vmatpush1.msra.mxu0 0.0
  %3992 = vmatprep.subr.mxu0 0.0
  %3993 = vmatpush1.msra.mxu0 0.0
  %3994 = vmatprep.subr.mxu0 0.0
  %3995 = vmatpush1.msra.mxu0 0.0
  %3996 = vmatprep.subr.mxu0 0.0
  %3997 = vmatpush1.msra.mxu0 0.0
  %3998 = vmatprep.subr.mxu0 0.0
  %3999 = vmatpush1.msra.mxu0 0.0
  %4000 = vmatprep.subr.mxu0 0.0
  %4001 = vmatpush1.msra.mxu0 0.0
  %4002 = vmatprep.subr.mxu0 0.0
  %4003 = vmatpush1.msra.mxu0 0.0
  %4004 = vmatprep.subr.mxu0 0.0
  %4005 = vmatpush1.msra.mxu0 0.0
  %4006 = vmatprep.subr.mxu0 0.0
  %4007 = vmatpush1.msra.mxu0 0.0
  %4008 = vmatprep.subr.mxu0 0.0
  %4009 = vmatpush1.msra.mxu0 0.0
  %4010 = vmatprep.subr.mxu0 0.0
  %4011 = vmatpush1.msra.mxu0 0.0
  %4012 = vmatprep.subr.mxu0 0.0
  %4013 = vmatpush1.msra.mxu0 0.0
  %4014 = vmatprep.mubr.f32.mxu0 0.0
  %4015 = vmatmul.mubr.f32.gmra.mrb[0].mxu0 %v3801
  %v4016 = vpop.f32.mrb[0].mxu0
  %v4017 = vadd.f32 0.0, %v4016
  %v4018 = vpop.f32.mrb[0].mxu0
  %4019 = vdwg.mxu0
  %v4020 = vadd.f32 %v3628, %v4017
  %vm4021 = vmand %vm3235, %vm871
  %vm4022 = vmand %vm4021, %vm873
  %v4023 = vadd.s32 %v3238, %v870
  %vm4024 = vcmp.eq.s32.totalorder %v41, %v4023
  %vm4025 = vcmp.eq.s32.totalorder %v42, %v4023
  %vm4026 = vcmp.eq.s32.totalorder %v43, %v4023
  %vm4027 = vcmp.eq.s32.totalorder %v44, %v4023
  %vm4028 = vcmp.eq.s32.totalorder %v45, %v4023
  %vm4029 = vcmp.eq.s32.totalorder %v46, %v4023
  %vm4030 = vcmp.eq.s32.totalorder %v47, %v4023
  %vm4031 = vcmp.eq.s32.totalorder %v48, %v4023
  %vm4032 = vcmp.eq.s32.totalorder %v49, %v4023
  %vm4033 = vcmp.eq.s32.totalorder %v50, %v4023
  %vm4034 = vcmp.eq.s32.totalorder %v51, %v4023
  %vm4035 = vcmp.eq.s32.totalorder %v52, %v4023
  %vm4036 = vcmp.eq.s32.totalorder %v53, %v4023
  %vm4037 = vcmp.eq.s32.totalorder %v54, %v4023
  %vm4038 = vcmp.eq.s32.totalorder %v55, %v4023
  %vm4039 = vcmp.eq.s32.totalorder %v56, %v4023
  %vm4040 = vcmp.eq.s32.totalorder %v57, %v4023
  %vm4041 = vcmp.eq.s32.totalorder %v58, %v4023
  %vm4042 = vcmp.eq.s32.totalorder %v59, %v4023
  %vm4043 = vcmp.eq.s32.totalorder %v60, %v4023
  %vm4044 = vcmp.eq.s32.totalorder %v61, %v4023
  %vm4045 = vcmp.eq.s32.totalorder %v62, %v4023
  %vm4046 = vcmp.eq.s32.totalorder %v63, %v4023
  %vm4047 = vcmp.eq.s32.totalorder %v64, %v4023
  %vm4048 = vcmp.eq.s32.totalorder %v65, %v4023
  %vm4049 = vcmp.eq.s32.totalorder %v66, %v4023
  %vm4050 = vcmp.eq.s32.totalorder %v67, %v4023
  %vm4051 = vcmp.eq.s32.totalorder %v68, %v4023
  %vm4052 = vcmp.eq.s32.totalorder %v69, %v4023
  %vm4053 = vcmp.eq.s32.totalorder %v70, %v4023
  %vm4054 = vcmp.eq.s32.totalorder %v71, %v4023
  %vm4055 = vcmp.eq.s32.totalorder %v72, %v4023
  %vm4056 = vmand %vm4022, %vm4024
  %vm4057 = vmand %vm4022, %vm4025
  %vm4058 = vmand %vm4022, %vm4026
  %vm4059 = vmand %vm4022, %vm4027
  %vm4060 = vmand %vm4022, %vm4028
  %vm4061 = vmand %vm4022, %vm4029
  %vm4062 = vmand %vm4022, %vm4030
  %vm4063 = vmand %vm4022, %vm4031
  %vm4064 = vmand %vm4022, %vm4032
  %vm4065 = vmand %vm4022, %vm4033
  %vm4066 = vmand %vm4022, %vm4034
  %vm4067 = vmand %vm4022, %vm4035
  %vm4068 = vmand %vm4022, %vm4036
  %vm4069 = vmand %vm4022, %vm4037
  %vm4070 = vmand %vm4022, %vm4038
  %vm4071 = vmand %vm4022, %vm4039
  %vm4072 = vmand %vm4022, %vm4040
  %vm4073 = vmand %vm4022, %vm4041
  %vm4074 = vmand %vm4022, %vm4042
  %vm4075 = vmand %vm4022, %vm4043
  %vm4076 = vmand %vm4022, %vm4044
  %vm4077 = vmand %vm4022, %vm4045
  %vm4078 = vmand %vm4022, %vm4046
  %vm4079 = vmand %vm4022, %vm4047
  %vm4080 = vmand %vm4022, %vm4048
  %vm4081 = vmand %vm4022, %vm4049
  %vm4082 = vmand %vm4022, %vm4050
  %vm4083 = vmand %vm4022, %vm4051
  %vm4084 = vmand %vm4022, %vm4052
  %vm4085 = vmand %vm4022, %vm4053
  %vm4086 = vmand %vm4022, %vm4054
  %vm4087 = vmand %vm4022, %vm4055
  %v4088 = vsel %vm4056, 1.0, 0.0
  %v4089 = vsel %vm4057, 1.0, 0.0
  %v4090 = vsel %vm4058, 1.0, 0.0
  %v4091 = vsel %vm4059, 1.0, 0.0
  %v4092 = vsel %vm4060, 1.0, 0.0
  %v4093 = vsel %vm4061, 1.0, 0.0
  %v4094 = vsel %vm4062, 1.0, 0.0
  %v4095 = vsel %vm4063, 1.0, 0.0
  %v4096 = vsel %vm4064, 1.0, 0.0
  %v4097 = vsel %vm4065, 1.0, 0.0
  %v4098 = vsel %vm4066, 1.0, 0.0
  %v4099 = vsel %vm4067, 1.0, 0.0
  %v4100 = vsel %vm4068, 1.0, 0.0
  %v4101 = vsel %vm4069, 1.0, 0.0
  %v4102 = vsel %vm4070, 1.0, 0.0
  %v4103 = vsel %vm4071, 1.0, 0.0
  %v4104 = vsel %vm4072, 1.0, 0.0
  %v4105 = vsel %vm4073, 1.0, 0.0
  %v4106 = vsel %vm4074, 1.0, 0.0
  %v4107 = vsel %vm4075, 1.0, 0.0
  %v4108 = vsel %vm4076, 1.0, 0.0
  %v4109 = vsel %vm4077, 1.0, 0.0
  %v4110 = vsel %vm4078, 1.0, 0.0
  %v4111 = vsel %vm4079, 1.0, 0.0
  %v4112 = vsel %vm4080, 1.0, 0.0
  %v4113 = vsel %vm4081, 1.0, 0.0
  %v4114 = vsel %vm4082, 1.0, 0.0
  %v4115 = vsel %vm4083, 1.0, 0.0
  %v4116 = vsel %vm4084, 1.0, 0.0
  %v4117 = vsel %vm4085, 1.0, 0.0
  %v4118 = vsel %vm4086, 1.0, 0.0
  %v4119 = vsel %vm4087, 1.0, 0.0
  %s4120 = scalar_lea.vmem %s1, 80
  %v4121 = vld [vmem:[%s4120] sm:$0xff]
  %4122 = vmatprep.subr.mxu0 0.0
  %4123 = vmatpush1.msra.mxu0 %v4088
  %4124 = vmatprep.subr.mxu0 0.0
  %4125 = vmatpush1.msra.mxu0 %v4089
  %4126 = vmatprep.subr.mxu0 0.0
  %4127 = vmatpush1.msra.mxu0 %v4090
  %4128 = vmatprep.subr.mxu0 0.0
  %4129 = vmatpush1.msra.mxu0 %v4091
  %4130 = vmatprep.subr.mxu0 0.0
  %4131 = vmatpush1.msra.mxu0 %v4092
  %4132 = vmatprep.subr.mxu0 0.0
  %4133 = vmatpush1.msra.mxu0 %v4093
  %4134 = vmatprep.subr.mxu0 0.0
  %4135 = vmatpush1.msra.mxu0 %v4094
  %4136 = vmatprep.subr.mxu0 0.0
  %4137 = vmatpush1.msra.mxu0 %v4095
  %4138 = vmatprep.subr.mxu0 0.0
  %4139 = vmatpush1.msra.mxu0 %v4096
  %4140 = vmatprep.subr.mxu0 0.0
  %4141 = vmatpush1.msra.mxu0 %v4097
  %4142 = vmatprep.subr.mxu0 0.0
  %4143 = vmatpush1.msra.mxu0 %v4098
  %4144 = vmatprep.subr.mxu0 0.0
  %4145 = vmatpush1.msra.mxu0 %v4099
  %4146 = vmatprep.subr.mxu0 0.0
  %4147 = vmatpush1.msra.mxu0 %v4100
  %4148 = vmatprep.subr.mxu0 0.0
  %4149 = vmatpush1.msra.mxu0 %v4101
  %4150 = vmatprep.subr.mxu0 0.0
  %4151 = vmatpush1.msra.mxu0 %v4102
  %4152 = vmatprep.subr.mxu0 0.0
  %4153 = vmatpush1.msra.mxu0 %v4103
  %4154 = vmatprep.subr.mxu0 0.0
  %4155 = vmatpush1.msra.mxu0 %v4104
  %4156 = vmatprep.subr.mxu0 0.0
  %4157 = vmatpush1.msra.mxu0 %v4105
  %4158 = vmatprep.subr.mxu0 0.0
  %4159 = vmatpush1.msra.mxu0 %v4106
  %4160 = vmatprep.subr.mxu0 0.0
  %4161 = vmatpush1.msra.mxu0 %v4107
  %4162 = vmatprep.subr.mxu0 0.0
  %4163 = vmatpush1.msra.mxu0 %v4108
  %4164 = vmatprep.subr.mxu0 0.0
  %4165 = vmatpush1.msra.mxu0 %v4109
  %4166 = vmatprep.subr.mxu0 0.0
  %4167 = vmatpush1.msra.mxu0 %v4110
  %4168 = vmatprep.subr.mxu0 0.0
  %4169 = vmatpush1.msra.mxu0 %v4111
  %4170 = vmatprep.subr.mxu0 0.0
  %4171 = vmatpush1.msra.mxu0 %v4112
  %4172 = vmatprep.subr.mxu0 0.0
  %4173 = vmatpush1.msra.mxu0 %v4113
  %4174 = vmatprep.subr.mxu0 0.0
  %4175 = vmatpush1.msra.mxu0 %v4114
  %4176 = vmatprep.subr.mxu0 0.0
  %4177 = vmatpush1.msra.mxu0 %v4115
  %4178 = vmatprep.subr.mxu0 0.0
  %4179 = vmatpush1.msra.mxu0 %v4116
  %4180 = vmatprep.subr.mxu0 0.0
  %4181 = vmatpush1.msra.mxu0 %v4117
  %4182 = vmatprep.subr.mxu0 0.0
  %4183 = vmatpush1.msra.mxu0 %v4118
  %4184 = vmatprep.subr.mxu0 0.0
  %4185 = vmatpush1.msra.mxu0 %v4119
  %4186 = vmatprep.mubr.f32.mxu0 %v25
  %4187 = vmatmul.mubr.f32.gmra.mrb[0].mxu0 %v23
  %v4188 = vpop.f32.mrb[0].mxu0
  %v4189 = vadd.f32 0.0, %v4188
  %v4190 = vpop.f32.mrb[0].mxu0
  %4191 = vdwg.mxu0
  %v4193 = vsel %vm500, %v4121, 0
  %v4196 = vsel %vm504, %v4189, 0
  %4198 = vmatprep.subr.mxu0 0.0
  %4199 = vmatpush1.msra.mxu0 %v4196
  %4200 = vmatprep.subr.mxu0 0.0
  %4201 = vmatpush1.msra.mxu0 0.0
  %4202 = vmatprep.subr.mxu0 0.0
  %4203 = vmatpush1.msra.mxu0 0.0
  %4204 = vmatprep.subr.mxu0 0.0
  %4205 = vmatpush1.msra.mxu0 0.0
  %4206 = vmatprep.subr.mxu0 0.0
  %4207 = vmatpush1.msra.mxu0 0.0
  %4208 = vmatprep.subr.mxu0 0.0
  %4209 = vmatpush1.msra.mxu0 0.0
  %4210 = vmatprep.subr.mxu0 0.0
  %4211 = vmatpush1.msra.mxu0 0.0
  %4212 = vmatprep.subr.mxu0 0.0
  %4213 = vmatpush1.msra.mxu0 0.0
  %4214 = vmatprep.subr.mxu0 0.0
  %4215 = vmatpush1.msra.mxu0 0.0
  %4216 = vmatprep.subr.mxu0 0.0
  %4217 = vmatpush1.msra.mxu0 0.0
  %4218 = vmatprep.subr.mxu0 0.0
  %4219 = vmatpush1.msra.mxu0 0.0
  %4220 = vmatprep.subr.mxu0 0.0
  %4221 = vmatpush1.msra.mxu0 0.0
  %4222 = vmatprep.subr.mxu0 0.0
  %4223 = vmatpush1.msra.mxu0 0.0
  %4224 = vmatprep.subr.mxu0 0.0
  %4225 = vmatpush1.msra.mxu0 0.0
  %4226 = vmatprep.subr.mxu0 0.0
  %4227 = vmatpush1.msra.mxu0 0.0
  %4228 = vmatprep.subr.mxu0 0.0
  %4229 = vmatpush1.msra.mxu0 0.0
  %4230 = vmatprep.subr.mxu0 0.0
  %4231 = vmatpush1.msra.mxu0 0.0
  %4232 = vmatprep.subr.mxu0 0.0
  %4233 = vmatpush1.msra.mxu0 0.0
  %4234 = vmatprep.subr.mxu0 0.0
  %4235 = vmatpush1.msra.mxu0 0.0
  %4236 = vmatprep.subr.mxu0 0.0
  %4237 = vmatpush1.msra.mxu0 0.0
  %4238 = vmatprep.subr.mxu0 0.0
  %4239 = vmatpush1.msra.mxu0 0.0
  %4240 = vmatprep.subr.mxu0 0.0
  %4241 = vmatpush1.msra.mxu0 0.0
  %4242 = vmatprep.subr.mxu0 0.0
  %4243 = vmatpush1.msra.mxu0 0.0
  %4244 = vmatprep.subr.mxu0 0.0
  %4245 = vmatpush1.msra.mxu0 0.0
  %4246 = vmatprep.subr.mxu0 0.0
  %4247 = vmatpush1.msra.mxu0 0.0
  %4248 = vmatprep.subr.mxu0 0.0
  %4249 = vmatpush1.msra.mxu0 0.0
  %4250 = vmatprep.subr.mxu0 0.0
  %4251 = vmatpush1.msra.mxu0 0.0
  %4252 = vmatprep.subr.mxu0 0.0
  %4253 = vmatpush1.msra.mxu0 0.0
  %4254 = vmatprep.subr.mxu0 0.0
  %4255 = vmatpush1.msra.mxu0 0.0
  %4256 = vmatprep.subr.mxu0 0.0
  %4257 = vmatpush1.msra.mxu0 0.0
  %4258 = vmatprep.subr.mxu0 0.0
  %4259 = vmatpush1.msra.mxu0 0.0
  %4260 = vmatprep.subr.mxu0 0.0
  %4261 = vmatpush1.msra.mxu0 0.0
  %4262 = vmatprep.mubr.f32.mxu0 0.0
  %4263 = vmatmul.mubr.f32.gmra.mrb[0].mxu0 %v4193
  %v4264 = vpop.f32.mrb[0].mxu0
  %v4265 = vadd.f32 0.0, %v4264
  %v4266 = vpop.f32.mrb[0].mxu0
  %4267 = vdwg.mxu0
  %v4268 = vadd.f32 %v3876, %v4265
  %4269 = vmatprep.subr.mxu0 0.0
  %4270 = vmatpush1.msra.mxu0 %v4088
  %4271 = vmatprep.subr.mxu0 0.0
  %4272 = vmatpush1.msra.mxu0 %v4089
  %4273 = vmatprep.subr.mxu0 0.0
  %4274 = vmatpush1.msra.mxu0 %v4090
  %4275 = vmatprep.subr.mxu0 0.0
  %4276 = vmatpush1.msra.mxu0 %v4091
  %4277 = vmatprep.subr.mxu0 0.0
  %4278 = vmatpush1.msra.mxu0 %v4092
  %4279 = vmatprep.subr.mxu0 0.0
  %4280 = vmatpush1.msra.mxu0 %v4093
  %4281 = vmatprep.subr.mxu0 0.0
  %4282 = vmatpush1.msra.mxu0 %v4094
  %4283 = vmatprep.subr.mxu0 0.0
  %4284 = vmatpush1.msra.mxu0 %v4095
  %4285 = vmatprep.subr.mxu0 0.0
  %4286 = vmatpush1.msra.mxu0 %v4096
  %4287 = vmatprep.subr.mxu0 0.0
  %4288 = vmatpush1.msra.mxu0 %v4097
  %4289 = vmatprep.subr.mxu0 0.0
  %4290 = vmatpush1.msra.mxu0 %v4098
  %4291 = vmatprep.subr.mxu0 0.0
  %4292 = vmatpush1.msra.mxu0 %v4099
  %4293 = vmatprep.subr.mxu0 0.0
  %4294 = vmatpush1.msra.mxu0 %v4100
  %4295 = vmatprep.subr.mxu0 0.0
  %4296 = vmatpush1.msra.mxu0 %v4101
  %4297 = vmatprep.subr.mxu0 0.0
  %4298 = vmatpush1.msra.mxu0 %v4102
  %4299 = vmatprep.subr.mxu0 0.0
  %4300 = vmatpush1.msra.mxu0 %v4103
  %4301 = vmatprep.subr.mxu0 0.0
  %4302 = vmatpush1.msra.mxu0 %v4104
  %4303 = vmatprep.subr.mxu0 0.0
  %4304 = vmatpush1.msra.mxu0 %v4105
  %4305 = vmatprep.subr.mxu0 0.0
  %4306 = vmatpush1.msra.mxu0 %v4106
  %4307 = vmatprep.subr.mxu0 0.0
  %4308 = vmatpush1.msra.mxu0 %v4107
  %4309 = vmatprep.subr.mxu0 0.0
  %4310 = vmatpush1.msra.mxu0 %v4108
  %4311 = vmatprep.subr.mxu0 0.0
  %4312 = vmatpush1.msra.mxu0 %v4109
  %4313 = vmatprep.subr.mxu0 0.0
  %4314 = vmatpush1.msra.mxu0 %v4110
  %4315 = vmatprep.subr.mxu0 0.0
  %4316 = vmatpush1.msra.mxu0 %v4111
  %4317 = vmatprep.subr.mxu0 0.0
  %4318 = vmatpush1.msra.mxu0 %v4112
  %4319 = vmatprep.subr.mxu0 0.0
  %4320 = vmatpush1.msra.mxu0 %v4113
  %4321 = vmatprep.subr.mxu0 0.0
  %4322 = vmatpush1.msra.mxu0 %v4114
  %4323 = vmatprep.subr.mxu0 0.0
  %4324 = vmatpush1.msra.mxu0 %v4115
  %4325 = vmatprep.subr.mxu0 0.0
  %4326 = vmatpush1.msra.mxu0 %v4116
  %4327 = vmatprep.subr.mxu0 0.0
  %4328 = vmatpush1.msra.mxu0 %v4117
  %4329 = vmatprep.subr.mxu0 0.0
  %4330 = vmatpush1.msra.mxu0 %v4118
  %4331 = vmatprep.subr.mxu0 0.0
  %4332 = vmatpush1.msra.mxu0 %v4119
  %4333 = vmatprep.mubr.f32.mxu0 %v35
  %4334 = vmatmul.mubr.f32.gmra.mrb[0].mxu0 %v33
  %v4335 = vpop.f32.mrb[0].mxu0
  %v4336 = vadd.f32 0.0, %v4335
  %v4337 = vpop.f32.mrb[0].mxu0
  %4338 = vdwg.mxu0
  %v4340 = vsel %vm504, %v4336, 0
  %4342 = vmatprep.subr.mxu0 0.0
  %4343 = vmatpush1.msra.mxu0 %v4340
  %4344 = vmatprep.subr.mxu0 0.0
  %4345 = vmatpush1.msra.mxu0 0.0
  %4346 = vmatprep.subr.mxu0 0.0
  %4347 = vmatpush1.msra.mxu0 0.0
  %4348 = vmatprep.subr.mxu0 0.0
  %4349 = vmatpush1.msra.mxu0 0.0
  %4350 = vmatprep.subr.mxu0 0.0
  %4351 = vmatpush1.msra.mxu0 0.0
  %4352 = vmatprep.subr.mxu0 0.0
  %4353 = vmatpush1.msra.mxu0 0.0
  %4354 = vmatprep.subr.mxu0 0.0
  %4355 = vmatpush1.msra.mxu0 0.0
  %4356 = vmatprep.subr.mxu0 0.0
  %4357 = vmatpush1.msra.mxu0 0.0
  %4358 = vmatprep.subr.mxu0 0.0
  %4359 = vmatpush1.msra.mxu0 0.0
  %4360 = vmatprep.subr.mxu0 0.0
  %4361 = vmatpush1.msra.mxu0 0.0
  %4362 = vmatprep.subr.mxu0 0.0
  %4363 = vmatpush1.msra.mxu0 0.0
  %4364 = vmatprep.subr.mxu0 0.0
  %4365 = vmatpush1.msra.mxu0 0.0
  %4366 = vmatprep.subr.mxu0 0.0
  %4367 = vmatpush1.msra.mxu0 0.0
  %4368 = vmatprep.subr.mxu0 0.0
  %4369 = vmatpush1.msra.mxu0 0.0
  %4370 = vmatprep.subr.mxu0 0.0
  %4371 = vmatpush1.msra.mxu0 0.0
  %4372 = vmatprep.subr.mxu0 0.0
  %4373 = vmatpush1.msra.mxu0 0.0
  %4374 = vmatprep.subr.mxu0 0.0
  %4375 = vmatpush1.msra.mxu0 0.0
  %4376 = vmatprep.subr.mxu0 0.0
  %4377 = vmatpush1.msra.mxu0 0.0
  %4378 = vmatprep.subr.mxu0 0.0
  %4379 = vmatpush1.msra.mxu0 0.0
  %4380 = vmatprep.subr.mxu0 0.0
  %4381 = vmatpush1.msra.mxu0 0.0
  %4382 = vmatprep.subr.mxu0 0.0
  %4383 = vmatpush1.msra.mxu0 0.0
  %4384 = vmatprep.subr.mxu0 0.0
  %4385 = vmatpush1.msra.mxu0 0.0
  %4386 = vmatprep.subr.mxu0 0.0
  %4387 = vmatpush1.msra.mxu0 0.0
  %4388 = vmatprep.subr.mxu0 0.0
  %4389 = vmatpush1.msra.mxu0 0.0
  %4390 = vmatprep.subr.mxu0 0.0
  %4391 = vmatpush1.msra.mxu0 0.0
  %4392 = vmatprep.subr.mxu0 0.0
  %4393 = vmatpush1.msra.mxu0 0.0
  %4394 = vmatprep.subr.mxu0 0.0
  %4395 = vmatpush1.msra.mxu0 0.0
  %4396 = vmatprep.subr.mxu0 0.0
  %4397 = vmatpush1.msra.mxu0 0.0
  %4398 = vmatprep.subr.mxu0 0.0
  %4399 = vmatpush1.msra.mxu0 0.0
  %4400 = vmatprep.subr.mxu0 0.0
  %4401 = vmatpush1.msra.mxu0 0.0
  %4402 = vmatprep.subr.mxu0 0.0
  %4403 = vmatpush1.msra.mxu0 0.0
  %4404 = vmatprep.subr.mxu0 0.0
  %4405 = vmatpush1.msra.mxu0 0.0
  %4406 = vmatprep.mubr.f32.mxu0 0.0
  %4407 = vmatmul.mubr.f32.gmra.mrb[0].mxu0 %v4193
  %v4408 = vpop.f32.mrb[0].mxu0
  %v4409 = vadd.f32 0.0, %v4408
  %v4410 = vpop.f32.mrb[0].mxu0
  %4411 = vdwg.mxu0
  %v4412 = vadd.f32 %v4020, %v4409
  %vm4413 = vmand %vm3235, %vm1266
  %vm4414 = vmand %vm4413, %vm1268
  %v4415 = vadd.s32 %v3238, %v1265
  %vm4416 = vcmp.eq.s32.totalorder %v41, %v4415
  %vm4417 = vcmp.eq.s32.totalorder %v42, %v4415
  %vm4418 = vcmp.eq.s32.totalorder %v43, %v4415
  %vm4419 = vcmp.eq.s32.totalorder %v44, %v4415
  %vm4420 = vcmp.eq.s32.totalorder %v45, %v4415
  %vm4421 = vcmp.eq.s32.totalorder %v46, %v4415
  %vm4422 = vcmp.eq.s32.totalorder %v47, %v4415
  %vm4423 = vcmp.eq.s32.totalorder %v48, %v4415
  %vm4424 = vcmp.eq.s32.totalorder %v49, %v4415
  %vm4425 = vcmp.eq.s32.totalorder %v50, %v4415
  %vm4426 = vcmp.eq.s32.totalorder %v51, %v4415
  %vm4427 = vcmp.eq.s32.totalorder %v52, %v4415
  %vm4428 = vcmp.eq.s32.totalorder %v53, %v4415
  %vm4429 = vcmp.eq.s32.totalorder %v54, %v4415
  %vm4430 = vcmp.eq.s32.totalorder %v55, %v4415
  %vm4431 = vcmp.eq.s32.totalorder %v56, %v4415
  %vm4432 = vcmp.eq.s32.totalorder %v57, %v4415
  %vm4433 = vcmp.eq.s32.totalorder %v58, %v4415
  %vm4434 = vcmp.eq.s32.totalorder %v59, %v4415
  %vm4435 = vcmp.eq.s32.totalorder %v60, %v4415
  %vm4436 = vcmp.eq.s32.totalorder %v61, %v4415
  %vm4437 = vcmp.eq.s32.totalorder %v62, %v4415
  %vm4438 = vcmp.eq.s32.totalorder %v63, %v4415
  %vm4439 = vcmp.eq.s32.totalorder %v64, %v4415
  %vm4440 = vcmp.eq.s32.totalorder %v65, %v4415
  %vm4441 = vcmp.eq.s32.totalorder %v66, %v4415
  %vm4442 = vcmp.eq.s32.totalorder %v67, %v4415
  %vm4443 = vcmp.eq.s32.totalorder %v68, %v4415
  %vm4444 = vcmp.eq.s32.totalorder %v69, %v4415
  %vm4445 = vcmp.eq.s32.totalorder %v70, %v4415
  %vm4446 = vcmp.eq.s32.totalorder %v71, %v4415
  %vm4447 = vcmp.eq.s32.totalorder %v72, %v4415
  %vm4448 = vmand %vm4414, %vm4416
  %vm4449 = vmand %vm4414, %vm4417
  %vm4450 = vmand %vm4414, %vm4418
  %vm4451 = vmand %vm4414, %vm4419
  %vm4452 = vmand %vm4414, %vm4420
  %vm4453 = vmand %vm4414, %vm4421
  %vm4454 = vmand %vm4414, %vm4422
  %vm4455 = vmand %vm4414, %vm4423
  %vm4456 = vmand %vm4414, %vm4424
  %vm4457 = vmand %vm4414, %vm4425
  %vm4458 = vmand %vm4414, %vm4426
  %vm4459 = vmand %vm4414, %vm4427
  %vm4460 = vmand %vm4414, %vm4428
  %vm4461 = vmand %vm4414, %vm4429
  %vm4462 = vmand %vm4414, %vm4430
  %vm4463 = vmand %vm4414, %vm4431
  %vm4464 = vmand %vm4414, %vm4432
  %vm4465 = vmand %vm4414, %vm4433
  %vm4466 = vmand %vm4414, %vm4434
  %vm4467 = vmand %vm4414, %vm4435
  %vm4468 = vmand %vm4414, %vm4436
  %vm4469 = vmand %vm4414, %vm4437
  %vm4470 = vmand %vm4414, %vm4438
  %vm4471 = vmand %vm4414, %vm4439
  %vm4472 = vmand %vm4414, %vm4440
  %vm4473 = vmand %vm4414, %vm4441
  %vm4474 = vmand %vm4414, %vm4442
  %vm4475 = vmand %vm4414, %vm4443
  %vm4476 = vmand %vm4414, %vm4444
  %vm4477 = vmand %vm4414, %vm4445
  %vm4478 = vmand %vm4414, %vm4446
  %vm4479 = vmand %vm4414, %vm4447
  %v4480 = vsel %vm4448, 1.0, 0.0
  %v4481 = vsel %vm4449, 1.0, 0.0
  %v4482 = vsel %vm4450, 1.0, 0.0
  %v4483 = vsel %vm4451, 1.0, 0.0
  %v4484 = vsel %vm4452, 1.0, 0.0
  %v4485 = vsel %vm4453, 1.0, 0.0
  %v4486 = vsel %vm4454, 1.0, 0.0
  %v4487 = vsel %vm4455, 1.0, 0.0
  %v4488 = vsel %vm4456, 1.0, 0.0
  %v4489 = vsel %vm4457, 1.0, 0.0
  %v4490 = vsel %vm4458, 1.0, 0.0
  %v4491 = vsel %vm4459, 1.0, 0.0
  %v4492 = vsel %vm4460, 1.0, 0.0
  %v4493 = vsel %vm4461, 1.0, 0.0
  %v4494 = vsel %vm4462, 1.0, 0.0
  %v4495 = vsel %vm4463, 1.0, 0.0
  %v4496 = vsel %vm4464, 1.0, 0.0
  %v4497 = vsel %vm4465, 1.0, 0.0
  %v4498 = vsel %vm4466, 1.0, 0.0
  %v4499 = vsel %vm4467, 1.0, 0.0
  %v4500 = vsel %vm4468, 1.0, 0.0
  %v4501 = vsel %vm4469, 1.0, 0.0
  %v4502 = vsel %vm4470, 1.0, 0.0
  %v4503 = vsel %vm4471, 1.0, 0.0
  %v4504 = vsel %vm4472, 1.0, 0.0
  %v4505 = vsel %vm4473, 1.0, 0.0
  %v4506 = vsel %vm4474, 1.0, 0.0
  %v4507 = vsel %vm4475, 1.0, 0.0
  %v4508 = vsel %vm4476, 1.0, 0.0
  %v4509 = vsel %vm4477, 1.0, 0.0
  %v4510 = vsel %vm4478, 1.0, 0.0
  %v4511 = vsel %vm4479, 1.0, 0.0
  %s4512 = scalar_lea.vmem %s1, 88
  %v4513 = vld [vmem:[%s4512] sm:$0xff]
  %4514 = vmatprep.subr.mxu0 0.0
  %4515 = vmatpush1.msra.mxu0 %v4480
  %4516 = vmatprep.subr.mxu0 0.0
  %4517 = vmatpush1.msra.mxu0 %v4481
  %4518 = vmatprep.subr.mxu0 0.0
  %4519 = vmatpush1.msra.mxu0 %v4482
  %4520 = vmatprep.subr.mxu0 0.0
  %4521 = vmatpush1.msra.mxu0 %v4483
  %4522 = vmatprep.subr.mxu0 0.0
  %4523 = vmatpush1.msra.mxu0 %v4484
  %4524 = vmatprep.subr.mxu0 0.0
  %4525 = vmatpush1.msra.mxu0 %v4485
  %4526 = vmatprep.subr.mxu0 0.0
  %4527 = vmatpush1.msra.mxu0 %v4486
  %4528 = vmatprep.subr.mxu0 0.0
  %4529 = vmatpush1.msra.mxu0 %v4487
  %4530 = vmatprep.subr.mxu0 0.0
  %4531 = vmatpush1.msra.mxu0 %v4488
  %4532 = vmatprep.subr.mxu0 0.0
  %4533 = vmatpush1.msra.mxu0 %v4489
  %4534 = vmatprep.subr.mxu0 0.0
  %4535 = vmatpush1.msra.mxu0 %v4490
  %4536 = vmatprep.subr.mxu0 0.0
  %4537 = vmatpush1.msra.mxu0 %v4491
  %4538 = vmatprep.subr.mxu0 0.0
  %4539 = vmatpush1.msra.mxu0 %v4492
  %4540 = vmatprep.subr.mxu0 0.0
  %4541 = vmatpush1.msra.mxu0 %v4493
  %4542 = vmatprep.subr.mxu0 0.0
  %4543 = vmatpush1.msra.mxu0 %v4494
  %4544 = vmatprep.subr.mxu0 0.0
  %4545 = vmatpush1.msra.mxu0 %v4495
  %4546 = vmatprep.subr.mxu0 0.0
  %4547 = vmatpush1.msra.mxu0 %v4496
  %4548 = vmatprep.subr.mxu0 0.0
  %4549 = vmatpush1.msra.mxu0 %v4497
  %4550 = vmatprep.subr.mxu0 0.0
  %4551 = vmatpush1.msra.mxu0 %v4498
  %4552 = vmatprep.subr.mxu0 0.0
  %4553 = vmatpush1.msra.mxu0 %v4499
  %4554 = vmatprep.subr.mxu0 0.0
  %4555 = vmatpush1.msra.mxu0 %v4500
  %4556 = vmatprep.subr.mxu0 0.0
  %4557 = vmatpush1.msra.mxu0 %v4501
  %4558 = vmatprep.subr.mxu0 0.0
  %4559 = vmatpush1.msra.mxu0 %v4502
  %4560 = vmatprep.subr.mxu0 0.0
  %4561 = vmatpush1.msra.mxu0 %v4503
  %4562 = vmatprep.subr.mxu0 0.0
  %4563 = vmatpush1.msra.mxu0 %v4504
  %4564 = vmatprep.subr.mxu0 0.0
  %4565 = vmatpush1.msra.mxu0 %v4505
  %4566 = vmatprep.subr.mxu0 0.0
  %4567 = vmatpush1.msra.mxu0 %v4506
  %4568 = vmatprep.subr.mxu0 0.0
  %4569 = vmatpush1.msra.mxu0 %v4507
  %4570 = vmatprep.subr.mxu0 0.0
  %4571 = vmatpush1.msra.mxu0 %v4508
  %4572 = vmatprep.subr.mxu0 0.0
  %4573 = vmatpush1.msra.mxu0 %v4509
  %4574 = vmatprep.subr.mxu0 0.0
  %4575 = vmatpush1.msra.mxu0 %v4510
  %4576 = vmatprep.subr.mxu0 0.0
  %4577 = vmatpush1.msra.mxu0 %v4511
  %4578 = vmatprep.mubr.f32.mxu0 %v25
  %4579 = vmatmul.mubr.f32.gmra.mrb[0].mxu0 %v23
  %v4580 = vpop.f32.mrb[0].mxu0
  %v4581 = vadd.f32 0.0, %v4580
  %v4582 = vpop.f32.mrb[0].mxu0
  %4583 = vdwg.mxu0
  %v4585 = vsel %vm500, %v4513, 0
  %v4588 = vsel %vm504, %v4581, 0
  %4590 = vmatprep.subr.mxu0 0.0
  %4591 = vmatpush1.msra.mxu0 %v4588
  %4592 = vmatprep.subr.mxu0 0.0
  %4593 = vmatpush1.msra.mxu0 0.0
  %4594 = vmatprep.subr.mxu0 0.0
  %4595 = vmatpush1.msra.mxu0 0.0
  %4596 = vmatprep.subr.mxu0 0.0
  %4597 = vmatpush1.msra.mxu0 0.0
  %4598 = vmatprep.subr.mxu0 0.0
  %4599 = vmatpush1.msra.mxu0 0.0
  %4600 = vmatprep.subr.mxu0 0.0
  %4601 = vmatpush1.msra.mxu0 0.0
  %4602 = vmatprep.subr.mxu0 0.0
  %4603 = vmatpush1.msra.mxu0 0.0
  %4604 = vmatprep.subr.mxu0 0.0
  %4605 = vmatpush1.msra.mxu0 0.0
  %4606 = vmatprep.subr.mxu0 0.0
  %4607 = vmatpush1.msra.mxu0 0.0
  %4608 = vmatprep.subr.mxu0 0.0
  %4609 = vmatpush1.msra.mxu0 0.0
  %4610 = vmatprep.subr.mxu0 0.0
  %4611 = vmatpush1.msra.mxu0 0.0
  %4612 = vmatprep.subr.mxu0 0.0
  %4613 = vmatpush1.msra.mxu0 0.0
  %4614 = vmatprep.subr.mxu0 0.0
  %4615 = vmatpush1.msra.mxu0 0.0
  %4616 = vmatprep.subr.mxu0 0.0
  %4617 = vmatpush1.msra.mxu0 0.0
  %4618 = vmatprep.subr.mxu0 0.0
  %4619 = vmatpush1.msra.mxu0 0.0
  %4620 = vmatprep.subr.mxu0 0.0
  %4621 = vmatpush1.msra.mxu0 0.0
  %4622 = vmatprep.subr.mxu0 0.0
  %4623 = vmatpush1.msra.mxu0 0.0
  %4624 = vmatprep.subr.mxu0 0.0
  %4625 = vmatpush1.msra.mxu0 0.0
  %4626 = vmatprep.subr.mxu0 0.0
  %4627 = vmatpush1.msra.mxu0 0.0
  %4628 = vmatprep.subr.mxu0 0.0
  %4629 = vmatpush1.msra.mxu0 0.0
  %4630 = vmatprep.subr.mxu0 0.0
  %4631 = vmatpush1.msra.mxu0 0.0
  %4632 = vmatprep.subr.mxu0 0.0
  %4633 = vmatpush1.msra.mxu0 0.0
  %4634 = vmatprep.subr.mxu0 0.0
  %4635 = vmatpush1.msra.mxu0 0.0
  %4636 = vmatprep.subr.mxu0 0.0
  %4637 = vmatpush1.msra.mxu0 0.0
  %4638 = vmatprep.subr.mxu0 0.0
  %4639 = vmatpush1.msra.mxu0 0.0
  %4640 = vmatprep.subr.mxu0 0.0
  %4641 = vmatpush1.msra.mxu0 0.0
  %4642 = vmatprep.subr.mxu0 0.0
  %4643 = vmatpush1.msra.mxu0 0.0
  %4644 = vmatprep.subr.mxu0 0.0
  %4645 = vmatpush1.msra.mxu0 0.0
  %4646 = vmatprep.subr.mxu0 0.0
  %4647 = vmatpush1.msra.mxu0 0.0
  %4648 = vmatprep.subr.mxu0 0.0
  %4649 = vmatpush1.msra.mxu0 0.0
  %4650 = vmatprep.subr.mxu0 0.0
  %4651 = vmatpush1.msra.mxu0 0.0
  %4652 = vmatprep.subr.mxu0 0.0
  %4653 = vmatpush1.msra.mxu0 0.0
  %4654 = vmatprep.mubr.f32.mxu0 0.0
  %4655 = vmatmul.mubr.f32.gmra.mrb[0].mxu0 %v4585
  %v4656 = vpop.f32.mrb[0].mxu0
  %v4657 = vadd.f32 0.0, %v4656
  %v4658 = vpop.f32.mrb[0].mxu0
  %4659 = vdwg.mxu0
  %v4660 = vadd.f32 %v4268, %v4657
  %4661 = vmatprep.subr.mxu0 0.0
  %4662 = vmatpush1.msra.mxu0 %v4480
  %4663 = vmatprep.subr.mxu0 0.0
  %4664 = vmatpush1.msra.mxu0 %v4481
  %4665 = vmatprep.subr.mxu0 0.0
  %4666 = vmatpush1.msra.mxu0 %v4482
  %4667 = vmatprep.subr.mxu0 0.0
  %4668 = vmatpush1.msra.mxu0 %v4483
  %4669 = vmatprep.subr.mxu0 0.0
  %4670 = vmatpush1.msra.mxu0 %v4484
  %4671 = vmatprep.subr.mxu0 0.0
  %4672 = vmatpush1.msra.mxu0 %v4485
  %4673 = vmatprep.subr.mxu0 0.0
  %4674 = vmatpush1.msra.mxu0 %v4486
  %4675 = vmatprep.subr.mxu0 0.0
  %4676 = vmatpush1.msra.mxu0 %v4487
  %4677 = vmatprep.subr.mxu0 0.0
  %4678 = vmatpush1.msra.mxu0 %v4488
  %4679 = vmatprep.subr.mxu0 0.0
  %4680 = vmatpush1.msra.mxu0 %v4489
  %4681 = vmatprep.subr.mxu0 0.0
  %4682 = vmatpush1.msra.mxu0 %v4490
  %4683 = vmatprep.subr.mxu0 0.0
  %4684 = vmatpush1.msra.mxu0 %v4491
  %4685 = vmatprep.subr.mxu0 0.0
  %4686 = vmatpush1.msra.mxu0 %v4492
  %4687 = vmatprep.subr.mxu0 0.0
  %4688 = vmatpush1.msra.mxu0 %v4493
  %4689 = vmatprep.subr.mxu0 0.0
  %4690 = vmatpush1.msra.mxu0 %v4494
  %4691 = vmatprep.subr.mxu0 0.0
  %4692 = vmatpush1.msra.mxu0 %v4495
  %4693 = vmatprep.subr.mxu0 0.0
  %4694 = vmatpush1.msra.mxu0 %v4496
  %4695 = vmatprep.subr.mxu0 0.0
  %4696 = vmatpush1.msra.mxu0 %v4497
  %4697 = vmatprep.subr.mxu0 0.0
  %4698 = vmatpush1.msra.mxu0 %v4498
  %4699 = vmatprep.subr.mxu0 0.0
  %4700 = vmatpush1.msra.mxu0 %v4499
  %4701 = vmatprep.subr.mxu0 0.0
  %4702 = vmatpush1.msra.mxu0 %v4500
  %4703 = vmatprep.subr.mxu0 0.0
  %4704 = vmatpush1.msra.mxu0 %v4501
  %4705 = vmatprep.subr.mxu0 0.0
  %4706 = vmatpush1.msra.mxu0 %v4502
  %4707 = vmatprep.subr.mxu0 0.0
  %4708 = vmatpush1.msra.mxu0 %v4503
  %4709 = vmatprep.subr.mxu0 0.0
  %4710 = vmatpush1.msra.mxu0 %v4504
  %4711 = vmatprep.subr.mxu0 0.0
  %4712 = vmatpush1.msra.mxu0 %v4505
  %4713 = vmatprep.subr.mxu0 0.0
  %4714 = vmatpush1.msra.mxu0 %v4506
  %4715 = vmatprep.subr.mxu0 0.0
  %4716 = vmatpush1.msra.mxu0 %v4507
  %4717 = vmatprep.subr.mxu0 0.0
  %4718 = vmatpush1.msra.mxu0 %v4508
  %4719 = vmatprep.subr.mxu0 0.0
  %4720 = vmatpush1.msra.mxu0 %v4509
  %4721 = vmatprep.subr.mxu0 0.0
  %4722 = vmatpush1.msra.mxu0 %v4510
  %4723 = vmatprep.subr.mxu0 0.0
  %4724 = vmatpush1.msra.mxu0 %v4511
  %4725 = vmatprep.mubr.f32.mxu0 %v35
  %4726 = vmatmul.mubr.f32.gmra.mrb[0].mxu0 %v33
  %v4727 = vpop.f32.mrb[0].mxu0
  %v4728 = vadd.f32 0.0, %v4727
  %v4729 = vpop.f32.mrb[0].mxu0
  %4730 = vdwg.mxu0
  %v4732 = vsel %vm504, %v4728, 0
  %4734 = vmatprep.subr.mxu0 0.0
  %4735 = vmatpush1.msra.mxu0 %v4732
  %4736 = vmatprep.subr.mxu0 0.0
  %4737 = vmatpush1.msra.mxu0 0.0
  %4738 = vmatprep.subr.mxu0 0.0
  %4739 = vmatpush1.msra.mxu0 0.0
  %4740 = vmatprep.subr.mxu0 0.0
  %4741 = vmatpush1.msra.mxu0 0.0
  %4742 = vmatprep.subr.mxu0 0.0
  %4743 = vmatpush1.msra.mxu0 0.0
  %4744 = vmatprep.subr.mxu0 0.0
  %4745 = vmatpush1.msra.mxu0 0.0
  %4746 = vmatprep.subr.mxu0 0.0
  %4747 = vmatpush1.msra.mxu0 0.0
  %4748 = vmatprep.subr.mxu0 0.0
  %4749 = vmatpush1.msra.mxu0 0.0
  %4750 = vmatprep.subr.mxu0 0.0
  %4751 = vmatpush1.msra.mxu0 0.0
  %4752 = vmatprep.subr.mxu0 0.0
  %4753 = vmatpush1.msra.mxu0 0.0
  %4754 = vmatprep.subr.mxu0 0.0
  %4755 = vmatpush1.msra.mxu0 0.0
  %4756 = vmatprep.subr.mxu0 0.0
  %4757 = vmatpush1.msra.mxu0 0.0
  %4758 = vmatprep.subr.mxu0 0.0
  %4759 = vmatpush1.msra.mxu0 0.0
  %4760 = vmatprep.subr.mxu0 0.0
  %4761 = vmatpush1.msra.mxu0 0.0
  %4762 = vmatprep.subr.mxu0 0.0
  %4763 = vmatpush1.msra.mxu0 0.0
  %4764 = vmatprep.subr.mxu0 0.0
  %4765 = vmatpush1.msra.mxu0 0.0
  %4766 = vmatprep.subr.mxu0 0.0
  %4767 = vmatpush1.msra.mxu0 0.0
  %4768 = vmatprep.subr.mxu0 0.0
  %4769 = vmatpush1.msra.mxu0 0.0
  %4770 = vmatprep.subr.mxu0 0.0
  %4771 = vmatpush1.msra.mxu0 0.0
  %4772 = vmatprep.subr.mxu0 0.0
  %4773 = vmatpush1.msra.mxu0 0.0
  %4774 = vmatprep.subr.mxu0 0.0
  %4775 = vmatpush1.msra.mxu0 0.0
  %4776 = vmatprep.subr.mxu0 0.0
  %4777 = vmatpush1.msra.mxu0 0.0
  %4778 = vmatprep.subr.mxu0 0.0
  %4779 = vmatpush1.msra.mxu0 0.0
  %4780 = vmatprep.subr.mxu0 0.0
  %4781 = vmatpush1.msra.mxu0 0.0
  %4782 = vmatprep.subr.mxu0 0.0
  %4783 = vmatpush1.msra.mxu0 0.0
  %4784 = vmatprep.subr.mxu0 0.0
  %4785 = vmatpush1.msra.mxu0 0.0
  %4786 = vmatprep.subr.mxu0 0.0
  %4787 = vmatpush1.msra.mxu0 0.0
  %4788 = vmatprep.subr.mxu0 0.0
  %4789 = vmatpush1.msra.mxu0 0.0
  %4790 = vmatprep.subr.mxu0 0.0
  %4791 = vmatpush1.msra.mxu0 0.0
  %4792 = vmatprep.subr.mxu0 0.0
  %4793 = vmatpush1.msra.mxu0 0.0
  %4794 = vmatprep.subr.mxu0 0.0
  %4795 = vmatpush1.msra.mxu0 0.0
  %4796 = vmatprep.subr.mxu0 0.0
  %4797 = vmatpush1.msra.mxu0 0.0
  %4798 = vmatprep.mubr.f32.mxu0 0.0
  %4799 = vmatmul.mubr.f32.gmra.mrb[0].mxu0 %v4585
  %v4800 = vpop.f32.mrb[0].mxu0
  %v4801 = vadd.f32 0.0, %v4800
  %v4802 = vpop.f32.mrb[0].mxu0
  %4803 = vdwg.mxu0
  %v4804 = vadd.f32 %v4412, %v4801
  %v4805 = vadd.s32 %v76, 2
  %vm4806 = vcmp.ge.s32.totalorder %v4805, 0
  %vm4807 = vcmp.lt.s32.totalorder %v4805, 16
  %vm4808 = vmand %vm4806, %vm4807
  %vm4809 = vmand %vm4808, %vm84
  %vm4810 = vmand %vm4809, %vm86
  %v4811 = vmul.u32 %v4805, 16
  %v4812 = vadd.s32 %v4811, %v80
  %vm4813 = vcmp.eq.s32.totalorder %v41, %v4812
  %vm4814 = vcmp.eq.s32.totalorder %v42, %v4812
  %vm4815 = vcmp.eq.s32.totalorder %v43, %v4812
  %vm4816 = vcmp.eq.s32.totalorder %v44, %v4812
  %vm4817 = vcmp.eq.s32.totalorder %v45, %v4812
  %vm4818 = vcmp.eq.s32.totalorder %v46, %v4812
  %vm4819 = vcmp.eq.s32.totalorder %v47, %v4812
  %vm4820 = vcmp.eq.s32.totalorder %v48, %v4812
  %vm4821 = vcmp.eq.s32.totalorder %v49, %v4812
  %vm4822 = vcmp.eq.s32.totalorder %v50, %v4812
  %vm4823 = vcmp.eq.s32.totalorder %v51, %v4812
  %vm4824 = vcmp.eq.s32.totalorder %v52, %v4812
  %vm4825 = vcmp.eq.s32.totalorder %v53, %v4812
  %vm4826 = vcmp.eq.s32.totalorder %v54, %v4812
  %vm4827 = vcmp.eq.s32.totalorder %v55, %v4812
  %vm4828 = vcmp.eq.s32.totalorder %v56, %v4812
  %vm4829 = vcmp.eq.s32.totalorder %v57, %v4812
  %vm4830 = vcmp.eq.s32.totalorder %v58, %v4812
  %vm4831 = vcmp.eq.s32.totalorder %v59, %v4812
  %vm4832 = vcmp.eq.s32.totalorder %v60, %v4812
  %vm4833 = vcmp.eq.s32.totalorder %v61, %v4812
  %vm4834 = vcmp.eq.s32.totalorder %v62, %v4812
  %vm4835 = vcmp.eq.s32.totalorder %v63, %v4812
  %vm4836 = vcmp.eq.s32.totalorder %v64, %v4812
  %vm4837 = vcmp.eq.s32.totalorder %v65, %v4812
  %vm4838 = vcmp.eq.s32.totalorder %v66, %v4812
  %vm4839 = vcmp.eq.s32.totalorder %v67, %v4812
  %vm4840 = vcmp.eq.s32.totalorder %v68, %v4812
  %vm4841 = vcmp.eq.s32.totalorder %v69, %v4812
  %vm4842 = vcmp.eq.s32.totalorder %v70, %v4812
  %vm4843 = vcmp.eq.s32.totalorder %v71, %v4812
  %vm4844 = vcmp.eq.s32.totalorder %v72, %v4812
  %vm4845 = vmand %vm4810, %vm4813
  %vm4846 = vmand %vm4810, %vm4814
  %vm4847 = vmand %vm4810, %vm4815
  %vm4848 = vmand %vm4810, %vm4816
  %vm4849 = vmand %vm4810, %vm4817
  %vm4850 = vmand %vm4810, %vm4818
  %vm4851 = vmand %vm4810, %vm4819
  %vm4852 = vmand %vm4810, %vm4820
  %vm4853 = vmand %vm4810, %vm4821
  %vm4854 = vmand %vm4810, %vm4822
  %vm4855 = vmand %vm4810, %vm4823
  %vm4856 = vmand %vm4810, %vm4824
  %vm4857 = vmand %vm4810, %vm4825
  %vm4858 = vmand %vm4810, %vm4826
  %vm4859 = vmand %vm4810, %vm4827
  %vm4860 = vmand %vm4810, %vm4828
  %vm4861 = vmand %vm4810, %vm4829
  %vm4862 = vmand %vm4810, %vm4830
  %vm4863 = vmand %vm4810, %vm4831
  %vm4864 = vmand %vm4810, %vm4832
  %vm4865 = vmand %vm4810, %vm4833
  %vm4866 = vmand %vm4810, %vm4834
  %vm4867 = vmand %vm4810, %vm4835
  %vm4868 = vmand %vm4810, %vm4836
  %vm4869 = vmand %vm4810, %vm4837
  %vm4870 = vmand %vm4810, %vm4838
  %vm4871 = vmand %vm4810, %vm4839
  %vm4872 = vmand %vm4810, %vm4840
  %vm4873 = vmand %vm4810, %vm4841
  %vm4874 = vmand %vm4810, %vm4842
  %vm4875 = vmand %vm4810, %vm4843
  %vm4876 = vmand %vm4810, %vm4844
  %v4877 = vsel %vm4845, 1.0, 0.0
  %v4878 = vsel %vm4846, 1.0, 0.0
  %v4879 = vsel %vm4847, 1.0, 0.0
  %v4880 = vsel %vm4848, 1.0, 0.0
  %v4881 = vsel %vm4849, 1.0, 0.0
  %v4882 = vsel %vm4850, 1.0, 0.0
  %v4883 = vsel %vm4851, 1.0, 0.0
  %v4884 = vsel %vm4852, 1.0, 0.0
  %v4885 = vsel %vm4853, 1.0, 0.0
  %v4886 = vsel %vm4854, 1.0, 0.0
  %v4887 = vsel %vm4855, 1.0, 0.0
  %v4888 = vsel %vm4856, 1.0, 0.0
  %v4889 = vsel %vm4857, 1.0, 0.0
  %v4890 = vsel %vm4858, 1.0, 0.0
  %v4891 = vsel %vm4859, 1.0, 0.0
  %v4892 = vsel %vm4860, 1.0, 0.0
  %v4893 = vsel %vm4861, 1.0, 0.0
  %v4894 = vsel %vm4862, 1.0, 0.0
  %v4895 = vsel %vm4863, 1.0, 0.0
  %v4896 = vsel %vm4864, 1.0, 0.0
  %v4897 = vsel %vm4865, 1.0, 0.0
  %v4898 = vsel %vm4866, 1.0, 0.0
  %v4899 = vsel %vm4867, 1.0, 0.0
  %v4900 = vsel %vm4868, 1.0, 0.0
  %v4901 = vsel %vm4869, 1.0, 0.0
  %v4902 = vsel %vm4870, 1.0, 0.0
  %v4903 = vsel %vm4871, 1.0, 0.0
  %v4904 = vsel %vm4872, 1.0, 0.0
  %v4905 = vsel %vm4873, 1.0, 0.0
  %v4906 = vsel %vm4874, 1.0, 0.0
  %v4907 = vsel %vm4875, 1.0, 0.0
  %v4908 = vsel %vm4876, 1.0, 0.0
  %s4909 = scalar_lea.vmem %s1, 96
  %v4910 = vld [vmem:[%s4909] sm:$0xff]
  %4911 = vmatprep.subr.mxu0 0.0
  %4912 = vmatpush1.msra.mxu0 %v4877
  %4913 = vmatprep.subr.mxu0 0.0
  %4914 = vmatpush1.msra.mxu0 %v4878
  %4915 = vmatprep.subr.mxu0 0.0
  %4916 = vmatpush1.msra.mxu0 %v4879
  %4917 = vmatprep.subr.mxu0 0.0
  %4918 = vmatpush1.msra.mxu0 %v4880
  %4919 = vmatprep.subr.mxu0 0.0
  %4920 = vmatpush1.msra.mxu0 %v4881
  %4921 = vmatprep.subr.mxu0 0.0
  %4922 = vmatpush1.msra.mxu0 %v4882
  %4923 = vmatprep.subr.mxu0 0.0
  %4924 = vmatpush1.msra.mxu0 %v4883
  %4925 = vmatprep.subr.mxu0 0.0
  %4926 = vmatpush1.msra.mxu0 %v4884
  %4927 = vmatprep.subr.mxu0 0.0
  %4928 = vmatpush1.msra.mxu0 %v4885
  %4929 = vmatprep.subr.mxu0 0.0
  %4930 = vmatpush1.msra.mxu0 %v4886
  %4931 = vmatprep.subr.mxu0 0.0
  %4932 = vmatpush1.msra.mxu0 %v4887
  %4933 = vmatprep.subr.mxu0 0.0
  %4934 = vmatpush1.msra.mxu0 %v4888
  %4935 = vmatprep.subr.mxu0 0.0
  %4936 = vmatpush1.msra.mxu0 %v4889
  %4937 = vmatprep.subr.mxu0 0.0
  %4938 = vmatpush1.msra.mxu0 %v4890
  %4939 = vmatprep.subr.mxu0 0.0
  %4940 = vmatpush1.msra.mxu0 %v4891
  %4941 = vmatprep.subr.mxu0 0.0
  %4942 = vmatpush1.msra.mxu0 %v4892
  %4943 = vmatprep.subr.mxu0 0.0
  %4944 = vmatpush1.msra.mxu0 %v4893
  %4945 = vmatprep.subr.mxu0 0.0
  %4946 = vmatpush1.msra.mxu0 %v4894
  %4947 = vmatprep.subr.mxu0 0.0
  %4948 = vmatpush1.msra.mxu0 %v4895
  %4949 = vmatprep.subr.mxu0 0.0
  %4950 = vmatpush1.msra.mxu0 %v4896
  %4951 = vmatprep.subr.mxu0 0.0
  %4952 = vmatpush1.msra.mxu0 %v4897
  %4953 = vmatprep.subr.mxu0 0.0
  %4954 = vmatpush1.msra.mxu0 %v4898
  %4955 = vmatprep.subr.mxu0 0.0
  %4956 = vmatpush1.msra.mxu0 %v4899
  %4957 = vmatprep.subr.mxu0 0.0
  %4958 = vmatpush1.msra.mxu0 %v4900
  %4959 = vmatprep.subr.mxu0 0.0
  %4960 = vmatpush1.msra.mxu0 %v4901
  %4961 = vmatprep.subr.mxu0 0.0
  %4962 = vmatpush1.msra.mxu0 %v4902
  %4963 = vmatprep.subr.mxu0 0.0
  %4964 = vmatpush1.msra.mxu0 %v4903
  %4965 = vmatprep.subr.mxu0 0.0
  %4966 = vmatpush1.msra.mxu0 %v4904
  %4967 = vmatprep.subr.mxu0 0.0
  %4968 = vmatpush1.msra.mxu0 %v4905
  %4969 = vmatprep.subr.mxu0 0.0
  %4970 = vmatpush1.msra.mxu0 %v4906
  %4971 = vmatprep.subr.mxu0 0.0
  %4972 = vmatpush1.msra.mxu0 %v4907
  %4973 = vmatprep.subr.mxu0 0.0
  %4974 = vmatpush1.msra.mxu0 %v4908
  %4975 = vmatprep.mubr.f32.mxu0 %v25
  %4976 = vmatmul.mubr.f32.gmra.mrb[0].mxu0 %v23
  %v4977 = vpop.f32.mrb[0].mxu0
  %v4978 = vadd.f32 0.0, %v4977
  %v4979 = vpop.f32.mrb[0].mxu0
  %4980 = vdwg.mxu0
  %v4982 = vsel %vm500, %v4910, 0
  %v4985 = vsel %vm504, %v4978, 0
  %4987 = vmatprep.subr.mxu0 0.0
  %4988 = vmatpush1.msra.mxu0 %v4985
  %4989 = vmatprep.subr.mxu0 0.0
  %4990 = vmatpush1.msra.mxu0 0.0
  %4991 = vmatprep.subr.mxu0 0.0
  %4992 = vmatpush1.msra.mxu0 0.0
  %4993 = vmatprep.subr.mxu0 0.0
  %4994 = vmatpush1.msra.mxu0 0.0
  %4995 = vmatprep.subr.mxu0 0.0
  %4996 = vmatpush1.msra.mxu0 0.0
  %4997 = vmatprep.subr.mxu0 0.0
  %4998 = vmatpush1.msra.mxu0 0.0
  %4999 = vmatprep.subr.mxu0 0.0
  %5000 = vmatpush1.msra.mxu0 0.0
  %5001 = vmatprep.subr.mxu0 0.0
  %5002 = vmatpush1.msra.mxu0 0.0
  %5003 = vmatprep.subr.mxu0 0.0
  %5004 = vmatpush1.msra.mxu0 0.0
  %5005 = vmatprep.subr.mxu0 0.0
  %5006 = vmatpush1.msra.mxu0 0.0
  %5007 = vmatprep.subr.mxu0 0.0
  %5008 = vmatpush1.msra.mxu0 0.0
  %5009 = vmatprep.subr.mxu0 0.0
  %5010 = vmatpush1.msra.mxu0 0.0
  %5011 = vmatprep.subr.mxu0 0.0
  %5012 = vmatpush1.msra.mxu0 0.0
  %5013 = vmatprep.subr.mxu0 0.0
  %5014 = vmatpush1.msra.mxu0 0.0
  %5015 = vmatprep.subr.mxu0 0.0
  %5016 = vmatpush1.msra.mxu0 0.0
  %5017 = vmatprep.subr.mxu0 0.0
  %5018 = vmatpush1.msra.mxu0 0.0
  %5019 = vmatprep.subr.mxu0 0.0
  %5020 = vmatpush1.msra.mxu0 0.0
  %5021 = vmatprep.subr.mxu0 0.0
  %5022 = vmatpush1.msra.mxu0 0.0
  %5023 = vmatprep.subr.mxu0 0.0
  %5024 = vmatpush1.msra.mxu0 0.0
  %5025 = vmatprep.subr.mxu0 0.0
  %5026 = vmatpush1.msra.mxu0 0.0
  %5027 = vmatprep.subr.mxu0 0.0
  %5028 = vmatpush1.msra.mxu0 0.0
  %5029 = vmatprep.subr.mxu0 0.0
  %5030 = vmatpush1.msra.mxu0 0.0
  %5031 = vmatprep.subr.mxu0 0.0
  %5032 = vmatpush1.msra.mxu0 0.0
  %5033 = vmatprep.subr.mxu0 0.0
  %5034 = vmatpush1.msra.mxu0 0.0
  %5035 = vmatprep.subr.mxu0 0.0
  %5036 = vmatpush1.msra.mxu0 0.0
  %5037 = vmatprep.subr.mxu0 0.0
  %5038 = vmatpush1.msra.mxu0 0.0
  %5039 = vmatprep.subr.mxu0 0.0
  %5040 = vmatpush1.msra.mxu0 0.0
  %5041 = vmatprep.subr.mxu0 0.0
  %5042 = vmatpush1.msra.mxu0 0.0
  %5043 = vmatprep.subr.mxu0 0.0
  %5044 = vmatpush1.msra.mxu0 0.0
  %5045 = vmatprep.subr.mxu0 0.0
  %5046 = vmatpush1.msra.mxu0 0.0
  %5047 = vmatprep.subr.mxu0 0.0
  %5048 = vmatpush1.msra.mxu0 0.0
  %5049 = vmatprep.subr.mxu0 0.0
  %5050 = vmatpush1.msra.mxu0 0.0
  %5051 = vmatprep.mubr.f32.mxu0 0.0
  %5052 = vmatmul.mubr.f32.gmra.mrb[0].mxu0 %v4982
  %v5053 = vpop.f32.mrb[0].mxu0
  %v5054 = vadd.f32 0.0, %v5053
  %v5055 = vpop.f32.mrb[0].mxu0
  %5056 = vdwg.mxu0
  %v5057 = vadd.f32 %v4660, %v5054
  %5058 = vmatprep.subr.mxu0 0.0
  %5059 = vmatpush1.msra.mxu0 %v4877
  %5060 = vmatprep.subr.mxu0 0.0
  %5061 = vmatpush1.msra.mxu0 %v4878
  %5062 = vmatprep.subr.mxu0 0.0
  %5063 = vmatpush1.msra.mxu0 %v4879
  %5064 = vmatprep.subr.mxu0 0.0
  %5065 = vmatpush1.msra.mxu0 %v4880
  %5066 = vmatprep.subr.mxu0 0.0
  %5067 = vmatpush1.msra.mxu0 %v4881
  %5068 = vmatprep.subr.mxu0 0.0
  %5069 = vmatpush1.msra.mxu0 %v4882
  %5070 = vmatprep.subr.mxu0 0.0
  %5071 = vmatpush1.msra.mxu0 %v4883
  %5072 = vmatprep.subr.mxu0 0.0
  %5073 = vmatpush1.msra.mxu0 %v4884
  %5074 = vmatprep.subr.mxu0 0.0
  %5075 = vmatpush1.msra.mxu0 %v4885
  %5076 = vmatprep.subr.mxu0 0.0
  %5077 = vmatpush1.msra.mxu0 %v4886
  %5078 = vmatprep.subr.mxu0 0.0
  %5079 = vmatpush1.msra.mxu0 %v4887
  %5080 = vmatprep.subr.mxu0 0.0
  %5081 = vmatpush1.msra.mxu0 %v4888
  %5082 = vmatprep.subr.mxu0 0.0
  %5083 = vmatpush1.msra.mxu0 %v4889
  %5084 = vmatprep.subr.mxu0 0.0
  %5085 = vmatpush1.msra.mxu0 %v4890
  %5086 = vmatprep.subr.mxu0 0.0
  %5087 = vmatpush1.msra.mxu0 %v4891
  %5088 = vmatprep.subr.mxu0 0.0
  %5089 = vmatpush1.msra.mxu0 %v4892
  %5090 = vmatprep.subr.mxu0 0.0
  %5091 = vmatpush1.msra.mxu0 %v4893
  %5092 = vmatprep.subr.mxu0 0.0
  %5093 = vmatpush1.msra.mxu0 %v4894
  %5094 = vmatprep.subr.mxu0 0.0
  %5095 = vmatpush1.msra.mxu0 %v4895
  %5096 = vmatprep.subr.mxu0 0.0
  %5097 = vmatpush1.msra.mxu0 %v4896
  %5098 = vmatprep.subr.mxu0 0.0
  %5099 = vmatpush1.msra.mxu0 %v4897
  %5100 = vmatprep.subr.mxu0 0.0
  %5101 = vmatpush1.msra.mxu0 %v4898
  %5102 = vmatprep.subr.mxu0 0.0
  %5103 = vmatpush1.msra.mxu0 %v4899
  %5104 = vmatprep.subr.mxu0 0.0
  %5105 = vmatpush1.msra.mxu0 %v4900
  %5106 = vmatprep.subr.mxu0 0.0
  %5107 = vmatpush1.msra.mxu0 %v4901
  %5108 = vmatprep.subr.mxu0 0.0
  %5109 = vmatpush1.msra.mxu0 %v4902
  %5110 = vmatprep.subr.mxu0 0.0
  %5111 = vmatpush1.msra.mxu0 %v4903
  %5112 = vmatprep.subr.mxu0 0.0
  %5113 = vmatpush1.msra.mxu0 %v4904
  %5114 = vmatprep.subr.mxu0 0.0
  %5115 = vmatpush1.msra.mxu0 %v4905
  %5116 = vmatprep.subr.mxu0 0.0
  %5117 = vmatpush1.msra.mxu0 %v4906
  %5118 = vmatprep.subr.mxu0 0.0
  %5119 = vmatpush1.msra.mxu0 %v4907
  %5120 = vmatprep.subr.mxu0 0.0
  %5121 = vmatpush1.msra.mxu0 %v4908
  %5122 = vmatprep.mubr.f32.mxu0 %v35
  %5123 = vmatmul.mubr.f32.gmra.mrb[0].mxu0 %v33
  %v5124 = vpop.f32.mrb[0].mxu0
  %v5125 = vadd.f32 0.0, %v5124
  %v5126 = vpop.f32.mrb[0].mxu0
  %5127 = vdwg.mxu0
  %v5129 = vsel %vm504, %v5125, 0
  %5131 = vmatprep.subr.mxu0 0.0
  %5132 = vmatpush1.msra.mxu0 %v5129
  %5133 = vmatprep.subr.mxu0 0.0
  %5134 = vmatpush1.msra.mxu0 0.0
  %5135 = vmatprep.subr.mxu0 0.0
  %5136 = vmatpush1.msra.mxu0 0.0
  %5137 = vmatprep.subr.mxu0 0.0
  %5138 = vmatpush1.msra.mxu0 0.0
  %5139 = vmatprep.subr.mxu0 0.0
  %5140 = vmatpush1.msra.mxu0 0.0
  %5141 = vmatprep.subr.mxu0 0.0
  %5142 = vmatpush1.msra.mxu0 0.0
  %5143 = vmatprep.subr.mxu0 0.0
  %5144 = vmatpush1.msra.mxu0 0.0
  %5145 = vmatprep.subr.mxu0 0.0
  %5146 = vmatpush1.msra.mxu0 0.0
  %5147 = vmatprep.subr.mxu0 0.0
  %5148 = vmatpush1.msra.mxu0 0.0
  %5149 = vmatprep.subr.mxu0 0.0
  %5150 = vmatpush1.msra.mxu0 0.0
  %5151 = vmatprep.subr.mxu0 0.0
  %5152 = vmatpush1.msra.mxu0 0.0
  %5153 = vmatprep.subr.mxu0 0.0
  %5154 = vmatpush1.msra.mxu0 0.0
  %5155 = vmatprep.subr.mxu0 0.0
  %5156 = vmatpush1.msra.mxu0 0.0
  %5157 = vmatprep.subr.mxu0 0.0
  %5158 = vmatpush1.msra.mxu0 0.0
  %5159 = vmatprep.subr.mxu0 0.0
  %5160 = vmatpush1.msra.mxu0 0.0
  %5161 = vmatprep.subr.mxu0 0.0
  %5162 = vmatpush1.msra.mxu0 0.0
  %5163 = vmatprep.subr.mxu0 0.0
  %5164 = vmatpush1.msra.mxu0 0.0
  %5165 = vmatprep.subr.mxu0 0.0
  %5166 = vmatpush1.msra.mxu0 0.0
  %5167 = vmatprep.subr.mxu0 0.0
  %5168 = vmatpush1.msra.mxu0 0.0
  %5169 = vmatprep.subr.mxu0 0.0
  %5170 = vmatpush1.msra.mxu0 0.0
  %5171 = vmatprep.subr.mxu0 0.0
  %5172 = vmatpush1.msra.mxu0 0.0
  %5173 = vmatprep.subr.mxu0 0.0
  %5174 = vmatpush1.msra.mxu0 0.0
  %5175 = vmatprep.subr.mxu0 0.0
  %5176 = vmatpush1.msra.mxu0 0.0
  %5177 = vmatprep.subr.mxu0 0.0
  %5178 = vmatpush1.msra.mxu0 0.0
  %5179 = vmatprep.subr.mxu0 0.0
  %5180 = vmatpush1.msra.mxu0 0.0
  %5181 = vmatprep.subr.mxu0 0.0
  %5182 = vmatpush1.msra.mxu0 0.0
  %5183 = vmatprep.subr.mxu0 0.0
  %5184 = vmatpush1.msra.mxu0 0.0
  %5185 = vmatprep.subr.mxu0 0.0
  %5186 = vmatpush1.msra.mxu0 0.0
  %5187 = vmatprep.subr.mxu0 0.0
  %5188 = vmatpush1.msra.mxu0 0.0
  %5189 = vmatprep.subr.mxu0 0.0
  %5190 = vmatpush1.msra.mxu0 0.0
  %5191 = vmatprep.subr.mxu0 0.0
  %5192 = vmatpush1.msra.mxu0 0.0
  %5193 = vmatprep.subr.mxu0 0.0
  %5194 = vmatpush1.msra.mxu0 0.0
  %5195 = vmatprep.mubr.f32.mxu0 0.0
  %5196 = vmatmul.mubr.f32.gmra.mrb[0].mxu0 %v4982
  %v5197 = vpop.f32.mrb[0].mxu0
  %v5198 = vadd.f32 0.0, %v5197
  %v5199 = vpop.f32.mrb[0].mxu0
  %5200 = vdwg.mxu0
  %v5201 = vadd.f32 %v4804, %v5198
  %vm5202 = vmand %vm4808, %vm327
  %vm5203 = vmand %vm5202, %vm329
  %v5204 = vadd.s32 %v4811, %v78
  %vm5205 = vcmp.eq.s32.totalorder %v41, %v5204
  %vm5206 = vcmp.eq.s32.totalorder %v42, %v5204
  %vm5207 = vcmp.eq.s32.totalorder %v43, %v5204
  %vm5208 = vcmp.eq.s32.totalorder %v44, %v5204
  %vm5209 = vcmp.eq.s32.totalorder %v45, %v5204
  %vm5210 = vcmp.eq.s32.totalorder %v46, %v5204
  %vm5211 = vcmp.eq.s32.totalorder %v47, %v5204
  %vm5212 = vcmp.eq.s32.totalorder %v48, %v5204
  %vm5213 = vcmp.eq.s32.totalorder %v49, %v5204
  %vm5214 = vcmp.eq.s32.totalorder %v50, %v5204
  %vm5215 = vcmp.eq.s32.totalorder %v51, %v5204
  %vm5216 = vcmp.eq.s32.totalorder %v52, %v5204
  %vm5217 = vcmp.eq.s32.totalorder %v53, %v5204
  %vm5218 = vcmp.eq.s32.totalorder %v54, %v5204
  %vm5219 = vcmp.eq.s32.totalorder %v55, %v5204
  %vm5220 = vcmp.eq.s32.totalorder %v56, %v5204
  %vm5221 = vcmp.eq.s32.totalorder %v57, %v5204
  %vm5222 = vcmp.eq.s32.totalorder %v58, %v5204
  %vm5223 = vcmp.eq.s32.totalorder %v59, %v5204
  %vm5224 = vcmp.eq.s32.totalorder %v60, %v5204
  %vm5225 = vcmp.eq.s32.totalorder %v61, %v5204
  %vm5226 = vcmp.eq.s32.totalorder %v62, %v5204
  %vm5227 = vcmp.eq.s32.totalorder %v63, %v5204
  %vm5228 = vcmp.eq.s32.totalorder %v64, %v5204
  %vm5229 = vcmp.eq.s32.totalorder %v65, %v5204
  %vm5230 = vcmp.eq.s32.totalorder %v66, %v5204
  %vm5231 = vcmp.eq.s32.totalorder %v67, %v5204
  %vm5232 = vcmp.eq.s32.totalorder %v68, %v5204
  %vm5233 = vcmp.eq.s32.totalorder %v69, %v5204
  %vm5234 = vcmp.eq.s32.totalorder %v70, %v5204
  %vm5235 = vcmp.eq.s32.totalorder %v71, %v5204
  %vm5236 = vcmp.eq.s32.totalorder %v72, %v5204
  %vm5237 = vmand %vm5203, %vm5205
  %vm5238 = vmand %vm5203, %vm5206
  %vm5239 = vmand %vm5203, %vm5207
  %vm5240 = vmand %vm5203, %vm5208
  %vm5241 = vmand %vm5203, %vm5209
  %vm5242 = vmand %vm5203, %vm5210
  %vm5243 = vmand %vm5203, %vm5211
  %vm5244 = vmand %vm5203, %vm5212
  %vm5245 = vmand %vm5203, %vm5213
  %vm5246 = vmand %vm5203, %vm5214
  %vm5247 = vmand %vm5203, %vm5215
  %vm5248 = vmand %vm5203, %vm5216
  %vm5249 = vmand %vm5203, %vm5217
  %vm5250 = vmand %vm5203, %vm5218
  %vm5251 = vmand %vm5203, %vm5219
  %vm5252 = vmand %vm5203, %vm5220
  %vm5253 = vmand %vm5203, %vm5221
  %vm5254 = vmand %vm5203, %vm5222
  %vm5255 = vmand %vm5203, %vm5223
  %vm5256 = vmand %vm5203, %vm5224
  %vm5257 = vmand %vm5203, %vm5225
  %vm5258 = vmand %vm5203, %vm5226
  %vm5259 = vmand %vm5203, %vm5227
  %vm5260 = vmand %vm5203, %vm5228
  %vm5261 = vmand %vm5203, %vm5229
  %vm5262 = vmand %vm5203, %vm5230
  %vm5263 = vmand %vm5203, %vm5231
  %vm5264 = vmand %vm5203, %vm5232
  %vm5265 = vmand %vm5203, %vm5233
  %vm5266 = vmand %vm5203, %vm5234
  %vm5267 = vmand %vm5203, %vm5235
  %vm5268 = vmand %vm5203, %vm5236
  %v5269 = vsel %vm5237, 1.0, 0.0
  %v5270 = vsel %vm5238, 1.0, 0.0
  %v5271 = vsel %vm5239, 1.0, 0.0
  %v5272 = vsel %vm5240, 1.0, 0.0
  %v5273 = vsel %vm5241, 1.0, 0.0
  %v5274 = vsel %vm5242, 1.0, 0.0
  %v5275 = vsel %vm5243, 1.0, 0.0
  %v5276 = vsel %vm5244, 1.0, 0.0
  %v5277 = vsel %vm5245, 1.0, 0.0
  %v5278 = vsel %vm5246, 1.0, 0.0
  %v5279 = vsel %vm5247, 1.0, 0.0
  %v5280 = vsel %vm5248, 1.0, 0.0
  %v5281 = vsel %vm5249, 1.0, 0.0
  %v5282 = vsel %vm5250, 1.0, 0.0
  %v5283 = vsel %vm5251, 1.0, 0.0
  %v5284 = vsel %vm5252, 1.0, 0.0
  %v5285 = vsel %vm5253, 1.0, 0.0
  %v5286 = vsel %vm5254, 1.0, 0.0
  %v5287 = vsel %vm5255, 1.0, 0.0
  %v5288 = vsel %vm5256, 1.0, 0.0
  %v5289 = vsel %vm5257, 1.0, 0.0
  %v5290 = vsel %vm5258, 1.0, 0.0
  %v5291 = vsel %vm5259, 1.0, 0.0
  %v5292 = vsel %vm5260, 1.0, 0.0
  %v5293 = vsel %vm5261, 1.0, 0.0
  %v5294 = vsel %vm5262, 1.0, 0.0
  %v5295 = vsel %vm5263, 1.0, 0.0
  %v5296 = vsel %vm5264, 1.0, 0.0
  %v5297 = vsel %vm5265, 1.0, 0.0
  %v5298 = vsel %vm5266, 1.0, 0.0
  %v5299 = vsel %vm5267, 1.0, 0.0
  %v5300 = vsel %vm5268, 1.0, 0.0
  %s5301 = scalar_lea.vmem %s1, 104
  %v5302 = vld [vmem:[%s5301] sm:$0xff]
  %5303 = vmatprep.subr.mxu0 0.0
  %5304 = vmatpush1.msra.mxu0 %v5269
  %5305 = vmatprep.subr.mxu0 0.0
  %5306 = vmatpush1.msra.mxu0 %v5270
  %5307 = vmatprep.subr.mxu0 0.0
  %5308 = vmatpush1.msra.mxu0 %v5271
  %5309 = vmatprep.subr.mxu0 0.0
  %5310 = vmatpush1.msra.mxu0 %v5272
  %5311 = vmatprep.subr.mxu0 0.0
  %5312 = vmatpush1.msra.mxu0 %v5273
  %5313 = vmatprep.subr.mxu0 0.0
  %5314 = vmatpush1.msra.mxu0 %v5274
  %5315 = vmatprep.subr.mxu0 0.0
  %5316 = vmatpush1.msra.mxu0 %v5275
  %5317 = vmatprep.subr.mxu0 0.0
  %5318 = vmatpush1.msra.mxu0 %v5276
  %5319 = vmatprep.subr.mxu0 0.0
  %5320 = vmatpush1.msra.mxu0 %v5277
  %5321 = vmatprep.subr.mxu0 0.0
  %5322 = vmatpush1.msra.mxu0 %v5278
  %5323 = vmatprep.subr.mxu0 0.0
  %5324 = vmatpush1.msra.mxu0 %v5279
  %5325 = vmatprep.subr.mxu0 0.0
  %5326 = vmatpush1.msra.mxu0 %v5280
  %5327 = vmatprep.subr.mxu0 0.0
  %5328 = vmatpush1.msra.mxu0 %v5281
  %5329 = vmatprep.subr.mxu0 0.0
  %5330 = vmatpush1.msra.mxu0 %v5282
  %5331 = vmatprep.subr.mxu0 0.0
  %5332 = vmatpush1.msra.mxu0 %v5283
  %5333 = vmatprep.subr.mxu0 0.0
  %5334 = vmatpush1.msra.mxu0 %v5284
  %5335 = vmatprep.subr.mxu0 0.0
  %5336 = vmatpush1.msra.mxu0 %v5285
  %5337 = vmatprep.subr.mxu0 0.0
  %5338 = vmatpush1.msra.mxu0 %v5286
  %5339 = vmatprep.subr.mxu0 0.0
  %5340 = vmatpush1.msra.mxu0 %v5287
  %5341 = vmatprep.subr.mxu0 0.0
  %5342 = vmatpush1.msra.mxu0 %v5288
  %5343 = vmatprep.subr.mxu0 0.0
  %5344 = vmatpush1.msra.mxu0 %v5289
  %5345 = vmatprep.subr.mxu0 0.0
  %5346 = vmatpush1.msra.mxu0 %v5290
  %5347 = vmatprep.subr.mxu0 0.0
  %5348 = vmatpush1.msra.mxu0 %v5291
  %5349 = vmatprep.subr.mxu0 0.0
  %5350 = vmatpush1.msra.mxu0 %v5292
  %5351 = vmatprep.subr.mxu0 0.0
  %5352 = vmatpush1.msra.mxu0 %v5293
  %5353 = vmatprep.subr.mxu0 0.0
  %5354 = vmatpush1.msra.mxu0 %v5294
  %5355 = vmatprep.subr.mxu0 0.0
  %5356 = vmatpush1.msra.mxu0 %v5295
  %5357 = vmatprep.subr.mxu0 0.0
  %5358 = vmatpush1.msra.mxu0 %v5296
  %5359 = vmatprep.subr.mxu0 0.0
  %5360 = vmatpush1.msra.mxu0 %v5297
  %5361 = vmatprep.subr.mxu0 0.0
  %5362 = vmatpush1.msra.mxu0 %v5298
  %5363 = vmatprep.subr.mxu0 0.0
  %5364 = vmatpush1.msra.mxu0 %v5299
  %5365 = vmatprep.subr.mxu0 0.0
  %5366 = vmatpush1.msra.mxu0 %v5300
  %5367 = vmatprep.mubr.f32.mxu0 %v25
  %5368 = vmatmul.mubr.f32.gmra.mrb[0].mxu0 %v23
  %v5369 = vpop.f32.mrb[0].mxu0
  %v5370 = vadd.f32 0.0, %v5369
  %v5371 = vpop.f32.mrb[0].mxu0
  %5372 = vdwg.mxu0
  %v5374 = vsel %vm500, %v5302, 0
  %v5377 = vsel %vm504, %v5370, 0
  %5379 = vmatprep.subr.mxu0 0.0
  %5380 = vmatpush1.msra.mxu0 %v5377
  %5381 = vmatprep.subr.mxu0 0.0
  %5382 = vmatpush1.msra.mxu0 0.0
  %5383 = vmatprep.subr.mxu0 0.0
  %5384 = vmatpush1.msra.mxu0 0.0
  %5385 = vmatprep.subr.mxu0 0.0
  %5386 = vmatpush1.msra.mxu0 0.0
  %5387 = vmatprep.subr.mxu0 0.0
  %5388 = vmatpush1.msra.mxu0 0.0
  %5389 = vmatprep.subr.mxu0 0.0
  %5390 = vmatpush1.msra.mxu0 0.0
  %5391 = vmatprep.subr.mxu0 0.0
  %5392 = vmatpush1.msra.mxu0 0.0
  %5393 = vmatprep.subr.mxu0 0.0
  %5394 = vmatpush1.msra.mxu0 0.0
  %5395 = vmatprep.subr.mxu0 0.0
  %5396 = vmatpush1.msra.mxu0 0.0
  %5397 = vmatprep.subr.mxu0 0.0
  %5398 = vmatpush1.msra.mxu0 0.0
  %5399 = vmatprep.subr.mxu0 0.0
  %5400 = vmatpush1.msra.mxu0 0.0
  %5401 = vmatprep.subr.mxu0 0.0
  %5402 = vmatpush1.msra.mxu0 0.0
  %5403 = vmatprep.subr.mxu0 0.0
  %5404 = vmatpush1.msra.mxu0 0.0
  %5405 = vmatprep.subr.mxu0 0.0
  %5406 = vmatpush1.msra.mxu0 0.0
  %5407 = vmatprep.subr.mxu0 0.0
  %5408 = vmatpush1.msra.mxu0 0.0
  %5409 = vmatprep.subr.mxu0 0.0
  %5410 = vmatpush1.msra.mxu0 0.0
  %5411 = vmatprep.subr.mxu0 0.0
  %5412 = vmatpush1.msra.mxu0 0.0
  %5413 = vmatprep.subr.mxu0 0.0
  %5414 = vmatpush1.msra.mxu0 0.0
  %5415 = vmatprep.subr.mxu0 0.0
  %5416 = vmatpush1.msra.mxu0 0.0
  %5417 = vmatprep.subr.mxu0 0.0
  %5418 = vmatpush1.msra.mxu0 0.0
  %5419 = vmatprep.subr.mxu0 0.0
  %5420 = vmatpush1.msra.mxu0 0.0
  %5421 = vmatprep.subr.mxu0 0.0
  %5422 = vmatpush1.msra.mxu0 0.0
  %5423 = vmatprep.subr.mxu0 0.0
  %5424 = vmatpush1.msra.mxu0 0.0
  %5425 = vmatprep.subr.mxu0 0.0
  %5426 = vmatpush1.msra.mxu0 0.0
  %5427 = vmatprep.subr.mxu0 0.0
  %5428 = vmatpush1.msra.mxu0 0.0
  %5429 = vmatprep.subr.mxu0 0.0
  %5430 = vmatpush1.msra.mxu0 0.0
  %5431 = vmatprep.subr.mxu0 0.0
  %5432 = vmatpush1.msra.mxu0 0.0
  %5433 = vmatprep.subr.mxu0 0.0
  %5434 = vmatpush1.msra.mxu0 0.0
  %5435 = vmatprep.subr.mxu0 0.0
  %5436 = vmatpush1.msra.mxu0 0.0
  %5437 = vmatprep.subr.mxu0 0.0
  %5438 = vmatpush1.msra.mxu0 0.0
  %5439 = vmatprep.subr.mxu0 0.0
  %5440 = vmatpush1.msra.mxu0 0.0
  %5441 = vmatprep.subr.mxu0 0.0
  %5442 = vmatpush1.msra.mxu0 0.0
  %5443 = vmatprep.mubr.f32.mxu0 0.0
  %5444 = vmatmul.mubr.f32.gmra.mrb[0].mxu0 %v5374
  %v5445 = vpop.f32.mrb[0].mxu0
  %v5446 = vadd.f32 0.0, %v5445
  %v5447 = vpop.f32.mrb[0].mxu0
  %5448 = vdwg.mxu0
  %v5449 = vadd.f32 %v5057, %v5446
  %5450 = vmatprep.subr.mxu0 0.0
  %5451 = vmatpush1.msra.mxu0 %v5269
  %5452 = vmatprep.subr.mxu0 0.0
  %5453 = vmatpush1.msra.mxu0 %v5270
  %5454 = vmatprep.subr.mxu0 0.0
  %5455 = vmatpush1.msra.mxu0 %v5271
  %5456 = vmatprep.subr.mxu0 0.0
  %5457 = vmatpush1.msra.mxu0 %v5272
  %5458 = vmatprep.subr.mxu0 0.0
  %5459 = vmatpush1.msra.mxu0 %v5273
  %5460 = vmatprep.subr.mxu0 0.0
  %5461 = vmatpush1.msra.mxu0 %v5274
  %5462 = vmatprep.subr.mxu0 0.0
  %5463 = vmatpush1.msra.mxu0 %v5275
  %5464 = vmatprep.subr.mxu0 0.0
  %5465 = vmatpush1.msra.mxu0 %v5276
  %5466 = vmatprep.subr.mxu0 0.0
  %5467 = vmatpush1.msra.mxu0 %v5277
  %5468 = vmatprep.subr.mxu0 0.0
  %5469 = vmatpush1.msra.mxu0 %v5278
  %5470 = vmatprep.subr.mxu0 0.0
  %5471 = vmatpush1.msra.mxu0 %v5279
  %5472 = vmatprep.subr.mxu0 0.0
  %5473 = vmatpush1.msra.mxu0 %v5280
  %5474 = vmatprep.subr.mxu0 0.0
  %5475 = vmatpush1.msra.mxu0 %v5281
  %5476 = vmatprep.subr.mxu0 0.0
  %5477 = vmatpush1.msra.mxu0 %v5282
  %5478 = vmatprep.subr.mxu0 0.0
  %5479 = vmatpush1.msra.mxu0 %v5283
  %5480 = vmatprep.subr.mxu0 0.0
  %5481 = vmatpush1.msra.mxu0 %v5284
  %5482 = vmatprep.subr.mxu0 0.0
  %5483 = vmatpush1.msra.mxu0 %v5285
  %5484 = vmatprep.subr.mxu0 0.0
  %5485 = vmatpush1.msra.mxu0 %v5286
  %5486 = vmatprep.subr.mxu0 0.0
  %5487 = vmatpush1.msra.mxu0 %v5287
  %5488 = vmatprep.subr.mxu0 0.0
  %5489 = vmatpush1.msra.mxu0 %v5288
  %5490 = vmatprep.subr.mxu0 0.0
  %5491 = vmatpush1.msra.mxu0 %v5289
  %5492 = vmatprep.subr.mxu0 0.0
  %5493 = vmatpush1.msra.mxu0 %v5290
  %5494 = vmatprep.subr.mxu0 0.0
  %5495 = vmatpush1.msra.mxu0 %v5291
  %5496 = vmatprep.subr.mxu0 0.0
  %5497 = vmatpush1.msra.mxu0 %v5292
  %5498 = vmatprep.subr.mxu0 0.0
  %5499 = vmatpush1.msra.mxu0 %v5293
  %5500 = vmatprep.subr.mxu0 0.0
  %5501 = vmatpush1.msra.mxu0 %v5294
  %5502 = vmatprep.subr.mxu0 0.0
  %5503 = vmatpush1.msra.mxu0 %v5295
  %5504 = vmatprep.subr.mxu0 0.0
  %5505 = vmatpush1.msra.mxu0 %v5296
  %5506 = vmatprep.subr.mxu0 0.0
  %5507 = vmatpush1.msra.mxu0 %v5297
  %5508 = vmatprep.subr.mxu0 0.0
  %5509 = vmatpush1.msra.mxu0 %v5298
  %5510 = vmatprep.subr.mxu0 0.0
  %5511 = vmatpush1.msra.mxu0 %v5299
  %5512 = vmatprep.subr.mxu0 0.0
  %5513 = vmatpush1.msra.mxu0 %v5300
  %5514 = vmatprep.mubr.f32.mxu0 %v35
  %5515 = vmatmul.mubr.f32.gmra.mrb[0].mxu0 %v33
  %v5516 = vpop.f32.mrb[0].mxu0
  %v5517 = vadd.f32 0.0, %v5516
  %v5518 = vpop.f32.mrb[0].mxu0
  %5519 = vdwg.mxu0
  %v5521 = vsel %vm504, %v5517, 0
  %5523 = vmatprep.subr.mxu0 0.0
  %5524 = vmatpush1.msra.mxu0 %v5521
  %5525 = vmatprep.subr.mxu0 0.0
  %5526 = vmatpush1.msra.mxu0 0.0
  %5527 = vmatprep.subr.mxu0 0.0
  %5528 = vmatpush1.msra.mxu0 0.0
  %5529 = vmatprep.subr.mxu0 0.0
  %5530 = vmatpush1.msra.mxu0 0.0
  %5531 = vmatprep.subr.mxu0 0.0
  %5532 = vmatpush1.msra.mxu0 0.0
  %5533 = vmatprep.subr.mxu0 0.0
  %5534 = vmatpush1.msra.mxu0 0.0
  %5535 = vmatprep.subr.mxu0 0.0
  %5536 = vmatpush1.msra.mxu0 0.0
  %5537 = vmatprep.subr.mxu0 0.0
  %5538 = vmatpush1.msra.mxu0 0.0
  %5539 = vmatprep.subr.mxu0 0.0
  %5540 = vmatpush1.msra.mxu0 0.0
  %5541 = vmatprep.subr.mxu0 0.0
  %5542 = vmatpush1.msra.mxu0 0.0
  %5543 = vmatprep.subr.mxu0 0.0
  %5544 = vmatpush1.msra.mxu0 0.0
  %5545 = vmatprep.subr.mxu0 0.0
  %5546 = vmatpush1.msra.mxu0 0.0
  %5547 = vmatprep.subr.mxu0 0.0
  %5548 = vmatpush1.msra.mxu0 0.0
  %5549 = vmatprep.subr.mxu0 0.0
  %5550 = vmatpush1.msra.mxu0 0.0
  %5551 = vmatprep.subr.mxu0 0.0
  %5552 = vmatpush1.msra.mxu0 0.0
  %5553 = vmatprep.subr.mxu0 0.0
  %5554 = vmatpush1.msra.mxu0 0.0
  %5555 = vmatprep.subr.mxu0 0.0
  %5556 = vmatpush1.msra.mxu0 0.0
  %5557 = vmatprep.subr.mxu0 0.0
  %5558 = vmatpush1.msra.mxu0 0.0
  %5559 = vmatprep.subr.mxu0 0.0
  %5560 = vmatpush1.msra.mxu0 0.0
  %5561 = vmatprep.subr.mxu0 0.0
  %5562 = vmatpush1.msra.mxu0 0.0
  %5563 = vmatprep.subr.mxu0 0.0
  %5564 = vmatpush1.msra.mxu0 0.0
  %5565 = vmatprep.subr.mxu0 0.0
  %5566 = vmatpush1.msra.mxu0 0.0
  %5567 = vmatprep.subr.mxu0 0.0
  %5568 = vmatpush1.msra.mxu0 0.0
  %5569 = vmatprep.subr.mxu0 0.0
  %5570 = vmatpush1.msra.mxu0 0.0
  %5571 = vmatprep.subr.mxu0 0.0
  %5572 = vmatpush1.msra.mxu0 0.0
  %5573 = vmatprep.subr.mxu0 0.0
  %5574 = vmatpush1.msra.mxu0 0.0
  %5575 = vmatprep.subr.mxu0 0.0
  %5576 = vmatpush1.msra.mxu0 0.0
  %5577 = vmatprep.subr.mxu0 0.0
  %5578 = vmatpush1.msra.mxu0 0.0
  %5579 = vmatprep.subr.mxu0 0.0
  %5580 = vmatpush1.msra.mxu0 0.0
  %5581 = vmatprep.subr.mxu0 0.0
  %5582 = vmatpush1.msra.mxu0 0.0
  %5583 = vmatprep.subr.mxu0 0.0
  %5584 = vmatpush1.msra.mxu0 0.0
  %5585 = vmatprep.subr.mxu0 0.0
  %5586 = vmatpush1.msra.mxu0 0.0
  %5587 = vmatprep.mubr.f32.mxu0 0.0
  %5588 = vmatmul.mubr.f32.gmra.mrb[0].mxu0 %v5374
  %v5589 = vpop.f32.mrb[0].mxu0
  %v5590 = vadd.f32 0.0, %v5589
  %v5591 = vpop.f32.mrb[0].mxu0
  %5592 = vdwg.mxu0
  %v5593 = vadd.f32 %v5201, %v5590
  %vm5594 = vmand %vm4808, %vm871
  %vm5595 = vmand %vm5594, %vm873
  %v5596 = vadd.s32 %v4811, %v870
  %vm5597 = vcmp.eq.s32.totalorder %v41, %v5596
  %vm5598 = vcmp.eq.s32.totalorder %v42, %v5596
  %vm5599 = vcmp.eq.s32.totalorder %v43, %v5596
  %vm5600 = vcmp.eq.s32.totalorder %v44, %v5596
  %vm5601 = vcmp.eq.s32.totalorder %v45, %v5596
  %vm5602 = vcmp.eq.s32.totalorder %v46, %v5596
  %vm5603 = vcmp.eq.s32.totalorder %v47, %v5596
  %vm5604 = vcmp.eq.s32.totalorder %v48, %v5596
  %vm5605 = vcmp.eq.s32.totalorder %v49, %v5596
  %vm5606 = vcmp.eq.s32.totalorder %v50, %v5596
  %vm5607 = vcmp.eq.s32.totalorder %v51, %v5596
  %vm5608 = vcmp.eq.s32.totalorder %v52, %v5596
  %vm5609 = vcmp.eq.s32.totalorder %v53, %v5596
  %vm5610 = vcmp.eq.s32.totalorder %v54, %v5596
  %vm5611 = vcmp.eq.s32.totalorder %v55, %v5596
  %vm5612 = vcmp.eq.s32.totalorder %v56, %v5596
  %vm5613 = vcmp.eq.s32.totalorder %v57, %v5596
  %vm5614 = vcmp.eq.s32.totalorder %v58, %v5596
  %vm5615 = vcmp.eq.s32.totalorder %v59, %v5596
  %vm5616 = vcmp.eq.s32.totalorder %v60, %v5596
  %vm5617 = vcmp.eq.s32.totalorder %v61, %v5596
  %vm5618 = vcmp.eq.s32.totalorder %v62, %v5596
  %vm5619 = vcmp.eq.s32.totalorder %v63, %v5596
  %vm5620 = vcmp.eq.s32.totalorder %v64, %v5596
  %vm5621 = vcmp.eq.s32.totalorder %v65, %v5596
  %vm5622 = vcmp.eq.s32.totalorder %v66, %v5596
  %vm5623 = vcmp.eq.s32.totalorder %v67, %v5596
  %vm5624 = vcmp.eq.s32.totalorder %v68, %v5596
  %vm5625 = vcmp.eq.s32.totalorder %v69, %v5596
  %vm5626 = vcmp.eq.s32.totalorder %v70, %v5596
  %vm5627 = vcmp.eq.s32.totalorder %v71, %v5596
  %vm5628 = vcmp.eq.s32.totalorder %v72, %v5596
  %vm5629 = vmand %vm5595, %vm5597
  %vm5630 = vmand %vm5595, %vm5598
  %vm5631 = vmand %vm5595, %vm5599
  %vm5632 = vmand %vm5595, %vm5600
  %vm5633 = vmand %vm5595, %vm5601
  %vm5634 = vmand %vm5595, %vm5602
  %vm5635 = vmand %vm5595, %vm5603
  %vm5636 = vmand %vm5595, %vm5604
  %vm5637 = vmand %vm5595, %vm5605
  %vm5638 = vmand %vm5595, %vm5606
  %vm5639 = vmand %vm5595, %vm5607
  %vm5640 = vmand %vm5595, %vm5608
  %vm5641 = vmand %vm5595, %vm5609
  %vm5642 = vmand %vm5595, %vm5610
  %vm5643 = vmand %vm5595, %vm5611
  %vm5644 = vmand %vm5595, %vm5612
  %vm5645 = vmand %vm5595, %vm5613
  %vm5646 = vmand %vm5595, %vm5614
  %vm5647 = vmand %vm5595, %vm5615
  %vm5648 = vmand %vm5595, %vm5616
  %vm5649 = vmand %vm5595, %vm5617
  %vm5650 = vmand %vm5595, %vm5618
  %vm5651 = vmand %vm5595, %vm5619
  %vm5652 = vmand %vm5595, %vm5620
  %vm5653 = vmand %vm5595, %vm5621
  %vm5654 = vmand %vm5595, %vm5622
  %vm5655 = vmand %vm5595, %vm5623
  %vm5656 = vmand %vm5595, %vm5624
  %vm5657 = vmand %vm5595, %vm5625
  %vm5658 = vmand %vm5595, %vm5626
  %vm5659 = vmand %vm5595, %vm5627
  %vm5660 = vmand %vm5595, %vm5628
  %v5661 = vsel %vm5629, 1.0, 0.0
  %v5662 = vsel %vm5630, 1.0, 0.0
  %v5663 = vsel %vm5631, 1.0, 0.0
  %v5664 = vsel %vm5632, 1.0, 0.0
  %v5665 = vsel %vm5633, 1.0, 0.0
  %v5666 = vsel %vm5634, 1.0, 0.0
  %v5667 = vsel %vm5635, 1.0, 0.0
  %v5668 = vsel %vm5636, 1.0, 0.0
  %v5669 = vsel %vm5637, 1.0, 0.0
  %v5670 = vsel %vm5638, 1.0, 0.0
  %v5671 = vsel %vm5639, 1.0, 0.0
  %v5672 = vsel %vm5640, 1.0, 0.0
  %v5673 = vsel %vm5641, 1.0, 0.0
  %v5674 = vsel %vm5642, 1.0, 0.0
  %v5675 = vsel %vm5643, 1.0, 0.0
  %v5676 = vsel %vm5644, 1.0, 0.0
  %v5677 = vsel %vm5645, 1.0, 0.0
  %v5678 = vsel %vm5646, 1.0, 0.0
  %v5679 = vsel %vm5647, 1.0, 0.0
  %v5680 = vsel %vm5648, 1.0, 0.0
  %v5681 = vsel %vm5649, 1.0, 0.0
  %v5682 = vsel %vm5650, 1.0, 0.0
  %v5683 = vsel %vm5651, 1.0, 0.0
  %v5684 = vsel %vm5652, 1.0, 0.0
  %v5685 = vsel %vm5653, 1.0, 0.0
  %v5686 = vsel %vm5654, 1.0, 0.0
  %v5687 = vsel %vm5655, 1.0, 0.0
  %v5688 = vsel %vm5656, 1.0, 0.0
  %v5689 = vsel %vm5657, 1.0, 0.0
  %v5690 = vsel %vm5658, 1.0, 0.0
  %v5691 = vsel %vm5659, 1.0, 0.0
  %v5692 = vsel %vm5660, 1.0, 0.0
  %s5693 = scalar_lea.vmem %s1, 112
  %v5694 = vld [vmem:[%s5693] sm:$0xff]
  %5695 = vmatprep.subr.mxu0 0.0
  %5696 = vmatpush1.msra.mxu0 %v5661
  %5697 = vmatprep.subr.mxu0 0.0
  %5698 = vmatpush1.msra.mxu0 %v5662
  %5699 = vmatprep.subr.mxu0 0.0
  %5700 = vmatpush1.msra.mxu0 %v5663
  %5701 = vmatprep.subr.mxu0 0.0
  %5702 = vmatpush1.msra.mxu0 %v5664
  %5703 = vmatprep.subr.mxu0 0.0
  %5704 = vmatpush1.msra.mxu0 %v5665
  %5705 = vmatprep.subr.mxu0 0.0
  %5706 = vmatpush1.msra.mxu0 %v5666
  %5707 = vmatprep.subr.mxu0 0.0
  %5708 = vmatpush1.msra.mxu0 %v5667
  %5709 = vmatprep.subr.mxu0 0.0
  %5710 = vmatpush1.msra.mxu0 %v5668
  %5711 = vmatprep.subr.mxu0 0.0
  %5712 = vmatpush1.msra.mxu0 %v5669
  %5713 = vmatprep.subr.mxu0 0.0
  %5714 = vmatpush1.msra.mxu0 %v5670
  %5715 = vmatprep.subr.mxu0 0.0
  %5716 = vmatpush1.msra.mxu0 %v5671
  %5717 = vmatprep.subr.mxu0 0.0
  %5718 = vmatpush1.msra.mxu0 %v5672
  %5719 = vmatprep.subr.mxu0 0.0
  %5720 = vmatpush1.msra.mxu0 %v5673
  %5721 = vmatprep.subr.mxu0 0.0
  %5722 = vmatpush1.msra.mxu0 %v5674
  %5723 = vmatprep.subr.mxu0 0.0
  %5724 = vmatpush1.msra.mxu0 %v5675
  %5725 = vmatprep.subr.mxu0 0.0
  %5726 = vmatpush1.msra.mxu0 %v5676
  %5727 = vmatprep.subr.mxu0 0.0
  %5728 = vmatpush1.msra.mxu0 %v5677
  %5729 = vmatprep.subr.mxu0 0.0
  %5730 = vmatpush1.msra.mxu0 %v5678
  %5731 = vmatprep.subr.mxu0 0.0
  %5732 = vmatpush1.msra.mxu0 %v5679
  %5733 = vmatprep.subr.mxu0 0.0
  %5734 = vmatpush1.msra.mxu0 %v5680
  %5735 = vmatprep.subr.mxu0 0.0
  %5736 = vmatpush1.msra.mxu0 %v5681
  %5737 = vmatprep.subr.mxu0 0.0
  %5738 = vmatpush1.msra.mxu0 %v5682
  %5739 = vmatprep.subr.mxu0 0.0
  %5740 = vmatpush1.msra.mxu0 %v5683
  %5741 = vmatprep.subr.mxu0 0.0
  %5742 = vmatpush1.msra.mxu0 %v5684
  %5743 = vmatprep.subr.mxu0 0.0
  %5744 = vmatpush1.msra.mxu0 %v5685
  %5745 = vmatprep.subr.mxu0 0.0
  %5746 = vmatpush1.msra.mxu0 %v5686
  %5747 = vmatprep.subr.mxu0 0.0
  %5748 = vmatpush1.msra.mxu0 %v5687
  %5749 = vmatprep.subr.mxu0 0.0
  %5750 = vmatpush1.msra.mxu0 %v5688
  %5751 = vmatprep.subr.mxu0 0.0
  %5752 = vmatpush1.msra.mxu0 %v5689
  %5753 = vmatprep.subr.mxu0 0.0
  %5754 = vmatpush1.msra.mxu0 %v5690
  %5755 = vmatprep.subr.mxu0 0.0
  %5756 = vmatpush1.msra.mxu0 %v5691
  %5757 = vmatprep.subr.mxu0 0.0
  %5758 = vmatpush1.msra.mxu0 %v5692
  %5759 = vmatprep.mubr.f32.mxu0 %v25
  %5760 = vmatmul.mubr.f32.gmra.mrb[0].mxu0 %v23
  %v5761 = vpop.f32.mrb[0].mxu0
  %v5762 = vadd.f32 0.0, %v5761
  %v5763 = vpop.f32.mrb[0].mxu0
  %5764 = vdwg.mxu0
  %v5766 = vsel %vm500, %v5694, 0
  %v5769 = vsel %vm504, %v5762, 0
  %5771 = vmatprep.subr.mxu0 0.0
  %5772 = vmatpush1.msra.mxu0 %v5769
  %5773 = vmatprep.subr.mxu0 0.0
  %5774 = vmatpush1.msra.mxu0 0.0
  %5775 = vmatprep.subr.mxu0 0.0
  %5776 = vmatpush1.msra.mxu0 0.0
  %5777 = vmatprep.subr.mxu0 0.0
  %5778 = vmatpush1.msra.mxu0 0.0
  %5779 = vmatprep.subr.mxu0 0.0
  %5780 = vmatpush1.msra.mxu0 0.0
  %5781 = vmatprep.subr.mxu0 0.0
  %5782 = vmatpush1.msra.mxu0 0.0
  %5783 = vmatprep.subr.mxu0 0.0
  %5784 = vmatpush1.msra.mxu0 0.0
  %5785 = vmatprep.subr.mxu0 0.0
  %5786 = vmatpush1.msra.mxu0 0.0
  %5787 = vmatprep.subr.mxu0 0.0
  %5788 = vmatpush1.msra.mxu0 0.0
  %5789 = vmatprep.subr.mxu0 0.0
  %5790 = vmatpush1.msra.mxu0 0.0
  %5791 = vmatprep.subr.mxu0 0.0
  %5792 = vmatpush1.msra.mxu0 0.0
  %5793 = vmatprep.subr.mxu0 0.0
  %5794 = vmatpush1.msra.mxu0 0.0
  %5795 = vmatprep.subr.mxu0 0.0
  %5796 = vmatpush1.msra.mxu0 0.0
  %5797 = vmatprep.subr.mxu0 0.0
  %5798 = vmatpush1.msra.mxu0 0.0
  %5799 = vmatprep.subr.mxu0 0.0
  %5800 = vmatpush1.msra.mxu0 0.0
  %5801 = vmatprep.subr.mxu0 0.0
  %5802 = vmatpush1.msra.mxu0 0.0
  %5803 = vmatprep.subr.mxu0 0.0
  %5804 = vmatpush1.msra.mxu0 0.0
  %5805 = vmatprep.subr.mxu0 0.0
  %5806 = vmatpush1.msra.mxu0 0.0
  %5807 = vmatprep.subr.mxu0 0.0
  %5808 = vmatpush1.msra.mxu0 0.0
  %5809 = vmatprep.subr.mxu0 0.0
  %5810 = vmatpush1.msra.mxu0 0.0
  %5811 = vmatprep.subr.mxu0 0.0
  %5812 = vmatpush1.msra.mxu0 0.0
  %5813 = vmatprep.subr.mxu0 0.0
  %5814 = vmatpush1.msra.mxu0 0.0
  %5815 = vmatprep.subr.mxu0 0.0
  %5816 = vmatpush1.msra.mxu0 0.0
  %5817 = vmatprep.subr.mxu0 0.0
  %5818 = vmatpush1.msra.mxu0 0.0
  %5819 = vmatprep.subr.mxu0 0.0
  %5820 = vmatpush1.msra.mxu0 0.0
  %5821 = vmatprep.subr.mxu0 0.0
  %5822 = vmatpush1.msra.mxu0 0.0
  %5823 = vmatprep.subr.mxu0 0.0
  %5824 = vmatpush1.msra.mxu0 0.0
  %5825 = vmatprep.subr.mxu0 0.0
  %5826 = vmatpush1.msra.mxu0 0.0
  %5827 = vmatprep.subr.mxu0 0.0
  %5828 = vmatpush1.msra.mxu0 0.0
  %5829 = vmatprep.subr.mxu0 0.0
  %5830 = vmatpush1.msra.mxu0 0.0
  %5831 = vmatprep.subr.mxu0 0.0
  %5832 = vmatpush1.msra.mxu0 0.0
  %5833 = vmatprep.subr.mxu0 0.0
  %5834 = vmatpush1.msra.mxu0 0.0
  %5835 = vmatprep.mubr.f32.mxu0 0.0
  %5836 = vmatmul.mubr.f32.gmra.mrb[0].mxu0 %v5766
  %v5837 = vpop.f32.mrb[0].mxu0
  %v5838 = vadd.f32 0.0, %v5837
  %v5839 = vpop.f32.mrb[0].mxu0
  %5840 = vdwg.mxu0
  %v5841 = vadd.f32 %v5449, %v5838
  %5842 = vmatprep.subr.mxu0 0.0
  %5843 = vmatpush1.msra.mxu0 %v5661
  %5844 = vmatprep.subr.mxu0 0.0
  %5845 = vmatpush1.msra.mxu0 %v5662
  %5846 = vmatprep.subr.mxu0 0.0
  %5847 = vmatpush1.msra.mxu0 %v5663
  %5848 = vmatprep.subr.mxu0 0.0
  %5849 = vmatpush1.msra.mxu0 %v5664
  %5850 = vmatprep.subr.mxu0 0.0
  %5851 = vmatpush1.msra.mxu0 %v5665
  %5852 = vmatprep.subr.mxu0 0.0
  %5853 = vmatpush1.msra.mxu0 %v5666
  %5854 = vmatprep.subr.mxu0 0.0
  %5855 = vmatpush1.msra.mxu0 %v5667
  %5856 = vmatprep.subr.mxu0 0.0
  %5857 = vmatpush1.msra.mxu0 %v5668
  %5858 = vmatprep.subr.mxu0 0.0
  %5859 = vmatpush1.msra.mxu0 %v5669
  %5860 = vmatprep.subr.mxu0 0.0
  %5861 = vmatpush1.msra.mxu0 %v5670
  %5862 = vmatprep.subr.mxu0 0.0
  %5863 = vmatpush1.msra.mxu0 %v5671
  %5864 = vmatprep.subr.mxu0 0.0
  %5865 = vmatpush1.msra.mxu0 %v5672
  %5866 = vmatprep.subr.mxu0 0.0
  %5867 = vmatpush1.msra.mxu0 %v5673
  %5868 = vmatprep.subr.mxu0 0.0
  %5869 = vmatpush1.msra.mxu0 %v5674
  %5870 = vmatprep.subr.mxu0 0.0
  %5871 = vmatpush1.msra.mxu0 %v5675
  %5872 = vmatprep.subr.mxu0 0.0
  %5873 = vmatpush1.msra.mxu0 %v5676
  %5874 = vmatprep.subr.mxu0 0.0
  %5875 = vmatpush1.msra.mxu0 %v5677
  %5876 = vmatprep.subr.mxu0 0.0
  %5877 = vmatpush1.msra.mxu0 %v5678
  %5878 = vmatprep.subr.mxu0 0.0
  %5879 = vmatpush1.msra.mxu0 %v5679
  %5880 = vmatprep.subr.mxu0 0.0
  %5881 = vmatpush1.msra.mxu0 %v5680
  %5882 = vmatprep.subr.mxu0 0.0
  %5883 = vmatpush1.msra.mxu0 %v5681
  %5884 = vmatprep.subr.mxu0 0.0
  %5885 = vmatpush1.msra.mxu0 %v5682
  %5886 = vmatprep.subr.mxu0 0.0
  %5887 = vmatpush1.msra.mxu0 %v5683
  %5888 = vmatprep.subr.mxu0 0.0
  %5889 = vmatpush1.msra.mxu0 %v5684
  %5890 = vmatprep.subr.mxu0 0.0
  %5891 = vmatpush1.msra.mxu0 %v5685
  %5892 = vmatprep.subr.mxu0 0.0
  %5893 = vmatpush1.msra.mxu0 %v5686
  %5894 = vmatprep.subr.mxu0 0.0
  %5895 = vmatpush1.msra.mxu0 %v5687
  %5896 = vmatprep.subr.mxu0 0.0
  %5897 = vmatpush1.msra.mxu0 %v5688
  %5898 = vmatprep.subr.mxu0 0.0
  %5899 = vmatpush1.msra.mxu0 %v5689
  %5900 = vmatprep.subr.mxu0 0.0
  %5901 = vmatpush1.msra.mxu0 %v5690
  %5902 = vmatprep.subr.mxu0 0.0
  %5903 = vmatpush1.msra.mxu0 %v5691
  %5904 = vmatprep.subr.mxu0 0.0
  %5905 = vmatpush1.msra.mxu0 %v5692
  %5906 = vmatprep.mubr.f32.mxu0 %v35
  %5907 = vmatmul.mubr.f32.gmra.mrb[0].mxu0 %v33
  %v5908 = vpop.f32.mrb[0].mxu0
  %v5909 = vadd.f32 0.0, %v5908
  %v5910 = vpop.f32.mrb[0].mxu0
  %5911 = vdwg.mxu0
  %v5913 = vsel %vm504, %v5909, 0
  %5915 = vmatprep.subr.mxu0 0.0
  %5916 = vmatpush1.msra.mxu0 %v5913
  %5917 = vmatprep.subr.mxu0 0.0
  %5918 = vmatpush1.msra.mxu0 0.0
  %5919 = vmatprep.subr.mxu0 0.0
  %5920 = vmatpush1.msra.mxu0 0.0
  %5921 = vmatprep.subr.mxu0 0.0
  %5922 = vmatpush1.msra.mxu0 0.0
  %5923 = vmatprep.subr.mxu0 0.0
  %5924 = vmatpush1.msra.mxu0 0.0
  %5925 = vmatprep.subr.mxu0 0.0
  %5926 = vmatpush1.msra.mxu0 0.0
  %5927 = vmatprep.subr.mxu0 0.0
  %5928 = vmatpush1.msra.mxu0 0.0
  %5929 = vmatprep.subr.mxu0 0.0
  %5930 = vmatpush1.msra.mxu0 0.0
  %5931 = vmatprep.subr.mxu0 0.0
  %5932 = vmatpush1.msra.mxu0 0.0
  %5933 = vmatprep.subr.mxu0 0.0
  %5934 = vmatpush1.msra.mxu0 0.0
  %5935 = vmatprep.subr.mxu0 0.0
  %5936 = vmatpush1.msra.mxu0 0.0
  %5937 = vmatprep.subr.mxu0 0.0
  %5938 = vmatpush1.msra.mxu0 0.0
  %5939 = vmatprep.subr.mxu0 0.0
  %5940 = vmatpush1.msra.mxu0 0.0
  %5941 = vmatprep.subr.mxu0 0.0
  %5942 = vmatpush1.msra.mxu0 0.0
  %5943 = vmatprep.subr.mxu0 0.0
  %5944 = vmatpush1.msra.mxu0 0.0
  %5945 = vmatprep.subr.mxu0 0.0
  %5946 = vmatpush1.msra.mxu0 0.0
  %5947 = vmatprep.subr.mxu0 0.0
  %5948 = vmatpush1.msra.mxu0 0.0
  %5949 = vmatprep.subr.mxu0 0.0
  %5950 = vmatpush1.msra.mxu0 0.0
  %5951 = vmatprep.subr.mxu0 0.0
  %5952 = vmatpush1.msra.mxu0 0.0
  %5953 = vmatprep.subr.mxu0 0.0
  %5954 = vmatpush1.msra.mxu0 0.0
  %5955 = vmatprep.subr.mxu0 0.0
  %5956 = vmatpush1.msra.mxu0 0.0
  %5957 = vmatprep.subr.mxu0 0.0
  %5958 = vmatpush1.msra.mxu0 0.0
  %5959 = vmatprep.subr.mxu0 0.0
  %5960 = vmatpush1.msra.mxu0 0.0
  %5961 = vmatprep.subr.mxu0 0.0
  %5962 = vmatpush1.msra.mxu0 0.0
  %5963 = vmatprep.subr.mxu0 0.0
  %5964 = vmatpush1.msra.mxu0 0.0
  %5965 = vmatprep.subr.mxu0 0.0
  %5966 = vmatpush1.msra.mxu0 0.0
  %5967 = vmatprep.subr.mxu0 0.0
  %5968 = vmatpush1.msra.mxu0 0.0
  %5969 = vmatprep.subr.mxu0 0.0
  %5970 = vmatpush1.msra.mxu0 0.0
  %5971 = vmatprep.subr.mxu0 0.0
  %5972 = vmatpush1.msra.mxu0 0.0
  %5973 = vmatprep.subr.mxu0 0.0
  %5974 = vmatpush1.msra.mxu0 0.0
  %5975 = vmatprep.subr.mxu0 0.0
  %5976 = vmatpush1.msra.mxu0 0.0
  %5977 = vmatprep.subr.mxu0 0.0
  %5978 = vmatpush1.msra.mxu0 0.0
  %5979 = vmatprep.mubr.f32.mxu0 0.0
  %5980 = vmatmul.mubr.f32.gmra.mrb[0].mxu0 %v5766
  %v5981 = vpop.f32.mrb[0].mxu0
  %v5982 = vadd.f32 0.0, %v5981
  %v5983 = vpop.f32.mrb[0].mxu0
  %5984 = vdwg.mxu0
  %v5985 = vadd.f32 %v5593, %v5982
  %vm5986 = vmand %vm4808, %vm1266
  %vm5987 = vmand %vm5986, %vm1268
  %v5988 = vadd.s32 %v4811, %v1265
  %vm5989 = vcmp.eq.s32.totalorder %v41, %v5988
  %vm5990 = vcmp.eq.s32.totalorder %v42, %v5988
  %vm5991 = vcmp.eq.s32.totalorder %v43, %v5988
  %vm5992 = vcmp.eq.s32.totalorder %v44, %v5988
  %vm5993 = vcmp.eq.s32.totalorder %v45, %v5988
  %vm5994 = vcmp.eq.s32.totalorder %v46, %v5988
  %vm5995 = vcmp.eq.s32.totalorder %v47, %v5988
  %vm5996 = vcmp.eq.s32.totalorder %v48, %v5988
  %vm5997 = vcmp.eq.s32.totalorder %v49, %v5988
  %vm5998 = vcmp.eq.s32.totalorder %v50, %v5988
  %vm5999 = vcmp.eq.s32.totalorder %v51, %v5988
  %vm6000 = vcmp.eq.s32.totalorder %v52, %v5988
  %vm6001 = vcmp.eq.s32.totalorder %v53, %v5988
  %vm6002 = vcmp.eq.s32.totalorder %v54, %v5988
  %vm6003 = vcmp.eq.s32.totalorder %v55, %v5988
  %vm6004 = vcmp.eq.s32.totalorder %v56, %v5988
  %vm6005 = vcmp.eq.s32.totalorder %v57, %v5988
  %vm6006 = vcmp.eq.s32.totalorder %v58, %v5988
  %vm6007 = vcmp.eq.s32.totalorder %v59, %v5988
  %vm6008 = vcmp.eq.s32.totalorder %v60, %v5988
  %vm6009 = vcmp.eq.s32.totalorder %v61, %v5988
  %vm6010 = vcmp.eq.s32.totalorder %v62, %v5988
  %vm6011 = vcmp.eq.s32.totalorder %v63, %v5988
  %vm6012 = vcmp.eq.s32.totalorder %v64, %v5988
  %vm6013 = vcmp.eq.s32.totalorder %v65, %v5988
  %vm6014 = vcmp.eq.s32.totalorder %v66, %v5988
  %vm6015 = vcmp.eq.s32.totalorder %v67, %v5988
  %vm6016 = vcmp.eq.s32.totalorder %v68, %v5988
  %vm6017 = vcmp.eq.s32.totalorder %v69, %v5988
  %vm6018 = vcmp.eq.s32.totalorder %v70, %v5988
  %vm6019 = vcmp.eq.s32.totalorder %v71, %v5988
  %vm6020 = vcmp.eq.s32.totalorder %v72, %v5988
  %vm6021 = vmand %vm5987, %vm5989
  %vm6022 = vmand %vm5987, %vm5990
  %vm6023 = vmand %vm5987, %vm5991
  %vm6024 = vmand %vm5987, %vm5992
  %vm6025 = vmand %vm5987, %vm5993
  %vm6026 = vmand %vm5987, %vm5994
  %vm6027 = vmand %vm5987, %vm5995
  %vm6028 = vmand %vm5987, %vm5996
  %vm6029 = vmand %vm5987, %vm5997
  %vm6030 = vmand %vm5987, %vm5998
  %vm6031 = vmand %vm5987, %vm5999
  %vm6032 = vmand %vm5987, %vm6000
  %vm6033 = vmand %vm5987, %vm6001
  %vm6034 = vmand %vm5987, %vm6002
  %vm6035 = vmand %vm5987, %vm6003
  %vm6036 = vmand %vm5987, %vm6004
  %vm6037 = vmand %vm5987, %vm6005
  %vm6038 = vmand %vm5987, %vm6006
  %vm6039 = vmand %vm5987, %vm6007
  %vm6040 = vmand %vm5987, %vm6008
  %vm6041 = vmand %vm5987, %vm6009
  %vm6042 = vmand %vm5987, %vm6010
  %vm6043 = vmand %vm5987, %vm6011
  %vm6044 = vmand %vm5987, %vm6012
  %vm6045 = vmand %vm5987, %vm6013
  %vm6046 = vmand %vm5987, %vm6014
  %vm6047 = vmand %vm5987, %vm6015
  %vm6048 = vmand %vm5987, %vm6016
  %vm6049 = vmand %vm5987, %vm6017
  %vm6050 = vmand %vm5987, %vm6018
  %vm6051 = vmand %vm5987, %vm6019
  %vm6052 = vmand %vm5987, %vm6020
  %v6053 = vsel %vm6021, 1.0, 0.0
  %v6054 = vsel %vm6022, 1.0, 0.0
  %v6055 = vsel %vm6023, 1.0, 0.0
  %v6056 = vsel %vm6024, 1.0, 0.0
  %v6057 = vsel %vm6025, 1.0, 0.0
  %v6058 = vsel %vm6026, 1.0, 0.0
  %v6059 = vsel %vm6027, 1.0, 0.0
  %v6060 = vsel %vm6028, 1.0, 0.0
  %v6061 = vsel %vm6029, 1.0, 0.0
  %v6062 = vsel %vm6030, 1.0, 0.0
  %v6063 = vsel %vm6031, 1.0, 0.0
  %v6064 = vsel %vm6032, 1.0, 0.0
  %v6065 = vsel %vm6033, 1.0, 0.0
  %v6066 = vsel %vm6034, 1.0, 0.0
  %v6067 = vsel %vm6035, 1.0, 0.0
  %v6068 = vsel %vm6036, 1.0, 0.0
  %v6069 = vsel %vm6037, 1.0, 0.0
  %v6070 = vsel %vm6038, 1.0, 0.0
  %v6071 = vsel %vm6039, 1.0, 0.0
  %v6072 = vsel %vm6040, 1.0, 0.0
  %v6073 = vsel %vm6041, 1.0, 0.0
  %v6074 = vsel %vm6042, 1.0, 0.0
  %v6075 = vsel %vm6043, 1.0, 0.0
  %v6076 = vsel %vm6044, 1.0, 0.0
  %v6077 = vsel %vm6045, 1.0, 0.0
  %v6078 = vsel %vm6046, 1.0, 0.0
  %v6079 = vsel %vm6047, 1.0, 0.0
  %v6080 = vsel %vm6048, 1.0, 0.0
  %v6081 = vsel %vm6049, 1.0, 0.0
  %v6082 = vsel %vm6050, 1.0, 0.0
  %v6083 = vsel %vm6051, 1.0, 0.0
  %v6084 = vsel %vm6052, 1.0, 0.0
  %s6085 = scalar_lea.vmem %s1, 120
  %v6086 = vld [vmem:[%s6085] sm:$0xff]
  %6087 = vmatprep.subr.mxu0 0.0
  %6088 = vmatpush1.msra.mxu0 %v6053
  %6089 = vmatprep.subr.mxu0 0.0
  %6090 = vmatpush1.msra.mxu0 %v6054
  %6091 = vmatprep.subr.mxu0 0.0
  %6092 = vmatpush1.msra.mxu0 %v6055
  %6093 = vmatprep.subr.mxu0 0.0
  %6094 = vmatpush1.msra.mxu0 %v6056
  %6095 = vmatprep.subr.mxu0 0.0
  %6096 = vmatpush1.msra.mxu0 %v6057
  %6097 = vmatprep.subr.mxu0 0.0
  %6098 = vmatpush1.msra.mxu0 %v6058
  %6099 = vmatprep.subr.mxu0 0.0
  %6100 = vmatpush1.msra.mxu0 %v6059
  %6101 = vmatprep.subr.mxu0 0.0
  %6102 = vmatpush1.msra.mxu0 %v6060
  %6103 = vmatprep.subr.mxu0 0.0
  %6104 = vmatpush1.msra.mxu0 %v6061
  %6105 = vmatprep.subr.mxu0 0.0
  %6106 = vmatpush1.msra.mxu0 %v6062
  %6107 = vmatprep.subr.mxu0 0.0
  %6108 = vmatpush1.msra.mxu0 %v6063
  %6109 = vmatprep.subr.mxu0 0.0
  %6110 = vmatpush1.msra.mxu0 %v6064
  %6111 = vmatprep.subr.mxu0 0.0
  %6112 = vmatpush1.msra.mxu0 %v6065
  %6113 = vmatprep.subr.mxu0 0.0
  %6114 = vmatpush1.msra.mxu0 %v6066
  %6115 = vmatprep.subr.mxu0 0.0
  %6116 = vmatpush1.msra.mxu0 %v6067
  %6117 = vmatprep.subr.mxu0 0.0
  %6118 = vmatpush1.msra.mxu0 %v6068
  %6119 = vmatprep.subr.mxu0 0.0
  %6120 = vmatpush1.msra.mxu0 %v6069
  %6121 = vmatprep.subr.mxu0 0.0
  %6122 = vmatpush1.msra.mxu0 %v6070
  %6123 = vmatprep.subr.mxu0 0.0
  %6124 = vmatpush1.msra.mxu0 %v6071
  %6125 = vmatprep.subr.mxu0 0.0
  %6126 = vmatpush1.msra.mxu0 %v6072
  %6127 = vmatprep.subr.mxu0 0.0
  %6128 = vmatpush1.msra.mxu0 %v6073
  %6129 = vmatprep.subr.mxu0 0.0
  %6130 = vmatpush1.msra.mxu0 %v6074
  %6131 = vmatprep.subr.mxu0 0.0
  %6132 = vmatpush1.msra.mxu0 %v6075
  %6133 = vmatprep.subr.mxu0 0.0
  %6134 = vmatpush1.msra.mxu0 %v6076
  %6135 = vmatprep.subr.mxu0 0.0
  %6136 = vmatpush1.msra.mxu0 %v6077
  %6137 = vmatprep.subr.mxu0 0.0
  %6138 = vmatpush1.msra.mxu0 %v6078
  %6139 = vmatprep.subr.mxu0 0.0
  %6140 = vmatpush1.msra.mxu0 %v6079
  %6141 = vmatprep.subr.mxu0 0.0
  %6142 = vmatpush1.msra.mxu0 %v6080
  %6143 = vmatprep.subr.mxu0 0.0
  %6144 = vmatpush1.msra.mxu0 %v6081
  %6145 = vmatprep.subr.mxu0 0.0
  %6146 = vmatpush1.msra.mxu0 %v6082
  %6147 = vmatprep.subr.mxu0 0.0
  %6148 = vmatpush1.msra.mxu0 %v6083
  %6149 = vmatprep.subr.mxu0 0.0
  %6150 = vmatpush1.msra.mxu0 %v6084
  %6151 = vmatprep.mubr.f32.mxu0 %v25
  %6152 = vmatmul.mubr.f32.gmra.mrb[0].mxu0 %v23
  %v6153 = vpop.f32.mrb[0].mxu0
  %v6154 = vadd.f32 0.0, %v6153
  %v6155 = vpop.f32.mrb[0].mxu0
  %6156 = vdwg.mxu0
  %v6158 = vsel %vm500, %v6086, 0
  %v6161 = vsel %vm504, %v6154, 0
  %6163 = vmatprep.subr.mxu0 0.0
  %6164 = vmatpush1.msra.mxu0 %v6161
  %6165 = vmatprep.subr.mxu0 0.0
  %6166 = vmatpush1.msra.mxu0 0.0
  %6167 = vmatprep.subr.mxu0 0.0
  %6168 = vmatpush1.msra.mxu0 0.0
  %6169 = vmatprep.subr.mxu0 0.0
  %6170 = vmatpush1.msra.mxu0 0.0
  %6171 = vmatprep.subr.mxu0 0.0
  %6172 = vmatpush1.msra.mxu0 0.0
  %6173 = vmatprep.subr.mxu0 0.0
  %6174 = vmatpush1.msra.mxu0 0.0
  %6175 = vmatprep.subr.mxu0 0.0
  %6176 = vmatpush1.msra.mxu0 0.0
  %6177 = vmatprep.subr.mxu0 0.0
  %6178 = vmatpush1.msra.mxu0 0.0
  %6179 = vmatprep.subr.mxu0 0.0
  %6180 = vmatpush1.msra.mxu0 0.0
  %6181 = vmatprep.subr.mxu0 0.0
  %6182 = vmatpush1.msra.mxu0 0.0
  %6183 = vmatprep.subr.mxu0 0.0
  %6184 = vmatpush1.msra.mxu0 0.0
  %6185 = vmatprep.subr.mxu0 0.0
  %6186 = vmatpush1.msra.mxu0 0.0
  %6187 = vmatprep.subr.mxu0 0.0
  %6188 = vmatpush1.msra.mxu0 0.0
  %6189 = vmatprep.subr.mxu0 0.0
  %6190 = vmatpush1.msra.mxu0 0.0
  %6191 = vmatprep.subr.mxu0 0.0
  %6192 = vmatpush1.msra.mxu0 0.0
  %6193 = vmatprep.subr.mxu0 0.0
  %6194 = vmatpush1.msra.mxu0 0.0
  %6195 = vmatprep.subr.mxu0 0.0
  %6196 = vmatpush1.msra.mxu0 0.0
  %6197 = vmatprep.subr.mxu0 0.0
  %6198 = vmatpush1.msra.mxu0 0.0
  %6199 = vmatprep.subr.mxu0 0.0
  %6200 = vmatpush1.msra.mxu0 0.0
  %6201 = vmatprep.subr.mxu0 0.0
  %6202 = vmatpush1.msra.mxu0 0.0
  %6203 = vmatprep.subr.mxu0 0.0
  %6204 = vmatpush1.msra.mxu0 0.0
  %6205 = vmatprep.subr.mxu0 0.0
  %6206 = vmatpush1.msra.mxu0 0.0
  %6207 = vmatprep.subr.mxu0 0.0
  %6208 = vmatpush1.msra.mxu0 0.0
  %6209 = vmatprep.subr.mxu0 0.0
  %6210 = vmatpush1.msra.mxu0 0.0
  %6211 = vmatprep.subr.mxu0 0.0
  %6212 = vmatpush1.msra.mxu0 0.0
  %6213 = vmatprep.subr.mxu0 0.0
  %6214 = vmatpush1.msra.mxu0 0.0
  %6215 = vmatprep.subr.mxu0 0.0
  %6216 = vmatpush1.msra.mxu0 0.0
  %6217 = vmatprep.subr.mxu0 0.0
  %6218 = vmatpush1.msra.mxu0 0.0
  %6219 = vmatprep.subr.mxu0 0.0
  %6220 = vmatpush1.msra.mxu0 0.0
  %6221 = vmatprep.subr.mxu0 0.0
  %6222 = vmatpush1.msra.mxu0 0.0
  %6223 = vmatprep.subr.mxu0 0.0
  %6224 = vmatpush1.msra.mxu0 0.0
  %6225 = vmatprep.subr.mxu0 0.0
  %6226 = vmatpush1.msra.mxu0 0.0
  %6227 = vmatprep.mubr.f32.mxu0 0.0
  %6228 = vmatmul.mubr.f32.gmra.mrb[0].mxu0 %v6158
  %v6229 = vpop.f32.mrb[0].mxu0
  %v6230 = vadd.f32 0.0, %v6229
  %v6231 = vpop.f32.mrb[0].mxu0
  %6232 = vdwg.mxu0
  %v6233 = vadd.f32 %v5841, %v6230
  %6234 = vmatprep.subr.mxu0 0.0
  %6235 = vmatpush1.msra.mxu0 %v6053
  %6236 = vmatprep.subr.mxu0 0.0
  %6237 = vmatpush1.msra.mxu0 %v6054
  %6238 = vmatprep.subr.mxu0 0.0
  %6239 = vmatpush1.msra.mxu0 %v6055
  %6240 = vmatprep.subr.mxu0 0.0
  %6241 = vmatpush1.msra.mxu0 %v6056
  %6242 = vmatprep.subr.mxu0 0.0
  %6243 = vmatpush1.msra.mxu0 %v6057
  %6244 = vmatprep.subr.mxu0 0.0
  %6245 = vmatpush1.msra.mxu0 %v6058
  %6246 = vmatprep.subr.mxu0 0.0
  %6247 = vmatpush1.msra.mxu0 %v6059
  %6248 = vmatprep.subr.mxu0 0.0
  %6249 = vmatpush1.msra.mxu0 %v6060
  %6250 = vmatprep.subr.mxu0 0.0
  %6251 = vmatpush1.msra.mxu0 %v6061
  %6252 = vmatprep.subr.mxu0 0.0
  %6253 = vmatpush1.msra.mxu0 %v6062
  %6254 = vmatprep.subr.mxu0 0.0
  %6255 = vmatpush1.msra.mxu0 %v6063
  %6256 = vmatprep.subr.mxu0 0.0
  %6257 = vmatpush1.msra.mxu0 %v6064
  %6258 = vmatprep.subr.mxu0 0.0
  %6259 = vmatpush1.msra.mxu0 %v6065
  %6260 = vmatprep.subr.mxu0 0.0
  %6261 = vmatpush1.msra.mxu0 %v6066
  %6262 = vmatprep.subr.mxu0 0.0
  %6263 = vmatpush1.msra.mxu0 %v6067
  %6264 = vmatprep.subr.mxu0 0.0
  %6265 = vmatpush1.msra.mxu0 %v6068
  %6266 = vmatprep.subr.mxu0 0.0
  %6267 = vmatpush1.msra.mxu0 %v6069
  %6268 = vmatprep.subr.mxu0 0.0
  %6269 = vmatpush1.msra.mxu0 %v6070
  %6270 = vmatprep.subr.mxu0 0.0
  %6271 = vmatpush1.msra.mxu0 %v6071
  %6272 = vmatprep.subr.mxu0 0.0
  %6273 = vmatpush1.msra.mxu0 %v6072
  %6274 = vmatprep.subr.mxu0 0.0
  %6275 = vmatpush1.msra.mxu0 %v6073
  %6276 = vmatprep.subr.mxu0 0.0
  %6277 = vmatpush1.msra.mxu0 %v6074
  %6278 = vmatprep.subr.mxu0 0.0
  %6279 = vmatpush1.msra.mxu0 %v6075
  %6280 = vmatprep.subr.mxu0 0.0
  %6281 = vmatpush1.msra.mxu0 %v6076
  %6282 = vmatprep.subr.mxu0 0.0
  %6283 = vmatpush1.msra.mxu0 %v6077
  %6284 = vmatprep.subr.mxu0 0.0
  %6285 = vmatpush1.msra.mxu0 %v6078
  %6286 = vmatprep.subr.mxu0 0.0
  %6287 = vmatpush1.msra.mxu0 %v6079
  %6288 = vmatprep.subr.mxu0 0.0
  %6289 = vmatpush1.msra.mxu0 %v6080
  %6290 = vmatprep.subr.mxu0 0.0
  %6291 = vmatpush1.msra.mxu0 %v6081
  %6292 = vmatprep.subr.mxu0 0.0
  %6293 = vmatpush1.msra.mxu0 %v6082
  %6294 = vmatprep.subr.mxu0 0.0
  %6295 = vmatpush1.msra.mxu0 %v6083
  %6296 = vmatprep.subr.mxu0 0.0
  %6297 = vmatpush1.msra.mxu0 %v6084
  %6298 = vmatprep.mubr.f32.mxu0 %v35
  %6299 = vmatmul.mubr.f32.gmra.mrb[0].mxu0 %v33
  %v6300 = vpop.f32.mrb[0].mxu0
  %v6301 = vadd.f32 0.0, %v6300
  %v6302 = vpop.f32.mrb[0].mxu0
  %6303 = vdwg.mxu0
  %v6305 = vsel %vm504, %v6301, 0
  %6307 = vmatprep.subr.mxu0 0.0
  %6308 = vmatpush1.msra.mxu0 %v6305
  %6309 = vmatprep.subr.mxu0 0.0
  %6310 = vmatpush1.msra.mxu0 0.0
  %6311 = vmatprep.subr.mxu0 0.0
  %6312 = vmatpush1.msra.mxu0 0.0
  %6313 = vmatprep.subr.mxu0 0.0
  %6314 = vmatpush1.msra.mxu0 0.0
  %6315 = vmatprep.subr.mxu0 0.0
  %6316 = vmatpush1.msra.mxu0 0.0
  %6317 = vmatprep.subr.mxu0 0.0
  %6318 = vmatpush1.msra.mxu0 0.0
  %6319 = vmatprep.subr.mxu0 0.0
  %6320 = vmatpush1.msra.mxu0 0.0
  %6321 = vmatprep.subr.mxu0 0.0
  %6322 = vmatpush1.msra.mxu0 0.0
  %6323 = vmatprep.subr.mxu0 0.0
  %6324 = vmatpush1.msra.mxu0 0.0
  %6325 = vmatprep.subr.mxu0 0.0
  %6326 = vmatpush1.msra.mxu0 0.0
  %6327 = vmatprep.subr.mxu0 0.0
  %6328 = vmatpush1.msra.mxu0 0.0
  %6329 = vmatprep.subr.mxu0 0.0
  %6330 = vmatpush1.msra.mxu0 0.0
  %6331 = vmatprep.subr.mxu0 0.0
  %6332 = vmatpush1.msra.mxu0 0.0
  %6333 = vmatprep.subr.mxu0 0.0
  %6334 = vmatpush1.msra.mxu0 0.0
  %6335 = vmatprep.subr.mxu0 0.0
  %6336 = vmatpush1.msra.mxu0 0.0
  %6337 = vmatprep.subr.mxu0 0.0
  %6338 = vmatpush1.msra.mxu0 0.0
  %6339 = vmatprep.subr.mxu0 0.0
  %6340 = vmatpush1.msra.mxu0 0.0
  %6341 = vmatprep.subr.mxu0 0.0
  %6342 = vmatpush1.msra.mxu0 0.0
  %6343 = vmatprep.subr.mxu0 0.0
  %6344 = vmatpush1.msra.mxu0 0.0
  %6345 = vmatprep.subr.mxu0 0.0
  %6346 = vmatpush1.msra.mxu0 0.0
  %6347 = vmatprep.subr.mxu0 0.0
  %6348 = vmatpush1.msra.mxu0 0.0
  %6349 = vmatprep.subr.mxu0 0.0
  %6350 = vmatpush1.msra.mxu0 0.0
  %6351 = vmatprep.subr.mxu0 0.0
  %6352 = vmatpush1.msra.mxu0 0.0
  %6353 = vmatprep.subr.mxu0 0.0
  %6354 = vmatpush1.msra.mxu0 0.0
  %6355 = vmatprep.subr.mxu0 0.0
  %6356 = vmatpush1.msra.mxu0 0.0
  %6357 = vmatprep.subr.mxu0 0.0
  %6358 = vmatpush1.msra.mxu0 0.0
  %6359 = vmatprep.subr.mxu0 0.0
  %6360 = vmatpush1.msra.mxu0 0.0
  %6361 = vmatprep.subr.mxu0 0.0
  %6362 = vmatpush1.msra.mxu0 0.0
  %6363 = vmatprep.subr.mxu0 0.0
  %6364 = vmatpush1.msra.mxu0 0.0
  %6365 = vmatprep.subr.mxu0 0.0
  %6366 = vmatpush1.msra.mxu0 0.0
  %6367 = vmatprep.subr.mxu0 0.0
  %6368 = vmatpush1.msra.mxu0 0.0
  %6369 = vmatprep.subr.mxu0 0.0
  %6370 = vmatpush1.msra.mxu0 0.0
  %6371 = vmatprep.mubr.f32.mxu0 0.0
  %6372 = vmatmul.mubr.f32.gmra.mrb[0].mxu0 %v6158
  %v6373 = vpop.f32.mrb[0].mxu0
  %v6374 = vadd.f32 0.0, %v6373
  %v6375 = vpop.f32.mrb[0].mxu0
  %6376 = vdwg.mxu0
  %v6377 = vadd.f32 %v5985, %v6374
  %v6378 = vmax.f32 %v6233, 0.0
  %v6379 = vmax.f32 %v6377, 0.0
  %v6380 = vadd.s32 %v74, 128
  %v6381 = vshra.s32 %v74, 4
  %v6382 = vshra.s32 %v6380, 4
  %v6383 = vand.u32 %v74, 15
  %v6384 = vand.u32 %v6380, 15
  %v6385 = vadd.s32 %v6381, 4294967295
  %v6386 = vadd.s32 %v6382, 4294967295
  %vm6387 = vcmp.gt.s32.totalorder %v6385, 0
  %v6388 = vsel %vm6387, %v6385, 0
  %vm6389 = vcmp.gt.s32.totalorder %v6386, 0
  %v6390 = vsel %vm6389, %v6386, 0
  %vm6391 = vcmp.lt.s32.totalorder %v6388, 15
  %v6392 = vsel %vm6391, %v6388, 15
  %vm6393 = vcmp.lt.s32.totalorder %v6390, 15
  %v6394 = vsel %vm6393, %v6390, 15
  %v6395 = vshra.s32 %v6392, 1
  %v6396 = vshra.s32 %v6394, 1
  %v6397 = vadd.s32 %v6383, 4294967295
  %v6398 = vadd.s32 %v6384, 4294967295
  %vm6399 = vcmp.gt.s32.totalorder %v6397, 0
  %v6400 = vsel %vm6399, %v6397, 0
  %vm6401 = vcmp.gt.s32.totalorder %v6398, 0
  %v6402 = vsel %vm6401, %v6398, 0
  %vm6403 = vcmp.lt.s32.totalorder %v6400, 15
  %v6404 = vsel %vm6403, %v6400, 15
  %vm6405 = vcmp.lt.s32.totalorder %v6402, 15
  %v6406 = vsel %vm6405, %v6402, 15
  %v6407 = vshra.s32 %v6404, 1
  %v6408 = vshra.s32 %v6406, 1
  %v6409 = vmul.u32 %v6395, 8
  %v6410 = vmul.u32 %v6396, 8
  %v6411 = vadd.s32 %v6409, %v6407
  %v6412 = vadd.s32 %v6410, %v6408
  %vm6413 = vcmp.eq.s32.totalorder %v41, %v6411
  %vm6414 = vcmp.eq.s32.totalorder %v41, %v6412
  %vm6415 = vcmp.eq.s32.totalorder %v42, %v6411
  %vm6416 = vcmp.eq.s32.totalorder %v42, %v6412
  %vm6417 = vcmp.eq.s32.totalorder %v43, %v6411
  %vm6418 = vcmp.eq.s32.totalorder %v43, %v6412
  %vm6419 = vcmp.eq.s32.totalorder %v44, %v6411
  %vm6420 = vcmp.eq.s32.totalorder %v44, %v6412
  %vm6421 = vcmp.eq.s32.totalorder %v45, %v6411
  %vm6422 = vcmp.eq.s32.totalorder %v45, %v6412
  %vm6423 = vcmp.eq.s32.totalorder %v46, %v6411
  %vm6424 = vcmp.eq.s32.totalorder %v46, %v6412
  %vm6425 = vcmp.eq.s32.totalorder %v47, %v6411
  %vm6426 = vcmp.eq.s32.totalorder %v47, %v6412
  %vm6427 = vcmp.eq.s32.totalorder %v48, %v6411
  %vm6428 = vcmp.eq.s32.totalorder %v48, %v6412
  %v6429 = vsel %vm6413, 1.0, 0.0
  %v6430 = vsel %vm6414, 1.0, 0.0
  %v6431 = vsel %vm6415, 1.0, 0.0
  %v6432 = vsel %vm6416, 1.0, 0.0
  %v6433 = vsel %vm6417, 1.0, 0.0
  %v6434 = vsel %vm6418, 1.0, 0.0
  %v6435 = vsel %vm6419, 1.0, 0.0
  %v6436 = vsel %vm6420, 1.0, 0.0
  %v6437 = vsel %vm6421, 1.0, 0.0
  %v6438 = vsel %vm6422, 1.0, 0.0
  %v6439 = vsel %vm6423, 1.0, 0.0
  %v6440 = vsel %vm6424, 1.0, 0.0
  %v6441 = vsel %vm6425, 1.0, 0.0
  %v6442 = vsel %vm6426, 1.0, 0.0
  %v6443 = vsel %vm6427, 1.0, 0.0
  %v6444 = vsel %vm6428, 1.0, 0.0
  %v6445 = vld [vmem:[%s2] sm:$0xf]
  %vm6446 = vcmask 523264
  %v6448 = vsel %vm6446, %v6378, 0
  %6450 = vmatprep.subr.mxu0 %v6430
  %6451 = vmatpush1.msra.mxu0 %v6429
  %6452 = vmatprep.subr.mxu0 %v6432
  %6453 = vmatpush1.msra.mxu0 %v6431
  %6454 = vmatprep.subr.mxu0 %v6434
  %6455 = vmatpush1.msra.mxu0 %v6433
  %6456 = vmatprep.subr.mxu0 %v6436
  %6457 = vmatpush1.msra.mxu0 %v6435
  %6458 = vmatprep.subr.mxu0 %v6438
  %6459 = vmatpush1.msra.mxu0 %v6437
  %6460 = vmatprep.subr.mxu0 %v6440
  %6461 = vmatpush1.msra.mxu0 %v6439
  %6462 = vmatprep.subr.mxu0 %v6442
  %6463 = vmatpush1.msra.mxu0 %v6441
  %6464 = vmatprep.subr.mxu0 %v6444
  %6465 = vmatpush1.msra.mxu0 %v6443
  %6466 = vmatprep.subr.mxu0 0.0
  %6467 = vmatpush1.msra.mxu0 0.0
  %6468 = vmatprep.subr.mxu0 0.0
  %6469 = vmatpush1.msra.mxu0 0.0
  %6470 = vmatprep.subr.mxu0 0.0
  %6471 = vmatpush1.msra.mxu0 0.0
  %6472 = vmatprep.subr.mxu0 0.0
  %6473 = vmatpush1.msra.mxu0 0.0
  %6474 = vmatprep.subr.mxu0 0.0
  %6475 = vmatpush1.msra.mxu0 0.0
  %6476 = vmatprep.subr.mxu0 0.0
  %6477 = vmatpush1.msra.mxu0 0.0
  %6478 = vmatprep.subr.mxu0 0.0
  %6479 = vmatpush1.msra.mxu0 0.0
  %6480 = vmatprep.subr.mxu0 0.0
  %6481 = vmatpush1.msra.mxu0 0.0
  %6482 = vmatprep.subr.mxu0 0.0
  %6483 = vmatpush1.msra.mxu0 0.0
  %6484 = vmatprep.subr.mxu0 0.0
  %6485 = vmatpush1.msra.mxu0 0.0
  %6486 = vmatprep.subr.mxu0 0.0
  %6487 = vmatpush1.msra.mxu0 0.0
  %6488 = vmatprep.subr.mxu0 0.0
  %6489 = vmatpush1.msra.mxu0 0.0
  %6490 = vmatprep.subr.mxu0 0.0
  %6491 = vmatpush1.msra.mxu0 0.0
  %6492 = vmatprep.subr.mxu0 0.0
  %6493 = vmatpush1.msra.mxu0 0.0
  %6494 = vmatprep.subr.mxu0 0.0
  %6495 = vmatpush1.msra.mxu0 0.0
  %6496 = vmatprep.subr.mxu0 0.0
  %6497 = vmatpush1.msra.mxu0 0.0
  %6498 = vmatprep.subr.mxu0 0.0
  %6499 = vmatpush1.msra.mxu0 0.0
  %6500 = vmatprep.subr.mxu0 0.0
  %6501 = vmatpush1.msra.mxu0 0.0
  %6502 = vmatprep.subr.mxu0 0.0
  %6503 = vmatpush1.msra.mxu0 0.0
  %6504 = vmatprep.subr.mxu0 0.0
  %6505 = vmatpush1.msra.mxu0 0.0
  %6506 = vmatprep.subr.mxu0 0.0
  %6507 = vmatpush1.msra.mxu0 0.0
  %6508 = vmatprep.subr.mxu0 0.0
  %6509 = vmatpush1.msra.mxu0 0.0
  %6510 = vmatprep.subr.mxu0 0.0
  %6511 = vmatpush1.msra.mxu0 0.0
  %6512 = vmatprep.subr.mxu0 0.0
  %6513 = vmatpush1.msra.mxu0 0.0
  %6514 = vmatprep.mubr.f32.mxu0 0.0
  %6515 = vmatmul.mubr.f32.gmra.mrb[0].mxu0 %v6448
  %v6516 = vpop.f32.mrb[0].mxu0
  %v6517 = vadd.f32 0.0, %v6516
  %v6518 = vpop.f32.mrb[0].mxu0
  %v6519 = vadd.f32 0.0, %v6518
  %6520 = vdwg.mxu0
  %v6522 = vsel %vm6446, %v6379, 0
  %6524 = vmatprep.subr.mxu0 %v6430
  %6525 = vmatpush1.msra.mxu0 %v6429
  %6526 = vmatprep.subr.mxu0 %v6432
  %6527 = vmatpush1.msra.mxu0 %v6431
  %6528 = vmatprep.subr.mxu0 %v6434
  %6529 = vmatpush1.msra.mxu0 %v6433
  %6530 = vmatprep.subr.mxu0 %v6436
  %6531 = vmatpush1.msra.mxu0 %v6435
  %6532 = vmatprep.subr.mxu0 %v6438
  %6533 = vmatpush1.msra.mxu0 %v6437
  %6534 = vmatprep.subr.mxu0 %v6440
  %6535 = vmatpush1.msra.mxu0 %v6439
  %6536 = vmatprep.subr.mxu0 %v6442
  %6537 = vmatpush1.msra.mxu0 %v6441
  %6538 = vmatprep.subr.mxu0 %v6444
  %6539 = vmatpush1.msra.mxu0 %v6443
  %6540 = vmatprep.subr.mxu0 0.0
  %6541 = vmatpush1.msra.mxu0 0.0
  %6542 = vmatprep.subr.mxu0 0.0
  %6543 = vmatpush1.msra.mxu0 0.0
  %6544 = vmatprep.subr.mxu0 0.0
  %6545 = vmatpush1.msra.mxu0 0.0
  %6546 = vmatprep.subr.mxu0 0.0
  %6547 = vmatpush1.msra.mxu0 0.0
  %6548 = vmatprep.subr.mxu0 0.0
  %6549 = vmatpush1.msra.mxu0 0.0
  %6550 = vmatprep.subr.mxu0 0.0
  %6551 = vmatpush1.msra.mxu0 0.0
  %6552 = vmatprep.subr.mxu0 0.0
  %6553 = vmatpush1.msra.mxu0 0.0
  %6554 = vmatprep.subr.mxu0 0.0
  %6555 = vmatpush1.msra.mxu0 0.0
  %6556 = vmatprep.subr.mxu0 0.0
  %6557 = vmatpush1.msra.mxu0 0.0
  %6558 = vmatprep.subr.mxu0 0.0
  %6559 = vmatpush1.msra.mxu0 0.0
  %6560 = vmatprep.subr.mxu0 0.0
  %6561 = vmatpush1.msra.mxu0 0.0
  %6562 = vmatprep.subr.mxu0 0.0
  %6563 = vmatpush1.msra.mxu0 0.0
  %6564 = vmatprep.subr.mxu0 0.0
  %6565 = vmatpush1.msra.mxu0 0.0
  %6566 = vmatprep.subr.mxu0 0.0
  %6567 = vmatpush1.msra.mxu0 0.0
  %6568 = vmatprep.subr.mxu0 0.0
  %6569 = vmatpush1.msra.mxu0 0.0
  %6570 = vmatprep.subr.mxu0 0.0
  %6571 = vmatpush1.msra.mxu0 0.0
  %6572 = vmatprep.subr.mxu0 0.0
  %6573 = vmatpush1.msra.mxu0 0.0
  %6574 = vmatprep.subr.mxu0 0.0
  %6575 = vmatpush1.msra.mxu0 0.0
  %6576 = vmatprep.subr.mxu0 0.0
  %6577 = vmatpush1.msra.mxu0 0.0
  %6578 = vmatprep.subr.mxu0 0.0
  %6579 = vmatpush1.msra.mxu0 0.0
  %6580 = vmatprep.subr.mxu0 0.0
  %6581 = vmatpush1.msra.mxu0 0.0
  %6582 = vmatprep.subr.mxu0 0.0
  %6583 = vmatpush1.msra.mxu0 0.0
  %6584 = vmatprep.subr.mxu0 0.0
  %6585 = vmatpush1.msra.mxu0 0.0
  %6586 = vmatprep.subr.mxu0 0.0
  %6587 = vmatpush1.msra.mxu0 0.0
  %6588 = vmatprep.mubr.f32.mxu0 0.0
  %6589 = vmatmul.mubr.f32.gmra.mrb[0].mxu0 %v6522
  %v6590 = vpop.f32.mrb[0].mxu0
  %v6591 = vadd.f32 0.0, %v6590
  %v6592 = vpop.f32.mrb[0].mxu0
  %v6593 = vadd.f32 0.0, %v6592
  %6594 = vdwg.mxu0
  %vm6595 = vcmp.gt.s32.totalorder %v6383, 0
  %v6596 = vsel %vm6595, %v6383, 0
  %vm6597 = vcmp.gt.s32.totalorder %v6384, 0
  %v6598 = vsel %vm6597, %v6384, 0
  %vm6599 = vcmp.lt.s32.totalorder %v6596, 15
  %v6600 = vsel %vm6599, %v6596, 15
  %vm6601 = vcmp.lt.s32.totalorder %v6598, 15
  %v6602 = vsel %vm6601, %v6598, 15
  %v6603 = vshra.s32 %v6600, 1
  %v6604 = vshra.s32 %v6602, 1
  %v6605 = vadd.s32 %v6409, %v6603
  %v6606 = vadd.s32 %v6410, %v6604
  %vm6607 = vcmp.eq.s32.totalorder %v41, %v6605
  %vm6608 = vcmp.eq.s32.totalorder %v41, %v6606
  %vm6609 = vcmp.eq.s32.totalorder %v42, %v6605
  %vm6610 = vcmp.eq.s32.totalorder %v42, %v6606
  %vm6611 = vcmp.eq.s32.totalorder %v43, %v6605
  %vm6612 = vcmp.eq.s32.totalorder %v43, %v6606
  %vm6613 = vcmp.eq.s32.totalorder %v44, %v6605
  %vm6614 = vcmp.eq.s32.totalorder %v44, %v6606
  %vm6615 = vcmp.eq.s32.totalorder %v45, %v6605
  %vm6616 = vcmp.eq.s32.totalorder %v45, %v6606
  %vm6617 = vcmp.eq.s32.totalorder %v46, %v6605
  %vm6618 = vcmp.eq.s32.totalorder %v46, %v6606
  %vm6619 = vcmp.eq.s32.totalorder %v47, %v6605
  %vm6620 = vcmp.eq.s32.totalorder %v47, %v6606
  %vm6621 = vcmp.eq.s32.totalorder %v48, %v6605
  %vm6622 = vcmp.eq.s32.totalorder %v48, %v6606
  %v6623 = vsel %vm6607, 1.0, 0.0
  %v6624 = vsel %vm6608, 1.0, 0.0
  %v6625 = vsel %vm6609, 1.0, 0.0
  %v6626 = vsel %vm6610, 1.0, 0.0
  %v6627 = vsel %vm6611, 1.0, 0.0
  %v6628 = vsel %vm6612, 1.0, 0.0
  %v6629 = vsel %vm6613, 1.0, 0.0
  %v6630 = vsel %vm6614, 1.0, 0.0
  %v6631 = vsel %vm6615, 1.0, 0.0
  %v6632 = vsel %vm6616, 1.0, 0.0
  %v6633 = vsel %vm6617, 1.0, 0.0
  %v6634 = vsel %vm6618, 1.0, 0.0
  %v6635 = vsel %vm6619, 1.0, 0.0
  %v6636 = vsel %vm6620, 1.0, 0.0
  %v6637 = vsel %vm6621, 1.0, 0.0
  %v6638 = vsel %vm6622, 1.0, 0.0
  %s6639 = scalar_lea.vmem %s2, 4
  %v6640 = vld [vmem:[%s6639] sm:$0xf]
  %6641 = vmatprep.subr.mxu0 %v6624
  %6642 = vmatpush1.msra.mxu0 %v6623
  %6643 = vmatprep.subr.mxu0 %v6626
  %6644 = vmatpush1.msra.mxu0 %v6625
  %6645 = vmatprep.subr.mxu0 %v6628
  %6646 = vmatpush1.msra.mxu0 %v6627
  %6647 = vmatprep.subr.mxu0 %v6630
  %6648 = vmatpush1.msra.mxu0 %v6629
  %6649 = vmatprep.subr.mxu0 %v6632
  %6650 = vmatpush1.msra.mxu0 %v6631
  %6651 = vmatprep.subr.mxu0 %v6634
  %6652 = vmatpush1.msra.mxu0 %v6633
  %6653 = vmatprep.subr.mxu0 %v6636
  %6654 = vmatpush1.msra.mxu0 %v6635
  %6655 = vmatprep.subr.mxu0 %v6638
  %6656 = vmatpush1.msra.mxu0 %v6637
  %6657 = vmatprep.subr.mxu0 0.0
  %6658 = vmatpush1.msra.mxu0 0.0
  %6659 = vmatprep.subr.mxu0 0.0
  %6660 = vmatpush1.msra.mxu0 0.0
  %6661 = vmatprep.subr.mxu0 0.0
  %6662 = vmatpush1.msra.mxu0 0.0
  %6663 = vmatprep.subr.mxu0 0.0
  %6664 = vmatpush1.msra.mxu0 0.0
  %6665 = vmatprep.subr.mxu0 0.0
  %6666 = vmatpush1.msra.mxu0 0.0
  %6667 = vmatprep.subr.mxu0 0.0
  %6668 = vmatpush1.msra.mxu0 0.0
  %6669 = vmatprep.subr.mxu0 0.0
  %6670 = vmatpush1.msra.mxu0 0.0
  %6671 = vmatprep.subr.mxu0 0.0
  %6672 = vmatpush1.msra.mxu0 0.0
  %6673 = vmatprep.subr.mxu0 0.0
  %6674 = vmatpush1.msra.mxu0 0.0
  %6675 = vmatprep.subr.mxu0 0.0
  %6676 = vmatpush1.msra.mxu0 0.0
  %6677 = vmatprep.subr.mxu0 0.0
  %6678 = vmatpush1.msra.mxu0 0.0
  %6679 = vmatprep.subr.mxu0 0.0
  %6680 = vmatpush1.msra.mxu0 0.0
  %6681 = vmatprep.subr.mxu0 0.0
  %6682 = vmatpush1.msra.mxu0 0.0
  %6683 = vmatprep.subr.mxu0 0.0
  %6684 = vmatpush1.msra.mxu0 0.0
  %6685 = vmatprep.subr.mxu0 0.0
  %6686 = vmatpush1.msra.mxu0 0.0
  %6687 = vmatprep.subr.mxu0 0.0
  %6688 = vmatpush1.msra.mxu0 0.0
  %6689 = vmatprep.subr.mxu0 0.0
  %6690 = vmatpush1.msra.mxu0 0.0
  %6691 = vmatprep.subr.mxu0 0.0
  %6692 = vmatpush1.msra.mxu0 0.0
  %6693 = vmatprep.subr.mxu0 0.0
  %6694 = vmatpush1.msra.mxu0 0.0
  %6695 = vmatprep.subr.mxu0 0.0
  %6696 = vmatpush1.msra.mxu0 0.0
  %6697 = vmatprep.subr.mxu0 0.0
  %6698 = vmatpush1.msra.mxu0 0.0
  %6699 = vmatprep.subr.mxu0 0.0
  %6700 = vmatpush1.msra.mxu0 0.0
  %6701 = vmatprep.subr.mxu0 0.0
  %6702 = vmatpush1.msra.mxu0 0.0
  %6703 = vmatprep.subr.mxu0 0.0
  %6704 = vmatpush1.msra.mxu0 0.0
  %6705 = vmatprep.mubr.f32.mxu0 0.0
  %6706 = vmatmul.mubr.f32.gmra.mrb[0].mxu0 %v6448
  %v6707 = vpop.f32.mrb[0].mxu0
  %v6708 = vadd.f32 0.0, %v6707
  %v6709 = vpop.f32.mrb[0].mxu0
  %v6710 = vadd.f32 0.0, %v6709
  %6711 = vdwg.mxu0
  %vm6712 = vcmask 64512
  %v6714 = vsel %vm6712, %v6640, 0
  %6716 = vmatprep.subr.mxu0 %v6710
  %6717 = vmatpush1.msra.mxu0 %v6708
  %6718 = vmatprep.subr.mxu0 0.0
  %6719 = vmatpush1.msra.mxu0 0.0
  %6720 = vmatprep.subr.mxu0 0.0
  %6721 = vmatpush1.msra.mxu0 0.0
  %6722 = vmatprep.subr.mxu0 0.0
  %6723 = vmatpush1.msra.mxu0 0.0
  %6724 = vmatprep.subr.mxu0 0.0
  %6725 = vmatpush1.msra.mxu0 0.0
  %6726 = vmatprep.subr.mxu0 0.0
  %6727 = vmatpush1.msra.mxu0 0.0
  %6728 = vmatprep.subr.mxu0 0.0
  %6729 = vmatpush1.msra.mxu0 0.0
  %6730 = vmatprep.subr.mxu0 0.0
  %6731 = vmatpush1.msra.mxu0 0.0
  %6732 = vmatprep.subr.mxu0 0.0
  %6733 = vmatpush1.msra.mxu0 0.0
  %6734 = vmatprep.subr.mxu0 0.0
  %6735 = vmatpush1.msra.mxu0 0.0
  %6736 = vmatprep.subr.mxu0 0.0
  %6737 = vmatpush1.msra.mxu0 0.0
  %6738 = vmatprep.subr.mxu0 0.0
  %6739 = vmatpush1.msra.mxu0 0.0
  %6740 = vmatprep.subr.mxu0 0.0
  %6741 = vmatpush1.msra.mxu0 0.0
  %6742 = vmatprep.subr.mxu0 0.0
  %6743 = vmatpush1.msra.mxu0 0.0
  %6744 = vmatprep.subr.mxu0 0.0
  %6745 = vmatpush1.msra.mxu0 0.0
  %6746 = vmatprep.subr.mxu0 0.0
  %6747 = vmatpush1.msra.mxu0 0.0
  %6748 = vmatprep.subr.mxu0 0.0
  %6749 = vmatpush1.msra.mxu0 0.0
  %6750 = vmatprep.subr.mxu0 0.0
  %6751 = vmatpush1.msra.mxu0 0.0
  %6752 = vmatprep.subr.mxu0 0.0
  %6753 = vmatpush1.msra.mxu0 0.0
  %6754 = vmatprep.subr.mxu0 0.0
  %6755 = vmatpush1.msra.mxu0 0.0
  %6756 = vmatprep.subr.mxu0 0.0
  %6757 = vmatpush1.msra.mxu0 0.0
  %6758 = vmatprep.subr.mxu0 0.0
  %6759 = vmatpush1.msra.mxu0 0.0
  %6760 = vmatprep.subr.mxu0 0.0
  %6761 = vmatpush1.msra.mxu0 0.0
  %6762 = vmatprep.subr.mxu0 0.0
  %6763 = vmatpush1.msra.mxu0 0.0
  %6764 = vmatprep.subr.mxu0 0.0
  %6765 = vmatpush1.msra.mxu0 0.0
  %6766 = vmatprep.subr.mxu0 0.0
  %6767 = vmatpush1.msra.mxu0 0.0
  %6768 = vmatprep.subr.mxu0 0.0
  %6769 = vmatpush1.msra.mxu0 0.0
  %6770 = vmatprep.subr.mxu0 0.0
  %6771 = vmatpush1.msra.mxu0 0.0
  %6772 = vmatprep.subr.mxu0 0.0
  %6773 = vmatpush1.msra.mxu0 0.0
  %6774 = vmatprep.subr.mxu0 0.0
  %6775 = vmatpush1.msra.mxu0 0.0
  %6776 = vmatprep.subr.mxu0 0.0
  %6777 = vmatpush1.msra.mxu0 0.0
  %6778 = vmatprep.subr.mxu0 0.0
  %6779 = vmatpush1.msra.mxu0 0.0
  %6780 = vmatprep.mubr.f32.mxu0 0.0
  %6781 = vmatmul.mubr.f32.gmra.mrb[0].mxu0 %v6714
  %v6782 = vpop.f32.mrb[0].mxu0
  %v6783 = vadd.f32 0.0, %v6782
  %v6784 = vpop.f32.mrb[0].mxu0
  %v6785 = vadd.f32 0.0, %v6784
  %6786 = vdwg.mxu0
  %v6788 = vsel %vm6712, %v6445, 0
  %6790 = vmatprep.subr.mxu0 %v6519
  %6791 = vmatpush1.msra.mxu0 %v6517
  %6792 = vmatprep.subr.mxu0 0.0
  %6793 = vmatpush1.msra.mxu0 0.0
  %6794 = vmatprep.subr.mxu0 0.0
  %6795 = vmatpush1.msra.mxu0 0.0
  %6796 = vmatprep.subr.mxu0 0.0
  %6797 = vmatpush1.msra.mxu0 0.0
  %6798 = vmatprep.subr.mxu0 0.0
  %6799 = vmatpush1.msra.mxu0 0.0
  %6800 = vmatprep.subr.mxu0 0.0
  %6801 = vmatpush1.msra.mxu0 0.0
  %6802 = vmatprep.subr.mxu0 0.0
  %6803 = vmatpush1.msra.mxu0 0.0
  %6804 = vmatprep.subr.mxu0 0.0
  %6805 = vmatpush1.msra.mxu0 0.0
  %6806 = vmatprep.subr.mxu0 0.0
  %6807 = vmatpush1.msra.mxu0 0.0
  %6808 = vmatprep.subr.mxu0 0.0
  %6809 = vmatpush1.msra.mxu0 0.0
  %6810 = vmatprep.subr.mxu0 0.0
  %6811 = vmatpush1.msra.mxu0 0.0
  %6812 = vmatprep.subr.mxu0 0.0
  %6813 = vmatpush1.msra.mxu0 0.0
  %6814 = vmatprep.subr.mxu0 0.0
  %6815 = vmatpush1.msra.mxu0 0.0
  %6816 = vmatprep.subr.mxu0 0.0
  %6817 = vmatpush1.msra.mxu0 0.0
  %6818 = vmatprep.subr.mxu0 0.0
  %6819 = vmatpush1.msra.mxu0 0.0
  %6820 = vmatprep.subr.mxu0 0.0
  %6821 = vmatpush1.msra.mxu0 0.0
  %6822 = vmatprep.subr.mxu0 0.0
  %6823 = vmatpush1.msra.mxu0 0.0
  %6824 = vmatprep.subr.mxu0 0.0
  %6825 = vmatpush1.msra.mxu0 0.0
  %6826 = vmatprep.subr.mxu0 0.0
  %6827 = vmatpush1.msra.mxu0 0.0
  %6828 = vmatprep.subr.mxu0 0.0
  %6829 = vmatpush1.msra.mxu0 0.0
  %6830 = vmatprep.subr.mxu0 0.0
  %6831 = vmatpush1.msra.mxu0 0.0
  %6832 = vmatprep.subr.mxu0 0.0
  %6833 = vmatpush1.msra.mxu0 0.0
  %6834 = vmatprep.subr.mxu0 0.0
  %6835 = vmatpush1.msra.mxu0 0.0
  %6836 = vmatprep.subr.mxu0 0.0
  %6837 = vmatpush1.msra.mxu0 0.0
  %6838 = vmatprep.subr.mxu0 0.0
  %6839 = vmatpush1.msra.mxu0 0.0
  %6840 = vmatprep.subr.mxu0 0.0
  %6841 = vmatpush1.msra.mxu0 0.0
  %6842 = vmatprep.subr.mxu0 0.0
  %6843 = vmatpush1.msra.mxu0 0.0
  %6844 = vmatprep.subr.mxu0 0.0
  %6845 = vmatpush1.msra.mxu0 0.0
  %6846 = vmatprep.subr.mxu0 0.0
  %6847 = vmatpush1.msra.mxu0 0.0
  %6848 = vmatprep.subr.mxu0 0.0
  %6849 = vmatpush1.msra.mxu0 0.0
  %6850 = vmatprep.subr.mxu0 0.0
  %6851 = vmatpush1.msra.mxu0 0.0
  %6852 = vmatprep.subr.mxu0 0.0
  %6853 = vmatpush1.msra.mxu0 0.0
  %6854 = vmatprep.mubr.f32.mxu0 0.0
  %6855 = vmatmul.mubr.f32.gmra.mrb[0].mxu0 %v6788
  %v6856 = vpop.f32.mrb[0].mxu0
  %v6857 = vadd.f32 %v6783, %v6856
  %v6858 = vpop.f32.mrb[0].mxu0
  %v6859 = vadd.f32 %v6785, %v6858
  %6860 = vdwg.mxu0
  %6861 = vmatprep.subr.mxu0 %v6624
  %6862 = vmatpush1.msra.mxu0 %v6623
  %6863 = vmatprep.subr.mxu0 %v6626
  %6864 = vmatpush1.msra.mxu0 %v6625
  %6865 = vmatprep.subr.mxu0 %v6628
  %6866 = vmatpush1.msra.mxu0 %v6627
  %6867 = vmatprep.subr.mxu0 %v6630
  %6868 = vmatpush1.msra.mxu0 %v6629
  %6869 = vmatprep.subr.mxu0 %v6632
  %6870 = vmatpush1.msra.mxu0 %v6631
  %6871 = vmatprep.subr.mxu0 %v6634
  %6872 = vmatpush1.msra.mxu0 %v6633
  %6873 = vmatprep.subr.mxu0 %v6636
  %6874 = vmatpush1.msra.mxu0 %v6635
  %6875 = vmatprep.subr.mxu0 %v6638
  %6876 = vmatpush1.msra.mxu0 %v6637
  %6877 = vmatprep.subr.mxu0 0.0
  %6878 = vmatpush1.msra.mxu0 0.0
  %6879 = vmatprep.subr.mxu0 0.0
  %6880 = vmatpush1.msra.mxu0 0.0
  %6881 = vmatprep.subr.mxu0 0.0
  %6882 = vmatpush1.msra.mxu0 0.0
  %6883 = vmatprep.subr.mxu0 0.0
  %6884 = vmatpush1.msra.mxu0 0.0
  %6885 = vmatprep.subr.mxu0 0.0
  %6886 = vmatpush1.msra.mxu0 0.0
  %6887 = vmatprep.subr.mxu0 0.0
  %6888 = vmatpush1.msra.mxu0 0.0
  %6889 = vmatprep.subr.mxu0 0.0
  %6890 = vmatpush1.msra.mxu0 0.0
  %6891 = vmatprep.subr.mxu0 0.0
  %6892 = vmatpush1.msra.mxu0 0.0
  %6893 = vmatprep.subr.mxu0 0.0
  %6894 = vmatpush1.msra.mxu0 0.0
  %6895 = vmatprep.subr.mxu0 0.0
  %6896 = vmatpush1.msra.mxu0 0.0
  %6897 = vmatprep.subr.mxu0 0.0
  %6898 = vmatpush1.msra.mxu0 0.0
  %6899 = vmatprep.subr.mxu0 0.0
  %6900 = vmatpush1.msra.mxu0 0.0
  %6901 = vmatprep.subr.mxu0 0.0
  %6902 = vmatpush1.msra.mxu0 0.0
  %6903 = vmatprep.subr.mxu0 0.0
  %6904 = vmatpush1.msra.mxu0 0.0
  %6905 = vmatprep.subr.mxu0 0.0
  %6906 = vmatpush1.msra.mxu0 0.0
  %6907 = vmatprep.subr.mxu0 0.0
  %6908 = vmatpush1.msra.mxu0 0.0
  %6909 = vmatprep.subr.mxu0 0.0
  %6910 = vmatpush1.msra.mxu0 0.0
  %6911 = vmatprep.subr.mxu0 0.0
  %6912 = vmatpush1.msra.mxu0 0.0
  %6913 = vmatprep.subr.mxu0 0.0
  %6914 = vmatpush1.msra.mxu0 0.0
  %6915 = vmatprep.subr.mxu0 0.0
  %6916 = vmatpush1.msra.mxu0 0.0
  %6917 = vmatprep.subr.mxu0 0.0
  %6918 = vmatpush1.msra.mxu0 0.0
  %6919 = vmatprep.subr.mxu0 0.0
  %6920 = vmatpush1.msra.mxu0 0.0
  %6921 = vmatprep.subr.mxu0 0.0
  %6922 = vmatpush1.msra.mxu0 0.0
  %6923 = vmatprep.subr.mxu0 0.0
  %6924 = vmatpush1.msra.mxu0 0.0
  %6925 = vmatprep.mubr.f32.mxu0 0.0
  %6926 = vmatmul.mubr.f32.gmra.mrb[0].mxu0 %v6522
  %v6927 = vpop.f32.mrb[0].mxu0
  %v6928 = vadd.f32 0.0, %v6927
  %v6929 = vpop.f32.mrb[0].mxu0
  %v6930 = vadd.f32 0.0, %v6929
  %6931 = vdwg.mxu0
  %6932 = vmatprep.subr.mxu0 %v6930
  %6933 = vmatpush1.msra.mxu0 %v6928
  %6934 = vmatprep.subr.mxu0 0.0
  %6935 = vmatpush1.msra.mxu0 0.0
  %6936 = vmatprep.subr.mxu0 0.0
  %6937 = vmatpush1.msra.mxu0 0.0
  %6938 = vmatprep.subr.mxu0 0.0
  %6939 = vmatpush1.msra.mxu0 0.0
  %6940 = vmatprep.subr.mxu0 0.0
  %6941 = vmatpush1.msra.mxu0 0.0
  %6942 = vmatprep.subr.mxu0 0.0
  %6943 = vmatpush1.msra.mxu0 0.0
  %6944 = vmatprep.subr.mxu0 0.0
  %6945 = vmatpush1.msra.mxu0 0.0
  %6946 = vmatprep.subr.mxu0 0.0
  %6947 = vmatpush1.msra.mxu0 0.0
  %6948 = vmatprep.subr.mxu0 0.0
  %6949 = vmatpush1.msra.mxu0 0.0
  %6950 = vmatprep.subr.mxu0 0.0
  %6951 = vmatpush1.msra.mxu0 0.0
  %6952 = vmatprep.subr.mxu0 0.0
  %6953 = vmatpush1.msra.mxu0 0.0
  %6954 = vmatprep.subr.mxu0 0.0
  %6955 = vmatpush1.msra.mxu0 0.0
  %6956 = vmatprep.subr.mxu0 0.0
  %6957 = vmatpush1.msra.mxu0 0.0
  %6958 = vmatprep.subr.mxu0 0.0
  %6959 = vmatpush1.msra.mxu0 0.0
  %6960 = vmatprep.subr.mxu0 0.0
  %6961 = vmatpush1.msra.mxu0 0.0
  %6962 = vmatprep.subr.mxu0 0.0
  %6963 = vmatpush1.msra.mxu0 0.0
  %6964 = vmatprep.subr.mxu0 0.0
  %6965 = vmatpush1.msra.mxu0 0.0
  %6966 = vmatprep.subr.mxu0 0.0
  %6967 = vmatpush1.msra.mxu0 0.0
  %6968 = vmatprep.subr.mxu0 0.0
  %6969 = vmatpush1.msra.mxu0 0.0
  %6970 = vmatprep.subr.mxu0 0.0
  %6971 = vmatpush1.msra.mxu0 0.0
  %6972 = vmatprep.subr.mxu0 0.0
  %6973 = vmatpush1.msra.mxu0 0.0
  %6974 = vmatprep.subr.mxu0 0.0
  %6975 = vmatpush1.msra.mxu0 0.0
  %6976 = vmatprep.subr.mxu0 0.0
  %6977 = vmatpush1.msra.mxu0 0.0
  %6978 = vmatprep.subr.mxu0 0.0
  %6979 = vmatpush1.msra.mxu0 0.0
  %6980 = vmatprep.subr.mxu0 0.0
  %6981 = vmatpush1.msra.mxu0 0.0
  %6982 = vmatprep.subr.mxu0 0.0
  %6983 = vmatpush1.msra.mxu0 0.0
  %6984 = vmatprep.subr.mxu0 0.0
  %6985 = vmatpush1.msra.mxu0 0.0
  %6986 = vmatprep.subr.mxu0 0.0
  %6987 = vmatpush1.msra.mxu0 0.0
  %6988 = vmatprep.subr.mxu0 0.0
  %6989 = vmatpush1.msra.mxu0 0.0
  %6990 = vmatprep.subr.mxu0 0.0
  %6991 = vmatpush1.msra.mxu0 0.0
  %6992 = vmatprep.subr.mxu0 0.0
  %6993 = vmatpush1.msra.mxu0 0.0
  %6994 = vmatprep.subr.mxu0 0.0
  %6995 = vmatpush1.msra.mxu0 0.0
  %6996 = vmatprep.mubr.f32.mxu0 0.0
  %6997 = vmatmul.mubr.f32.gmra.mrb[0].mxu0 %v6714
  %v6998 = vpop.f32.mrb[0].mxu0
  %v6999 = vadd.f32 0.0, %v6998
  %v7000 = vpop.f32.mrb[0].mxu0
  %v7001 = vadd.f32 0.0, %v7000
  %7002 = vdwg.mxu0
  %7003 = vmatprep.subr.mxu0 %v6593
  %7004 = vmatpush1.msra.mxu0 %v6591
  %7005 = vmatprep.subr.mxu0 0.0
  %7006 = vmatpush1.msra.mxu0 0.0
  %7007 = vmatprep.subr.mxu0 0.0
  %7008 = vmatpush1.msra.mxu0 0.0
  %7009 = vmatprep.subr.mxu0 0.0
  %7010 = vmatpush1.msra.mxu0 0.0
  %7011 = vmatprep.subr.mxu0 0.0
  %7012 = vmatpush1.msra.mxu0 0.0
  %7013 = vmatprep.subr.mxu0 0.0
  %7014 = vmatpush1.msra.mxu0 0.0
  %7015 = vmatprep.subr.mxu0 0.0
  %7016 = vmatpush1.msra.mxu0 0.0
  %7017 = vmatprep.subr.mxu0 0.0
  %7018 = vmatpush1.msra.mxu0 0.0
  %7019 = vmatprep.subr.mxu0 0.0
  %7020 = vmatpush1.msra.mxu0 0.0
  %7021 = vmatprep.subr.mxu0 0.0
  %7022 = vmatpush1.msra.mxu0 0.0
  %7023 = vmatprep.subr.mxu0 0.0
  %7024 = vmatpush1.msra.mxu0 0.0
  %7025 = vmatprep.subr.mxu0 0.0
  %7026 = vmatpush1.msra.mxu0 0.0
  %7027 = vmatprep.subr.mxu0 0.0
  %7028 = vmatpush1.msra.mxu0 0.0
  %7029 = vmatprep.subr.mxu0 0.0
  %7030 = vmatpush1.msra.mxu0 0.0
  %7031 = vmatprep.subr.mxu0 0.0
  %7032 = vmatpush1.msra.mxu0 0.0
  %7033 = vmatprep.subr.mxu0 0.0
  %7034 = vmatpush1.msra.mxu0 0.0
  %7035 = vmatprep.subr.mxu0 0.0
  %7036 = vmatpush1.msra.mxu0 0.0
  %7037 = vmatprep.subr.mxu0 0.0
  %7038 = vmatpush1.msra.mxu0 0.0
  %7039 = vmatprep.subr.mxu0 0.0
  %7040 = vmatpush1.msra.mxu0 0.0
  %7041 = vmatprep.subr.mxu0 0.0
  %7042 = vmatpush1.msra.mxu0 0.0
  %7043 = vmatprep.subr.mxu0 0.0
  %7044 = vmatpush1.msra.mxu0 0.0
  %7045 = vmatprep.subr.mxu0 0.0
  %7046 = vmatpush1.msra.mxu0 0.0
  %7047 = vmatprep.subr.mxu0 0.0
  %7048 = vmatpush1.msra.mxu0 0.0
  %7049 = vmatprep.subr.mxu0 0.0
  %7050 = vmatpush1.msra.mxu0 0.0
  %7051 = vmatprep.subr.mxu0 0.0
  %7052 = vmatpush1.msra.mxu0 0.0
  %7053 = vmatprep.subr.mxu0 0.0
  %7054 = vmatpush1.msra.mxu0 0.0
  %7055 = vmatprep.subr.mxu0 0.0
  %7056 = vmatpush1.msra.mxu0 0.0
  %7057 = vmatprep.subr.mxu0 0.0
  %7058 = vmatpush1.msra.mxu0 0.0
  %7059 = vmatprep.subr.mxu0 0.0
  %7060 = vmatpush1.msra.mxu0 0.0
  %7061 = vmatprep.subr.mxu0 0.0
  %7062 = vmatpush1.msra.mxu0 0.0
  %7063 = vmatprep.subr.mxu0 0.0
  %7064 = vmatpush1.msra.mxu0 0.0
  %7065 = vmatprep.subr.mxu0 0.0
  %7066 = vmatpush1.msra.mxu0 0.0
  %7067 = vmatprep.mubr.f32.mxu0 0.0
  %7068 = vmatmul.mubr.f32.gmra.mrb[0].mxu0 %v6788
  %v7069 = vpop.f32.mrb[0].mxu0
  %v7070 = vadd.f32 %v6999, %v7069
  %v7071 = vpop.f32.mrb[0].mxu0
  %v7072 = vadd.f32 %v7001, %v7071
  %7073 = vdwg.mxu0
  %v7074 = vadd.s32 %v6383, 1
  %v7075 = vadd.s32 %v6384, 1
  %vm7076 = vcmp.gt.s32.totalorder %v7074, 0
  %v7077 = vsel %vm7076, %v7074, 0
  %vm7078 = vcmp.gt.s32.totalorder %v7075, 0
  %v7079 = vsel %vm7078, %v7075, 0
  %vm7080 = vcmp.lt.s32.totalorder %v7077, 15
  %v7081 = vsel %vm7080, %v7077, 15
  %vm7082 = vcmp.lt.s32.totalorder %v7079, 15
  %v7083 = vsel %vm7082, %v7079, 15
  %v7084 = vshra.s32 %v7081, 1
  %v7085 = vshra.s32 %v7083, 1
  %v7086 = vadd.s32 %v6409, %v7084
  %v7087 = vadd.s32 %v6410, %v7085
  %vm7088 = vcmp.eq.s32.totalorder %v41, %v7086
  %vm7089 = vcmp.eq.s32.totalorder %v41, %v7087
  %vm7090 = vcmp.eq.s32.totalorder %v42, %v7086
  %vm7091 = vcmp.eq.s32.totalorder %v42, %v7087
  %vm7092 = vcmp.eq.s32.totalorder %v43, %v7086
  %vm7093 = vcmp.eq.s32.totalorder %v43, %v7087
  %vm7094 = vcmp.eq.s32.totalorder %v44, %v7086
  %vm7095 = vcmp.eq.s32.totalorder %v44, %v7087
  %vm7096 = vcmp.eq.s32.totalorder %v45, %v7086
  %vm7097 = vcmp.eq.s32.totalorder %v45, %v7087
  %vm7098 = vcmp.eq.s32.totalorder %v46, %v7086
  %vm7099 = vcmp.eq.s32.totalorder %v46, %v7087
  %vm7100 = vcmp.eq.s32.totalorder %v47, %v7086
  %vm7101 = vcmp.eq.s32.totalorder %v47, %v7087
  %vm7102 = vcmp.eq.s32.totalorder %v48, %v7086
  %vm7103 = vcmp.eq.s32.totalorder %v48, %v7087
  %v7104 = vsel %vm7088, 1.0, 0.0
  %v7105 = vsel %vm7089, 1.0, 0.0
  %v7106 = vsel %vm7090, 1.0, 0.0
  %v7107 = vsel %vm7091, 1.0, 0.0
  %v7108 = vsel %vm7092, 1.0, 0.0
  %v7109 = vsel %vm7093, 1.0, 0.0
  %v7110 = vsel %vm7094, 1.0, 0.0
  %v7111 = vsel %vm7095, 1.0, 0.0
  %v7112 = vsel %vm7096, 1.0, 0.0
  %v7113 = vsel %vm7097, 1.0, 0.0
  %v7114 = vsel %vm7098, 1.0, 0.0
  %v7115 = vsel %vm7099, 1.0, 0.0
  %v7116 = vsel %vm7100, 1.0, 0.0
  %v7117 = vsel %vm7101, 1.0, 0.0
  %v7118 = vsel %vm7102, 1.0, 0.0
  %v7119 = vsel %vm7103, 1.0, 0.0
  %s7120 = scalar_lea.vmem %s2, 8
  %v7121 = vld [vmem:[%s7120] sm:$0xf]
  %7122 = vmatprep.subr.mxu0 %v7105
  %7123 = vmatpush1.msra.mxu0 %v7104
  %7124 = vmatprep.subr.mxu0 %v7107
  %7125 = vmatpush1.msra.mxu0 %v7106
  %7126 = vmatprep.subr.mxu0 %v7109
  %7127 = vmatpush1.msra.mxu0 %v7108
  %7128 = vmatprep.subr.mxu0 %v7111
  %7129 = vmatpush1.msra.mxu0 %v7110
  %7130 = vmatprep.subr.mxu0 %v7113
  %7131 = vmatpush1.msra.mxu0 %v7112
  %7132 = vmatprep.subr.mxu0 %v7115
  %7133 = vmatpush1.msra.mxu0 %v7114
  %7134 = vmatprep.subr.mxu0 %v7117
  %7135 = vmatpush1.msra.mxu0 %v7116
  %7136 = vmatprep.subr.mxu0 %v7119
  %7137 = vmatpush1.msra.mxu0 %v7118
  %7138 = vmatprep.subr.mxu0 0.0
  %7139 = vmatpush1.msra.mxu0 0.0
  %7140 = vmatprep.subr.mxu0 0.0
  %7141 = vmatpush1.msra.mxu0 0.0
  %7142 = vmatprep.subr.mxu0 0.0
  %7143 = vmatpush1.msra.mxu0 0.0
  %7144 = vmatprep.subr.mxu0 0.0
  %7145 = vmatpush1.msra.mxu0 0.0
  %7146 = vmatprep.subr.mxu0 0.0
  %7147 = vmatpush1.msra.mxu0 0.0
  %7148 = vmatprep.subr.mxu0 0.0
  %7149 = vmatpush1.msra.mxu0 0.0
  %7150 = vmatprep.subr.mxu0 0.0
  %7151 = vmatpush1.msra.mxu0 0.0
  %7152 = vmatprep.subr.mxu0 0.0
  %7153 = vmatpush1.msra.mxu0 0.0
  %7154 = vmatprep.subr.mxu0 0.0
  %7155 = vmatpush1.msra.mxu0 0.0
  %7156 = vmatprep.subr.mxu0 0.0
  %7157 = vmatpush1.msra.mxu0 0.0
  %7158 = vmatprep.subr.mxu0 0.0
  %7159 = vmatpush1.msra.mxu0 0.0
  %7160 = vmatprep.subr.mxu0 0.0
  %7161 = vmatpush1.msra.mxu0 0.0
  %7162 = vmatprep.subr.mxu0 0.0
  %7163 = vmatpush1.msra.mxu0 0.0
  %7164 = vmatprep.subr.mxu0 0.0
  %7165 = vmatpush1.msra.mxu0 0.0
  %7166 = vmatprep.subr.mxu0 0.0
  %7167 = vmatpush1.msra.mxu0 0.0
  %7168 = vmatprep.subr.mxu0 0.0
  %7169 = vmatpush1.msra.mxu0 0.0
  %7170 = vmatprep.subr.mxu0 0.0
  %7171 = vmatpush1.msra.mxu0 0.0
  %7172 = vmatprep.subr.mxu0 0.0
  %7173 = vmatpush1.msra.mxu0 0.0
  %7174 = vmatprep.subr.mxu0 0.0
  %7175 = vmatpush1.msra.mxu0 0.0
  %7176 = vmatprep.subr.mxu0 0.0
  %7177 = vmatpush1.msra.mxu0 0.0
  %7178 = vmatprep.subr.mxu0 0.0
  %7179 = vmatpush1.msra.mxu0 0.0
  %7180 = vmatprep.subr.mxu0 0.0
  %7181 = vmatpush1.msra.mxu0 0.0
  %7182 = vmatprep.subr.mxu0 0.0
  %7183 = vmatpush1.msra.mxu0 0.0
  %7184 = vmatprep.subr.mxu0 0.0
  %7185 = vmatpush1.msra.mxu0 0.0
  %7186 = vmatprep.mubr.f32.mxu0 0.0
  %7187 = vmatmul.mubr.f32.gmra.mrb[0].mxu0 %v6448
  %v7188 = vpop.f32.mrb[0].mxu0
  %v7189 = vadd.f32 0.0, %v7188
  %v7190 = vpop.f32.mrb[0].mxu0
  %v7191 = vadd.f32 0.0, %v7190
  %7192 = vdwg.mxu0
  %v7194 = vsel %vm6712, %v7121, 0
  %7196 = vmatprep.subr.mxu0 %v7191
  %7197 = vmatpush1.msra.mxu0 %v7189
  %7198 = vmatprep.subr.mxu0 0.0
  %7199 = vmatpush1.msra.mxu0 0.0
  %7200 = vmatprep.subr.mxu0 0.0
  %7201 = vmatpush1.msra.mxu0 0.0
  %7202 = vmatprep.subr.mxu0 0.0
  %7203 = vmatpush1.msra.mxu0 0.0
  %7204 = vmatprep.subr.mxu0 0.0
  %7205 = vmatpush1.msra.mxu0 0.0
  %7206 = vmatprep.subr.mxu0 0.0
  %7207 = vmatpush1.msra.mxu0 0.0
  %7208 = vmatprep.subr.mxu0 0.0
  %7209 = vmatpush1.msra.mxu0 0.0
  %7210 = vmatprep.subr.mxu0 0.0
  %7211 = vmatpush1.msra.mxu0 0.0
  %7212 = vmatprep.subr.mxu0 0.0
  %7213 = vmatpush1.msra.mxu0 0.0
  %7214 = vmatprep.subr.mxu0 0.0
  %7215 = vmatpush1.msra.mxu0 0.0
  %7216 = vmatprep.subr.mxu0 0.0
  %7217 = vmatpush1.msra.mxu0 0.0
  %7218 = vmatprep.subr.mxu0 0.0
  %7219 = vmatpush1.msra.mxu0 0.0
  %7220 = vmatprep.subr.mxu0 0.0
  %7221 = vmatpush1.msra.mxu0 0.0
  %7222 = vmatprep.subr.mxu0 0.0
  %7223 = vmatpush1.msra.mxu0 0.0
  %7224 = vmatprep.subr.mxu0 0.0
  %7225 = vmatpush1.msra.mxu0 0.0
  %7226 = vmatprep.subr.mxu0 0.0
  %7227 = vmatpush1.msra.mxu0 0.0
  %7228 = vmatprep.subr.mxu0 0.0
  %7229 = vmatpush1.msra.mxu0 0.0
  %7230 = vmatprep.subr.mxu0 0.0
  %7231 = vmatpush1.msra.mxu0 0.0
  %7232 = vmatprep.subr.mxu0 0.0
  %7233 = vmatpush1.msra.mxu0 0.0
  %7234 = vmatprep.subr.mxu0 0.0
  %7235 = vmatpush1.msra.mxu0 0.0
  %7236 = vmatprep.subr.mxu0 0.0
  %7237 = vmatpush1.msra.mxu0 0.0
  %7238 = vmatprep.subr.mxu0 0.0
  %7239 = vmatpush1.msra.mxu0 0.0
  %7240 = vmatprep.subr.mxu0 0.0
  %7241 = vmatpush1.msra.mxu0 0.0
  %7242 = vmatprep.subr.mxu0 0.0
  %7243 = vmatpush1.msra.mxu0 0.0
  %7244 = vmatprep.subr.mxu0 0.0
  %7245 = vmatpush1.msra.mxu0 0.0
  %7246 = vmatprep.subr.mxu0 0.0
  %7247 = vmatpush1.msra.mxu0 0.0
  %7248 = vmatprep.subr.mxu0 0.0
  %7249 = vmatpush1.msra.mxu0 0.0
  %7250 = vmatprep.subr.mxu0 0.0
  %7251 = vmatpush1.msra.mxu0 0.0
  %7252 = vmatprep.subr.mxu0 0.0
  %7253 = vmatpush1.msra.mxu0 0.0
  %7254 = vmatprep.subr.mxu0 0.0
  %7255 = vmatpush1.msra.mxu0 0.0
  %7256 = vmatprep.subr.mxu0 0.0
  %7257 = vmatpush1.msra.mxu0 0.0
  %7258 = vmatprep.subr.mxu0 0.0
  %7259 = vmatpush1.msra.mxu0 0.0
  %7260 = vmatprep.mubr.f32.mxu0 0.0
  %7261 = vmatmul.mubr.f32.gmra.mrb[0].mxu0 %v7194
  %v7262 = vpop.f32.mrb[0].mxu0
  %v7263 = vadd.f32 0.0, %v7262
  %v7264 = vpop.f32.mrb[0].mxu0
  %v7265 = vadd.f32 0.0, %v7264
  %7266 = vdwg.mxu0
  %v7267 = vadd.f32 %v6857, %v7263
  %v7268 = vadd.f32 %v6859, %v7265
  %7269 = vmatprep.subr.mxu0 %v7105
  %7270 = vmatpush1.msra.mxu0 %v7104
  %7271 = vmatprep.subr.mxu0 %v7107
  %7272 = vmatpush1.msra.mxu0 %v7106
  %7273 = vmatprep.subr.mxu0 %v7109
  %7274 = vmatpush1.msra.mxu0 %v7108
  %7275 = vmatprep.subr.mxu0 %v7111
  %7276 = vmatpush1.msra.mxu0 %v7110
  %7277 = vmatprep.subr.mxu0 %v7113
  %7278 = vmatpush1.msra.mxu0 %v7112
  %7279 = vmatprep.subr.mxu0 %v7115
  %7280 = vmatpush1.msra.mxu0 %v7114
  %7281 = vmatprep.subr.mxu0 %v7117
  %7282 = vmatpush1.msra.mxu0 %v7116
  %7283 = vmatprep.subr.mxu0 %v7119
  %7284 = vmatpush1.msra.mxu0 %v7118
  %7285 = vmatprep.subr.mxu0 0.0
  %7286 = vmatpush1.msra.mxu0 0.0
  %7287 = vmatprep.subr.mxu0 0.0
  %7288 = vmatpush1.msra.mxu0 0.0
  %7289 = vmatprep.subr.mxu0 0.0
  %7290 = vmatpush1.msra.mxu0 0.0
  %7291 = vmatprep.subr.mxu0 0.0
  %7292 = vmatpush1.msra.mxu0 0.0
  %7293 = vmatprep.subr.mxu0 0.0
  %7294 = vmatpush1.msra.mxu0 0.0
  %7295 = vmatprep.subr.mxu0 0.0
  %7296 = vmatpush1.msra.mxu0 0.0
  %7297 = vmatprep.subr.mxu0 0.0
  %7298 = vmatpush1.msra.mxu0 0.0
  %7299 = vmatprep.subr.mxu0 0.0
  %7300 = vmatpush1.msra.mxu0 0.0
  %7301 = vmatprep.subr.mxu0 0.0
  %7302 = vmatpush1.msra.mxu0 0.0
  %7303 = vmatprep.subr.mxu0 0.0
  %7304 = vmatpush1.msra.mxu0 0.0
  %7305 = vmatprep.subr.mxu0 0.0
  %7306 = vmatpush1.msra.mxu0 0.0
  %7307 = vmatprep.subr.mxu0 0.0
  %7308 = vmatpush1.msra.mxu0 0.0
  %7309 = vmatprep.subr.mxu0 0.0
  %7310 = vmatpush1.msra.mxu0 0.0
  %7311 = vmatprep.subr.mxu0 0.0
  %7312 = vmatpush1.msra.mxu0 0.0
  %7313 = vmatprep.subr.mxu0 0.0
  %7314 = vmatpush1.msra.mxu0 0.0
  %7315 = vmatprep.subr.mxu0 0.0
  %7316 = vmatpush1.msra.mxu0 0.0
  %7317 = vmatprep.subr.mxu0 0.0
  %7318 = vmatpush1.msra.mxu0 0.0
  %7319 = vmatprep.subr.mxu0 0.0
  %7320 = vmatpush1.msra.mxu0 0.0
  %7321 = vmatprep.subr.mxu0 0.0
  %7322 = vmatpush1.msra.mxu0 0.0
  %7323 = vmatprep.subr.mxu0 0.0
  %7324 = vmatpush1.msra.mxu0 0.0
  %7325 = vmatprep.subr.mxu0 0.0
  %7326 = vmatpush1.msra.mxu0 0.0
  %7327 = vmatprep.subr.mxu0 0.0
  %7328 = vmatpush1.msra.mxu0 0.0
  %7329 = vmatprep.subr.mxu0 0.0
  %7330 = vmatpush1.msra.mxu0 0.0
  %7331 = vmatprep.subr.mxu0 0.0
  %7332 = vmatpush1.msra.mxu0 0.0
  %7333 = vmatprep.mubr.f32.mxu0 0.0
  %7334 = vmatmul.mubr.f32.gmra.mrb[0].mxu0 %v6522
  %v7335 = vpop.f32.mrb[0].mxu0
  %v7336 = vadd.f32 0.0, %v7335
  %v7337 = vpop.f32.mrb[0].mxu0
  %v7338 = vadd.f32 0.0, %v7337
  %7339 = vdwg.mxu0
  %7340 = vmatprep.subr.mxu0 %v7338
  %7341 = vmatpush1.msra.mxu0 %v7336
  %7342 = vmatprep.subr.mxu0 0.0
  %7343 = vmatpush1.msra.mxu0 0.0
  %7344 = vmatprep.subr.mxu0 0.0
  %7345 = vmatpush1.msra.mxu0 0.0
  %7346 = vmatprep.subr.mxu0 0.0
  %7347 = vmatpush1.msra.mxu0 0.0
  %7348 = vmatprep.subr.mxu0 0.0
  %7349 = vmatpush1.msra.mxu0 0.0
  %7350 = vmatprep.subr.mxu0 0.0
  %7351 = vmatpush1.msra.mxu0 0.0
  %7352 = vmatprep.subr.mxu0 0.0
  %7353 = vmatpush1.msra.mxu0 0.0
  %7354 = vmatprep.subr.mxu0 0.0
  %7355 = vmatpush1.msra.mxu0 0.0
  %7356 = vmatprep.subr.mxu0 0.0
  %7357 = vmatpush1.msra.mxu0 0.0
  %7358 = vmatprep.subr.mxu0 0.0
  %7359 = vmatpush1.msra.mxu0 0.0
  %7360 = vmatprep.subr.mxu0 0.0
  %7361 = vmatpush1.msra.mxu0 0.0
  %7362 = vmatprep.subr.mxu0 0.0
  %7363 = vmatpush1.msra.mxu0 0.0
  %7364 = vmatprep.subr.mxu0 0.0
  %7365 = vmatpush1.msra.mxu0 0.0
  %7366 = vmatprep.subr.mxu0 0.0
  %7367 = vmatpush1.msra.mxu0 0.0
  %7368 = vmatprep.subr.mxu0 0.0
  %7369 = vmatpush1.msra.mxu0 0.0
  %7370 = vmatprep.subr.mxu0 0.0
  %7371 = vmatpush1.msra.mxu0 0.0
  %7372 = vmatprep.subr.mxu0 0.0
  %7373 = vmatpush1.msra.mxu0 0.0
  %7374 = vmatprep.subr.mxu0 0.0
  %7375 = vmatpush1.msra.mxu0 0.0
  %7376 = vmatprep.subr.mxu0 0.0
  %7377 = vmatpush1.msra.mxu0 0.0
  %7378 = vmatprep.subr.mxu0 0.0
  %7379 = vmatpush1.msra.mxu0 0.0
  %7380 = vmatprep.subr.mxu0 0.0
  %7381 = vmatpush1.msra.mxu0 0.0
  %7382 = vmatprep.subr.mxu0 0.0
  %7383 = vmatpush1.msra.mxu0 0.0
  %7384 = vmatprep.subr.mxu0 0.0
  %7385 = vmatpush1.msra.mxu0 0.0
  %7386 = vmatprep.subr.mxu0 0.0
  %7387 = vmatpush1.msra.mxu0 0.0
  %7388 = vmatprep.subr.mxu0 0.0
  %7389 = vmatpush1.msra.mxu0 0.0
  %7390 = vmatprep.subr.mxu0 0.0
  %7391 = vmatpush1.msra.mxu0 0.0
  %7392 = vmatprep.subr.mxu0 0.0
  %7393 = vmatpush1.msra.mxu0 0.0
  %7394 = vmatprep.subr.mxu0 0.0
  %7395 = vmatpush1.msra.mxu0 0.0
  %7396 = vmatprep.subr.mxu0 0.0
  %7397 = vmatpush1.msra.mxu0 0.0
  %7398 = vmatprep.subr.mxu0 0.0
  %7399 = vmatpush1.msra.mxu0 0.0
  %7400 = vmatprep.subr.mxu0 0.0
  %7401 = vmatpush1.msra.mxu0 0.0
  %7402 = vmatprep.subr.mxu0 0.0
  %7403 = vmatpush1.msra.mxu0 0.0
  %7404 = vmatprep.mubr.f32.mxu0 0.0
  %7405 = vmatmul.mubr.f32.gmra.mrb[0].mxu0 %v7194
  %v7406 = vpop.f32.mrb[0].mxu0
  %v7407 = vadd.f32 0.0, %v7406
  %v7408 = vpop.f32.mrb[0].mxu0
  %v7409 = vadd.f32 0.0, %v7408
  %7410 = vdwg.mxu0
  %v7411 = vadd.f32 %v7070, %v7407
  %v7412 = vadd.f32 %v7072, %v7409
  %vm7413 = vcmp.gt.s32.totalorder %v6381, 0
  %v7414 = vsel %vm7413, %v6381, 0
  %vm7415 = vcmp.gt.s32.totalorder %v6382, 0
  %v7416 = vsel %vm7415, %v6382, 0
  %vm7417 = vcmp.lt.s32.totalorder %v7414, 15
  %v7418 = vsel %vm7417, %v7414, 15
  %vm7419 = vcmp.lt.s32.totalorder %v7416, 15
  %v7420 = vsel %vm7419, %v7416, 15
  %v7421 = vshra.s32 %v7418, 1
  %v7422 = vshra.s32 %v7420, 1
  %v7423 = vmul.u32 %v7421, 8
  %v7424 = vmul.u32 %v7422, 8
  %v7425 = vadd.s32 %v7423, %v6407
  %v7426 = vadd.s32 %v7424, %v6408
  %vm7427 = vcmp.eq.s32.totalorder %v41, %v7425
  %vm7428 = vcmp.eq.s32.totalorder %v41, %v7426
  %vm7429 = vcmp.eq.s32.totalorder %v42, %v7425
  %vm7430 = vcmp.eq.s32.totalorder %v42, %v7426
  %vm7431 = vcmp.eq.s32.totalorder %v43, %v7425
  %vm7432 = vcmp.eq.s32.totalorder %v43, %v7426
  %vm7433 = vcmp.eq.s32.totalorder %v44, %v7425
  %vm7434 = vcmp.eq.s32.totalorder %v44, %v7426
  %vm7435 = vcmp.eq.s32.totalorder %v45, %v7425
  %vm7436 = vcmp.eq.s32.totalorder %v45, %v7426
  %vm7437 = vcmp.eq.s32.totalorder %v46, %v7425
  %vm7438 = vcmp.eq.s32.totalorder %v46, %v7426
  %vm7439 = vcmp.eq.s32.totalorder %v47, %v7425
  %vm7440 = vcmp.eq.s32.totalorder %v47, %v7426
  %vm7441 = vcmp.eq.s32.totalorder %v48, %v7425
  %vm7442 = vcmp.eq.s32.totalorder %v48, %v7426
  %v7443 = vsel %vm7427, 1.0, 0.0
  %v7444 = vsel %vm7428, 1.0, 0.0
  %v7445 = vsel %vm7429, 1.0, 0.0
  %v7446 = vsel %vm7430, 1.0, 0.0
  %v7447 = vsel %vm7431, 1.0, 0.0
  %v7448 = vsel %vm7432, 1.0, 0.0
  %v7449 = vsel %vm7433, 1.0, 0.0
  %v7450 = vsel %vm7434, 1.0, 0.0
  %v7451 = vsel %vm7435, 1.0, 0.0
  %v7452 = vsel %vm7436, 1.0, 0.0
  %v7453 = vsel %vm7437, 1.0, 0.0
  %v7454 = vsel %vm7438, 1.0, 0.0
  %v7455 = vsel %vm7439, 1.0, 0.0
  %v7456 = vsel %vm7440, 1.0, 0.0
  %v7457 = vsel %vm7441, 1.0, 0.0
  %v7458 = vsel %vm7442, 1.0, 0.0
  %s7459 = scalar_lea.vmem %s2, 12
  %v7460 = vld [vmem:[%s7459] sm:$0xf]
  %7461 = vmatprep.subr.mxu0 %v7444
  %7462 = vmatpush1.msra.mxu0 %v7443
  %7463 = vmatprep.subr.mxu0 %v7446
  %7464 = vmatpush1.msra.mxu0 %v7445
  %7465 = vmatprep.subr.mxu0 %v7448
  %7466 = vmatpush1.msra.mxu0 %v7447
  %7467 = vmatprep.subr.mxu0 %v7450
  %7468 = vmatpush1.msra.mxu0 %v7449
  %7469 = vmatprep.subr.mxu0 %v7452
  %7470 = vmatpush1.msra.mxu0 %v7451
  %7471 = vmatprep.subr.mxu0 %v7454
  %7472 = vmatpush1.msra.mxu0 %v7453
  %7473 = vmatprep.subr.mxu0 %v7456
  %7474 = vmatpush1.msra.mxu0 %v7455
  %7475 = vmatprep.subr.mxu0 %v7458
  %7476 = vmatpush1.msra.mxu0 %v7457
  %7477 = vmatprep.subr.mxu0 0.0
  %7478 = vmatpush1.msra.mxu0 0.0
  %7479 = vmatprep.subr.mxu0 0.0
  %7480 = vmatpush1.msra.mxu0 0.0
  %7481 = vmatprep.subr.mxu0 0.0
  %7482 = vmatpush1.msra.mxu0 0.0
  %7483 = vmatprep.subr.mxu0 0.0
  %7484 = vmatpush1.msra.mxu0 0.0
  %7485 = vmatprep.subr.mxu0 0.0
  %7486 = vmatpush1.msra.mxu0 0.0
  %7487 = vmatprep.subr.mxu0 0.0
  %7488 = vmatpush1.msra.mxu0 0.0
  %7489 = vmatprep.subr.mxu0 0.0
  %7490 = vmatpush1.msra.mxu0 0.0
  %7491 = vmatprep.subr.mxu0 0.0
  %7492 = vmatpush1.msra.mxu0 0.0
  %7493 = vmatprep.subr.mxu0 0.0
  %7494 = vmatpush1.msra.mxu0 0.0
  %7495 = vmatprep.subr.mxu0 0.0
  %7496 = vmatpush1.msra.mxu0 0.0
  %7497 = vmatprep.subr.mxu0 0.0
  %7498 = vmatpush1.msra.mxu0 0.0
  %7499 = vmatprep.subr.mxu0 0.0
  %7500 = vmatpush1.msra.mxu0 0.0
  %7501 = vmatprep.subr.mxu0 0.0
  %7502 = vmatpush1.msra.mxu0 0.0
  %7503 = vmatprep.subr.mxu0 0.0
  %7504 = vmatpush1.msra.mxu0 0.0
  %7505 = vmatprep.subr.mxu0 0.0
  %7506 = vmatpush1.msra.mxu0 0.0
  %7507 = vmatprep.subr.mxu0 0.0
  %7508 = vmatpush1.msra.mxu0 0.0
  %7509 = vmatprep.subr.mxu0 0.0
  %7510 = vmatpush1.msra.mxu0 0.0
  %7511 = vmatprep.subr.mxu0 0.0
  %7512 = vmatpush1.msra.mxu0 0.0
  %7513 = vmatprep.subr.mxu0 0.0
  %7514 = vmatpush1.msra.mxu0 0.0
  %7515 = vmatprep.subr.mxu0 0.0
  %7516 = vmatpush1.msra.mxu0 0.0
  %7517 = vmatprep.subr.mxu0 0.0
  %7518 = vmatpush1.msra.mxu0 0.0
  %7519 = vmatprep.subr.mxu0 0.0
  %7520 = vmatpush1.msra.mxu0 0.0
  %7521 = vmatprep.subr.mxu0 0.0
  %7522 = vmatpush1.msra.mxu0 0.0
  %7523 = vmatprep.subr.mxu0 0.0
  %7524 = vmatpush1.msra.mxu0 0.0
  %7525 = vmatprep.mubr.f32.mxu0 0.0
  %7526 = vmatmul.mubr.f32.gmra.mrb[0].mxu0 %v6448
  %v7527 = vpop.f32.mrb[0].mxu0
  %v7528 = vadd.f32 0.0, %v7527
  %v7529 = vpop.f32.mrb[0].mxu0
  %v7530 = vadd.f32 0.0, %v7529
  %7531 = vdwg.mxu0
  %v7533 = vsel %vm6712, %v7460, 0
  %7535 = vmatprep.subr.mxu0 %v7530
  %7536 = vmatpush1.msra.mxu0 %v7528
  %7537 = vmatprep.subr.mxu0 0.0
  %7538 = vmatpush1.msra.mxu0 0.0
  %7539 = vmatprep.subr.mxu0 0.0
  %7540 = vmatpush1.msra.mxu0 0.0
  %7541 = vmatprep.subr.mxu0 0.0
  %7542 = vmatpush1.msra.mxu0 0.0
  %7543 = vmatprep.subr.mxu0 0.0
  %7544 = vmatpush1.msra.mxu0 0.0
  %7545 = vmatprep.subr.mxu0 0.0
  %7546 = vmatpush1.msra.mxu0 0.0
  %7547 = vmatprep.subr.mxu0 0.0
  %7548 = vmatpush1.msra.mxu0 0.0
  %7549 = vmatprep.subr.mxu0 0.0
  %7550 = vmatpush1.msra.mxu0 0.0
  %7551 = vmatprep.subr.mxu0 0.0
  %7552 = vmatpush1.msra.mxu0 0.0
  %7553 = vmatprep.subr.mxu0 0.0
  %7554 = vmatpush1.msra.mxu0 0.0
  %7555 = vmatprep.subr.mxu0 0.0
  %7556 = vmatpush1.msra.mxu0 0.0
  %7557 = vmatprep.subr.mxu0 0.0
  %7558 = vmatpush1.msra.mxu0 0.0
  %7559 = vmatprep.subr.mxu0 0.0
  %7560 = vmatpush1.msra.mxu0 0.0
  %7561 = vmatprep.subr.mxu0 0.0
  %7562 = vmatpush1.msra.mxu0 0.0
  %7563 = vmatprep.subr.mxu0 0.0
  %7564 = vmatpush1.msra.mxu0 0.0
  %7565 = vmatprep.subr.mxu0 0.0
  %7566 = vmatpush1.msra.mxu0 0.0
  %7567 = vmatprep.subr.mxu0 0.0
  %7568 = vmatpush1.msra.mxu0 0.0
  %7569 = vmatprep.subr.mxu0 0.0
  %7570 = vmatpush1.msra.mxu0 0.0
  %7571 = vmatprep.subr.mxu0 0.0
  %7572 = vmatpush1.msra.mxu0 0.0
  %7573 = vmatprep.subr.mxu0 0.0
  %7574 = vmatpush1.msra.mxu0 0.0
  %7575 = vmatprep.subr.mxu0 0.0
  %7576 = vmatpush1.msra.mxu0 0.0
  %7577 = vmatprep.subr.mxu0 0.0
  %7578 = vmatpush1.msra.mxu0 0.0
  %7579 = vmatprep.subr.mxu0 0.0
  %7580 = vmatpush1.msra.mxu0 0.0
  %7581 = vmatprep.subr.mxu0 0.0
  %7582 = vmatpush1.msra.mxu0 0.0
  %7583 = vmatprep.subr.mxu0 0.0
  %7584 = vmatpush1.msra.mxu0 0.0
  %7585 = vmatprep.subr.mxu0 0.0
  %7586 = vmatpush1.msra.mxu0 0.0
  %7587 = vmatprep.subr.mxu0 0.0
  %7588 = vmatpush1.msra.mxu0 0.0
  %7589 = vmatprep.subr.mxu0 0.0
  %7590 = vmatpush1.msra.mxu0 0.0
  %7591 = vmatprep.subr.mxu0 0.0
  %7592 = vmatpush1.msra.mxu0 0.0
  %7593 = vmatprep.subr.mxu0 0.0
  %7594 = vmatpush1.msra.mxu0 0.0
  %7595 = vmatprep.subr.mxu0 0.0
  %7596 = vmatpush1.msra.mxu0 0.0
  %7597 = vmatprep.subr.mxu0 0.0
  %7598 = vmatpush1.msra.mxu0 0.0
  %7599 = vmatprep.mubr.f32.mxu0 0.0
  %7600 = vmatmul.mubr.f32.gmra.mrb[0].mxu0 %v7533
  %v7601 = vpop.f32.mrb[0].mxu0
  %v7602 = vadd.f32 0.0, %v7601
  %v7603 = vpop.f32.mrb[0].mxu0
  %v7604 = vadd.f32 0.0, %v7603
  %7605 = vdwg.mxu0
  %v7606 = vadd.f32 %v7267, %v7602
  %v7607 = vadd.f32 %v7268, %v7604
  %7608 = vmatprep.subr.mxu0 %v7444
  %7609 = vmatpush1.msra.mxu0 %v7443
  %7610 = vmatprep.subr.mxu0 %v7446
  %7611 = vmatpush1.msra.mxu0 %v7445
  %7612 = vmatprep.subr.mxu0 %v7448
  %7613 = vmatpush1.msra.mxu0 %v7447
  %7614 = vmatprep.subr.mxu0 %v7450
  %7615 = vmatpush1.msra.mxu0 %v7449
  %7616 = vmatprep.subr.mxu0 %v7452
  %7617 = vmatpush1.msra.mxu0 %v7451
  %7618 = vmatprep.subr.mxu0 %v7454
  %7619 = vmatpush1.msra.mxu0 %v7453
  %7620 = vmatprep.subr.mxu0 %v7456
  %7621 = vmatpush1.msra.mxu0 %v7455
  %7622 = vmatprep.subr.mxu0 %v7458
  %7623 = vmatpush1.msra.mxu0 %v7457
  %7624 = vmatprep.subr.mxu0 0.0
  %7625 = vmatpush1.msra.mxu0 0.0
  %7626 = vmatprep.subr.mxu0 0.0
  %7627 = vmatpush1.msra.mxu0 0.0
  %7628 = vmatprep.subr.mxu0 0.0
  %7629 = vmatpush1.msra.mxu0 0.0
  %7630 = vmatprep.subr.mxu0 0.0
  %7631 = vmatpush1.msra.mxu0 0.0
  %7632 = vmatprep.subr.mxu0 0.0
  %7633 = vmatpush1.msra.mxu0 0.0
  %7634 = vmatprep.subr.mxu0 0.0
  %7635 = vmatpush1.msra.mxu0 0.0
  %7636 = vmatprep.subr.mxu0 0.0
  %7637 = vmatpush1.msra.mxu0 0.0
  %7638 = vmatprep.subr.mxu0 0.0
  %7639 = vmatpush1.msra.mxu0 0.0
  %7640 = vmatprep.subr.mxu0 0.0
  %7641 = vmatpush1.msra.mxu0 0.0
  %7642 = vmatprep.subr.mxu0 0.0
  %7643 = vmatpush1.msra.mxu0 0.0
  %7644 = vmatprep.subr.mxu0 0.0
  %7645 = vmatpush1.msra.mxu0 0.0
  %7646 = vmatprep.subr.mxu0 0.0
  %7647 = vmatpush1.msra.mxu0 0.0
  %7648 = vmatprep.subr.mxu0 0.0
  %7649 = vmatpush1.msra.mxu0 0.0
  %7650 = vmatprep.subr.mxu0 0.0
  %7651 = vmatpush1.msra.mxu0 0.0
  %7652 = vmatprep.subr.mxu0 0.0
  %7653 = vmatpush1.msra.mxu0 0.0
  %7654 = vmatprep.subr.mxu0 0.0
  %7655 = vmatpush1.msra.mxu0 0.0
  %7656 = vmatprep.subr.mxu0 0.0
  %7657 = vmatpush1.msra.mxu0 0.0
  %7658 = vmatprep.subr.mxu0 0.0
  %7659 = vmatpush1.msra.mxu0 0.0
  %7660 = vmatprep.subr.mxu0 0.0
  %7661 = vmatpush1.msra.mxu0 0.0
  %7662 = vmatprep.subr.mxu0 0.0
  %7663 = vmatpush1.msra.mxu0 0.0
  %7664 = vmatprep.subr.mxu0 0.0
  %7665 = vmatpush1.msra.mxu0 0.0
  %7666 = vmatprep.subr.mxu0 0.0
  %7667 = vmatpush1.msra.mxu0 0.0
  %7668 = vmatprep.subr.mxu0 0.0
  %7669 = vmatpush1.msra.mxu0 0.0
  %7670 = vmatprep.subr.mxu0 0.0
  %7671 = vmatpush1.msra.mxu0 0.0
  %7672 = vmatprep.mubr.f32.mxu0 0.0
  %7673 = vmatmul.mubr.f32.gmra.mrb[0].mxu0 %v6522
  %v7674 = vpop.f32.mrb[0].mxu0
  %v7675 = vadd.f32 0.0, %v7674
  %v7676 = vpop.f32.mrb[0].mxu0
  %v7677 = vadd.f32 0.0, %v7676
  %7678 = vdwg.mxu0
  %7679 = vmatprep.subr.mxu0 %v7677
  %7680 = vmatpush1.msra.mxu0 %v7675
  %7681 = vmatprep.subr.mxu0 0.0
  %7682 = vmatpush1.msra.mxu0 0.0
  %7683 = vmatprep.subr.mxu0 0.0
  %7684 = vmatpush1.msra.mxu0 0.0
  %7685 = vmatprep.subr.mxu0 0.0
  %7686 = vmatpush1.msra.mxu0 0.0
  %7687 = vmatprep.subr.mxu0 0.0
  %7688 = vmatpush1.msra.mxu0 0.0
  %7689 = vmatprep.subr.mxu0 0.0
  %7690 = vmatpush1.msra.mxu0 0.0
  %7691 = vmatprep.subr.mxu0 0.0
  %7692 = vmatpush1.msra.mxu0 0.0
  %7693 = vmatprep.subr.mxu0 0.0
  %7694 = vmatpush1.msra.mxu0 0.0
  %7695 = vmatprep.subr.mxu0 0.0
  %7696 = vmatpush1.msra.mxu0 0.0
  %7697 = vmatprep.subr.mxu0 0.0
  %7698 = vmatpush1.msra.mxu0 0.0
  %7699 = vmatprep.subr.mxu0 0.0
  %7700 = vmatpush1.msra.mxu0 0.0
  %7701 = vmatprep.subr.mxu0 0.0
  %7702 = vmatpush1.msra.mxu0 0.0
  %7703 = vmatprep.subr.mxu0 0.0
  %7704 = vmatpush1.msra.mxu0 0.0
  %7705 = vmatprep.subr.mxu0 0.0
  %7706 = vmatpush1.msra.mxu0 0.0
  %7707 = vmatprep.subr.mxu0 0.0
  %7708 = vmatpush1.msra.mxu0 0.0
  %7709 = vmatprep.subr.mxu0 0.0
  %7710 = vmatpush1.msra.mxu0 0.0
  %7711 = vmatprep.subr.mxu0 0.0
  %7712 = vmatpush1.msra.mxu0 0.0
  %7713 = vmatprep.subr.mxu0 0.0
  %7714 = vmatpush1.msra.mxu0 0.0
  %7715 = vmatprep.subr.mxu0 0.0
  %7716 = vmatpush1.msra.mxu0 0.0
  %7717 = vmatprep.subr.mxu0 0.0
  %7718 = vmatpush1.msra.mxu0 0.0
  %7719 = vmatprep.subr.mxu0 0.0
  %7720 = vmatpush1.msra.mxu0 0.0
  %7721 = vmatprep.subr.mxu0 0.0
  %7722 = vmatpush1.msra.mxu0 0.0
  %7723 = vmatprep.subr.mxu0 0.0
  %7724 = vmatpush1.msra.mxu0 0.0
  %7725 = vmatprep.subr.mxu0 0.0
  %7726 = vmatpush1.msra.mxu0 0.0
  %7727 = vmatprep.subr.mxu0 0.0
  %7728 = vmatpush1.msra.mxu0 0.0
  %7729 = vmatprep.subr.mxu0 0.0
  %7730 = vmatpush1.msra.mxu0 0.0
  %7731 = vmatprep.subr.mxu0 0.0
  %7732 = vmatpush1.msra.mxu0 0.0
  %7733 = vmatprep.subr.mxu0 0.0
  %7734 = vmatpush1.msra.mxu0 0.0
  %7735 = vmatprep.subr.mxu0 0.0
  %7736 = vmatpush1.msra.mxu0 0.0
  %7737 = vmatprep.subr.mxu0 0.0
  %7738 = vmatpush1.msra.mxu0 0.0
  %7739 = vmatprep.subr.mxu0 0.0
  %7740 = vmatpush1.msra.mxu0 0.0
  %7741 = vmatprep.subr.mxu0 0.0
  %7742 = vmatpush1.msra.mxu0 0.0
  %7743 = vmatprep.mubr.f32.mxu0 0.0
  %7744 = vmatmul.mubr.f32.gmra.mrb[0].mxu0 %v7533
  %v7745 = vpop.f32.mrb[0].mxu0
  %v7746 = vadd.f32 0.0, %v7745
  %v7747 = vpop.f32.mrb[0].mxu0
  %v7748 = vadd.f32 0.0, %v7747
  %7749 = vdwg.mxu0
  %v7750 = vadd.f32 %v7411, %v7746
  %v7751 = vadd.f32 %v7412, %v7748
  %v7752 = vadd.s32 %v7423, %v6603
  %v7753 = vadd.s32 %v7424, %v6604
  %vm7754 = vcmp.eq.s32.totalorder %v41, %v7752
  %vm7755 = vcmp.eq.s32.totalorder %v41, %v7753
  %vm7756 = vcmp.eq.s32.totalorder %v42, %v7752
  %vm7757 = vcmp.eq.s32.totalorder %v42, %v7753
  %vm7758 = vcmp.eq.s32.totalorder %v43, %v7752
  %vm7759 = vcmp.eq.s32.totalorder %v43, %v7753
  %vm7760 = vcmp.eq.s32.totalorder %v44, %v7752
  %vm7761 = vcmp.eq.s32.totalorder %v44, %v7753
  %vm7762 = vcmp.eq.s32.totalorder %v45, %v7752
  %vm7763 = vcmp.eq.s32.totalorder %v45, %v7753
  %vm7764 = vcmp.eq.s32.totalorder %v46, %v7752
  %vm7765 = vcmp.eq.s32.totalorder %v46, %v7753
  %vm7766 = vcmp.eq.s32.totalorder %v47, %v7752
  %vm7767 = vcmp.eq.s32.totalorder %v47, %v7753
  %vm7768 = vcmp.eq.s32.totalorder %v48, %v7752
  %vm7769 = vcmp.eq.s32.totalorder %v48, %v7753
  %v7770 = vsel %vm7754, 1.0, 0.0
  %v7771 = vsel %vm7755, 1.0, 0.0
  %v7772 = vsel %vm7756, 1.0, 0.0
  %v7773 = vsel %vm7757, 1.0, 0.0
  %v7774 = vsel %vm7758, 1.0, 0.0
  %v7775 = vsel %vm7759, 1.0, 0.0
  %v7776 = vsel %vm7760, 1.0, 0.0
  %v7777 = vsel %vm7761, 1.0, 0.0
  %v7778 = vsel %vm7762, 1.0, 0.0
  %v7779 = vsel %vm7763, 1.0, 0.0
  %v7780 = vsel %vm7764, 1.0, 0.0
  %v7781 = vsel %vm7765, 1.0, 0.0
  %v7782 = vsel %vm7766, 1.0, 0.0
  %v7783 = vsel %vm7767, 1.0, 0.0
  %v7784 = vsel %vm7768, 1.0, 0.0
  %v7785 = vsel %vm7769, 1.0, 0.0
  %s7786 = scalar_lea.vmem %s2, 16
  %v7787 = vld [vmem:[%s7786] sm:$0xf]
  %7788 = vmatprep.subr.mxu0 %v7771
  %7789 = vmatpush1.msra.mxu0 %v7770
  %7790 = vmatprep.subr.mxu0 %v7773
  %7791 = vmatpush1.msra.mxu0 %v7772
  %7792 = vmatprep.subr.mxu0 %v7775
  %7793 = vmatpush1.msra.mxu0 %v7774
  %7794 = vmatprep.subr.mxu0 %v7777
  %7795 = vmatpush1.msra.mxu0 %v7776
  %7796 = vmatprep.subr.mxu0 %v7779
  %7797 = vmatpush1.msra.mxu0 %v7778
  %7798 = vmatprep.subr.mxu0 %v7781
  %7799 = vmatpush1.msra.mxu0 %v7780
  %7800 = vmatprep.subr.mxu0 %v7783
  %7801 = vmatpush1.msra.mxu0 %v7782
  %7802 = vmatprep.subr.mxu0 %v7785
  %7803 = vmatpush1.msra.mxu0 %v7784
  %7804 = vmatprep.subr.mxu0 0.0
  %7805 = vmatpush1.msra.mxu0 0.0
  %7806 = vmatprep.subr.mxu0 0.0
  %7807 = vmatpush1.msra.mxu0 0.0
  %7808 = vmatprep.subr.mxu0 0.0
  %7809 = vmatpush1.msra.mxu0 0.0
  %7810 = vmatprep.subr.mxu0 0.0
  %7811 = vmatpush1.msra.mxu0 0.0
  %7812 = vmatprep.subr.mxu0 0.0
  %7813 = vmatpush1.msra.mxu0 0.0
  %7814 = vmatprep.subr.mxu0 0.0
  %7815 = vmatpush1.msra.mxu0 0.0
  %7816 = vmatprep.subr.mxu0 0.0
  %7817 = vmatpush1.msra.mxu0 0.0
  %7818 = vmatprep.subr.mxu0 0.0
  %7819 = vmatpush1.msra.mxu0 0.0
  %7820 = vmatprep.subr.mxu0 0.0
  %7821 = vmatpush1.msra.mxu0 0.0
  %7822 = vmatprep.subr.mxu0 0.0
  %7823 = vmatpush1.msra.mxu0 0.0
  %7824 = vmatprep.subr.mxu0 0.0
  %7825 = vmatpush1.msra.mxu0 0.0
  %7826 = vmatprep.subr.mxu0 0.0
  %7827 = vmatpush1.msra.mxu0 0.0
  %7828 = vmatprep.subr.mxu0 0.0
  %7829 = vmatpush1.msra.mxu0 0.0
  %7830 = vmatprep.subr.mxu0 0.0
  %7831 = vmatpush1.msra.mxu0 0.0
  %7832 = vmatprep.subr.mxu0 0.0
  %7833 = vmatpush1.msra.mxu0 0.0
  %7834 = vmatprep.subr.mxu0 0.0
  %7835 = vmatpush1.msra.mxu0 0.0
  %7836 = vmatprep.subr.mxu0 0.0
  %7837 = vmatpush1.msra.mxu0 0.0
  %7838 = vmatprep.subr.mxu0 0.0
  %7839 = vmatpush1.msra.mxu0 0.0
  %7840 = vmatprep.subr.mxu0 0.0
  %7841 = vmatpush1.msra.mxu0 0.0
  %7842 = vmatprep.subr.mxu0 0.0
  %7843 = vmatpush1.msra.mxu0 0.0
  %7844 = vmatprep.subr.mxu0 0.0
  %7845 = vmatpush1.msra.mxu0 0.0
  %7846 = vmatprep.subr.mxu0 0.0
  %7847 = vmatpush1.msra.mxu0 0.0
  %7848 = vmatprep.subr.mxu0 0.0
  %7849 = vmatpush1.msra.mxu0 0.0
  %7850 = vmatprep.subr.mxu0 0.0
  %7851 = vmatpush1.msra.mxu0 0.0
  %7852 = vmatprep.mubr.f32.mxu0 0.0
  %7853 = vmatmul.mubr.f32.gmra.mrb[0].mxu0 %v6448
  %v7854 = vpop.f32.mrb[0].mxu0
  %v7855 = vadd.f32 0.0, %v7854
  %v7856 = vpop.f32.mrb[0].mxu0
  %v7857 = vadd.f32 0.0, %v7856
  %7858 = vdwg.mxu0
  %v7860 = vsel %vm6712, %v7787, 0
  %7862 = vmatprep.subr.mxu0 %v7857
  %7863 = vmatpush1.msra.mxu0 %v7855
  %7864 = vmatprep.subr.mxu0 0.0
  %7865 = vmatpush1.msra.mxu0 0.0
  %7866 = vmatprep.subr.mxu0 0.0
  %7867 = vmatpush1.msra.mxu0 0.0
  %7868 = vmatprep.subr.mxu0 0.0
  %7869 = vmatpush1.msra.mxu0 0.0
  %7870 = vmatprep.subr.mxu0 0.0
  %7871 = vmatpush1.msra.mxu0 0.0
  %7872 = vmatprep.subr.mxu0 0.0
  %7873 = vmatpush1.msra.mxu0 0.0
  %7874 = vmatprep.subr.mxu0 0.0
  %7875 = vmatpush1.msra.mxu0 0.0
  %7876 = vmatprep.subr.mxu0 0.0
  %7877 = vmatpush1.msra.mxu0 0.0
  %7878 = vmatprep.subr.mxu0 0.0
  %7879 = vmatpush1.msra.mxu0 0.0
  %7880 = vmatprep.subr.mxu0 0.0
  %7881 = vmatpush1.msra.mxu0 0.0
  %7882 = vmatprep.subr.mxu0 0.0
  %7883 = vmatpush1.msra.mxu0 0.0
  %7884 = vmatprep.subr.mxu0 0.0
  %7885 = vmatpush1.msra.mxu0 0.0
  %7886 = vmatprep.subr.mxu0 0.0
  %7887 = vmatpush1.msra.mxu0 0.0
  %7888 = vmatprep.subr.mxu0 0.0
  %7889 = vmatpush1.msra.mxu0 0.0
  %7890 = vmatprep.subr.mxu0 0.0
  %7891 = vmatpush1.msra.mxu0 0.0
  %7892 = vmatprep.subr.mxu0 0.0
  %7893 = vmatpush1.msra.mxu0 0.0
  %7894 = vmatprep.subr.mxu0 0.0
  %7895 = vmatpush1.msra.mxu0 0.0
  %7896 = vmatprep.subr.mxu0 0.0
  %7897 = vmatpush1.msra.mxu0 0.0
  %7898 = vmatprep.subr.mxu0 0.0
  %7899 = vmatpush1.msra.mxu0 0.0
  %7900 = vmatprep.subr.mxu0 0.0
  %7901 = vmatpush1.msra.mxu0 0.0
  %7902 = vmatprep.subr.mxu0 0.0
  %7903 = vmatpush1.msra.mxu0 0.0
  %7904 = vmatprep.subr.mxu0 0.0
  %7905 = vmatpush1.msra.mxu0 0.0
  %7906 = vmatprep.subr.mxu0 0.0
  %7907 = vmatpush1.msra.mxu0 0.0
  %7908 = vmatprep.subr.mxu0 0.0
  %7909 = vmatpush1.msra.mxu0 0.0
  %7910 = vmatprep.subr.mxu0 0.0
  %7911 = vmatpush1.msra.mxu0 0.0
  %7912 = vmatprep.subr.mxu0 0.0
  %7913 = vmatpush1.msra.mxu0 0.0
  %7914 = vmatprep.subr.mxu0 0.0
  %7915 = vmatpush1.msra.mxu0 0.0
  %7916 = vmatprep.subr.mxu0 0.0
  %7917 = vmatpush1.msra.mxu0 0.0
  %7918 = vmatprep.subr.mxu0 0.0
  %7919 = vmatpush1.msra.mxu0 0.0
  %7920 = vmatprep.subr.mxu0 0.0
  %7921 = vmatpush1.msra.mxu0 0.0
  %7922 = vmatprep.subr.mxu0 0.0
  %7923 = vmatpush1.msra.mxu0 0.0
  %7924 = vmatprep.subr.mxu0 0.0
  %7925 = vmatpush1.msra.mxu0 0.0
  %7926 = vmatprep.mubr.f32.mxu0 0.0
  %7927 = vmatmul.mubr.f32.gmra.mrb[0].mxu0 %v7860
  %v7928 = vpop.f32.mrb[0].mxu0
  %v7929 = vadd.f32 0.0, %v7928
  %v7930 = vpop.f32.mrb[0].mxu0
  %v7931 = vadd.f32 0.0, %v7930
  %7932 = vdwg.mxu0
  %v7933 = vadd.f32 %v7606, %v7929
  %v7934 = vadd.f32 %v7607, %v7931
  %7935 = vmatprep.subr.mxu0 %v7771
  %7936 = vmatpush1.msra.mxu0 %v7770
  %7937 = vmatprep.subr.mxu0 %v7773
  %7938 = vmatpush1.msra.mxu0 %v7772
  %7939 = vmatprep.subr.mxu0 %v7775
  %7940 = vmatpush1.msra.mxu0 %v7774
  %7941 = vmatprep.subr.mxu0 %v7777
  %7942 = vmatpush1.msra.mxu0 %v7776
  %7943 = vmatprep.subr.mxu0 %v7779
  %7944 = vmatpush1.msra.mxu0 %v7778
  %7945 = vmatprep.subr.mxu0 %v7781
  %7946 = vmatpush1.msra.mxu0 %v7780
  %7947 = vmatprep.subr.mxu0 %v7783
  %7948 = vmatpush1.msra.mxu0 %v7782
  %7949 = vmatprep.subr.mxu0 %v7785
  %7950 = vmatpush1.msra.mxu0 %v7784
  %7951 = vmatprep.subr.mxu0 0.0
  %7952 = vmatpush1.msra.mxu0 0.0
  %7953 = vmatprep.subr.mxu0 0.0
  %7954 = vmatpush1.msra.mxu0 0.0
  %7955 = vmatprep.subr.mxu0 0.0
  %7956 = vmatpush1.msra.mxu0 0.0
  %7957 = vmatprep.subr.mxu0 0.0
  %7958 = vmatpush1.msra.mxu0 0.0
  %7959 = vmatprep.subr.mxu0 0.0
  %7960 = vmatpush1.msra.mxu0 0.0
  %7961 = vmatprep.subr.mxu0 0.0
  %7962 = vmatpush1.msra.mxu0 0.0
  %7963 = vmatprep.subr.mxu0 0.0
  %7964 = vmatpush1.msra.mxu0 0.0
  %7965 = vmatprep.subr.mxu0 0.0
  %7966 = vmatpush1.msra.mxu0 0.0
  %7967 = vmatprep.subr.mxu0 0.0
  %7968 = vmatpush1.msra.mxu0 0.0
  %7969 = vmatprep.subr.mxu0 0.0
  %7970 = vmatpush1.msra.mxu0 0.0
  %7971 = vmatprep.subr.mxu0 0.0
  %7972 = vmatpush1.msra.mxu0 0.0
  %7973 = vmatprep.subr.mxu0 0.0
  %7974 = vmatpush1.msra.mxu0 0.0
  %7975 = vmatprep.subr.mxu0 0.0
  %7976 = vmatpush1.msra.mxu0 0.0
  %7977 = vmatprep.subr.mxu0 0.0
  %7978 = vmatpush1.msra.mxu0 0.0
  %7979 = vmatprep.subr.mxu0 0.0
  %7980 = vmatpush1.msra.mxu0 0.0
  %7981 = vmatprep.subr.mxu0 0.0
  %7982 = vmatpush1.msra.mxu0 0.0
  %7983 = vmatprep.subr.mxu0 0.0
  %7984 = vmatpush1.msra.mxu0 0.0
  %7985 = vmatprep.subr.mxu0 0.0
  %7986 = vmatpush1.msra.mxu0 0.0
  %7987 = vmatprep.subr.mxu0 0.0
  %7988 = vmatpush1.msra.mxu0 0.0
  %7989 = vmatprep.subr.mxu0 0.0
  %7990 = vmatpush1.msra.mxu0 0.0
  %7991 = vmatprep.subr.mxu0 0.0
  %7992 = vmatpush1.msra.mxu0 0.0
  %7993 = vmatprep.subr.mxu0 0.0
  %7994 = vmatpush1.msra.mxu0 0.0
  %7995 = vmatprep.subr.mxu0 0.0
  %7996 = vmatpush1.msra.mxu0 0.0
  %7997 = vmatprep.subr.mxu0 0.0
  %7998 = vmatpush1.msra.mxu0 0.0
  %7999 = vmatprep.mubr.f32.mxu0 0.0
  %8000 = vmatmul.mubr.f32.gmra.mrb[0].mxu0 %v6522
  %v8001 = vpop.f32.mrb[0].mxu0
  %v8002 = vadd.f32 0.0, %v8001
  %v8003 = vpop.f32.mrb[0].mxu0
  %v8004 = vadd.f32 0.0, %v8003
  %8005 = vdwg.mxu0
  %8006 = vmatprep.subr.mxu0 %v8004
  %8007 = vmatpush1.msra.mxu0 %v8002
  %8008 = vmatprep.subr.mxu0 0.0
  %8009 = vmatpush1.msra.mxu0 0.0
  %8010 = vmatprep.subr.mxu0 0.0
  %8011 = vmatpush1.msra.mxu0 0.0
  %8012 = vmatprep.subr.mxu0 0.0
  %8013 = vmatpush1.msra.mxu0 0.0
  %8014 = vmatprep.subr.mxu0 0.0
  %8015 = vmatpush1.msra.mxu0 0.0
  %8016 = vmatprep.subr.mxu0 0.0
  %8017 = vmatpush1.msra.mxu0 0.0
  %8018 = vmatprep.subr.mxu0 0.0
  %8019 = vmatpush1.msra.mxu0 0.0
  %8020 = vmatprep.subr.mxu0 0.0
  %8021 = vmatpush1.msra.mxu0 0.0
  %8022 = vmatprep.subr.mxu0 0.0
  %8023 = vmatpush1.msra.mxu0 0.0
  %8024 = vmatprep.subr.mxu0 0.0
  %8025 = vmatpush1.msra.mxu0 0.0
  %8026 = vmatprep.subr.mxu0 0.0
  %8027 = vmatpush1.msra.mxu0 0.0
  %8028 = vmatprep.subr.mxu0 0.0
  %8029 = vmatpush1.msra.mxu0 0.0
  %8030 = vmatprep.subr.mxu0 0.0
  %8031 = vmatpush1.msra.mxu0 0.0
  %8032 = vmatprep.subr.mxu0 0.0
  %8033 = vmatpush1.msra.mxu0 0.0
  %8034 = vmatprep.subr.mxu0 0.0
  %8035 = vmatpush1.msra.mxu0 0.0
  %8036 = vmatprep.subr.mxu0 0.0
  %8037 = vmatpush1.msra.mxu0 0.0
  %8038 = vmatprep.subr.mxu0 0.0
  %8039 = vmatpush1.msra.mxu0 0.0
  %8040 = vmatprep.subr.mxu0 0.0
  %8041 = vmatpush1.msra.mxu0 0.0
  %8042 = vmatprep.subr.mxu0 0.0
  %8043 = vmatpush1.msra.mxu0 0.0
  %8044 = vmatprep.subr.mxu0 0.0
  %8045 = vmatpush1.msra.mxu0 0.0
  %8046 = vmatprep.subr.mxu0 0.0
  %8047 = vmatpush1.msra.mxu0 0.0
  %8048 = vmatprep.subr.mxu0 0.0
  %8049 = vmatpush1.msra.mxu0 0.0
  %8050 = vmatprep.subr.mxu0 0.0
  %8051 = vmatpush1.msra.mxu0 0.0
  %8052 = vmatprep.subr.mxu0 0.0
  %8053 = vmatpush1.msra.mxu0 0.0
  %8054 = vmatprep.subr.mxu0 0.0
  %8055 = vmatpush1.msra.mxu0 0.0
  %8056 = vmatprep.subr.mxu0 0.0
  %8057 = vmatpush1.msra.mxu0 0.0
  %8058 = vmatprep.subr.mxu0 0.0
  %8059 = vmatpush1.msra.mxu0 0.0
  %8060 = vmatprep.subr.mxu0 0.0
  %8061 = vmatpush1.msra.mxu0 0.0
  %8062 = vmatprep.subr.mxu0 0.0
  %8063 = vmatpush1.msra.mxu0 0.0
  %8064 = vmatprep.subr.mxu0 0.0
  %8065 = vmatpush1.msra.mxu0 0.0
  %8066 = vmatprep.subr.mxu0 0.0
  %8067 = vmatpush1.msra.mxu0 0.0
  %8068 = vmatprep.subr.mxu0 0.0
  %8069 = vmatpush1.msra.mxu0 0.0
  %8070 = vmatprep.mubr.f32.mxu0 0.0
  %8071 = vmatmul.mubr.f32.gmra.mrb[0].mxu0 %v7860
  %v8072 = vpop.f32.mrb[0].mxu0
  %v8073 = vadd.f32 0.0, %v8072
  %v8074 = vpop.f32.mrb[0].mxu0
  %v8075 = vadd.f32 0.0, %v8074
  %8076 = vdwg.mxu0
  %v8077 = vadd.f32 %v7750, %v8073
  %v8078 = vadd.f32 %v7751, %v8075
  %v8079 = vadd.s32 %v7423, %v7084
  %v8080 = vadd.s32 %v7424, %v7085
  %vm8081 = vcmp.eq.s32.totalorder %v41, %v8079
  %vm8082 = vcmp.eq.s32.totalorder %v41, %v8080
  %vm8083 = vcmp.eq.s32.totalorder %v42, %v8079
  %vm8084 = vcmp.eq.s32.totalorder %v42, %v8080
  %vm8085 = vcmp.eq.s32.totalorder %v43, %v8079
  %vm8086 = vcmp.eq.s32.totalorder %v43, %v8080
  %vm8087 = vcmp.eq.s32.totalorder %v44, %v8079
  %vm8088 = vcmp.eq.s32.totalorder %v44, %v8080
  %vm8089 = vcmp.eq.s32.totalorder %v45, %v8079
  %vm8090 = vcmp.eq.s32.totalorder %v45, %v8080
  %vm8091 = vcmp.eq.s32.totalorder %v46, %v8079
  %vm8092 = vcmp.eq.s32.totalorder %v46, %v8080
  %vm8093 = vcmp.eq.s32.totalorder %v47, %v8079
  %vm8094 = vcmp.eq.s32.totalorder %v47, %v8080
  %vm8095 = vcmp.eq.s32.totalorder %v48, %v8079
  %vm8096 = vcmp.eq.s32.totalorder %v48, %v8080
  %v8097 = vsel %vm8081, 1.0, 0.0
  %v8098 = vsel %vm8082, 1.0, 0.0
  %v8099 = vsel %vm8083, 1.0, 0.0
  %v8100 = vsel %vm8084, 1.0, 0.0
  %v8101 = vsel %vm8085, 1.0, 0.0
  %v8102 = vsel %vm8086, 1.0, 0.0
  %v8103 = vsel %vm8087, 1.0, 0.0
  %v8104 = vsel %vm8088, 1.0, 0.0
  %v8105 = vsel %vm8089, 1.0, 0.0
  %v8106 = vsel %vm8090, 1.0, 0.0
  %v8107 = vsel %vm8091, 1.0, 0.0
  %v8108 = vsel %vm8092, 1.0, 0.0
  %v8109 = vsel %vm8093, 1.0, 0.0
  %v8110 = vsel %vm8094, 1.0, 0.0
  %v8111 = vsel %vm8095, 1.0, 0.0
  %v8112 = vsel %vm8096, 1.0, 0.0
  %s8113 = scalar_lea.vmem %s2, 20
  %v8114 = vld [vmem:[%s8113] sm:$0xf]
  %8115 = vmatprep.subr.mxu0 %v8098
  %8116 = vmatpush1.msra.mxu0 %v8097
  %8117 = vmatprep.subr.mxu0 %v8100
  %8118 = vmatpush1.msra.mxu0 %v8099
  %8119 = vmatprep.subr.mxu0 %v8102
  %8120 = vmatpush1.msra.mxu0 %v8101
  %8121 = vmatprep.subr.mxu0 %v8104
  %8122 = vmatpush1.msra.mxu0 %v8103
  %8123 = vmatprep.subr.mxu0 %v8106
  %8124 = vmatpush1.msra.mxu0 %v8105
  %8125 = vmatprep.subr.mxu0 %v8108
  %8126 = vmatpush1.msra.mxu0 %v8107
  %8127 = vmatprep.subr.mxu0 %v8110
  %8128 = vmatpush1.msra.mxu0 %v8109
  %8129 = vmatprep.subr.mxu0 %v8112
  %8130 = vmatpush1.msra.mxu0 %v8111
  %8131 = vmatprep.subr.mxu0 0.0
  %8132 = vmatpush1.msra.mxu0 0.0
  %8133 = vmatprep.subr.mxu0 0.0
  %8134 = vmatpush1.msra.mxu0 0.0
  %8135 = vmatprep.subr.mxu0 0.0
  %8136 = vmatpush1.msra.mxu0 0.0
  %8137 = vmatprep.subr.mxu0 0.0
  %8138 = vmatpush1.msra.mxu0 0.0
  %8139 = vmatprep.subr.mxu0 0.0
  %8140 = vmatpush1.msra.mxu0 0.0
  %8141 = vmatprep.subr.mxu0 0.0
  %8142 = vmatpush1.msra.mxu0 0.0
  %8143 = vmatprep.subr.mxu0 0.0
  %8144 = vmatpush1.msra.mxu0 0.0
  %8145 = vmatprep.subr.mxu0 0.0
  %8146 = vmatpush1.msra.mxu0 0.0
  %8147 = vmatprep.subr.mxu0 0.0
  %8148 = vmatpush1.msra.mxu0 0.0
  %8149 = vmatprep.subr.mxu0 0.0
  %8150 = vmatpush1.msra.mxu0 0.0
  %8151 = vmatprep.subr.mxu0 0.0
  %8152 = vmatpush1.msra.mxu0 0.0
  %8153 = vmatprep.subr.mxu0 0.0
  %8154 = vmatpush1.msra.mxu0 0.0
  %8155 = vmatprep.subr.mxu0 0.0
  %8156 = vmatpush1.msra.mxu0 0.0
  %8157 = vmatprep.subr.mxu0 0.0
  %8158 = vmatpush1.msra.mxu0 0.0
  %8159 = vmatprep.subr.mxu0 0.0
  %8160 = vmatpush1.msra.mxu0 0.0
  %8161 = vmatprep.subr.mxu0 0.0
  %8162 = vmatpush1.msra.mxu0 0.0
  %8163 = vmatprep.subr.mxu0 0.0
  %8164 = vmatpush1.msra.mxu0 0.0
  %8165 = vmatprep.subr.mxu0 0.0
  %8166 = vmatpush1.msra.mxu0 0.0
  %8167 = vmatprep.subr.mxu0 0.0
  %8168 = vmatpush1.msra.mxu0 0.0
  %8169 = vmatprep.subr.mxu0 0.0
  %8170 = vmatpush1.msra.mxu0 0.0
  %8171 = vmatprep.subr.mxu0 0.0
  %8172 = vmatpush1.msra.mxu0 0.0
  %8173 = vmatprep.subr.mxu0 0.0
  %8174 = vmatpush1.msra.mxu0 0.0
  %8175 = vmatprep.subr.mxu0 0.0
  %8176 = vmatpush1.msra.mxu0 0.0
  %8177 = vmatprep.subr.mxu0 0.0
  %8178 = vmatpush1.msra.mxu0 0.0
  %8179 = vmatprep.mubr.f32.mxu0 0.0
  %8180 = vmatmul.mubr.f32.gmra.mrb[0].mxu0 %v6448
  %v8181 = vpop.f32.mrb[0].mxu0
  %v8182 = vadd.f32 0.0, %v8181
  %v8183 = vpop.f32.mrb[0].mxu0
  %v8184 = vadd.f32 0.0, %v8183
  %8185 = vdwg.mxu0
  %v8187 = vsel %vm6712, %v8114, 0
  %8189 = vmatprep.subr.mxu0 %v8184
  %8190 = vmatpush1.msra.mxu0 %v8182
  %8191 = vmatprep.subr.mxu0 0.0
  %8192 = vmatpush1.msra.mxu0 0.0
  %8193 = vmatprep.subr.mxu0 0.0
  %8194 = vmatpush1.msra.mxu0 0.0
  %8195 = vmatprep.subr.mxu0 0.0
  %8196 = vmatpush1.msra.mxu0 0.0
  %8197 = vmatprep.subr.mxu0 0.0
  %8198 = vmatpush1.msra.mxu0 0.0
  %8199 = vmatprep.subr.mxu0 0.0
  %8200 = vmatpush1.msra.mxu0 0.0
  %8201 = vmatprep.subr.mxu0 0.0
  %8202 = vmatpush1.msra.mxu0 0.0
  %8203 = vmatprep.subr.mxu0 0.0
  %8204 = vmatpush1.msra.mxu0 0.0
  %8205 = vmatprep.subr.mxu0 0.0
  %8206 = vmatpush1.msra.mxu0 0.0
  %8207 = vmatprep.subr.mxu0 0.0
  %8208 = vmatpush1.msra.mxu0 0.0
  %8209 = vmatprep.subr.mxu0 0.0
  %8210 = vmatpush1.msra.mxu0 0.0
  %8211 = vmatprep.subr.mxu0 0.0
  %8212 = vmatpush1.msra.mxu0 0.0
  %8213 = vmatprep.subr.mxu0 0.0
  %8214 = vmatpush1.msra.mxu0 0.0
  %8215 = vmatprep.subr.mxu0 0.0
  %8216 = vmatpush1.msra.mxu0 0.0
  %8217 = vmatprep.subr.mxu0 0.0
  %8218 = vmatpush1.msra.mxu0 0.0
  %8219 = vmatprep.subr.mxu0 0.0
  %8220 = vmatpush1.msra.mxu0 0.0
  %8221 = vmatprep.subr.mxu0 0.0
  %8222 = vmatpush1.msra.mxu0 0.0
  %8223 = vmatprep.subr.mxu0 0.0
  %8224 = vmatpush1.msra.mxu0 0.0
  %8225 = vmatprep.subr.mxu0 0.0
  %8226 = vmatpush1.msra.mxu0 0.0
  %8227 = vmatprep.subr.mxu0 0.0
  %8228 = vmatpush1.msra.mxu0 0.0
  %8229 = vmatprep.subr.mxu0 0.0
  %8230 = vmatpush1.msra.mxu0 0.0
  %8231 = vmatprep.subr.mxu0 0.0
  %8232 = vmatpush1.msra.mxu0 0.0
  %8233 = vmatprep.subr.mxu0 0.0
  %8234 = vmatpush1.msra.mxu0 0.0
  %8235 = vmatprep.subr.mxu0 0.0
  %8236 = vmatpush1.msra.mxu0 0.0
  %8237 = vmatprep.subr.mxu0 0.0
  %8238 = vmatpush1.msra.mxu0 0.0
  %8239 = vmatprep.subr.mxu0 0.0
  %8240 = vmatpush1.msra.mxu0 0.0
  %8241 = vmatprep.subr.mxu0 0.0
  %8242 = vmatpush1.msra.mxu0 0.0
  %8243 = vmatprep.subr.mxu0 0.0
  %8244 = vmatpush1.msra.mxu0 0.0
  %8245 = vmatprep.subr.mxu0 0.0
  %8246 = vmatpush1.msra.mxu0 0.0
  %8247 = vmatprep.subr.mxu0 0.0
  %8248 = vmatpush1.msra.mxu0 0.0
  %8249 = vmatprep.subr.mxu0 0.0
  %8250 = vmatpush1.msra.mxu0 0.0
  %8251 = vmatprep.subr.mxu0 0.0
  %8252 = vmatpush1.msra.mxu0 0.0
  %8253 = vmatprep.mubr.f32.mxu0 0.0
  %8254 = vmatmul.mubr.f32.gmra.mrb[0].mxu0 %v8187
  %v8255 = vpop.f32.mrb[0].mxu0
  %v8256 = vadd.f32 0.0, %v8255
  %v8257 = vpop.f32.mrb[0].mxu0
  %v8258 = vadd.f32 0.0, %v8257
  %8259 = vdwg.mxu0
  %v8260 = vadd.f32 %v7933, %v8256
  %v8261 = vadd.f32 %v7934, %v8258
  %8262 = vmatprep.subr.mxu0 %v8098
  %8263 = vmatpush1.msra.mxu0 %v8097
  %8264 = vmatprep.subr.mxu0 %v8100
  %8265 = vmatpush1.msra.mxu0 %v8099
  %8266 = vmatprep.subr.mxu0 %v8102
  %8267 = vmatpush1.msra.mxu0 %v8101
  %8268 = vmatprep.subr.mxu0 %v8104
  %8269 = vmatpush1.msra.mxu0 %v8103
  %8270 = vmatprep.subr.mxu0 %v8106
  %8271 = vmatpush1.msra.mxu0 %v8105
  %8272 = vmatprep.subr.mxu0 %v8108
  %8273 = vmatpush1.msra.mxu0 %v8107
  %8274 = vmatprep.subr.mxu0 %v8110
  %8275 = vmatpush1.msra.mxu0 %v8109
  %8276 = vmatprep.subr.mxu0 %v8112
  %8277 = vmatpush1.msra.mxu0 %v8111
  %8278 = vmatprep.subr.mxu0 0.0
  %8279 = vmatpush1.msra.mxu0 0.0
  %8280 = vmatprep.subr.mxu0 0.0
  %8281 = vmatpush1.msra.mxu0 0.0
  %8282 = vmatprep.subr.mxu0 0.0
  %8283 = vmatpush1.msra.mxu0 0.0
  %8284 = vmatprep.subr.mxu0 0.0
  %8285 = vmatpush1.msra.mxu0 0.0
  %8286 = vmatprep.subr.mxu0 0.0
  %8287 = vmatpush1.msra.mxu0 0.0
  %8288 = vmatprep.subr.mxu0 0.0
  %8289 = vmatpush1.msra.mxu0 0.0
  %8290 = vmatprep.subr.mxu0 0.0
  %8291 = vmatpush1.msra.mxu0 0.0
  %8292 = vmatprep.subr.mxu0 0.0
  %8293 = vmatpush1.msra.mxu0 0.0
  %8294 = vmatprep.subr.mxu0 0.0
  %8295 = vmatpush1.msra.mxu0 0.0
  %8296 = vmatprep.subr.mxu0 0.0
  %8297 = vmatpush1.msra.mxu0 0.0
  %8298 = vmatprep.subr.mxu0 0.0
  %8299 = vmatpush1.msra.mxu0 0.0
  %8300 = vmatprep.subr.mxu0 0.0
  %8301 = vmatpush1.msra.mxu0 0.0
  %8302 = vmatprep.subr.mxu0 0.0
  %8303 = vmatpush1.msra.mxu0 0.0
  %8304 = vmatprep.subr.mxu0 0.0
  %8305 = vmatpush1.msra.mxu0 0.0
  %8306 = vmatprep.subr.mxu0 0.0
  %8307 = vmatpush1.msra.mxu0 0.0
  %8308 = vmatprep.subr.mxu0 0.0
  %8309 = vmatpush1.msra.mxu0 0.0
  %8310 = vmatprep.subr.mxu0 0.0
  %8311 = vmatpush1.msra.mxu0 0.0
  %8312 = vmatprep.subr.mxu0 0.0
  %8313 = vmatpush1.msra.mxu0 0.0
  %8314 = vmatprep.subr.mxu0 0.0
  %8315 = vmatpush1.msra.mxu0 0.0
  %8316 = vmatprep.subr.mxu0 0.0
  %8317 = vmatpush1.msra.mxu0 0.0
  %8318 = vmatprep.subr.mxu0 0.0
  %8319 = vmatpush1.msra.mxu0 0.0
  %8320 = vmatprep.subr.mxu0 0.0
  %8321 = vmatpush1.msra.mxu0 0.0
  %8322 = vmatprep.subr.mxu0 0.0
  %8323 = vmatpush1.msra.mxu0 0.0
  %8324 = vmatprep.subr.mxu0 0.0
  %8325 = vmatpush1.msra.mxu0 0.0
  %8326 = vmatprep.mubr.f32.mxu0 0.0
  %8327 = vmatmul.mubr.f32.gmra.mrb[0].mxu0 %v6522
  %v8328 = vpop.f32.mrb[0].mxu0
  %v8329 = vadd.f32 0.0, %v8328
  %v8330 = vpop.f32.mrb[0].mxu0
  %v8331 = vadd.f32 0.0, %v8330
  %8332 = vdwg.mxu0
  %8333 = vmatprep.subr.mxu0 %v8331
  %8334 = vmatpush1.msra.mxu0 %v8329
  %8335 = vmatprep.subr.mxu0 0.0
  %8336 = vmatpush1.msra.mxu0 0.0
  %8337 = vmatprep.subr.mxu0 0.0
  %8338 = vmatpush1.msra.mxu0 0.0
  %8339 = vmatprep.subr.mxu0 0.0
  %8340 = vmatpush1.msra.mxu0 0.0
  %8341 = vmatprep.subr.mxu0 0.0
  %8342 = vmatpush1.msra.mxu0 0.0
  %8343 = vmatprep.subr.mxu0 0.0
  %8344 = vmatpush1.msra.mxu0 0.0
  %8345 = vmatprep.subr.mxu0 0.0
  %8346 = vmatpush1.msra.mxu0 0.0
  %8347 = vmatprep.subr.mxu0 0.0
  %8348 = vmatpush1.msra.mxu0 0.0
  %8349 = vmatprep.subr.mxu0 0.0
  %8350 = vmatpush1.msra.mxu0 0.0
  %8351 = vmatprep.subr.mxu0 0.0
  %8352 = vmatpush1.msra.mxu0 0.0
  %8353 = vmatprep.subr.mxu0 0.0
  %8354 = vmatpush1.msra.mxu0 0.0
  %8355 = vmatprep.subr.mxu0 0.0
  %8356 = vmatpush1.msra.mxu0 0.0
  %8357 = vmatprep.subr.mxu0 0.0
  %8358 = vmatpush1.msra.mxu0 0.0
  %8359 = vmatprep.subr.mxu0 0.0
  %8360 = vmatpush1.msra.mxu0 0.0
  %8361 = vmatprep.subr.mxu0 0.0
  %8362 = vmatpush1.msra.mxu0 0.0
  %8363 = vmatprep.subr.mxu0 0.0
  %8364 = vmatpush1.msra.mxu0 0.0
  %8365 = vmatprep.subr.mxu0 0.0
  %8366 = vmatpush1.msra.mxu0 0.0
  %8367 = vmatprep.subr.mxu0 0.0
  %8368 = vmatpush1.msra.mxu0 0.0
  %8369 = vmatprep.subr.mxu0 0.0
  %8370 = vmatpush1.msra.mxu0 0.0
  %8371 = vmatprep.subr.mxu0 0.0
  %8372 = vmatpush1.msra.mxu0 0.0
  %8373 = vmatprep.subr.mxu0 0.0
  %8374 = vmatpush1.msra.mxu0 0.0
  %8375 = vmatprep.subr.mxu0 0.0
  %8376 = vmatpush1.msra.mxu0 0.0
  %8377 = vmatprep.subr.mxu0 0.0
  %8378 = vmatpush1.msra.mxu0 0.0
  %8379 = vmatprep.subr.mxu0 0.0
  %8380 = vmatpush1.msra.mxu0 0.0
  %8381 = vmatprep.subr.mxu0 0.0
  %8382 = vmatpush1.msra.mxu0 0.0
  %8383 = vmatprep.subr.mxu0 0.0
  %8384 = vmatpush1.msra.mxu0 0.0
  %8385 = vmatprep.subr.mxu0 0.0
  %8386 = vmatpush1.msra.mxu0 0.0
  %8387 = vmatprep.subr.mxu0 0.0
  %8388 = vmatpush1.msra.mxu0 0.0
  %8389 = vmatprep.subr.mxu0 0.0
  %8390 = vmatpush1.msra.mxu0 0.0
  %8391 = vmatprep.subr.mxu0 0.0
  %8392 = vmatpush1.msra.mxu0 0.0
  %8393 = vmatprep.subr.mxu0 0.0
  %8394 = vmatpush1.msra.mxu0 0.0
  %8395 = vmatprep.subr.mxu0 0.0
  %8396 = vmatpush1.msra.mxu0 0.0
  %8397 = vmatprep.mubr.f32.mxu0 0.0
  %8398 = vmatmul.mubr.f32.gmra.mrb[0].mxu0 %v8187
  %v8399 = vpop.f32.mrb[0].mxu0
  %v8400 = vadd.f32 0.0, %v8399
  %v8401 = vpop.f32.mrb[0].mxu0
  %v8402 = vadd.f32 0.0, %v8401
  %8403 = vdwg.mxu0
  %v8404 = vadd.f32 %v8077, %v8400
  %v8405 = vadd.f32 %v8078, %v8402
  %v8406 = vadd.s32 %v6381, 1
  %v8407 = vadd.s32 %v6382, 1
  %vm8408 = vcmp.gt.s32.totalorder %v8406, 0
  %v8409 = vsel %vm8408, %v8406, 0
  %vm8410 = vcmp.gt.s32.totalorder %v8407, 0
  %v8411 = vsel %vm8410, %v8407, 0
  %vm8412 = vcmp.lt.s32.totalorder %v8409, 15
  %v8413 = vsel %vm8412, %v8409, 15
  %vm8414 = vcmp.lt.s32.totalorder %v8411, 15
  %v8415 = vsel %vm8414, %v8411, 15
  %v8416 = vshra.s32 %v8413, 1
  %v8417 = vshra.s32 %v8415, 1
  %v8418 = vmul.u32 %v8416, 8
  %v8419 = vmul.u32 %v8417, 8
  %v8420 = vadd.s32 %v8418, %v6407
  %v8421 = vadd.s32 %v8419, %v6408
  %vm8422 = vcmp.eq.s32.totalorder %v41, %v8420
  %vm8423 = vcmp.eq.s32.totalorder %v41, %v8421
  %vm8424 = vcmp.eq.s32.totalorder %v42, %v8420
  %vm8425 = vcmp.eq.s32.totalorder %v42, %v8421
  %vm8426 = vcmp.eq.s32.totalorder %v43, %v8420
  %vm8427 = vcmp.eq.s32.totalorder %v43, %v8421
  %vm8428 = vcmp.eq.s32.totalorder %v44, %v8420
  %vm8429 = vcmp.eq.s32.totalorder %v44, %v8421
  %vm8430 = vcmp.eq.s32.totalorder %v45, %v8420
  %vm8431 = vcmp.eq.s32.totalorder %v45, %v8421
  %vm8432 = vcmp.eq.s32.totalorder %v46, %v8420
  %vm8433 = vcmp.eq.s32.totalorder %v46, %v8421
  %vm8434 = vcmp.eq.s32.totalorder %v47, %v8420
  %vm8435 = vcmp.eq.s32.totalorder %v47, %v8421
  %vm8436 = vcmp.eq.s32.totalorder %v48, %v8420
  %vm8437 = vcmp.eq.s32.totalorder %v48, %v8421
  %v8438 = vsel %vm8422, 1.0, 0.0
  %v8439 = vsel %vm8423, 1.0, 0.0
  %v8440 = vsel %vm8424, 1.0, 0.0
  %v8441 = vsel %vm8425, 1.0, 0.0
  %v8442 = vsel %vm8426, 1.0, 0.0
  %v8443 = vsel %vm8427, 1.0, 0.0
  %v8444 = vsel %vm8428, 1.0, 0.0
  %v8445 = vsel %vm8429, 1.0, 0.0
  %v8446 = vsel %vm8430, 1.0, 0.0
  %v8447 = vsel %vm8431, 1.0, 0.0
  %v8448 = vsel %vm8432, 1.0, 0.0
  %v8449 = vsel %vm8433, 1.0, 0.0
  %v8450 = vsel %vm8434, 1.0, 0.0
  %v8451 = vsel %vm8435, 1.0, 0.0
  %v8452 = vsel %vm8436, 1.0, 0.0
  %v8453 = vsel %vm8437, 1.0, 0.0
  %s8454 = scalar_lea.vmem %s2, 24
  %v8455 = vld [vmem:[%s8454] sm:$0xf]
  %8456 = vmatprep.subr.mxu0 %v8439
  %8457 = vmatpush1.msra.mxu0 %v8438
  %8458 = vmatprep.subr.mxu0 %v8441
  %8459 = vmatpush1.msra.mxu0 %v8440
  %8460 = vmatprep.subr.mxu0 %v8443
  %8461 = vmatpush1.msra.mxu0 %v8442
  %8462 = vmatprep.subr.mxu0 %v8445
  %8463 = vmatpush1.msra.mxu0 %v8444
  %8464 = vmatprep.subr.mxu0 %v8447
  %8465 = vmatpush1.msra.mxu0 %v8446
  %8466 = vmatprep.subr.mxu0 %v8449
  %8467 = vmatpush1.msra.mxu0 %v8448
  %8468 = vmatprep.subr.mxu0 %v8451
  %8469 = vmatpush1.msra.mxu0 %v8450
  %8470 = vmatprep.subr.mxu0 %v8453
  %8471 = vmatpush1.msra.mxu0 %v8452
  %8472 = vmatprep.subr.mxu0 0.0
  %8473 = vmatpush1.msra.mxu0 0.0
  %8474 = vmatprep.subr.mxu0 0.0
  %8475 = vmatpush1.msra.mxu0 0.0
  %8476 = vmatprep.subr.mxu0 0.0
  %8477 = vmatpush1.msra.mxu0 0.0
  %8478 = vmatprep.subr.mxu0 0.0
  %8479 = vmatpush1.msra.mxu0 0.0
  %8480 = vmatprep.subr.mxu0 0.0
  %8481 = vmatpush1.msra.mxu0 0.0
  %8482 = vmatprep.subr.mxu0 0.0
  %8483 = vmatpush1.msra.mxu0 0.0
  %8484 = vmatprep.subr.mxu0 0.0
  %8485 = vmatpush1.msra.mxu0 0.0
  %8486 = vmatprep.subr.mxu0 0.0
  %8487 = vmatpush1.msra.mxu0 0.0
  %8488 = vmatprep.subr.mxu0 0.0
  %8489 = vmatpush1.msra.mxu0 0.0
  %8490 = vmatprep.subr.mxu0 0.0
  %8491 = vmatpush1.msra.mxu0 0.0
  %8492 = vmatprep.subr.mxu0 0.0
  %8493 = vmatpush1.msra.mxu0 0.0
  %8494 = vmatprep.subr.mxu0 0.0
  %8495 = vmatpush1.msra.mxu0 0.0
  %8496 = vmatprep.subr.mxu0 0.0
  %8497 = vmatpush1.msra.mxu0 0.0
  %8498 = vmatprep.subr.mxu0 0.0
  %8499 = vmatpush1.msra.mxu0 0.0
  %8500 = vmatprep.subr.mxu0 0.0
  %8501 = vmatpush1.msra.mxu0 0.0
  %8502 = vmatprep.subr.mxu0 0.0
  %8503 = vmatpush1.msra.mxu0 0.0
  %8504 = vmatprep.subr.mxu0 0.0
  %8505 = vmatpush1.msra.mxu0 0.0
  %8506 = vmatprep.subr.mxu0 0.0
  %8507 = vmatpush1.msra.mxu0 0.0
  %8508 = vmatprep.subr.mxu0 0.0
  %8509 = vmatpush1.msra.mxu0 0.0
  %8510 = vmatprep.subr.mxu0 0.0
  %8511 = vmatpush1.msra.mxu0 0.0
  %8512 = vmatprep.subr.mxu0 0.0
  %8513 = vmatpush1.msra.mxu0 0.0
  %8514 = vmatprep.subr.mxu0 0.0
  %8515 = vmatpush1.msra.mxu0 0.0
  %8516 = vmatprep.subr.mxu0 0.0
  %8517 = vmatpush1.msra.mxu0 0.0
  %8518 = vmatprep.subr.mxu0 0.0
  %8519 = vmatpush1.msra.mxu0 0.0
  %8520 = vmatprep.mubr.f32.mxu0 0.0
  %8521 = vmatmul.mubr.f32.gmra.mrb[0].mxu0 %v6448
  %v8522 = vpop.f32.mrb[0].mxu0
  %v8523 = vadd.f32 0.0, %v8522
  %v8524 = vpop.f32.mrb[0].mxu0
  %v8525 = vadd.f32 0.0, %v8524
  %8526 = vdwg.mxu0
  %v8528 = vsel %vm6712, %v8455, 0
  %8530 = vmatprep.subr.mxu0 %v8525
  %8531 = vmatpush1.msra.mxu0 %v8523
  %8532 = vmatprep.subr.mxu0 0.0
  %8533 = vmatpush1.msra.mxu0 0.0
  %8534 = vmatprep.subr.mxu0 0.0
  %8535 = vmatpush1.msra.mxu0 0.0
  %8536 = vmatprep.subr.mxu0 0.0
  %8537 = vmatpush1.msra.mxu0 0.0
  %8538 = vmatprep.subr.mxu0 0.0
  %8539 = vmatpush1.msra.mxu0 0.0
  %8540 = vmatprep.subr.mxu0 0.0
  %8541 = vmatpush1.msra.mxu0 0.0
  %8542 = vmatprep.subr.mxu0 0.0
  %8543 = vmatpush1.msra.mxu0 0.0
  %8544 = vmatprep.subr.mxu0 0.0
  %8545 = vmatpush1.msra.mxu0 0.0
  %8546 = vmatprep.subr.mxu0 0.0
  %8547 = vmatpush1.msra.mxu0 0.0
  %8548 = vmatprep.subr.mxu0 0.0
  %8549 = vmatpush1.msra.mxu0 0.0
  %8550 = vmatprep.subr.mxu0 0.0
  %8551 = vmatpush1.msra.mxu0 0.0
  %8552 = vmatprep.subr.mxu0 0.0
  %8553 = vmatpush1.msra.mxu0 0.0
  %8554 = vmatprep.subr.mxu0 0.0
  %8555 = vmatpush1.msra.mxu0 0.0
  %8556 = vmatprep.subr.mxu0 0.0
  %8557 = vmatpush1.msra.mxu0 0.0
  %8558 = vmatprep.subr.mxu0 0.0
  %8559 = vmatpush1.msra.mxu0 0.0
  %8560 = vmatprep.subr.mxu0 0.0
  %8561 = vmatpush1.msra.mxu0 0.0
  %8562 = vmatprep.subr.mxu0 0.0
  %8563 = vmatpush1.msra.mxu0 0.0
  %8564 = vmatprep.subr.mxu0 0.0
  %8565 = vmatpush1.msra.mxu0 0.0
  %8566 = vmatprep.subr.mxu0 0.0
  %8567 = vmatpush1.msra.mxu0 0.0
  %8568 = vmatprep.subr.mxu0 0.0
  %8569 = vmatpush1.msra.mxu0 0.0
  %8570 = vmatprep.subr.mxu0 0.0
  %8571 = vmatpush1.msra.mxu0 0.0
  %8572 = vmatprep.subr.mxu0 0.0
  %8573 = vmatpush1.msra.mxu0 0.0
  %8574 = vmatprep.subr.mxu0 0.0
  %8575 = vmatpush1.msra.mxu0 0.0
  %8576 = vmatprep.subr.mxu0 0.0
  %8577 = vmatpush1.msra.mxu0 0.0
  %8578 = vmatprep.subr.mxu0 0.0
  %8579 = vmatpush1.msra.mxu0 0.0
  %8580 = vmatprep.subr.mxu0 0.0
  %8581 = vmatpush1.msra.mxu0 0.0
  %8582 = vmatprep.subr.mxu0 0.0
  %8583 = vmatpush1.msra.mxu0 0.0
  %8584 = vmatprep.subr.mxu0 0.0
  %8585 = vmatpush1.msra.mxu0 0.0
  %8586 = vmatprep.subr.mxu0 0.0
  %8587 = vmatpush1.msra.mxu0 0.0
  %8588 = vmatprep.subr.mxu0 0.0
  %8589 = vmatpush1.msra.mxu0 0.0
  %8590 = vmatprep.subr.mxu0 0.0
  %8591 = vmatpush1.msra.mxu0 0.0
  %8592 = vmatprep.subr.mxu0 0.0
  %8593 = vmatpush1.msra.mxu0 0.0
  %8594 = vmatprep.mubr.f32.mxu0 0.0
  %8595 = vmatmul.mubr.f32.gmra.mrb[0].mxu0 %v8528
  %v8596 = vpop.f32.mrb[0].mxu0
  %v8597 = vadd.f32 0.0, %v8596
  %v8598 = vpop.f32.mrb[0].mxu0
  %v8599 = vadd.f32 0.0, %v8598
  %8600 = vdwg.mxu0
  %v8601 = vadd.f32 %v8260, %v8597
  %v8602 = vadd.f32 %v8261, %v8599
  %8603 = vmatprep.subr.mxu0 %v8439
  %8604 = vmatpush1.msra.mxu0 %v8438
  %8605 = vmatprep.subr.mxu0 %v8441
  %8606 = vmatpush1.msra.mxu0 %v8440
  %8607 = vmatprep.subr.mxu0 %v8443
  %8608 = vmatpush1.msra.mxu0 %v8442
  %8609 = vmatprep.subr.mxu0 %v8445
  %8610 = vmatpush1.msra.mxu0 %v8444
  %8611 = vmatprep.subr.mxu0 %v8447
  %8612 = vmatpush1.msra.mxu0 %v8446
  %8613 = vmatprep.subr.mxu0 %v8449
  %8614 = vmatpush1.msra.mxu0 %v8448
  %8615 = vmatprep.subr.mxu0 %v8451
  %8616 = vmatpush1.msra.mxu0 %v8450
  %8617 = vmatprep.subr.mxu0 %v8453
  %8618 = vmatpush1.msra.mxu0 %v8452
  %8619 = vmatprep.subr.mxu0 0.0
  %8620 = vmatpush1.msra.mxu0 0.0
  %8621 = vmatprep.subr.mxu0 0.0
  %8622 = vmatpush1.msra.mxu0 0.0
  %8623 = vmatprep.subr.mxu0 0.0
  %8624 = vmatpush1.msra.mxu0 0.0
  %8625 = vmatprep.subr.mxu0 0.0
  %8626 = vmatpush1.msra.mxu0 0.0
  %8627 = vmatprep.subr.mxu0 0.0
  %8628 = vmatpush1.msra.mxu0 0.0
  %8629 = vmatprep.subr.mxu0 0.0
  %8630 = vmatpush1.msra.mxu0 0.0
  %8631 = vmatprep.subr.mxu0 0.0
  %8632 = vmatpush1.msra.mxu0 0.0
  %8633 = vmatprep.subr.mxu0 0.0
  %8634 = vmatpush1.msra.mxu0 0.0
  %8635 = vmatprep.subr.mxu0 0.0
  %8636 = vmatpush1.msra.mxu0 0.0
  %8637 = vmatprep.subr.mxu0 0.0
  %8638 = vmatpush1.msra.mxu0 0.0
  %8639 = vmatprep.subr.mxu0 0.0
  %8640 = vmatpush1.msra.mxu0 0.0
  %8641 = vmatprep.subr.mxu0 0.0
  %8642 = vmatpush1.msra.mxu0 0.0
  %8643 = vmatprep.subr.mxu0 0.0
  %8644 = vmatpush1.msra.mxu0 0.0
  %8645 = vmatprep.subr.mxu0 0.0
  %8646 = vmatpush1.msra.mxu0 0.0
  %8647 = vmatprep.subr.mxu0 0.0
  %8648 = vmatpush1.msra.mxu0 0.0
  %8649 = vmatprep.subr.mxu0 0.0
  %8650 = vmatpush1.msra.mxu0 0.0
  %8651 = vmatprep.subr.mxu0 0.0
  %8652 = vmatpush1.msra.mxu0 0.0
  %8653 = vmatprep.subr.mxu0 0.0
  %8654 = vmatpush1.msra.mxu0 0.0
  %8655 = vmatprep.subr.mxu0 0.0
  %8656 = vmatpush1.msra.mxu0 0.0
  %8657 = vmatprep.subr.mxu0 0.0
  %8658 = vmatpush1.msra.mxu0 0.0
  %8659 = vmatprep.subr.mxu0 0.0
  %8660 = vmatpush1.msra.mxu0 0.0
  %8661 = vmatprep.subr.mxu0 0.0
  %8662 = vmatpush1.msra.mxu0 0.0
  %8663 = vmatprep.subr.mxu0 0.0
  %8664 = vmatpush1.msra.mxu0 0.0
  %8665 = vmatprep.subr.mxu0 0.0
  %8666 = vmatpush1.msra.mxu0 0.0
  %8667 = vmatprep.mubr.f32.mxu0 0.0
  %8668 = vmatmul.mubr.f32.gmra.mrb[0].mxu0 %v6522
  %v8669 = vpop.f32.mrb[0].mxu0
  %v8670 = vadd.f32 0.0, %v8669
  %v8671 = vpop.f32.mrb[0].mxu0
  %v8672 = vadd.f32 0.0, %v8671
  %8673 = vdwg.mxu0
  %8674 = vmatprep.subr.mxu0 %v8672
  %8675 = vmatpush1.msra.mxu0 %v8670
  %8676 = vmatprep.subr.mxu0 0.0
  %8677 = vmatpush1.msra.mxu0 0.0
  %8678 = vmatprep.subr.mxu0 0.0
  %8679 = vmatpush1.msra.mxu0 0.0
  %8680 = vmatprep.subr.mxu0 0.0
  %8681 = vmatpush1.msra.mxu0 0.0
  %8682 = vmatprep.subr.mxu0 0.0
  %8683 = vmatpush1.msra.mxu0 0.0
  %8684 = vmatprep.subr.mxu0 0.0
  %8685 = vmatpush1.msra.mxu0 0.0
  %8686 = vmatprep.subr.mxu0 0.0
  %8687 = vmatpush1.msra.mxu0 0.0
  %8688 = vmatprep.subr.mxu0 0.0
  %8689 = vmatpush1.msra.mxu0 0.0
  %8690 = vmatprep.subr.mxu0 0.0
  %8691 = vmatpush1.msra.mxu0 0.0
  %8692 = vmatprep.subr.mxu0 0.0
  %8693 = vmatpush1.msra.mxu0 0.0
  %8694 = vmatprep.subr.mxu0 0.0
  %8695 = vmatpush1.msra.mxu0 0.0
  %8696 = vmatprep.subr.mxu0 0.0
  %8697 = vmatpush1.msra.mxu0 0.0
  %8698 = vmatprep.subr.mxu0 0.0
  %8699 = vmatpush1.msra.mxu0 0.0
  %8700 = vmatprep.subr.mxu0 0.0
  %8701 = vmatpush1.msra.mxu0 0.0
  %8702 = vmatprep.subr.mxu0 0.0
  %8703 = vmatpush1.msra.mxu0 0.0
  %8704 = vmatprep.subr.mxu0 0.0
  %8705 = vmatpush1.msra.mxu0 0.0
  %8706 = vmatprep.subr.mxu0 0.0
  %8707 = vmatpush1.msra.mxu0 0.0
  %8708 = vmatprep.subr.mxu0 0.0
  %8709 = vmatpush1.msra.mxu0 0.0
  %8710 = vmatprep.subr.mxu0 0.0
  %8711 = vmatpush1.msra.mxu0 0.0
  %8712 = vmatprep.subr.mxu0 0.0
  %8713 = vmatpush1.msra.mxu0 0.0
  %8714 = vmatprep.subr.mxu0 0.0
  %8715 = vmatpush1.msra.mxu0 0.0
  %8716 = vmatprep.subr.mxu0 0.0
  %8717 = vmatpush1.msra.mxu0 0.0
  %8718 = vmatprep.subr.mxu0 0.0
  %8719 = vmatpush1.msra.mxu0 0.0
  %8720 = vmatprep.subr.mxu0 0.0
  %8721 = vmatpush1.msra.mxu0 0.0
  %8722 = vmatprep.subr.mxu0 0.0
  %8723 = vmatpush1.msra.mxu0 0.0
  %8724 = vmatprep.subr.mxu0 0.0
  %8725 = vmatpush1.msra.mxu0 0.0
  %8726 = vmatprep.subr.mxu0 0.0
  %8727 = vmatpush1.msra.mxu0 0.0
  %8728 = vmatprep.subr.mxu0 0.0
  %8729 = vmatpush1.msra.mxu0 0.0
  %8730 = vmatprep.subr.mxu0 0.0
  %8731 = vmatpush1.msra.mxu0 0.0
  %8732 = vmatprep.subr.mxu0 0.0
  %8733 = vmatpush1.msra.mxu0 0.0
  %8734 = vmatprep.subr.mxu0 0.0
  %8735 = vmatpush1.msra.mxu0 0.0
  %8736 = vmatprep.subr.mxu0 0.0
  %8737 = vmatpush1.msra.mxu0 0.0
  %8738 = vmatprep.mubr.f32.mxu0 0.0
  %8739 = vmatmul.mubr.f32.gmra.mrb[0].mxu0 %v8528
  %v8740 = vpop.f32.mrb[0].mxu0
  %v8741 = vadd.f32 0.0, %v8740
  %v8742 = vpop.f32.mrb[0].mxu0
  %v8743 = vadd.f32 0.0, %v8742
  %8744 = vdwg.mxu0
  %v8745 = vadd.f32 %v8404, %v8741
  %v8746 = vadd.f32 %v8405, %v8743
  %v8747 = vadd.s32 %v8418, %v6603
  %v8748 = vadd.s32 %v8419, %v6604
  %vm8749 = vcmp.eq.s32.totalorder %v41, %v8747
  %vm8750 = vcmp.eq.s32.totalorder %v41, %v8748
  %vm8751 = vcmp.eq.s32.totalorder %v42, %v8747
  %vm8752 = vcmp.eq.s32.totalorder %v42, %v8748
  %vm8753 = vcmp.eq.s32.totalorder %v43, %v8747
  %vm8754 = vcmp.eq.s32.totalorder %v43, %v8748
  %vm8755 = vcmp.eq.s32.totalorder %v44, %v8747
  %vm8756 = vcmp.eq.s32.totalorder %v44, %v8748
  %vm8757 = vcmp.eq.s32.totalorder %v45, %v8747
  %vm8758 = vcmp.eq.s32.totalorder %v45, %v8748
  %vm8759 = vcmp.eq.s32.totalorder %v46, %v8747
  %vm8760 = vcmp.eq.s32.totalorder %v46, %v8748
  %vm8761 = vcmp.eq.s32.totalorder %v47, %v8747
  %vm8762 = vcmp.eq.s32.totalorder %v47, %v8748
  %vm8763 = vcmp.eq.s32.totalorder %v48, %v8747
  %vm8764 = vcmp.eq.s32.totalorder %v48, %v8748
  %v8765 = vsel %vm8749, 1.0, 0.0
  %v8766 = vsel %vm8750, 1.0, 0.0
  %v8767 = vsel %vm8751, 1.0, 0.0
  %v8768 = vsel %vm8752, 1.0, 0.0
  %v8769 = vsel %vm8753, 1.0, 0.0
  %v8770 = vsel %vm8754, 1.0, 0.0
  %v8771 = vsel %vm8755, 1.0, 0.0
  %v8772 = vsel %vm8756, 1.0, 0.0
  %v8773 = vsel %vm8757, 1.0, 0.0
  %v8774 = vsel %vm8758, 1.0, 0.0
  %v8775 = vsel %vm8759, 1.0, 0.0
  %v8776 = vsel %vm8760, 1.0, 0.0
  %v8777 = vsel %vm8761, 1.0, 0.0
  %v8778 = vsel %vm8762, 1.0, 0.0
  %v8779 = vsel %vm8763, 1.0, 0.0
  %v8780 = vsel %vm8764, 1.0, 0.0
  %s8781 = scalar_lea.vmem %s2, 28
  %v8782 = vld [vmem:[%s8781] sm:$0xf]
  %8783 = vmatprep.subr.mxu0 %v8766
  %8784 = vmatpush1.msra.mxu0 %v8765
  %8785 = vmatprep.subr.mxu0 %v8768
  %8786 = vmatpush1.msra.mxu0 %v8767
  %8787 = vmatprep.subr.mxu0 %v8770
  %8788 = vmatpush1.msra.mxu0 %v8769
  %8789 = vmatprep.subr.mxu0 %v8772
  %8790 = vmatpush1.msra.mxu0 %v8771
  %8791 = vmatprep.subr.mxu0 %v8774
  %8792 = vmatpush1.msra.mxu0 %v8773
  %8793 = vmatprep.subr.mxu0 %v8776
  %8794 = vmatpush1.msra.mxu0 %v8775
  %8795 = vmatprep.subr.mxu0 %v8778
  %8796 = vmatpush1.msra.mxu0 %v8777
  %8797 = vmatprep.subr.mxu0 %v8780
  %8798 = vmatpush1.msra.mxu0 %v8779
  %8799 = vmatprep.subr.mxu0 0.0
  %8800 = vmatpush1.msra.mxu0 0.0
  %8801 = vmatprep.subr.mxu0 0.0
  %8802 = vmatpush1.msra.mxu0 0.0
  %8803 = vmatprep.subr.mxu0 0.0
  %8804 = vmatpush1.msra.mxu0 0.0
  %8805 = vmatprep.subr.mxu0 0.0
  %8806 = vmatpush1.msra.mxu0 0.0
  %8807 = vmatprep.subr.mxu0 0.0
  %8808 = vmatpush1.msra.mxu0 0.0
  %8809 = vmatprep.subr.mxu0 0.0
  %8810 = vmatpush1.msra.mxu0 0.0
  %8811 = vmatprep.subr.mxu0 0.0
  %8812 = vmatpush1.msra.mxu0 0.0
  %8813 = vmatprep.subr.mxu0 0.0
  %8814 = vmatpush1.msra.mxu0 0.0
  %8815 = vmatprep.subr.mxu0 0.0
  %8816 = vmatpush1.msra.mxu0 0.0
  %8817 = vmatprep.subr.mxu0 0.0
  %8818 = vmatpush1.msra.mxu0 0.0
  %8819 = vmatprep.subr.mxu0 0.0
  %8820 = vmatpush1.msra.mxu0 0.0
  %8821 = vmatprep.subr.mxu0 0.0
  %8822 = vmatpush1.msra.mxu0 0.0
  %8823 = vmatprep.subr.mxu0 0.0
  %8824 = vmatpush1.msra.mxu0 0.0
  %8825 = vmatprep.subr.mxu0 0.0
  %8826 = vmatpush1.msra.mxu0 0.0
  %8827 = vmatprep.subr.mxu0 0.0
  %8828 = vmatpush1.msra.mxu0 0.0
  %8829 = vmatprep.subr.mxu0 0.0
  %8830 = vmatpush1.msra.mxu0 0.0
  %8831 = vmatprep.subr.mxu0 0.0
  %8832 = vmatpush1.msra.mxu0 0.0
  %8833 = vmatprep.subr.mxu0 0.0
  %8834 = vmatpush1.msra.mxu0 0.0
  %8835 = vmatprep.subr.mxu0 0.0
  %8836 = vmatpush1.msra.mxu0 0.0
  %8837 = vmatprep.subr.mxu0 0.0
  %8838 = vmatpush1.msra.mxu0 0.0
  %8839 = vmatprep.subr.mxu0 0.0
  %8840 = vmatpush1.msra.mxu0 0.0
  %8841 = vmatprep.subr.mxu0 0.0
  %8842 = vmatpush1.msra.mxu0 0.0
  %8843 = vmatprep.subr.mxu0 0.0
  %8844 = vmatpush1.msra.mxu0 0.0
  %8845 = vmatprep.subr.mxu0 0.0
  %8846 = vmatpush1.msra.mxu0 0.0
  %8847 = vmatprep.mubr.f32.mxu0 0.0
  %8848 = vmatmul.mubr.f32.gmra.mrb[0].mxu0 %v6448
  %v8849 = vpop.f32.mrb[0].mxu0
  %v8850 = vadd.f32 0.0, %v8849
  %v8851 = vpop.f32.mrb[0].mxu0
  %v8852 = vadd.f32 0.0, %v8851
  %8853 = vdwg.mxu0
  %v8855 = vsel %vm6712, %v8782, 0
  %8857 = vmatprep.subr.mxu0 %v8852
  %8858 = vmatpush1.msra.mxu0 %v8850
  %8859 = vmatprep.subr.mxu0 0.0
  %8860 = vmatpush1.msra.mxu0 0.0
  %8861 = vmatprep.subr.mxu0 0.0
  %8862 = vmatpush1.msra.mxu0 0.0
  %8863 = vmatprep.subr.mxu0 0.0
  %8864 = vmatpush1.msra.mxu0 0.0
  %8865 = vmatprep.subr.mxu0 0.0
  %8866 = vmatpush1.msra.mxu0 0.0
  %8867 = vmatprep.subr.mxu0 0.0
  %8868 = vmatpush1.msra.mxu0 0.0
  %8869 = vmatprep.subr.mxu0 0.0
  %8870 = vmatpush1.msra.mxu0 0.0
  %8871 = vmatprep.subr.mxu0 0.0
  %8872 = vmatpush1.msra.mxu0 0.0
  %8873 = vmatprep.subr.mxu0 0.0
  %8874 = vmatpush1.msra.mxu0 0.0
  %8875 = vmatprep.subr.mxu0 0.0
  %8876 = vmatpush1.msra.mxu0 0.0
  %8877 = vmatprep.subr.mxu0 0.0
  %8878 = vmatpush1.msra.mxu0 0.0
  %8879 = vmatprep.subr.mxu0 0.0
  %8880 = vmatpush1.msra.mxu0 0.0
  %8881 = vmatprep.subr.mxu0 0.0
  %8882 = vmatpush1.msra.mxu0 0.0
  %8883 = vmatprep.subr.mxu0 0.0
  %8884 = vmatpush1.msra.mxu0 0.0
  %8885 = vmatprep.subr.mxu0 0.0
  %8886 = vmatpush1.msra.mxu0 0.0
  %8887 = vmatprep.subr.mxu0 0.0
  %8888 = vmatpush1.msra.mxu0 0.0
  %8889 = vmatprep.subr.mxu0 0.0
  %8890 = vmatpush1.msra.mxu0 0.0
  %8891 = vmatprep.subr.mxu0 0.0
  %8892 = vmatpush1.msra.mxu0 0.0
  %8893 = vmatprep.subr.mxu0 0.0
  %8894 = vmatpush1.msra.mxu0 0.0
  %8895 = vmatprep.subr.mxu0 0.0
  %8896 = vmatpush1.msra.mxu0 0.0
  %8897 = vmatprep.subr.mxu0 0.0
  %8898 = vmatpush1.msra.mxu0 0.0
  %8899 = vmatprep.subr.mxu0 0.0
  %8900 = vmatpush1.msra.mxu0 0.0
  %8901 = vmatprep.subr.mxu0 0.0
  %8902 = vmatpush1.msra.mxu0 0.0
  %8903 = vmatprep.subr.mxu0 0.0
  %8904 = vmatpush1.msra.mxu0 0.0
  %8905 = vmatprep.subr.mxu0 0.0
  %8906 = vmatpush1.msra.mxu0 0.0
  %8907 = vmatprep.subr.mxu0 0.0
  %8908 = vmatpush1.msra.mxu0 0.0
  %8909 = vmatprep.subr.mxu0 0.0
  %8910 = vmatpush1.msra.mxu0 0.0
  %8911 = vmatprep.subr.mxu0 0.0
  %8912 = vmatpush1.msra.mxu0 0.0
  %8913 = vmatprep.subr.mxu0 0.0
  %8914 = vmatpush1.msra.mxu0 0.0
  %8915 = vmatprep.subr.mxu0 0.0
  %8916 = vmatpush1.msra.mxu0 0.0
  %8917 = vmatprep.subr.mxu0 0.0
  %8918 = vmatpush1.msra.mxu0 0.0
  %8919 = vmatprep.subr.mxu0 0.0
  %8920 = vmatpush1.msra.mxu0 0.0
  %8921 = vmatprep.mubr.f32.mxu0 0.0
  %8922 = vmatmul.mubr.f32.gmra.mrb[0].mxu0 %v8855
  %v8923 = vpop.f32.mrb[0].mxu0
  %v8924 = vadd.f32 0.0, %v8923
  %v8925 = vpop.f32.mrb[0].mxu0
  %v8926 = vadd.f32 0.0, %v8925
  %8927 = vdwg.mxu0
  %v8928 = vadd.f32 %v8601, %v8924
  %v8929 = vadd.f32 %v8602, %v8926
  %8930 = vmatprep.subr.mxu0 %v8766
  %8931 = vmatpush1.msra.mxu0 %v8765
  %8932 = vmatprep.subr.mxu0 %v8768
  %8933 = vmatpush1.msra.mxu0 %v8767
  %8934 = vmatprep.subr.mxu0 %v8770
  %8935 = vmatpush1.msra.mxu0 %v8769
  %8936 = vmatprep.subr.mxu0 %v8772
  %8937 = vmatpush1.msra.mxu0 %v8771
  %8938 = vmatprep.subr.mxu0 %v8774
  %8939 = vmatpush1.msra.mxu0 %v8773
  %8940 = vmatprep.subr.mxu0 %v8776
  %8941 = vmatpush1.msra.mxu0 %v8775
  %8942 = vmatprep.subr.mxu0 %v8778
  %8943 = vmatpush1.msra.mxu0 %v8777
  %8944 = vmatprep.subr.mxu0 %v8780
  %8945 = vmatpush1.msra.mxu0 %v8779
  %8946 = vmatprep.subr.mxu0 0.0
  %8947 = vmatpush1.msra.mxu0 0.0
  %8948 = vmatprep.subr.mxu0 0.0
  %8949 = vmatpush1.msra.mxu0 0.0
  %8950 = vmatprep.subr.mxu0 0.0
  %8951 = vmatpush1.msra.mxu0 0.0
  %8952 = vmatprep.subr.mxu0 0.0
  %8953 = vmatpush1.msra.mxu0 0.0
  %8954 = vmatprep.subr.mxu0 0.0
  %8955 = vmatpush1.msra.mxu0 0.0
  %8956 = vmatprep.subr.mxu0 0.0
  %8957 = vmatpush1.msra.mxu0 0.0
  %8958 = vmatprep.subr.mxu0 0.0
  %8959 = vmatpush1.msra.mxu0 0.0
  %8960 = vmatprep.subr.mxu0 0.0
  %8961 = vmatpush1.msra.mxu0 0.0
  %8962 = vmatprep.subr.mxu0 0.0
  %8963 = vmatpush1.msra.mxu0 0.0
  %8964 = vmatprep.subr.mxu0 0.0
  %8965 = vmatpush1.msra.mxu0 0.0
  %8966 = vmatprep.subr.mxu0 0.0
  %8967 = vmatpush1.msra.mxu0 0.0
  %8968 = vmatprep.subr.mxu0 0.0
  %8969 = vmatpush1.msra.mxu0 0.0
  %8970 = vmatprep.subr.mxu0 0.0
  %8971 = vmatpush1.msra.mxu0 0.0
  %8972 = vmatprep.subr.mxu0 0.0
  %8973 = vmatpush1.msra.mxu0 0.0
  %8974 = vmatprep.subr.mxu0 0.0
  %8975 = vmatpush1.msra.mxu0 0.0
  %8976 = vmatprep.subr.mxu0 0.0
  %8977 = vmatpush1.msra.mxu0 0.0
  %8978 = vmatprep.subr.mxu0 0.0
  %8979 = vmatpush1.msra.mxu0 0.0
  %8980 = vmatprep.subr.mxu0 0.0
  %8981 = vmatpush1.msra.mxu0 0.0
  %8982 = vmatprep.subr.mxu0 0.0
  %8983 = vmatpush1.msra.mxu0 0.0
  %8984 = vmatprep.subr.mxu0 0.0
  %8985 = vmatpush1.msra.mxu0 0.0
  %8986 = vmatprep.subr.mxu0 0.0
  %8987 = vmatpush1.msra.mxu0 0.0
  %8988 = vmatprep.subr.mxu0 0.0
  %8989 = vmatpush1.msra.mxu0 0.0
  %8990 = vmatprep.subr.mxu0 0.0
  %8991 = vmatpush1.msra.mxu0 0.0
  %8992 = vmatprep.subr.mxu0 0.0
  %8993 = vmatpush1.msra.mxu0 0.0
  %8994 = vmatprep.mubr.f32.mxu0 0.0
  %8995 = vmatmul.mubr.f32.gmra.mrb[0].mxu0 %v6522
  %v8996 = vpop.f32.mrb[0].mxu0
  %v8997 = vadd.f32 0.0, %v8996
  %v8998 = vpop.f32.mrb[0].mxu0
  %v8999 = vadd.f32 0.0, %v8998
  %9000 = vdwg.mxu0
  %9001 = vmatprep.subr.mxu0 %v8999
  %9002 = vmatpush1.msra.mxu0 %v8997
  %9003 = vmatprep.subr.mxu0 0.0
  %9004 = vmatpush1.msra.mxu0 0.0
  %9005 = vmatprep.subr.mxu0 0.0
  %9006 = vmatpush1.msra.mxu0 0.0
  %9007 = vmatprep.subr.mxu0 0.0
  %9008 = vmatpush1.msra.mxu0 0.0
  %9009 = vmatprep.subr.mxu0 0.0
  %9010 = vmatpush1.msra.mxu0 0.0
  %9011 = vmatprep.subr.mxu0 0.0
  %9012 = vmatpush1.msra.mxu0 0.0
  %9013 = vmatprep.subr.mxu0 0.0
  %9014 = vmatpush1.msra.mxu0 0.0
  %9015 = vmatprep.subr.mxu0 0.0
  %9016 = vmatpush1.msra.mxu0 0.0
  %9017 = vmatprep.subr.mxu0 0.0
  %9018 = vmatpush1.msra.mxu0 0.0
  %9019 = vmatprep.subr.mxu0 0.0
  %9020 = vmatpush1.msra.mxu0 0.0
  %9021 = vmatprep.subr.mxu0 0.0
  %9022 = vmatpush1.msra.mxu0 0.0
  %9023 = vmatprep.subr.mxu0 0.0
  %9024 = vmatpush1.msra.mxu0 0.0
  %9025 = vmatprep.subr.mxu0 0.0
  %9026 = vmatpush1.msra.mxu0 0.0
  %9027 = vmatprep.subr.mxu0 0.0
  %9028 = vmatpush1.msra.mxu0 0.0
  %9029 = vmatprep.subr.mxu0 0.0
  %9030 = vmatpush1.msra.mxu0 0.0
  %9031 = vmatprep.subr.mxu0 0.0
  %9032 = vmatpush1.msra.mxu0 0.0
  %9033 = vmatprep.subr.mxu0 0.0
  %9034 = vmatpush1.msra.mxu0 0.0
  %9035 = vmatprep.subr.mxu0 0.0
  %9036 = vmatpush1.msra.mxu0 0.0
  %9037 = vmatprep.subr.mxu0 0.0
  %9038 = vmatpush1.msra.mxu0 0.0
  %9039 = vmatprep.subr.mxu0 0.0
  %9040 = vmatpush1.msra.mxu0 0.0
  %9041 = vmatprep.subr.mxu0 0.0
  %9042 = vmatpush1.msra.mxu0 0.0
  %9043 = vmatprep.subr.mxu0 0.0
  %9044 = vmatpush1.msra.mxu0 0.0
  %9045 = vmatprep.subr.mxu0 0.0
  %9046 = vmatpush1.msra.mxu0 0.0
  %9047 = vmatprep.subr.mxu0 0.0
  %9048 = vmatpush1.msra.mxu0 0.0
  %9049 = vmatprep.subr.mxu0 0.0
  %9050 = vmatpush1.msra.mxu0 0.0
  %9051 = vmatprep.subr.mxu0 0.0
  %9052 = vmatpush1.msra.mxu0 0.0
  %9053 = vmatprep.subr.mxu0 0.0
  %9054 = vmatpush1.msra.mxu0 0.0
  %9055 = vmatprep.subr.mxu0 0.0
  %9056 = vmatpush1.msra.mxu0 0.0
  %9057 = vmatprep.subr.mxu0 0.0
  %9058 = vmatpush1.msra.mxu0 0.0
  %9059 = vmatprep.subr.mxu0 0.0
  %9060 = vmatpush1.msra.mxu0 0.0
  %9061 = vmatprep.subr.mxu0 0.0
  %9062 = vmatpush1.msra.mxu0 0.0
  %9063 = vmatprep.subr.mxu0 0.0
  %9064 = vmatpush1.msra.mxu0 0.0
  %9065 = vmatprep.mubr.f32.mxu0 0.0
  %9066 = vmatmul.mubr.f32.gmra.mrb[0].mxu0 %v8855
  %v9067 = vpop.f32.mrb[0].mxu0
  %v9068 = vadd.f32 0.0, %v9067
  %v9069 = vpop.f32.mrb[0].mxu0
  %v9070 = vadd.f32 0.0, %v9069
  %9071 = vdwg.mxu0
  %v9072 = vadd.f32 %v8745, %v9068
  %v9073 = vadd.f32 %v8746, %v9070
  %v9074 = vadd.s32 %v8418, %v7084
  %v9075 = vadd.s32 %v8419, %v7085
  %vm9076 = vcmp.eq.s32.totalorder %v41, %v9074
  %vm9077 = vcmp.eq.s32.totalorder %v41, %v9075
  %vm9078 = vcmp.eq.s32.totalorder %v42, %v9074
  %vm9079 = vcmp.eq.s32.totalorder %v42, %v9075
  %vm9080 = vcmp.eq.s32.totalorder %v43, %v9074
  %vm9081 = vcmp.eq.s32.totalorder %v43, %v9075
  %vm9082 = vcmp.eq.s32.totalorder %v44, %v9074
  %vm9083 = vcmp.eq.s32.totalorder %v44, %v9075
  %vm9084 = vcmp.eq.s32.totalorder %v45, %v9074
  %vm9085 = vcmp.eq.s32.totalorder %v45, %v9075
  %vm9086 = vcmp.eq.s32.totalorder %v46, %v9074
  %vm9087 = vcmp.eq.s32.totalorder %v46, %v9075
  %vm9088 = vcmp.eq.s32.totalorder %v47, %v9074
  %vm9089 = vcmp.eq.s32.totalorder %v47, %v9075
  %vm9090 = vcmp.eq.s32.totalorder %v48, %v9074
  %vm9091 = vcmp.eq.s32.totalorder %v48, %v9075
  %v9092 = vsel %vm9076, 1.0, 0.0
  %v9093 = vsel %vm9077, 1.0, 0.0
  %v9094 = vsel %vm9078, 1.0, 0.0
  %v9095 = vsel %vm9079, 1.0, 0.0
  %v9096 = vsel %vm9080, 1.0, 0.0
  %v9097 = vsel %vm9081, 1.0, 0.0
  %v9098 = vsel %vm9082, 1.0, 0.0
  %v9099 = vsel %vm9083, 1.0, 0.0
  %v9100 = vsel %vm9084, 1.0, 0.0
  %v9101 = vsel %vm9085, 1.0, 0.0
  %v9102 = vsel %vm9086, 1.0, 0.0
  %v9103 = vsel %vm9087, 1.0, 0.0
  %v9104 = vsel %vm9088, 1.0, 0.0
  %v9105 = vsel %vm9089, 1.0, 0.0
  %v9106 = vsel %vm9090, 1.0, 0.0
  %v9107 = vsel %vm9091, 1.0, 0.0
  %s9108 = scalar_lea.vmem %s2, 32
  %v9109 = vld [vmem:[%s9108] sm:$0xf]
  %9110 = vmatprep.subr.mxu0 %v9093
  %9111 = vmatpush1.msra.mxu0 %v9092
  %9112 = vmatprep.subr.mxu0 %v9095
  %9113 = vmatpush1.msra.mxu0 %v9094
  %9114 = vmatprep.subr.mxu0 %v9097
  %9115 = vmatpush1.msra.mxu0 %v9096
  %9116 = vmatprep.subr.mxu0 %v9099
  %9117 = vmatpush1.msra.mxu0 %v9098
  %9118 = vmatprep.subr.mxu0 %v9101
  %9119 = vmatpush1.msra.mxu0 %v9100
  %9120 = vmatprep.subr.mxu0 %v9103
  %9121 = vmatpush1.msra.mxu0 %v9102
  %9122 = vmatprep.subr.mxu0 %v9105
  %9123 = vmatpush1.msra.mxu0 %v9104
  %9124 = vmatprep.subr.mxu0 %v9107
  %9125 = vmatpush1.msra.mxu0 %v9106
  %9126 = vmatprep.subr.mxu0 0.0
  %9127 = vmatpush1.msra.mxu0 0.0
  %9128 = vmatprep.subr.mxu0 0.0
  %9129 = vmatpush1.msra.mxu0 0.0
  %9130 = vmatprep.subr.mxu0 0.0
  %9131 = vmatpush1.msra.mxu0 0.0
  %9132 = vmatprep.subr.mxu0 0.0
  %9133 = vmatpush1.msra.mxu0 0.0
  %9134 = vmatprep.subr.mxu0 0.0
  %9135 = vmatpush1.msra.mxu0 0.0
  %9136 = vmatprep.subr.mxu0 0.0
  %9137 = vmatpush1.msra.mxu0 0.0
  %9138 = vmatprep.subr.mxu0 0.0
  %9139 = vmatpush1.msra.mxu0 0.0
  %9140 = vmatprep.subr.mxu0 0.0
  %9141 = vmatpush1.msra.mxu0 0.0
  %9142 = vmatprep.subr.mxu0 0.0
  %9143 = vmatpush1.msra.mxu0 0.0
  %9144 = vmatprep.subr.mxu0 0.0
  %9145 = vmatpush1.msra.mxu0 0.0
  %9146 = vmatprep.subr.mxu0 0.0
  %9147 = vmatpush1.msra.mxu0 0.0
  %9148 = vmatprep.subr.mxu0 0.0
  %9149 = vmatpush1.msra.mxu0 0.0
  %9150 = vmatprep.subr.mxu0 0.0
  %9151 = vmatpush1.msra.mxu0 0.0
  %9152 = vmatprep.subr.mxu0 0.0
  %9153 = vmatpush1.msra.mxu0 0.0
  %9154 = vmatprep.subr.mxu0 0.0
  %9155 = vmatpush1.msra.mxu0 0.0
  %9156 = vmatprep.subr.mxu0 0.0
  %9157 = vmatpush1.msra.mxu0 0.0
  %9158 = vmatprep.subr.mxu0 0.0
  %9159 = vmatpush1.msra.mxu0 0.0
  %9160 = vmatprep.subr.mxu0 0.0
  %9161 = vmatpush1.msra.mxu0 0.0
  %9162 = vmatprep.subr.mxu0 0.0
  %9163 = vmatpush1.msra.mxu0 0.0
  %9164 = vmatprep.subr.mxu0 0.0
  %9165 = vmatpush1.msra.mxu0 0.0
  %9166 = vmatprep.subr.mxu0 0.0
  %9167 = vmatpush1.msra.mxu0 0.0
  %9168 = vmatprep.subr.mxu0 0.0
  %9169 = vmatpush1.msra.mxu0 0.0
  %9170 = vmatprep.subr.mxu0 0.0
  %9171 = vmatpush1.msra.mxu0 0.0
  %9172 = vmatprep.subr.mxu0 0.0
  %9173 = vmatpush1.msra.mxu0 0.0
  %9174 = vmatprep.mubr.f32.mxu0 0.0
  %9175 = vmatmul.mubr.f32.gmra.mrb[0].mxu0 %v6448
  %v9176 = vpop.f32.mrb[0].mxu0
  %v9177 = vadd.f32 0.0, %v9176
  %v9178 = vpop.f32.mrb[0].mxu0
  %v9179 = vadd.f32 0.0, %v9178
  %9180 = vdwg.mxu0
  %v9182 = vsel %vm6712, %v9109, 0
  %9184 = vmatprep.subr.mxu0 %v9179
  %9185 = vmatpush1.msra.mxu0 %v9177
  %9186 = vmatprep.subr.mxu0 0.0
  %9187 = vmatpush1.msra.mxu0 0.0
  %9188 = vmatprep.subr.mxu0 0.0
  %9189 = vmatpush1.msra.mxu0 0.0
  %9190 = vmatprep.subr.mxu0 0.0
  %9191 = vmatpush1.msra.mxu0 0.0
  %9192 = vmatprep.subr.mxu0 0.0
  %9193 = vmatpush1.msra.mxu0 0.0
  %9194 = vmatprep.subr.mxu0 0.0
  %9195 = vmatpush1.msra.mxu0 0.0
  %9196 = vmatprep.subr.mxu0 0.0
  %9197 = vmatpush1.msra.mxu0 0.0
  %9198 = vmatprep.subr.mxu0 0.0
  %9199 = vmatpush1.msra.mxu0 0.0
  %9200 = vmatprep.subr.mxu0 0.0
  %9201 = vmatpush1.msra.mxu0 0.0
  %9202 = vmatprep.subr.mxu0 0.0
  %9203 = vmatpush1.msra.mxu0 0.0
  %9204 = vmatprep.subr.mxu0 0.0
  %9205 = vmatpush1.msra.mxu0 0.0
  %9206 = vmatprep.subr.mxu0 0.0
  %9207 = vmatpush1.msra.mxu0 0.0
  %9208 = vmatprep.subr.mxu0 0.0
  %9209 = vmatpush1.msra.mxu0 0.0
  %9210 = vmatprep.subr.mxu0 0.0
  %9211 = vmatpush1.msra.mxu0 0.0
  %9212 = vmatprep.subr.mxu0 0.0
  %9213 = vmatpush1.msra.mxu0 0.0
  %9214 = vmatprep.subr.mxu0 0.0
  %9215 = vmatpush1.msra.mxu0 0.0
  %9216 = vmatprep.subr.mxu0 0.0
  %9217 = vmatpush1.msra.mxu0 0.0
  %9218 = vmatprep.subr.mxu0 0.0
  %9219 = vmatpush1.msra.mxu0 0.0
  %9220 = vmatprep.subr.mxu0 0.0
  %9221 = vmatpush1.msra.mxu0 0.0
  %9222 = vmatprep.subr.mxu0 0.0
  %9223 = vmatpush1.msra.mxu0 0.0
  %9224 = vmatprep.subr.mxu0 0.0
  %9225 = vmatpush1.msra.mxu0 0.0
  %9226 = vmatprep.subr.mxu0 0.0
  %9227 = vmatpush1.msra.mxu0 0.0
  %9228 = vmatprep.subr.mxu0 0.0
  %9229 = vmatpush1.msra.mxu0 0.0
  %9230 = vmatprep.subr.mxu0 0.0
  %9231 = vmatpush1.msra.mxu0 0.0
  %9232 = vmatprep.subr.mxu0 0.0
  %9233 = vmatpush1.msra.mxu0 0.0
  %9234 = vmatprep.subr.mxu0 0.0
  %9235 = vmatpush1.msra.mxu0 0.0
  %9236 = vmatprep.subr.mxu0 0.0
  %9237 = vmatpush1.msra.mxu0 0.0
  %9238 = vmatprep.subr.mxu0 0.0
  %9239 = vmatpush1.msra.mxu0 0.0
  %9240 = vmatprep.subr.mxu0 0.0
  %9241 = vmatpush1.msra.mxu0 0.0
  %9242 = vmatprep.subr.mxu0 0.0
  %9243 = vmatpush1.msra.mxu0 0.0
  %9244 = vmatprep.subr.mxu0 0.0
  %9245 = vmatpush1.msra.mxu0 0.0
  %9246 = vmatprep.subr.mxu0 0.0
  %9247 = vmatpush1.msra.mxu0 0.0
  %9248 = vmatprep.mubr.f32.mxu0 0.0
  %9249 = vmatmul.mubr.f32.gmra.mrb[0].mxu0 %v9182
  %v9250 = vpop.f32.mrb[0].mxu0
  %v9251 = vadd.f32 0.0, %v9250
  %v9252 = vpop.f32.mrb[0].mxu0
  %v9253 = vadd.f32 0.0, %v9252
  %9254 = vdwg.mxu0
  %v9255 = vadd.f32 %v8928, %v9251
  %v9256 = vadd.f32 %v8929, %v9253
  %9257 = vmatprep.subr.mxu0 %v9093
  %9258 = vmatpush1.msra.mxu0 %v9092
  %9259 = vmatprep.subr.mxu0 %v9095
  %9260 = vmatpush1.msra.mxu0 %v9094
  %9261 = vmatprep.subr.mxu0 %v9097
  %9262 = vmatpush1.msra.mxu0 %v9096
  %9263 = vmatprep.subr.mxu0 %v9099
  %9264 = vmatpush1.msra.mxu0 %v9098
  %9265 = vmatprep.subr.mxu0 %v9101
  %9266 = vmatpush1.msra.mxu0 %v9100
  %9267 = vmatprep.subr.mxu0 %v9103
  %9268 = vmatpush1.msra.mxu0 %v9102
  %9269 = vmatprep.subr.mxu0 %v9105
  %9270 = vmatpush1.msra.mxu0 %v9104
  %9271 = vmatprep.subr.mxu0 %v9107
  %9272 = vmatpush1.msra.mxu0 %v9106
  %9273 = vmatprep.subr.mxu0 0.0
  %9274 = vmatpush1.msra.mxu0 0.0
  %9275 = vmatprep.subr.mxu0 0.0
  %9276 = vmatpush1.msra.mxu0 0.0
  %9277 = vmatprep.subr.mxu0 0.0
  %9278 = vmatpush1.msra.mxu0 0.0
  %9279 = vmatprep.subr.mxu0 0.0
  %9280 = vmatpush1.msra.mxu0 0.0
  %9281 = vmatprep.subr.mxu0 0.0
  %9282 = vmatpush1.msra.mxu0 0.0
  %9283 = vmatprep.subr.mxu0 0.0
  %9284 = vmatpush1.msra.mxu0 0.0
  %9285 = vmatprep.subr.mxu0 0.0
  %9286 = vmatpush1.msra.mxu0 0.0
  %9287 = vmatprep.subr.mxu0 0.0
  %9288 = vmatpush1.msra.mxu0 0.0
  %9289 = vmatprep.subr.mxu0 0.0
  %9290 = vmatpush1.msra.mxu0 0.0
  %9291 = vmatprep.subr.mxu0 0.0
  %9292 = vmatpush1.msra.mxu0 0.0
  %9293 = vmatprep.subr.mxu0 0.0
  %9294 = vmatpush1.msra.mxu0 0.0
  %9295 = vmatprep.subr.mxu0 0.0
  %9296 = vmatpush1.msra.mxu0 0.0
  %9297 = vmatprep.subr.mxu0 0.0
  %9298 = vmatpush1.msra.mxu0 0.0
  %9299 = vmatprep.subr.mxu0 0.0
  %9300 = vmatpush1.msra.mxu0 0.0
  %9301 = vmatprep.subr.mxu0 0.0
  %9302 = vmatpush1.msra.mxu0 0.0
  %9303 = vmatprep.subr.mxu0 0.0
  %9304 = vmatpush1.msra.mxu0 0.0
  %9305 = vmatprep.subr.mxu0 0.0
  %9306 = vmatpush1.msra.mxu0 0.0
  %9307 = vmatprep.subr.mxu0 0.0
  %9308 = vmatpush1.msra.mxu0 0.0
  %9309 = vmatprep.subr.mxu0 0.0
  %9310 = vmatpush1.msra.mxu0 0.0
  %9311 = vmatprep.subr.mxu0 0.0
  %9312 = vmatpush1.msra.mxu0 0.0
  %9313 = vmatprep.subr.mxu0 0.0
  %9314 = vmatpush1.msra.mxu0 0.0
  %9315 = vmatprep.subr.mxu0 0.0
  %9316 = vmatpush1.msra.mxu0 0.0
  %9317 = vmatprep.subr.mxu0 0.0
  %9318 = vmatpush1.msra.mxu0 0.0
  %9319 = vmatprep.subr.mxu0 0.0
  %9320 = vmatpush1.msra.mxu0 0.0
  %9321 = vmatprep.mubr.f32.mxu0 0.0
  %9322 = vmatmul.mubr.f32.gmra.mrb[0].mxu0 %v6522
  %v9323 = vpop.f32.mrb[0].mxu0
  %v9324 = vadd.f32 0.0, %v9323
  %v9325 = vpop.f32.mrb[0].mxu0
  %v9326 = vadd.f32 0.0, %v9325
  %9327 = vdwg.mxu0
  %9328 = vmatprep.subr.mxu0 %v9326
  %9329 = vmatpush1.msra.mxu0 %v9324
  %9330 = vmatprep.subr.mxu0 0.0
  %9331 = vmatpush1.msra.mxu0 0.0
  %9332 = vmatprep.subr.mxu0 0.0
  %9333 = vmatpush1.msra.mxu0 0.0
  %9334 = vmatprep.subr.mxu0 0.0
  %9335 = vmatpush1.msra.mxu0 0.0
  %9336 = vmatprep.subr.mxu0 0.0
  %9337 = vmatpush1.msra.mxu0 0.0
  %9338 = vmatprep.subr.mxu0 0.0
  %9339 = vmatpush1.msra.mxu0 0.0
  %9340 = vmatprep.subr.mxu0 0.0
  %9341 = vmatpush1.msra.mxu0 0.0
  %9342 = vmatprep.subr.mxu0 0.0
  %9343 = vmatpush1.msra.mxu0 0.0
  %9344 = vmatprep.subr.mxu0 0.0
  %9345 = vmatpush1.msra.mxu0 0.0
  %9346 = vmatprep.subr.mxu0 0.0
  %9347 = vmatpush1.msra.mxu0 0.0
  %9348 = vmatprep.subr.mxu0 0.0
  %9349 = vmatpush1.msra.mxu0 0.0
  %9350 = vmatprep.subr.mxu0 0.0
  %9351 = vmatpush1.msra.mxu0 0.0
  %9352 = vmatprep.subr.mxu0 0.0
  %9353 = vmatpush1.msra.mxu0 0.0
  %9354 = vmatprep.subr.mxu0 0.0
  %9355 = vmatpush1.msra.mxu0 0.0
  %9356 = vmatprep.subr.mxu0 0.0
  %9357 = vmatpush1.msra.mxu0 0.0
  %9358 = vmatprep.subr.mxu0 0.0
  %9359 = vmatpush1.msra.mxu0 0.0
  %9360 = vmatprep.subr.mxu0 0.0
  %9361 = vmatpush1.msra.mxu0 0.0
  %9362 = vmatprep.subr.mxu0 0.0
  %9363 = vmatpush1.msra.mxu0 0.0
  %9364 = vmatprep.subr.mxu0 0.0
  %9365 = vmatpush1.msra.mxu0 0.0
  %9366 = vmatprep.subr.mxu0 0.0
  %9367 = vmatpush1.msra.mxu0 0.0
  %9368 = vmatprep.subr.mxu0 0.0
  %9369 = vmatpush1.msra.mxu0 0.0
  %9370 = vmatprep.subr.mxu0 0.0
  %9371 = vmatpush1.msra.mxu0 0.0
  %9372 = vmatprep.subr.mxu0 0.0
  %9373 = vmatpush1.msra.mxu0 0.0
  %9374 = vmatprep.subr.mxu0 0.0
  %9375 = vmatpush1.msra.mxu0 0.0
  %9376 = vmatprep.subr.mxu0 0.0
  %9377 = vmatpush1.msra.mxu0 0.0
  %9378 = vmatprep.subr.mxu0 0.0
  %9379 = vmatpush1.msra.mxu0 0.0
  %9380 = vmatprep.subr.mxu0 0.0
  %9381 = vmatpush1.msra.mxu0 0.0
  %9382 = vmatprep.subr.mxu0 0.0
  %9383 = vmatpush1.msra.mxu0 0.0
  %9384 = vmatprep.subr.mxu0 0.0
  %9385 = vmatpush1.msra.mxu0 0.0
  %9386 = vmatprep.subr.mxu0 0.0
  %9387 = vmatpush1.msra.mxu0 0.0
  %9388 = vmatprep.subr.mxu0 0.0
  %9389 = vmatpush1.msra.mxu0 0.0
  %9390 = vmatprep.subr.mxu0 0.0
  %9391 = vmatpush1.msra.mxu0 0.0
  %9392 = vmatprep.mubr.f32.mxu0 0.0
  %9393 = vmatmul.mubr.f32.gmra.mrb[0].mxu0 %v9182
  %v9394 = vpop.f32.mrb[0].mxu0
  %v9395 = vadd.f32 0.0, %v9394
  %v9396 = vpop.f32.mrb[0].mxu0
  %v9397 = vadd.f32 0.0, %v9396
  %9398 = vdwg.mxu0
  %v9399 = vadd.f32 %v9072, %v9395
  %v9400 = vadd.f32 %v9073, %v9397
  %v9401 = vsel %vm504, %v9255, 0.0
  %v9402 = vsel %vm504, %v9256, 0.0
  %v9403 = vadd.f32 %v9401, %v9402
  %9404 = vadd.xlane.f32.xlu0 %v9403
  %v9405 = vpop.xlane.xlu0 %9404
  %v9406 = vadd.f32 %v9405, 0.0
  %v9407 = vsel %vm504, %v9399, 0.0
  %v9408 = vsel %vm504, %v9400, 0.0
  %v9409 = vadd.f32 %v9407, %v9408
  %9410 = vadd.xlane.f32.xlu0 %v9409
  %v9411 = vpop.xlane.xlu0 %9410
  %v9412 = vadd.f32 %v9406, %v9411
  %v9413 = vmul.f32 %v9412, 0.001953125
  %v9414 = vsub.f32 %v9255, %v9413
  %v9415 = vsub.f32 %v9256, %v9413
  %v9416 = vmul.f32 %v9414, %v9414
  %v9417 = vmul.f32 %v9415, %v9415
  %v9418 = vsel %vm504, %v9416, 0.0
  %v9419 = vsel %vm504, %v9417, 0.0
  %v9420 = vadd.f32 %v9418, %v9419
  %9421 = vadd.xlane.f32.xlu0 %v9420
  %v9422 = vpop.xlane.xlu0 %9421
  %v9423 = vadd.f32 %v9422, 0.0
  %v9424 = vsub.f32 %v9399, %v9413
  %v9425 = vsub.f32 %v9400, %v9413
  %v9426 = vmul.f32 %v9424, %v9424
  %v9427 = vmul.f32 %v9425, %v9425
  %v9428 = vsel %vm504, %v9426, 0.0
  %v9429 = vsel %vm504, %v9427, 0.0
  %v9430 = vadd.f32 %v9428, %v9429
  %9431 = vadd.xlane.f32.xlu0 %v9430
  %v9432 = vpop.xlane.xlu0 %9431
  %v9433 = vadd.f32 %v9423, %v9432
  %v9434 = vmul.f32 %v9433, 0.001953125
  %v9435 = vld [vmem:[%s3] sm:$0xf]
  %v9436 = vadd.f32 %v9434, 1e-05
  %v9437 = vrsqrt.pop %v9436
  %v9438 = vmul.f32 %v9435, %v9437
  %v9439 = vld [vmem:[%s4] sm:$0xf]
  %v9440 = vmul.f32 %v9413, %v9438
  %v9441 = vsub.f32 %v9439, %v9440
  %9443 = vset.pattern.permute.xlu0 0
  %9444 = vperm.xlu0 %9443, %v9438
  %v9445 = vpop.permute.xlu0 %9444
  %v9447 = vmul.f32 %v9255, %v9445
  %v9448 = vmul.f32 %v9256, %v9445
  %9450 = vset.pattern.permute.xlu0 0
  %9451 = vperm.xlu0 %9450, %v9441
  %v9452 = vpop.permute.xlu0 %9451
  %v9454 = vadd.f32 %v9447, %v9452
  %v9455 = vadd.f32 %v9448, %v9452
  %v9458 = vrot.slane %v9454, 4
  %v9459 = vrot.slane %v9455, 4
  %9462 = vst [vmem:[%s5] sm:$0xf0] %v9458
  %9463 = vst [vmem:[%s5 + $0x8] sm:$0xf0] %v9459
  %v9464 = vmul.f32 %v9399, %v9445
  %v9465 = vmul.f32 %v9400, %v9445
  %v9466 = vadd.f32 %v9464, %v9452
  %v9467 = vadd.f32 %v9465, %v9452
  %v9470 = vrot.slane %v9466, 4
  %v9471 = vrot.slane %v9467, 4
  %9474 = vst [vmem:[%s37] sm:$0xf0] %v9470
  %9475 = vst [vmem:[%s37 + $0x8] sm:$0xf0] %v9471
  // Predicated region
  $region22: #{unet_skip_block_forward.1} parent=0 // pred_check
    _
  $region23: #{unet_skip_block_forward.1} parent=0 // pred_check_branch
    %9477 = sbr.rel (0) target = $region25
  $region24: #{unet_skip_block_forward.1} parent=0 // pred_region
    _
  $region25: #{unet_skip_block_forward.1} parent=0 // pred_fallthru
    _
  // Predicated region
  $region26: #{unet_skip_block_forward.1} parent=0 // pred_check
    _
  $region27: #{unet_skip_block_forward.1} parent=0 // pred_check_branch
    %9479 = sbr.rel (0) target = $region29
  $region28: #{unet_skip_block_forward.1} parent=0 // pred_region
    _
  $region29: #{unet_skip_block_forward.1} parent=0 // pred_fallthru
    _

</llo_original>
